<compile_context>
chip_gen: v7x
topology: tpu7x:2x2x1
jax: 0.10.0
libtpu: 0.0.40
codegen_flags: <defaults>
</compile_context>

<pallas_src>
import numpy as np
import jax
import jax.numpy as jnp
from jax import lax
from jax.experimental import pallas as pl
from jax.experimental.pallas import tpu as pltpu

HIDDEN = 32
NLAYERS = 3
GATES = 4 * HIDDEN          # 128 -> lane-dense gate / output width


# --------------------------------- fused kernel ---------------------------------
def make_lstm_moe_kernel(has_ctxt, n_feat, S, H, L, layout, unroll):
    """MoE input layers + wavefronted stacked LSTM + pred/log-softmax, one pallas_call."""
    G = 4 * H
    n_steps = S + L - 1

    def kernel(*refs):
        it = iter(refs)
        # ----- dynamic inputs -----
        ctxt_ref = next(it) if has_ctxt else None          # (S, ctxt_dim)
        xcat_ref = next(it) if n_feat else None            # (S, sum f_k)
        h0_ref = next(it)                                   # (L, H)
        c0_ref = next(it)                                   # (L, H)
        # ----- packed weights -----
        featw_ref = next(it) if n_feat else None            # (sum f_k, n_feat*ndim) block-diag
        featb_ref = next(it) if n_feat else None            # (1, n_feat*ndim)
        main_ref = next(it)                                  # (rows, 4H) slab
        # ----- outputs -----
        o_ref = next(it)                                     # (S, 4H) lane-dense log-softmax slab
        hN_ref = next(it)                                    # (L, H)
        cN_ref = next(it)                                    # (L, H)
        # ----- scratch -----
        g_ref = next(it)                                     # (S, 4H) hoisted layer-0 pre-acts
        seq_ref = next(it)                                   # (S, H)  final layer hidden sequence

        def seg(name):
            a, b = layout[name]
            return main_ref[pl.ds(a, b - a), :]

        # ---- (1) fused MoE input layers + hoisted layer-0 input projection ----------
        acc = jnp.zeros((S, G), jnp.float32)
        if has_ctxt:
            acc = acc + jnp.dot(ctxt_ref[...], seg('wih0_ctxt'),
                                preferred_element_type=jnp.float32)
        if n_feat:
            y = jnp.dot(xcat_ref[...], featw_ref[...],
                        preferred_element_type=jnp.float32) + featb_ref[...]
            y = jnp.where(y > 0, y, 0.01 * y)                # LeakyReLU(0.01)
            acc = acc + jnp.dot(y, seg('wih0_feat'),
                                preferred_element_type=jnp.float32)
        g_ref[...] = acc + seg('b0')                          # bias folded (i/f/o cols prescaled)

        # ---- loop-invariant recurrent weights (hoisted loads) ------------------------
        whh0 = seg('whh0')                                    # (H, 4H)
        wihs = [seg(f'wih{l}') for l in range(1, L)]          # (H, 4H)
        whhs = [seg(f'whh{l}') for l in range(1, L)]          # (H, 4H)
        bls = [seg(f'bl{l}') for l in range(1, L)]            # (1, 4H)

        # sigmoid-via-tanh lane constants: sigma(x) = 0.5*(1 + tanh(x/2)); the x/2 is
        # already baked into the i/f/o weight columns by prepare_weights.
        lane = lax.broadcasted_iota(jnp.int32, (1, G), 1)
        is_g = (lane >= 2 * H) & (lane < 3 * H)
        a_scale = jnp.where(is_g, 1.0, 0.5).astype(jnp.float32)
        a_shift = jnp.where(is_g, 0.0, 0.5).astype(jnp.float32)

        def lstm_cell(gates, c_prev):
            t = jnp.tanh(gates)                               # ONE full-width EUP push
            act = t * a_scale + a_shift                       # i/f/o -> sigmoid, g -> tanh
            i_g = act[:, 0:H]
            f_g = act[:, H:2 * H]
            g_g = act[:, 2 * H:3 * H]
            o_g = act[:, 3 * H:4 * H]
            c_new = f_g * c_prev + i_g * g_g
            h_new = o_g * jnp.tanh(c_new)
            return h_new, c_new

        def blend(m, new, old):                               # exact select with f32 mask
            return m * new + (1.0 - m) * old

        # ---- (2) wavefront over the L layers ----------------------------------------
        def step(k, carry):
            hs, cs = carry                                    # tuples of (1, H) per layer
            new_hs, new_cs = [], []

            # layer 0: hoisted preact + (1,H)@(H,4H) recurrent dot
            t0 = jnp.minimum(k, S - 1)
            g0 = g_ref[pl.ds(t0, 1), :] + jnp.dot(hs[0], whh0,
                                                  preferred_element_type=jnp.float32)
            h_n, c_n = lstm_cell(g0, cs[0])
            m0 = (k < S).astype(jnp.float32)
            new_hs.append(blend(m0, h_n, hs[0]))
            new_cs.append(blend(m0, c_n, cs[0]))

            # layers 1..L-1: input dot on previous step's h of layer l-1 (independent work)
            for l in range(1, L):
                gl = (jnp.dot(hs[l - 1], wihs[l - 1], preferred_element_type=jnp.float32)
                      + jnp.dot(hs[l], whhs[l - 1], preferred_element_type=jnp.float32)
                      + bls[l - 1])
                h_n, c_n = lstm_cell(gl, cs[l])
                ml = ((k >= l) & (k - l < S)).astype(jnp.float32)
                new_hs.append(blend(ml, h_n, hs[l]))
                new_cs.append(blend(ml, c_n, cs[l]))

            # Store only the FINAL layer's hidden.  Index clamped to 0 while that layer
            # is still inactive (k < L-1); those spurious writes to row 0 are overwritten
            # with the correct value at k = L-1 and nothing reads seq_ref inside the loop.
            t_out = jnp.maximum(k - (L - 1), 0)
            seq_ref[pl.ds(t_out, 1), :] = new_hs[L - 1]
            return (tuple(new_hs), tuple(new_cs))

        init = (tuple(h0_ref[pl.ds(l, 1), :] for l in range(L)),
                tuple(c0_ref[pl.ds(l, 1), :] for l in range(L)))
        hs_f, cs_f = lax.fori_loop(0, n_steps, step, init, unroll=unroll)

        for l in range(L):
            hN_ref[pl.ds(l, 1), :] = hs_f[l]
            cN_ref[pl.ds(l, 1), :] = cs_f[l]

        # ---- pred Linear(H,2) + LogSoftmax: out = -softplus(+/-(l1-l0)), lane-dense ----
        d = jnp.dot(seq_ref[...], seg('wd'),
                    preferred_element_type=jnp.float32) + seg('bd')
        e = jnp.exp(-jnp.abs(d))
        # tail-preserving softplus: series log(1+e) ~ e - e^2/2 for tiny e
        lp = jnp.where(e < 1e-4, e * (1.0 - 0.5 * e), jnp.log(1.0 + e))
        o_ref[...] = -(jnp.maximum(d, 0.0) + lp)

    return kernel


# --------------------------------- params / weights ---------------------------------
def init_params(key, feature_size, hidden_units=HIDDEN, nlayers=NLAYERS, non_ctxt_dim=1024):
    if 'ctxt' in feature_size:
        non_ctxt_dim = feature_size['ctxt']
    non_ctxt_keys = [k for k in feature_size if k != 'ctxt']
    non_ctxt_size = len(non_ctxt_keys)
    if non_ctxt_size != 0:
        non_ctxt_dim = non_ctxt_dim // non_ctxt_size * non_ctxt_size
    else:
        non_ctxt_dim = 0
    ctxt_dim = feature_size.get('ctxt', 0)
    input_size = ctxt_dim + non_ctxt_dim
    ndim = non_ctxt_dim // non_ctxt_size if non_ctxt_size else 0

    def uni(k, shape, fan_in):
        bound = 1.0 / jnp.sqrt(jnp.float32(fan_in))
        return jax.random.uniform(k, shape, jnp.float32, -bound, bound)

    keys = iter(jax.random.split(key, 64))
    params = {'input_layer': {}, 'lstm': [], 'input_size': input_size, 'ndim': ndim}
    for k in non_ctxt_keys:
        fin = feature_size[k]
        params['input_layer'][k] = (uni(next(keys), (fin, ndim), fin),
                                    uni(next(keys), (1, ndim), fin))
    for l in range(nlayers):
        in_dim = input_size if l == 0 else hidden_units
        wih = uni(next(keys), (in_dim, 4 * hidden_units), in_dim)          # pre-transposed
        whh = uni(next(keys), (hidden_units, 4 * hidden_units), hidden_units)
        b_ih = uni(next(keys), (1, 4 * hidden_units), hidden_units)
        b_hh = uni(next(keys), (1, 4 * hidden_units), hidden_units)
        params['lstm'].append((wih, whh, b_ih + b_hh))                     # fuse biases
    params['pred_w'] = uni(next(keys), (hidden_units, 2), hidden_units)
    params['pred_b'] = uni(next(keys), (1, 2), hidden_units)
    return params


def prepare_weights(params, feature_size):
    """Pack all weights into 3 contiguous slabs (done once, outside forward)."""
    has_ctxt = 'ctxt' in feature_size
    feat_keys = [k for k in feature_size if k != 'ctxt']
    n_feat = len(feat_keys)
    ctxt_dim = feature_size.get('ctxt', 0)
    ndim = params['ndim']
    H, G, L = HIDDEN, GATES, NLAYERS

    # Pre-scale i/f/o gate columns by 0.5 (sigmoid-via-tanh in the kernel).
    col_scale = jnp.concatenate(
        [jnp.full((1, H), 0.5), jnp.full((1, H), 0.5),
         jnp.ones((1, H)), jnp.full((1, H), 0.5)], axis=1).astype(jnp.float32)
    sg = lambda w: w.astype(jnp.float32) * col_scale

    # ---- block-diagonal feature slab: one matmul replaces n_feat tiny ones ----
    featw = featb = None
    if n_feat:
        sum_f = sum(feature_size[k] for k in feat_keys)
        featw = jnp.zeros((sum_f, n_feat * ndim), jnp.float32)
        featb = jnp.zeros((1, n_feat * ndim), jnp.float32)
        r = 0
        for i, k in enumerate(feat_keys):
            w, b = params['input_layer'][k]
            featw = featw.at[r:r + w.shape[0], i * ndim:(i + 1) * ndim].set(w)
            featb = featb.at[:, i * ndim:(i + 1) * ndim].set(b)
            r += w.shape[0]

    # ---- single (rows, 4H) slab; every segment start aligned to 8 sublanes ----
    segs, layout = [], {}
    rows = 0

    def add(name, arr):
        nonlocal rows
        n = arr.shape[0]
        layout[name] = (rows, rows + n)
        segs.append(arr.astype(jnp.float32))
        pad = (-n) % 8
        if pad:
            segs.append(jnp.zeros((pad, G), jnp.float32))
        rows += n + pad

    wih0, whh0, b0 = params['lstm'][0]
    if has_ctxt:
        add('wih0_ctxt', sg(wih0[:ctxt_dim]))
    if n_feat:
        add('wih0_feat', sg(wih0[ctxt_dim:ctxt_dim + n_feat * ndim]))
    add('b0', sg(b0))
    add('whh0', sg(whh0))
    for l in range(1, L):
        wih_l, whh_l, b_l = params['lstm'][l]
        add(f'wih{l}', sg(wih_l))
        add(f'whh{l}', sg(whh_l))
        add(f'bl{l}', sg(b_l))
    # pred: log-softmax closed form only needs logit differences; NOT gate-scaled.
    wp, bp = params['pred_w'], params['pred_b']
    wd = jnp.zeros((H, G), jnp.float32)
    wd = wd.at[:, 0].set(wp[:, 1] - wp[:, 0]).at[:, 1].set(wp[:, 0] - wp[:, 1])
    bd = jnp.zeros((1, G), jnp.float32)
    bd = bd.at[0, 0].set(bp[0, 1] - bp[0, 0]).at[0, 1].set(bp[0, 0] - bp[0, 1])
    add('wd', wd)
    add('bd', bd)

    main = jnp.concatenate(segs, axis=0)
    return {'featw': featw, 'featb': featb, 'main': main, 'layout': layout,
            'has_ctxt': has_ctxt, 'n_feat': n_feat, 'feat_keys': feat_keys}


# --------------------------------- forward wrapper ---------------------------------
def lstm_moe_forward(features, weights, h0, c0):
    has_ctxt = weights['has_ctxt']
    n_feat = weights['n_feat']
    feat_keys = weights['feat_keys']
    S = next(iter(features.values())).shape[0]
    H, L = HIDDEN, NLAYERS

    args = []
    if has_ctxt:
        args.append(features['ctxt'].astype(jnp.float32))
    if n_feat:
        xcat = jnp.concatenate([features[k].astype(jnp.float32) for k in feat_keys],
                               axis=-1)
        args.append(xcat)
    args += [h0.astype(jnp.float32), c0.astype(jnp.float32)]
    if n_feat:
        args += [weights['featw'], weights['featb']]
    args.append(weights['main'])

    n_steps = S + L - 1
    unroll = True if n_steps <= 64 else 8      # gate full unroll on sequence length
    kernel = make_lstm_moe_kernel(has_ctxt, n_feat, S, H, L, weights['layout'], unroll)

    out_pad, h_n, c_n = pl.pallas_call(
        kernel,
        out_shape=(jax.ShapeDtypeStruct((S, GATES), jnp.float32),   # lane-dense slab
                   jax.ShapeDtypeStruct((L, H), jnp.float32),
                   jax.ShapeDtypeStruct((L, H), jnp.float32)),
        scratch_shapes=[pltpu.VMEM((S, GATES), jnp.float32),        # hoisted pre-acts
                        pltpu.VMEM((S, H), jnp.float32)],           # final-layer hidden seq
    )(*args)
    return out_pad[:, :2], h_n, c_n


# --------------------------------- pure-JAX reference ---------------------------------
def reference_forward(features, params, feature_size, h0, c0):
    feat_keys = [k for k in feature_size if k != 'ctxt']
    H, L = HIDDEN, NLAYERS
    xs = []
    if 'ctxt' in feature_size:
        xs.append(features['ctxt'].astype(jnp.float32))
    for k in feat_keys:
        w, b = params['input_layer'][k]
        y = features[k].astype(jnp.float32) @ w + b
        xs.append(jnp.where(y > 0, y, 0.01 * y))
    layer_in = jnp.concatenate(xs, axis=-1)
    h_out, c_out = [], []
    for l in range(L):
        wih, whh, b = params['lstm'][l]

        def cell(carry, xt, wih=wih, whh=whh, b=b):
            h, c = carry
            z = xt @ wih + h @ whh + b[0]
            i = jax.nn.sigmoid(z[0:H]); f = jax.nn.sigmoid(z[H:2 * H])
            g = jnp.tanh(z[2 * H:3 * H]); o = jax.nn.sigmoid(z[3 * H:4 * H])
            c_n = f * c + i * g
            h_n = o * jnp.tanh(c_n)
            return (h_n, c_n), h_n

        (h_f, c_f), layer_in = lax.scan(cell, (h0[l], c0[l]), layer_in)
        h_out.append(h_f); c_out.append(c_f)
    logits = layer_in @ params['pred_w'] + params['pred_b']
    return jax.nn.log_softmax(logits, axis=-1), jnp.stack(h_out), jnp.stack(c_out)


# --------------------------------------- demo ---------------------------------------
if __name__ == "__main__":
    feature_size = {'ctxt': 16, 'audio': 8, 'video': 12}
    seq_len = 8

    key = jax.random.PRNGKey(0)
    k_p, k_c, k_a, k_v, k_h, k_s = jax.random.split(key, 6)
    params = init_params(k_p, feature_size)
    weights = prepare_weights(params, feature_size)

    features = {
        'ctxt':  jax.random.normal(k_c, (seq_len, feature_size['ctxt']), jnp.float32),
        'audio': jax.random.normal(k_a, (seq_len, feature_size['audio']), jnp.float32),
        'video': jax.random.normal(k_v, (seq_len, feature_size['video']), jnp.float32),
    }
    # state as left by a previous call (module initializes to zeros; non-zero exercises carry)
    h0 = 0.1 * jax.random.normal(k_h, (NLAYERS, HIDDEN), jnp.float32)
    c0 = 0.1 * jax.random.normal(k_s, (NLAYERS, HIDDEN), jnp.float32)

    out, h_n, c_n = lstm_moe_forward(features, weights, h0, c0)
    jax.block_until_ready((out, h_n, c_n))
    assert out.shape == (seq_len, 2)
    assert h_n.shape == (NLAYERS, HIDDEN) and c_n.shape == (NLAYERS, HIDDEN)

    # pure-JAX reference check (sigmoid-via-tanh + summation order -> tiny f32 diffs)
    ref_out, ref_h, ref_c = reference_forward(features, params, feature_size, h0, c0)
    np.testing.assert_allclose(np.asarray(out), np.asarray(ref_out), atol=5e-4, rtol=5e-4)
    np.testing.assert_allclose(np.asarray(h_n), np.asarray(ref_h), atol=5e-4, rtol=5e-4)
    np.testing.assert_allclose(np.asarray(c_n), np.asarray(ref_c), atol=5e-4, rtol=5e-4)
    print("KERNEL_OK")
</pallas_src>

<mosaic_0001>
module attributes {stable_mosaic.version = 11 : i64} {
  func.func @kernel(%arg0: memref<8x16xf32, #tpu.memory_space<vmem>>, %arg1: memref<8x20xf32, #tpu.memory_space<vmem>>, %arg2: memref<3x32xf32, #tpu.memory_space<vmem>>, %arg3: memref<3x32xf32, #tpu.memory_space<vmem>>, %arg4: memref<20x16xf32, #tpu.memory_space<vmem>>, %arg5: memref<1x16xf32, #tpu.memory_space<vmem>>, %arg6: memref<256x128xf32, #tpu.memory_space<vmem>>, %arg7: memref<8x128xf32, #tpu.memory_space<vmem>>, %arg8: memref<3x32xf32, #tpu.memory_space<vmem>>, %arg9: memref<3x32xf32, #tpu.memory_space<vmem>>, %arg10: memref<8x128xf32, #tpu.memory_space<vmem>>, %arg11: memref<8x32xf32, #tpu.memory_space<vmem>>) attributes {dimension_semantics = [], scalar_prefetch = 0 : i64, scratch_operands = 2 : i64, tpu.core_type = #tpu.core_type<tc>} {
    %cst = arith.constant 0.000000e+00 : f32
    %0 = vector.broadcast %cst : f32 to vector<8x128xf32>
    %c0 = arith.constant 0 : index
    %c0_0 = arith.constant 0 : index
    %1 = vector.load %arg0[%c0, %c0_0] : memref<8x16xf32, #tpu.memory_space<vmem>>, vector<8x16xf32>
    %c0_1 = arith.constant 0 : index
    %c0_2 = arith.constant 0 : index
    %2 = vector.load %arg6[%c0_1, %c0_2] : memref<256x128xf32, #tpu.memory_space<vmem>>, vector<16x128xf32>
    %cst_3 = arith.constant dense<0.000000e+00> : vector<8x128xf32>
    %3 = tpu.matmul %1, %2, %cst_3 {dimension_numbers = #tpu.dot_dimension_numbers<[1], [0], [0], [1], [0, 0, 1, 1], [], []>} : vector<8x16xf32>, vector<16x128xf32>, vector<8x128xf32> -> vector<8x128xf32>
    %4 = arith.addf %0, %3 : vector<8x128xf32>
    %c0_4 = arith.constant 0 : index
    %c0_5 = arith.constant 0 : index
    %5 = vector.load %arg1[%c0_4, %c0_5] : memref<8x20xf32, #tpu.memory_space<vmem>>, vector<8x20xf32>
    %c0_6 = arith.constant 0 : index
    %c0_7 = arith.constant 0 : index
    %6 = vector.load %arg4[%c0_6, %c0_7] : memref<20x16xf32, #tpu.memory_space<vmem>>, vector<20x16xf32>
    %cst_8 = arith.constant dense<0.000000e+00> : vector<8x16xf32>
    %7 = tpu.matmul %5, %6, %cst_8 {dimension_numbers = #tpu.dot_dimension_numbers<[1], [0], [0], [1], [0, 0, 1, 1], [], []>} : vector<8x20xf32>, vector<20x16xf32>, vector<8x16xf32> -> vector<8x16xf32>
    %c0_9 = arith.constant 0 : index
    %c0_10 = arith.constant 0 : index
    %8 = vector.load %arg5[%c0_9, %c0_10] : memref<1x16xf32, #tpu.memory_space<vmem>>, vector<1x16xf32>
    %9 = vector.broadcast %8 : vector<1x16xf32> to vector<8x16xf32>
    %10 = arith.addf %7, %9 : vector<8x16xf32>
    %cst_11 = arith.constant 0.000000e+00 : f32
    %11 = vector.broadcast %cst_11 : f32 to vector<8x16xf32>
    %12 = arith.cmpf ogt, %10, %11 : vector<8x16xf32>
    %cst_12 = arith.constant 0.00999999977 : f32
    %13 = vector.broadcast %cst_12 : f32 to vector<8x16xf32>
    %14 = arith.mulf %13, %10 : vector<8x16xf32>
    %15 = arith.select %12, %10, %14 : vector<8x16xi1>, vector<8x16xf32>
    %c16 = arith.constant 16 : index
    %c0_13 = arith.constant 0 : index
    %16 = vector.load %arg6[%c16, %c0_13] : memref<256x128xf32, #tpu.memory_space<vmem>>, vector<16x128xf32>
    %cst_14 = arith.constant dense<0.000000e+00> : vector<8x128xf32>
    %17 = tpu.matmul %15, %16, %cst_14 {dimension_numbers = #tpu.dot_dimension_numbers<[1], [0], [0], [1], [0, 0, 1, 1], [], []>} : vector<8x16xf32>, vector<16x128xf32>, vector<8x128xf32> -> vector<8x128xf32>
    %18 = arith.addf %4, %17 : vector<8x128xf32>
    %c32 = arith.constant 32 : index
    %c0_15 = arith.constant 0 : index
    %19 = vector.load %arg6[%c32, %c0_15] : memref<256x128xf32, #tpu.memory_space<vmem>>, vector<1x128xf32>
    %20 = vector.broadcast %19 : vector<1x128xf32> to vector<8x128xf32>
    %21 = arith.addf %18, %20 : vector<8x128xf32>
    %c0_16 = arith.constant 0 : index
    %c0_17 = arith.constant 0 : index
    %22 = vector.load %arg10[%c0_16, %c0_17] : memref<8x128xf32, #tpu.memory_space<vmem>>, vector<8x128xf32>
    tpu.vector_store %arg10[%c0_16, %c0_17], %21 {strides = array<i32>} : memref<8x128xf32, #tpu.memory_space<vmem>>, vector<8x128xf32>,
    %c40 = arith.constant 40 : index
    %c0_18 = arith.constant 0 : index
    %23 = vector.load %arg6[%c40, %c0_18] : memref<256x128xf32, #tpu.memory_space<vmem>>, vector<32x128xf32>
    %c72 = arith.constant 72 : index
    %c0_19 = arith.constant 0 : index
    %24 = vector.load %arg6[%c72, %c0_19] : memref<256x128xf32, #tpu.memory_space<vmem>>, vector<32x128xf32>
    %c144 = arith.constant 144 : index
    %c0_20 = arith.constant 0 : index
    %25 = vector.load %arg6[%c144, %c0_20] : memref<256x128xf32, #tpu.memory_space<vmem>>, vector<32x128xf32>
    %c104 = arith.constant 104 : index
    %c0_21 = arith.constant 0 : index
    %26 = vector.load %arg6[%c104, %c0_21] : memref<256x128xf32, #tpu.memory_space<vmem>>, vector<32x128xf32>
    %c176 = arith.constant 176 : index
    %c0_22 = arith.constant 0 : index
    %27 = vector.load %arg6[%c176, %c0_22] : memref<256x128xf32, #tpu.memory_space<vmem>>, vector<32x128xf32>
    %c136 = arith.constant 136 : index
    %c0_23 = arith.constant 0 : index
    %28 = vector.load %arg6[%c136, %c0_23] : memref<256x128xf32, #tpu.memory_space<vmem>>, vector<1x128xf32>
    %c208 = arith.constant 208 : index
    %c0_24 = arith.constant 0 : index
    %29 = vector.load %arg6[%c208, %c0_24] : memref<256x128xf32, #tpu.memory_space<vmem>>, vector<1x128xf32>
    %30 = tpu.iota {dimensions = array<i32: 1>} : vector<1x128xi32>
    %c64_i32 = arith.constant 64 : i32
    %31 = vector.broadcast %c64_i32 : i32 to vector<1x128xi32>
    %32 = arith.cmpi sge, %30, %31 : vector<1x128xi32>
    %c96_i32 = arith.constant 96 : i32
    %33 = vector.broadcast %c96_i32 : i32 to vector<1x128xi32>
    %34 = arith.cmpi slt, %30, %33 : vector<1x128xi32>
    %35 = arith.andi %32, %34 : vector<1x128xi1>
    %cst_25 = arith.constant 1.000000e+00 : f32
    %cst_26 = arith.constant 5.000000e-01 : f32
    %36 = vector.broadcast %cst_25 : f32 to vector<1x128xf32>
    %37 = vector.broadcast %cst_26 : f32 to vector<1x128xf32>
    %38 = arith.select %35, %36, %37 : vector<1x128xi1>, vector<1x128xf32>
    %cst_27 = arith.constant 0.000000e+00 : f32
    %cst_28 = arith.constant 5.000000e-01 : f32
    %39 = vector.broadcast %cst_27 : f32 to vector<1x128xf32>
    %40 = vector.broadcast %cst_28 : f32 to vector<1x128xf32>
    %41 = arith.select %35, %39, %40 : vector<1x128xi1>, vector<1x128xf32>
    %c0_29 = arith.constant 0 : index
    %c0_30 = arith.constant 0 : index
    %42 = vector.load %arg2[%c0_29, %c0_30] : memref<3x32xf32, #tpu.memory_space<vmem>>, vector<1x32xf32>
    %c1 = arith.constant 1 : index
    %c0_31 = arith.constant 0 : index
    %43 = vector.load %arg2[%c1, %c0_31] : memref<3x32xf32, #tpu.memory_space<vmem>>, vector<1x32xf32>
    %c2 = arith.constant 2 : index
    %c0_32 = arith.constant 0 : index
    %44 = vector.load %arg2[%c2, %c0_32] : memref<3x32xf32, #tpu.memory_space<vmem>>, vector<1x32xf32>
    %c0_33 = arith.constant 0 : index
    %c0_34 = arith.constant 0 : index
    %45 = vector.load %arg3[%c0_33, %c0_34] : memref<3x32xf32, #tpu.memory_space<vmem>>, vector<1x32xf32>
    %c1_35 = arith.constant 1 : index
    %c0_36 = arith.constant 0 : index
    %46 = vector.load %arg3[%c1_35, %c0_36] : memref<3x32xf32, #tpu.memory_space<vmem>>, vector<1x32xf32>
    %c2_37 = arith.constant 2 : index
    %c0_38 = arith.constant 0 : index
    %47 = vector.load %arg3[%c2_37, %c0_38] : memref<3x32xf32, #tpu.memory_space<vmem>>, vector<1x32xf32>
    %c0_i32 = arith.constant 0 : i32
    %c7_i32 = arith.constant 7 : i32
    %48 = arith.minsi %c0_i32, %c7_i32 : i32
    %49 = arith.index_cast %48 : i32 to index
    %c0_39 = arith.constant 0 : index
    %50 = vector.load %arg10[%49, %c0_39] : memref<8x128xf32, #tpu.memory_space<vmem>>, vector<1x128xf32>
    %cst_40 = arith.constant dense<0.000000e+00> : vector<1x128xf32>
    %51 = tpu.matmul %42, %23, %cst_40 {dimension_numbers = #tpu.dot_dimension_numbers<[1], [0], [0], [1], [0, 0, 1, 1], [], []>} : vector<1x32xf32>, vector<32x128xf32>, vector<1x128xf32> -> vector<1x128xf32>
    %52 = arith.addf %50, %51 : vector<1x128xf32>
    %53 = math.tanh %52 : vector<1x128xf32>
    %54 = arith.mulf %53, %38 : vector<1x128xf32>
    %55 = arith.addf %54, %41 : vector<1x128xf32>
    %56 = vector.extract_strided_slice %55 {offsets = [0, 0], sizes = [1, 32], strides = [1, 1]} : vector<1x128xf32> to vector<1x32xf32>
    %57 = vector.extract_strided_slice %55 {offsets = [0, 32], sizes = [1, 32], strides = [1, 1]} : vector<1x128xf32> to vector<1x32xf32>
    %58 = vector.extract_strided_slice %55 {offsets = [0, 64], sizes = [1, 32], strides = [1, 1]} : vector<1x128xf32> to vector<1x32xf32>
    %59 = vector.extract_strided_slice %55 {offsets = [0, 96], sizes = [1, 32], strides = [1, 1]} : vector<1x128xf32> to vector<1x32xf32>
    %60 = arith.mulf %57, %45 : vector<1x32xf32>
    %61 = arith.mulf %56, %58 : vector<1x32xf32>
    %62 = arith.addf %60, %61 : vector<1x32xf32>
    %63 = math.tanh %62 : vector<1x32xf32>
    %64 = arith.mulf %59, %63 : vector<1x32xf32>
    %c8_i32 = arith.constant 8 : i32
    %65 = arith.cmpi slt, %c0_i32, %c8_i32 : i32
    %66 = arith.extui %65 : i1 to i32
    %67 = arith.sitofp %66 : i32 to f32
    %68 = vector.broadcast %67 : f32 to vector<1x32xf32>
    %69 = arith.mulf %68, %64 : vector<1x32xf32>
    %cst_41 = arith.constant 1.000000e+00 : f32
    %70 = arith.subf %cst_41, %67 : f32
    %71 = vector.broadcast %70 : f32 to vector<1x32xf32>
    %72 = arith.mulf %71, %42 : vector<1x32xf32>
    %73 = arith.addf %69, %72 : vector<1x32xf32>
    %74 = vector.broadcast %67 : f32 to vector<1x32xf32>
    %75 = arith.mulf %74, %62 : vector<1x32xf32>
    %cst_42 = arith.constant 1.000000e+00 : f32
    %76 = arith.subf %cst_42, %67 : f32
    %77 = vector.broadcast %76 : f32 to vector<1x32xf32>
    %78 = arith.mulf %77, %45 : vector<1x32xf32>
    %79 = arith.addf %75, %78 : vector<1x32xf32>
    %cst_43 = arith.constant dense<0.000000e+00> : vector<1x128xf32>
    %80 = tpu.matmul %42, %24, %cst_43 {dimension_numbers = #tpu.dot_dimension_numbers<[1], [0], [0], [1], [0, 0, 1, 1], [], []>} : vector<1x32xf32>, vector<32x128xf32>, vector<1x128xf32> -> vector<1x128xf32>
    %cst_44 = arith.constant dense<0.000000e+00> : vector<1x128xf32>
    %81 = tpu.matmul %43, %26, %cst_44 {dimension_numbers = #tpu.dot_dimension_numbers<[1], [0], [0], [1], [0, 0, 1, 1], [], []>} : vector<1x32xf32>, vector<32x128xf32>, vector<1x128xf32> -> vector<1x128xf32>
    %82 = arith.addf %80, %81 : vector<1x128xf32>
    %83 = arith.addf %82, %28 : vector<1x128xf32>
    %84 = math.tanh %83 : vector<1x128xf32>
    %85 = arith.mulf %84, %38 : vector<1x128xf32>
    %86 = arith.addf %85, %41 : vector<1x128xf32>
    %87 = vector.extract_strided_slice %86 {offsets = [0, 0], sizes = [1, 32], strides = [1, 1]} : vector<1x128xf32> to vector<1x32xf32>
    %88 = vector.extract_strided_slice %86 {offsets = [0, 32], sizes = [1, 32], strides = [1, 1]} : vector<1x128xf32> to vector<1x32xf32>
    %89 = vector.extract_strided_slice %86 {offsets = [0, 64], sizes = [1, 32], strides = [1, 1]} : vector<1x128xf32> to vector<1x32xf32>
    %90 = vector.extract_strided_slice %86 {offsets = [0, 96], sizes = [1, 32], strides = [1, 1]} : vector<1x128xf32> to vector<1x32xf32>
    %91 = arith.mulf %88, %46 : vector<1x32xf32>
    %92 = arith.mulf %87, %89 : vector<1x32xf32>
    %93 = arith.addf %91, %92 : vector<1x32xf32>
    %94 = math.tanh %93 : vector<1x32xf32>
    %95 = arith.mulf %90, %94 : vector<1x32xf32>
    %c1_i32 = arith.constant 1 : i32
    %96 = arith.cmpi sge, %c0_i32, %c1_i32 : i32
    %c1_i32_45 = arith.constant 1 : i32
    %97 = arith.subi %c0_i32, %c1_i32_45 : i32
    %c8_i32_46 = arith.constant 8 : i32
    %98 = arith.cmpi slt, %97, %c8_i32_46 : i32
    %99 = arith.andi %96, %98 : i1
    %100 = arith.extui %99 : i1 to i32
    %101 = arith.sitofp %100 : i32 to f32
    %102 = vector.broadcast %101 : f32 to vector<1x32xf32>
    %103 = arith.mulf %102, %95 : vector<1x32xf32>
    %cst_47 = arith.constant 1.000000e+00 : f32
    %104 = arith.subf %cst_47, %101 : f32
    %105 = vector.broadcast %104 : f32 to vector<1x32xf32>
    %106 = arith.mulf %105, %43 : vector<1x32xf32>
    %107 = arith.addf %103, %106 : vector<1x32xf32>
    %108 = vector.broadcast %101 : f32 to vector<1x32xf32>
    %109 = arith.mulf %108, %93 : vector<1x32xf32>
    %cst_48 = arith.constant 1.000000e+00 : f32
    %110 = arith.subf %cst_48, %101 : f32
    %111 = vector.broadcast %110 : f32 to vector<1x32xf32>
    %112 = arith.mulf %111, %46 : vector<1x32xf32>
    %113 = arith.addf %109, %112 : vector<1x32xf32>
    %cst_49 = arith.constant dense<0.000000e+00> : vector<1x128xf32>
    %114 = tpu.matmul %43, %25, %cst_49 {dimension_numbers = #tpu.dot_dimension_numbers<[1], [0], [0], [1], [0, 0, 1, 1], [], []>} : vector<1x32xf32>, vector<32x128xf32>, vector<1x128xf32> -> vector<1x128xf32>
    %cst_50 = arith.constant dense<0.000000e+00> : vector<1x128xf32>
    %115 = tpu.matmul %44, %27, %cst_50 {dimension_numbers = #tpu.dot_dimension_numbers<[1], [0], [0], [1], [0, 0, 1, 1], [], []>} : vector<1x32xf32>, vector<32x128xf32>, vector<1x128xf32> -> vector<1x128xf32>
    %116 = arith.addf %114, %115 : vector<1x128xf32>
    %117 = arith.addf %116, %29 : vector<1x128xf32>
    %118 = math.tanh %117 : vector<1x128xf32>
    %119 = arith.mulf %118, %38 : vector<1x128xf32>
    %120 = arith.addf %119, %41 : vector<1x128xf32>
    %121 = vector.extract_strided_slice %120 {offsets = [0, 0], sizes = [1, 32], strides = [1, 1]} : vector<1x128xf32> to vector<1x32xf32>
    %122 = vector.extract_strided_slice %120 {offsets = [0, 32], sizes = [1, 32], strides = [1, 1]} : vector<1x128xf32> to vector<1x32xf32>
    %123 = vector.extract_strided_slice %120 {offsets = [0, 64], sizes = [1, 32], strides = [1, 1]} : vector<1x128xf32> to vector<1x32xf32>
    %124 = vector.extract_strided_slice %120 {offsets = [0, 96], sizes = [1, 32], strides = [1, 1]} : vector<1x128xf32> to vector<1x32xf32>
    %125 = arith.mulf %122, %47 : vector<1x32xf32>
    %126 = arith.mulf %121, %123 : vector<1x32xf32>
    %127 = arith.addf %125, %126 : vector<1x32xf32>
    %128 = math.tanh %127 : vector<1x32xf32>
    %129 = arith.mulf %124, %128 : vector<1x32xf32>
    %c2_i32 = arith.constant 2 : i32
    %130 = arith.cmpi sge, %c0_i32, %c2_i32 : i32
    %c2_i32_51 = arith.constant 2 : i32
    %131 = arith.subi %c0_i32, %c2_i32_51 : i32
    %c8_i32_52 = arith.constant 8 : i32
    %132 = arith.cmpi slt, %131, %c8_i32_52 : i32
    %133 = arith.andi %130, %132 : i1
    %134 = arith.extui %133 : i1 to i32
    %135 = arith.sitofp %134 : i32 to f32
    %136 = vector.broadcast %135 : f32 to vector<1x32xf32>
    %137 = arith.mulf %136, %129 : vector<1x32xf32>
    %cst_53 = arith.constant 1.000000e+00 : f32
    %138 = arith.subf %cst_53, %135 : f32
    %139 = vector.broadcast %138 : f32 to vector<1x32xf32>
    %140 = arith.mulf %139, %44 : vector<1x32xf32>
    %141 = arith.addf %137, %140 : vector<1x32xf32>
    %142 = vector.broadcast %135 : f32 to vector<1x32xf32>
    %143 = arith.mulf %142, %127 : vector<1x32xf32>
    %cst_54 = arith.constant 1.000000e+00 : f32
    %144 = arith.subf %cst_54, %135 : f32
    %145 = vector.broadcast %144 : f32 to vector<1x32xf32>
    %146 = arith.mulf %145, %47 : vector<1x32xf32>
    %147 = arith.addf %143, %146 : vector<1x32xf32>
    %c2_i32_55 = arith.constant 2 : i32
    %148 = arith.subi %c0_i32, %c2_i32_55 : i32
    %c0_i32_56 = arith.constant 0 : i32
    %149 = arith.maxsi %148, %c0_i32_56 : i32
    %150 = arith.index_cast %149 : i32 to index
    %c0_57 = arith.constant 0 : index
    %151 = vector.load %arg11[%150, %c0_57] : memref<8x32xf32, #tpu.memory_space<vmem>>, vector<1x32xf32>
    tpu.vector_store %arg11[%150, %c0_57], %141 {strides = array<i32>} : memref<8x32xf32, #tpu.memory_space<vmem>>, vector<1x32xf32>,
    %c1_i32_58 = arith.constant 1 : i32
    %c7_i32_59 = arith.constant 7 : i32
    %152 = arith.minsi %c1_i32_58, %c7_i32_59 : i32
    %153 = arith.index_cast %152 : i32 to index
    %c0_60 = arith.constant 0 : index
    %154 = vector.load %arg10[%153, %c0_60] : memref<8x128xf32, #tpu.memory_space<vmem>>, vector<1x128xf32>
    %cst_61 = arith.constant dense<0.000000e+00> : vector<1x128xf32>
    %155 = tpu.matmul %73, %23, %cst_61 {dimension_numbers = #tpu.dot_dimension_numbers<[1], [0], [0], [1], [0, 0, 1, 1], [], []>} : vector<1x32xf32>, vector<32x128xf32>, vector<1x128xf32> -> vector<1x128xf32>
    %156 = arith.addf %154, %155 : vector<1x128xf32>
    %157 = math.tanh %156 : vector<1x128xf32>
    %158 = arith.mulf %157, %38 : vector<1x128xf32>
    %159 = arith.addf %158, %41 : vector<1x128xf32>
    %160 = vector.extract_strided_slice %159 {offsets = [0, 0], sizes = [1, 32], strides = [1, 1]} : vector<1x128xf32> to vector<1x32xf32>
    %161 = vector.extract_strided_slice %159 {offsets = [0, 32], sizes = [1, 32], strides = [1, 1]} : vector<1x128xf32> to vector<1x32xf32>
    %162 = vector.extract_strided_slice %159 {offsets = [0, 64], sizes = [1, 32], strides = [1, 1]} : vector<1x128xf32> to vector<1x32xf32>
    %163 = vector.extract_strided_slice %159 {offsets = [0, 96], sizes = [1, 32], strides = [1, 1]} : vector<1x128xf32> to vector<1x32xf32>
    %164 = arith.mulf %161, %79 : vector<1x32xf32>
    %165 = arith.mulf %160, %162 : vector<1x32xf32>
    %166 = arith.addf %164, %165 : vector<1x32xf32>
    %167 = math.tanh %166 : vector<1x32xf32>
    %168 = arith.mulf %163, %167 : vector<1x32xf32>
    %c8_i32_62 = arith.constant 8 : i32
    %169 = arith.cmpi slt, %c1_i32_58, %c8_i32_62 : i32
    %170 = arith.extui %169 : i1 to i32
    %171 = arith.sitofp %170 : i32 to f32
    %172 = vector.broadcast %171 : f32 to vector<1x32xf32>
    %173 = arith.mulf %172, %168 : vector<1x32xf32>
    %cst_63 = arith.constant 1.000000e+00 : f32
    %174 = arith.subf %cst_63, %171 : f32
    %175 = vector.broadcast %174 : f32 to vector<1x32xf32>
    %176 = arith.mulf %175, %73 : vector<1x32xf32>
    %177 = arith.addf %173, %176 : vector<1x32xf32>
    %178 = vector.broadcast %171 : f32 to vector<1x32xf32>
    %179 = arith.mulf %178, %166 : vector<1x32xf32>
    %cst_64 = arith.constant 1.000000e+00 : f32
    %180 = arith.subf %cst_64, %171 : f32
    %181 = vector.broadcast %180 : f32 to vector<1x32xf32>
    %182 = arith.mulf %181, %79 : vector<1x32xf32>
    %183 = arith.addf %179, %182 : vector<1x32xf32>
    %cst_65 = arith.constant dense<0.000000e+00> : vector<1x128xf32>
    %184 = tpu.matmul %73, %24, %cst_65 {dimension_numbers = #tpu.dot_dimension_numbers<[1], [0], [0], [1], [0, 0, 1, 1], [], []>} : vector<1x32xf32>, vector<32x128xf32>, vector<1x128xf32> -> vector<1x128xf32>
    %cst_66 = arith.constant dense<0.000000e+00> : vector<1x128xf32>
    %185 = tpu.matmul %107, %26, %cst_66 {dimension_numbers = #tpu.dot_dimension_numbers<[1], [0], [0], [1], [0, 0, 1, 1], [], []>} : vector<1x32xf32>, vector<32x128xf32>, vector<1x128xf32> -> vector<1x128xf32>
    %186 = arith.addf %184, %185 : vector<1x128xf32>
    %187 = arith.addf %186, %28 : vector<1x128xf32>
    %188 = math.tanh %187 : vector<1x128xf32>
    %189 = arith.mulf %188, %38 : vector<1x128xf32>
    %190 = arith.addf %189, %41 : vector<1x128xf32>
    %191 = vector.extract_strided_slice %190 {offsets = [0, 0], sizes = [1, 32], strides = [1, 1]} : vector<1x128xf32> to vector<1x32xf32>
    %192 = vector.extract_strided_slice %190 {offsets = [0, 32], sizes = [1, 32], strides = [1, 1]} : vector<1x128xf32> to vector<1x32xf32>
    %193 = vector.extract_strided_slice %190 {offsets = [0, 64], sizes = [1, 32], strides = [1, 1]} : vector<1x128xf32> to vector<1x32xf32>
    %194 = vector.extract_strided_slice %190 {offsets = [0, 96], sizes = [1, 32], strides = [1, 1]} : vector<1x128xf32> to vector<1x32xf32>
    %195 = arith.mulf %192, %113 : vector<1x32xf32>
    %196 = arith.mulf %191, %193 : vector<1x32xf32>
    %197 = arith.addf %195, %196 : vector<1x32xf32>
    %198 = math.tanh %197 : vector<1x32xf32>
    %199 = arith.mulf %194, %198 : vector<1x32xf32>
    %c1_i32_67 = arith.constant 1 : i32
    %200 = arith.cmpi sge, %c1_i32_58, %c1_i32_67 : i32
    %c1_i32_68 = arith.constant 1 : i32
    %201 = arith.subi %c1_i32_58, %c1_i32_68 : i32
    %c8_i32_69 = arith.constant 8 : i32
    %202 = arith.cmpi slt, %201, %c8_i32_69 : i32
    %203 = arith.andi %200, %202 : i1
    %204 = arith.extui %203 : i1 to i32
    %205 = arith.sitofp %204 : i32 to f32
    %206 = vector.broadcast %205 : f32 to vector<1x32xf32>
    %207 = arith.mulf %206, %199 : vector<1x32xf32>
    %cst_70 = arith.constant 1.000000e+00 : f32
    %208 = arith.subf %cst_70, %205 : f32
    %209 = vector.broadcast %208 : f32 to vector<1x32xf32>
    %210 = arith.mulf %209, %107 : vector<1x32xf32>
    %211 = arith.addf %207, %210 : vector<1x32xf32>
    %212 = vector.broadcast %205 : f32 to vector<1x32xf32>
    %213 = arith.mulf %212, %197 : vector<1x32xf32>
    %cst_71 = arith.constant 1.000000e+00 : f32
    %214 = arith.subf %cst_71, %205 : f32
    %215 = vector.broadcast %214 : f32 to vector<1x32xf32>
    %216 = arith.mulf %215, %113 : vector<1x32xf32>
    %217 = arith.addf %213, %216 : vector<1x32xf32>
    %cst_72 = arith.constant dense<0.000000e+00> : vector<1x128xf32>
    %218 = tpu.matmul %107, %25, %cst_72 {dimension_numbers = #tpu.dot_dimension_numbers<[1], [0], [0], [1], [0, 0, 1, 1], [], []>} : vector<1x32xf32>, vector<32x128xf32>, vector<1x128xf32> -> vector<1x128xf32>
    %cst_73 = arith.constant dense<0.000000e+00> : vector<1x128xf32>
    %219 = tpu.matmul %141, %27, %cst_73 {dimension_numbers = #tpu.dot_dimension_numbers<[1], [0], [0], [1], [0, 0, 1, 1], [], []>} : vector<1x32xf32>, vector<32x128xf32>, vector<1x128xf32> -> vector<1x128xf32>
    %220 = arith.addf %218, %219 : vector<1x128xf32>
    %221 = arith.addf %220, %29 : vector<1x128xf32>
    %222 = math.tanh %221 : vector<1x128xf32>
    %223 = arith.mulf %222, %38 : vector<1x128xf32>
    %224 = arith.addf %223, %41 : vector<1x128xf32>
    %225 = vector.extract_strided_slice %224 {offsets = [0, 0], sizes = [1, 32], strides = [1, 1]} : vector<1x128xf32> to vector<1x32xf32>
    %226 = vector.extract_strided_slice %224 {offsets = [0, 32], sizes = [1, 32], strides = [1, 1]} : vector<1x128xf32> to vector<1x32xf32>
    %227 = vector.extract_strided_slice %224 {offsets = [0, 64], sizes = [1, 32], strides = [1, 1]} : vector<1x128xf32> to vector<1x32xf32>
    %228 = vector.extract_strided_slice %224 {offsets = [0, 96], sizes = [1, 32], strides = [1, 1]} : vector<1x128xf32> to vector<1x32xf32>
    %229 = arith.mulf %226, %147 : vector<1x32xf32>
    %230 = arith.mulf %225, %227 : vector<1x32xf32>
    %231 = arith.addf %229, %230 : vector<1x32xf32>
    %232 = math.tanh %231 : vector<1x32xf32>
    %233 = arith.mulf %228, %232 : vector<1x32xf32>
    %c2_i32_74 = arith.constant 2 : i32
    %234 = arith.cmpi sge, %c1_i32_58, %c2_i32_74 : i32
    %c2_i32_75 = arith.constant 2 : i32
    %235 = arith.subi %c1_i32_58, %c2_i32_75 : i32
    %c8_i32_76 = arith.constant 8 : i32
    %236 = arith.cmpi slt, %235, %c8_i32_76 : i32
    %237 = arith.andi %234, %236 : i1
    %238 = arith.extui %237 : i1 to i32
    %239 = arith.sitofp %238 : i32 to f32
    %240 = vector.broadcast %239 : f32 to vector<1x32xf32>
    %241 = arith.mulf %240, %233 : vector<1x32xf32>
    %cst_77 = arith.constant 1.000000e+00 : f32
    %242 = arith.subf %cst_77, %239 : f32
    %243 = vector.broadcast %242 : f32 to vector<1x32xf32>
    %244 = arith.mulf %243, %141 : vector<1x32xf32>
    %245 = arith.addf %241, %244 : vector<1x32xf32>
    %246 = vector.broadcast %239 : f32 to vector<1x32xf32>
    %247 = arith.mulf %246, %231 : vector<1x32xf32>
    %cst_78 = arith.constant 1.000000e+00 : f32
    %248 = arith.subf %cst_78, %239 : f32
    %249 = vector.broadcast %248 : f32 to vector<1x32xf32>
    %250 = arith.mulf %249, %147 : vector<1x32xf32>
    %251 = arith.addf %247, %250 : vector<1x32xf32>
    %c2_i32_79 = arith.constant 2 : i32
    %252 = arith.subi %c1_i32_58, %c2_i32_79 : i32
    %c0_i32_80 = arith.constant 0 : i32
    %253 = arith.maxsi %252, %c0_i32_80 : i32
    %254 = arith.index_cast %253 : i32 to index
    %c0_81 = arith.constant 0 : index
    %255 = vector.load %arg11[%254, %c0_81] : memref<8x32xf32, #tpu.memory_space<vmem>>, vector<1x32xf32>
    tpu.vector_store %arg11[%254, %c0_81], %245 {strides = array<i32>} : memref<8x32xf32, #tpu.memory_space<vmem>>, vector<1x32xf32>,
    %c2_i32_82 = arith.constant 2 : i32
    %c7_i32_83 = arith.constant 7 : i32
    %256 = arith.minsi %c2_i32_82, %c7_i32_83 : i32
    %257 = arith.index_cast %256 : i32 to index
    %c0_84 = arith.constant 0 : index
    %258 = vector.load %arg10[%257, %c0_84] : memref<8x128xf32, #tpu.memory_space<vmem>>, vector<1x128xf32>
    %cst_85 = arith.constant dense<0.000000e+00> : vector<1x128xf32>
    %259 = tpu.matmul %177, %23, %cst_85 {dimension_numbers = #tpu.dot_dimension_numbers<[1], [0], [0], [1], [0, 0, 1, 1], [], []>} : vector<1x32xf32>, vector<32x128xf32>, vector<1x128xf32> -> vector<1x128xf32>
    %260 = arith.addf %258, %259 : vector<1x128xf32>
    %261 = math.tanh %260 : vector<1x128xf32>
    %262 = arith.mulf %261, %38 : vector<1x128xf32>
    %263 = arith.addf %262, %41 : vector<1x128xf32>
    %264 = vector.extract_strided_slice %263 {offsets = [0, 0], sizes = [1, 32], strides = [1, 1]} : vector<1x128xf32> to vector<1x32xf32>
    %265 = vector.extract_strided_slice %263 {offsets = [0, 32], sizes = [1, 32], strides = [1, 1]} : vector<1x128xf32> to vector<1x32xf32>
    %266 = vector.extract_strided_slice %263 {offsets = [0, 64], sizes = [1, 32], strides = [1, 1]} : vector<1x128xf32> to vector<1x32xf32>
    %267 = vector.extract_strided_slice %263 {offsets = [0, 96], sizes = [1, 32], strides = [1, 1]} : vector<1x128xf32> to vector<1x32xf32>
    %268 = arith.mulf %265, %183 : vector<1x32xf32>
    %269 = arith.mulf %264, %266 : vector<1x32xf32>
    %270 = arith.addf %268, %269 : vector<1x32xf32>
    %271 = math.tanh %270 : vector<1x32xf32>
    %272 = arith.mulf %267, %271 : vector<1x32xf32>
    %c8_i32_86 = arith.constant 8 : i32
    %273 = arith.cmpi slt, %c2_i32_82, %c8_i32_86 : i32
    %274 = arith.extui %273 : i1 to i32
    %275 = arith.sitofp %274 : i32 to f32
    %276 = vector.broadcast %275 : f32 to vector<1x32xf32>
    %277 = arith.mulf %276, %272 : vector<1x32xf32>
    %cst_87 = arith.constant 1.000000e+00 : f32
    %278 = arith.subf %cst_87, %275 : f32
    %279 = vector.broadcast %278 : f32 to vector<1x32xf32>
    %280 = arith.mulf %279, %177 : vector<1x32xf32>
    %281 = arith.addf %277, %280 : vector<1x32xf32>
    %282 = vector.broadcast %275 : f32 to vector<1x32xf32>
    %283 = arith.mulf %282, %270 : vector<1x32xf32>
    %cst_88 = arith.constant 1.000000e+00 : f32
    %284 = arith.subf %cst_88, %275 : f32
    %285 = vector.broadcast %284 : f32 to vector<1x32xf32>
    %286 = arith.mulf %285, %183 : vector<1x32xf32>
    %287 = arith.addf %283, %286 : vector<1x32xf32>
    %cst_89 = arith.constant dense<0.000000e+00> : vector<1x128xf32>
    %288 = tpu.matmul %177, %24, %cst_89 {dimension_numbers = #tpu.dot_dimension_numbers<[1], [0], [0], [1], [0, 0, 1, 1], [], []>} : vector<1x32xf32>, vector<32x128xf32>, vector<1x128xf32> -> vector<1x128xf32>
    %cst_90 = arith.constant dense<0.000000e+00> : vector<1x128xf32>
    %289 = tpu.matmul %211, %26, %cst_90 {dimension_numbers = #tpu.dot_dimension_numbers<[1], [0], [0], [1], [0, 0, 1, 1], [], []>} : vector<1x32xf32>, vector<32x128xf32>, vector<1x128xf32> -> vector<1x128xf32>
    %290 = arith.addf %288, %289 : vector<1x128xf32>
    %291 = arith.addf %290, %28 : vector<1x128xf32>
    %292 = math.tanh %291 : vector<1x128xf32>
    %293 = arith.mulf %292, %38 : vector<1x128xf32>
    %294 = arith.addf %293, %41 : vector<1x128xf32>
    %295 = vector.extract_strided_slice %294 {offsets = [0, 0], sizes = [1, 32], strides = [1, 1]} : vector<1x128xf32> to vector<1x32xf32>
    %296 = vector.extract_strided_slice %294 {offsets = [0, 32], sizes = [1, 32], strides = [1, 1]} : vector<1x128xf32> to vector<1x32xf32>
    %297 = vector.extract_strided_slice %294 {offsets = [0, 64], sizes = [1, 32], strides = [1, 1]} : vector<1x128xf32> to vector<1x32xf32>
    %298 = vector.extract_strided_slice %294 {offsets = [0, 96], sizes = [1, 32], strides = [1, 1]} : vector<1x128xf32> to vector<1x32xf32>
    %299 = arith.mulf %296, %217 : vector<1x32xf32>
    %300 = arith.mulf %295, %297 : vector<1x32xf32>
    %301 = arith.addf %299, %300 : vector<1x32xf32>
    %302 = math.tanh %301 : vector<1x32xf32>
    %303 = arith.mulf %298, %302 : vector<1x32xf32>
    %c1_i32_91 = arith.constant 1 : i32
    %304 = arith.cmpi sge, %c2_i32_82, %c1_i32_91 : i32
    %c1_i32_92 = arith.constant 1 : i32
    %305 = arith.subi %c2_i32_82, %c1_i32_92 : i32
    %c8_i32_93 = arith.constant 8 : i32
    %306 = arith.cmpi slt, %305, %c8_i32_93 : i32
    %307 = arith.andi %304, %306 : i1
    %308 = arith.extui %307 : i1 to i32
    %309 = arith.sitofp %308 : i32 to f32
    %310 = vector.broadcast %309 : f32 to vector<1x32xf32>
    %311 = arith.mulf %310, %303 : vector<1x32xf32>
    %cst_94 = arith.constant 1.000000e+00 : f32
    %312 = arith.subf %cst_94, %309 : f32
    %313 = vector.broadcast %312 : f32 to vector<1x32xf32>
    %314 = arith.mulf %313, %211 : vector<1x32xf32>
    %315 = arith.addf %311, %314 : vector<1x32xf32>
    %316 = vector.broadcast %309 : f32 to vector<1x32xf32>
    %317 = arith.mulf %316, %301 : vector<1x32xf32>
    %cst_95 = arith.constant 1.000000e+00 : f32
    %318 = arith.subf %cst_95, %309 : f32
    %319 = vector.broadcast %318 : f32 to vector<1x32xf32>
    %320 = arith.mulf %319, %217 : vector<1x32xf32>
    %321 = arith.addf %317, %320 : vector<1x32xf32>
    %cst_96 = arith.constant dense<0.000000e+00> : vector<1x128xf32>
    %322 = tpu.matmul %211, %25, %cst_96 {dimension_numbers = #tpu.dot_dimension_numbers<[1], [0], [0], [1], [0, 0, 1, 1], [], []>} : vector<1x32xf32>, vector<32x128xf32>, vector<1x128xf32> -> vector<1x128xf32>
    %cst_97 = arith.constant dense<0.000000e+00> : vector<1x128xf32>
    %323 = tpu.matmul %245, %27, %cst_97 {dimension_numbers = #tpu.dot_dimension_numbers<[1], [0], [0], [1], [0, 0, 1, 1], [], []>} : vector<1x32xf32>, vector<32x128xf32>, vector<1x128xf32> -> vector<1x128xf32>
    %324 = arith.addf %322, %323 : vector<1x128xf32>
    %325 = arith.addf %324, %29 : vector<1x128xf32>
    %326 = math.tanh %325 : vector<1x128xf32>
    %327 = arith.mulf %326, %38 : vector<1x128xf32>
    %328 = arith.addf %327, %41 : vector<1x128xf32>
    %329 = vector.extract_strided_slice %328 {offsets = [0, 0], sizes = [1, 32], strides = [1, 1]} : vector<1x128xf32> to vector<1x32xf32>
    %330 = vector.extract_strided_slice %328 {offsets = [0, 32], sizes = [1, 32], strides = [1, 1]} : vector<1x128xf32> to vector<1x32xf32>
    %331 = vector.extract_strided_slice %328 {offsets = [0, 64], sizes = [1, 32], strides = [1, 1]} : vector<1x128xf32> to vector<1x32xf32>
    %332 = vector.extract_strided_slice %328 {offsets = [0, 96], sizes = [1, 32], strides = [1, 1]} : vector<1x128xf32> to vector<1x32xf32>
    %333 = arith.mulf %330, %251 : vector<1x32xf32>
    %334 = arith.mulf %329, %331 : vector<1x32xf32>
    %335 = arith.addf %333, %334 : vector<1x32xf32>
    %336 = math.tanh %335 : vector<1x32xf32>
    %337 = arith.mulf %332, %336 : vector<1x32xf32>
    %c2_i32_98 = arith.constant 2 : i32
    %338 = arith.cmpi sge, %c2_i32_82, %c2_i32_98 : i32
    %c2_i32_99 = arith.constant 2 : i32
    %339 = arith.subi %c2_i32_82, %c2_i32_99 : i32
    %c8_i32_100 = arith.constant 8 : i32
    %340 = arith.cmpi slt, %339, %c8_i32_100 : i32
    %341 = arith.andi %338, %340 : i1
    %342 = arith.extui %341 : i1 to i32
    %343 = arith.sitofp %342 : i32 to f32
    %344 = vector.broadcast %343 : f32 to vector<1x32xf32>
    %345 = arith.mulf %344, %337 : vector<1x32xf32>
    %cst_101 = arith.constant 1.000000e+00 : f32
    %346 = arith.subf %cst_101, %343 : f32
    %347 = vector.broadcast %346 : f32 to vector<1x32xf32>
    %348 = arith.mulf %347, %245 : vector<1x32xf32>
    %349 = arith.addf %345, %348 : vector<1x32xf32>
    %350 = vector.broadcast %343 : f32 to vector<1x32xf32>
    %351 = arith.mulf %350, %335 : vector<1x32xf32>
    %cst_102 = arith.constant 1.000000e+00 : f32
    %352 = arith.subf %cst_102, %343 : f32
    %353 = vector.broadcast %352 : f32 to vector<1x32xf32>
    %354 = arith.mulf %353, %251 : vector<1x32xf32>
    %355 = arith.addf %351, %354 : vector<1x32xf32>
    %c2_i32_103 = arith.constant 2 : i32
    %356 = arith.subi %c2_i32_82, %c2_i32_103 : i32
    %c0_i32_104 = arith.constant 0 : i32
    %357 = arith.maxsi %356, %c0_i32_104 : i32
    %358 = arith.index_cast %357 : i32 to index
    %c0_105 = arith.constant 0 : index
    %359 = vector.load %arg11[%358, %c0_105] : memref<8x32xf32, #tpu.memory_space<vmem>>, vector<1x32xf32>
    tpu.vector_store %arg11[%358, %c0_105], %349 {strides = array<i32>} : memref<8x32xf32, #tpu.memory_space<vmem>>, vector<1x32xf32>,
    %c3_i32 = arith.constant 3 : i32
    %c7_i32_106 = arith.constant 7 : i32
    %360 = arith.minsi %c3_i32, %c7_i32_106 : i32
    %361 = arith.index_cast %360 : i32 to index
    %c0_107 = arith.constant 0 : index
    %362 = vector.load %arg10[%361, %c0_107] : memref<8x128xf32, #tpu.memory_space<vmem>>, vector<1x128xf32>
    %cst_108 = arith.constant dense<0.000000e+00> : vector<1x128xf32>
    %363 = tpu.matmul %281, %23, %cst_108 {dimension_numbers = #tpu.dot_dimension_numbers<[1], [0], [0], [1], [0, 0, 1, 1], [], []>} : vector<1x32xf32>, vector<32x128xf32>, vector<1x128xf32> -> vector<1x128xf32>
    %364 = arith.addf %362, %363 : vector<1x128xf32>
    %365 = math.tanh %364 : vector<1x128xf32>
    %366 = arith.mulf %365, %38 : vector<1x128xf32>
    %367 = arith.addf %366, %41 : vector<1x128xf32>
    %368 = vector.extract_strided_slice %367 {offsets = [0, 0], sizes = [1, 32], strides = [1, 1]} : vector<1x128xf32> to vector<1x32xf32>
    %369 = vector.extract_strided_slice %367 {offsets = [0, 32], sizes = [1, 32], strides = [1, 1]} : vector<1x128xf32> to vector<1x32xf32>
    %370 = vector.extract_strided_slice %367 {offsets = [0, 64], sizes = [1, 32], strides = [1, 1]} : vector<1x128xf32> to vector<1x32xf32>
    %371 = vector.extract_strided_slice %367 {offsets = [0, 96], sizes = [1, 32], strides = [1, 1]} : vector<1x128xf32> to vector<1x32xf32>
    %372 = arith.mulf %369, %287 : vector<1x32xf32>
    %373 = arith.mulf %368, %370 : vector<1x32xf32>
    %374 = arith.addf %372, %373 : vector<1x32xf32>
    %375 = math.tanh %374 : vector<1x32xf32>
    %376 = arith.mulf %371, %375 : vector<1x32xf32>
    %c8_i32_109 = arith.constant 8 : i32
    %377 = arith.cmpi slt, %c3_i32, %c8_i32_109 : i32
    %378 = arith.extui %377 : i1 to i32
    %379 = arith.sitofp %378 : i32 to f32
    %380 = vector.broadcast %379 : f32 to vector<1x32xf32>
    %381 = arith.mulf %380, %376 : vector<1x32xf32>
    %cst_110 = arith.constant 1.000000e+00 : f32
    %382 = arith.subf %cst_110, %379 : f32
    %383 = vector.broadcast %382 : f32 to vector<1x32xf32>
    %384 = arith.mulf %383, %281 : vector<1x32xf32>
    %385 = arith.addf %381, %384 : vector<1x32xf32>
    %386 = vector.broadcast %379 : f32 to vector<1x32xf32>
    %387 = arith.mulf %386, %374 : vector<1x32xf32>
    %cst_111 = arith.constant 1.000000e+00 : f32
    %388 = arith.subf %cst_111, %379 : f32
    %389 = vector.broadcast %388 : f32 to vector<1x32xf32>
    %390 = arith.mulf %389, %287 : vector<1x32xf32>
    %391 = arith.addf %387, %390 : vector<1x32xf32>
    %cst_112 = arith.constant dense<0.000000e+00> : vector<1x128xf32>
    %392 = tpu.matmul %281, %24, %cst_112 {dimension_numbers = #tpu.dot_dimension_numbers<[1], [0], [0], [1], [0, 0, 1, 1], [], []>} : vector<1x32xf32>, vector<32x128xf32>, vector<1x128xf32> -> vector<1x128xf32>
    %cst_113 = arith.constant dense<0.000000e+00> : vector<1x128xf32>
    %393 = tpu.matmul %315, %26, %cst_113 {dimension_numbers = #tpu.dot_dimension_numbers<[1], [0], [0], [1], [0, 0, 1, 1], [], []>} : vector<1x32xf32>, vector<32x128xf32>, vector<1x128xf32> -> vector<1x128xf32>
    %394 = arith.addf %392, %393 : vector<1x128xf32>
    %395 = arith.addf %394, %28 : vector<1x128xf32>
    %396 = math.tanh %395 : vector<1x128xf32>
    %397 = arith.mulf %396, %38 : vector<1x128xf32>
    %398 = arith.addf %397, %41 : vector<1x128xf32>
    %399 = vector.extract_strided_slice %398 {offsets = [0, 0], sizes = [1, 32], strides = [1, 1]} : vector<1x128xf32> to vector<1x32xf32>
    %400 = vector.extract_strided_slice %398 {offsets = [0, 32], sizes = [1, 32], strides = [1, 1]} : vector<1x128xf32> to vector<1x32xf32>
    %401 = vector.extract_strided_slice %398 {offsets = [0, 64], sizes = [1, 32], strides = [1, 1]} : vector<1x128xf32> to vector<1x32xf32>
    %402 = vector.extract_strided_slice %398 {offsets = [0, 96], sizes = [1, 32], strides = [1, 1]} : vector<1x128xf32> to vector<1x32xf32>
    %403 = arith.mulf %400, %321 : vector<1x32xf32>
    %404 = arith.mulf %399, %401 : vector<1x32xf32>
    %405 = arith.addf %403, %404 : vector<1x32xf32>
    %406 = math.tanh %405 : vector<1x32xf32>
    %407 = arith.mulf %402, %406 : vector<1x32xf32>
    %c1_i32_114 = arith.constant 1 : i32
    %408 = arith.cmpi sge, %c3_i32, %c1_i32_114 : i32
    %c1_i32_115 = arith.constant 1 : i32
    %409 = arith.subi %c3_i32, %c1_i32_115 : i32
    %c8_i32_116 = arith.constant 8 : i32
    %410 = arith.cmpi slt, %409, %c8_i32_116 : i32
    %411 = arith.andi %408, %410 : i1
    %412 = arith.extui %411 : i1 to i32
    %413 = arith.sitofp %412 : i32 to f32
    %414 = vector.broadcast %413 : f32 to vector<1x32xf32>
    %415 = arith.mulf %414, %407 : vector<1x32xf32>
    %cst_117 = arith.constant 1.000000e+00 : f32
    %416 = arith.subf %cst_117, %413 : f32
    %417 = vector.broadcast %416 : f32 to vector<1x32xf32>
    %418 = arith.mulf %417, %315 : vector<1x32xf32>
    %419 = arith.addf %415, %418 : vector<1x32xf32>
    %420 = vector.broadcast %413 : f32 to vector<1x32xf32>
    %421 = arith.mulf %420, %405 : vector<1x32xf32>
    %cst_118 = arith.constant 1.000000e+00 : f32
    %422 = arith.subf %cst_118, %413 : f32
    %423 = vector.broadcast %422 : f32 to vector<1x32xf32>
    %424 = arith.mulf %423, %321 : vector<1x32xf32>
    %425 = arith.addf %421, %424 : vector<1x32xf32>
    %cst_119 = arith.constant dense<0.000000e+00> : vector<1x128xf32>
    %426 = tpu.matmul %315, %25, %cst_119 {dimension_numbers = #tpu.dot_dimension_numbers<[1], [0], [0], [1], [0, 0, 1, 1], [], []>} : vector<1x32xf32>, vector<32x128xf32>, vector<1x128xf32> -> vector<1x128xf32>
    %cst_120 = arith.constant dense<0.000000e+00> : vector<1x128xf32>
    %427 = tpu.matmul %349, %27, %cst_120 {dimension_numbers = #tpu.dot_dimension_numbers<[1], [0], [0], [1], [0, 0, 1, 1], [], []>} : vector<1x32xf32>, vector<32x128xf32>, vector<1x128xf32> -> vector<1x128xf32>
    %428 = arith.addf %426, %427 : vector<1x128xf32>
    %429 = arith.addf %428, %29 : vector<1x128xf32>
    %430 = math.tanh %429 : vector<1x128xf32>
    %431 = arith.mulf %430, %38 : vector<1x128xf32>
    %432 = arith.addf %431, %41 : vector<1x128xf32>
    %433 = vector.extract_strided_slice %432 {offsets = [0, 0], sizes = [1, 32], strides = [1, 1]} : vector<1x128xf32> to vector<1x32xf32>
    %434 = vector.extract_strided_slice %432 {offsets = [0, 32], sizes = [1, 32], strides = [1, 1]} : vector<1x128xf32> to vector<1x32xf32>
    %435 = vector.extract_strided_slice %432 {offsets = [0, 64], sizes = [1, 32], strides = [1, 1]} : vector<1x128xf32> to vector<1x32xf32>
    %436 = vector.extract_strided_slice %432 {offsets = [0, 96], sizes = [1, 32], strides = [1, 1]} : vector<1x128xf32> to vector<1x32xf32>
    %437 = arith.mulf %434, %355 : vector<1x32xf32>
    %438 = arith.mulf %433, %435 : vector<1x32xf32>
    %439 = arith.addf %437, %438 : vector<1x32xf32>
    %440 = math.tanh %439 : vector<1x32xf32>
    %441 = arith.mulf %436, %440 : vector<1x32xf32>
    %c2_i32_121 = arith.constant 2 : i32
    %442 = arith.cmpi sge, %c3_i32, %c2_i32_121 : i32
    %c2_i32_122 = arith.constant 2 : i32
    %443 = arith.subi %c3_i32, %c2_i32_122 : i32
    %c8_i32_123 = arith.constant 8 : i32
    %444 = arith.cmpi slt, %443, %c8_i32_123 : i32
    %445 = arith.andi %442, %444 : i1
    %446 = arith.extui %445 : i1 to i32
    %447 = arith.sitofp %446 : i32 to f32
    %448 = vector.broadcast %447 : f32 to vector<1x32xf32>
    %449 = arith.mulf %448, %441 : vector<1x32xf32>
    %cst_124 = arith.constant 1.000000e+00 : f32
    %450 = arith.subf %cst_124, %447 : f32
    %451 = vector.broadcast %450 : f32 to vector<1x32xf32>
    %452 = arith.mulf %451, %349 : vector<1x32xf32>
    %453 = arith.addf %449, %452 : vector<1x32xf32>
    %454 = vector.broadcast %447 : f32 to vector<1x32xf32>
    %455 = arith.mulf %454, %439 : vector<1x32xf32>
    %cst_125 = arith.constant 1.000000e+00 : f32
    %456 = arith.subf %cst_125, %447 : f32
    %457 = vector.broadcast %456 : f32 to vector<1x32xf32>
    %458 = arith.mulf %457, %355 : vector<1x32xf32>
    %459 = arith.addf %455, %458 : vector<1x32xf32>
    %c2_i32_126 = arith.constant 2 : i32
    %460 = arith.subi %c3_i32, %c2_i32_126 : i32
    %c0_i32_127 = arith.constant 0 : i32
    %461 = arith.maxsi %460, %c0_i32_127 : i32
    %462 = arith.index_cast %461 : i32 to index
    %c0_128 = arith.constant 0 : index
    %463 = vector.load %arg11[%462, %c0_128] : memref<8x32xf32, #tpu.memory_space<vmem>>, vector<1x32xf32>
    tpu.vector_store %arg11[%462, %c0_128], %453 {strides = array<i32>} : memref<8x32xf32, #tpu.memory_space<vmem>>, vector<1x32xf32>,
    %c4_i32 = arith.constant 4 : i32
    %c7_i32_129 = arith.constant 7 : i32
    %464 = arith.minsi %c4_i32, %c7_i32_129 : i32
    %465 = arith.index_cast %464 : i32 to index
    %c0_130 = arith.constant 0 : index
    %466 = vector.load %arg10[%465, %c0_130] : memref<8x128xf32, #tpu.memory_space<vmem>>, vector<1x128xf32>
    %cst_131 = arith.constant dense<0.000000e+00> : vector<1x128xf32>
    %467 = tpu.matmul %385, %23, %cst_131 {dimension_numbers = #tpu.dot_dimension_numbers<[1], [0], [0], [1], [0, 0, 1, 1], [], []>} : vector<1x32xf32>, vector<32x128xf32>, vector<1x128xf32> -> vector<1x128xf32>
    %468 = arith.addf %466, %467 : vector<1x128xf32>
    %469 = math.tanh %468 : vector<1x128xf32>
    %470 = arith.mulf %469, %38 : vector<1x128xf32>
    %471 = arith.addf %470, %41 : vector<1x128xf32>
    %472 = vector.extract_strided_slice %471 {offsets = [0, 0], sizes = [1, 32], strides = [1, 1]} : vector<1x128xf32> to vector<1x32xf32>
    %473 = vector.extract_strided_slice %471 {offsets = [0, 32], sizes = [1, 32], strides = [1, 1]} : vector<1x128xf32> to vector<1x32xf32>
    %474 = vector.extract_strided_slice %471 {offsets = [0, 64], sizes = [1, 32], strides = [1, 1]} : vector<1x128xf32> to vector<1x32xf32>
    %475 = vector.extract_strided_slice %471 {offsets = [0, 96], sizes = [1, 32], strides = [1, 1]} : vector<1x128xf32> to vector<1x32xf32>
    %476 = arith.mulf %473, %391 : vector<1x32xf32>
    %477 = arith.mulf %472, %474 : vector<1x32xf32>
    %478 = arith.addf %476, %477 : vector<1x32xf32>
    %479 = math.tanh %478 : vector<1x32xf32>
    %480 = arith.mulf %475, %479 : vector<1x32xf32>
    %c8_i32_132 = arith.constant 8 : i32
    %481 = arith.cmpi slt, %c4_i32, %c8_i32_132 : i32
    %482 = arith.extui %481 : i1 to i32
    %483 = arith.sitofp %482 : i32 to f32
    %484 = vector.broadcast %483 : f32 to vector<1x32xf32>
    %485 = arith.mulf %484, %480 : vector<1x32xf32>
    %cst_133 = arith.constant 1.000000e+00 : f32
    %486 = arith.subf %cst_133, %483 : f32
    %487 = vector.broadcast %486 : f32 to vector<1x32xf32>
    %488 = arith.mulf %487, %385 : vector<1x32xf32>
    %489 = arith.addf %485, %488 : vector<1x32xf32>
    %490 = vector.broadcast %483 : f32 to vector<1x32xf32>
    %491 = arith.mulf %490, %478 : vector<1x32xf32>
    %cst_134 = arith.constant 1.000000e+00 : f32
    %492 = arith.subf %cst_134, %483 : f32
    %493 = vector.broadcast %492 : f32 to vector<1x32xf32>
    %494 = arith.mulf %493, %391 : vector<1x32xf32>
    %495 = arith.addf %491, %494 : vector<1x32xf32>
    %cst_135 = arith.constant dense<0.000000e+00> : vector<1x128xf32>
    %496 = tpu.matmul %385, %24, %cst_135 {dimension_numbers = #tpu.dot_dimension_numbers<[1], [0], [0], [1], [0, 0, 1, 1], [], []>} : vector<1x32xf32>, vector<32x128xf32>, vector<1x128xf32> -> vector<1x128xf32>
    %cst_136 = arith.constant dense<0.000000e+00> : vector<1x128xf32>
    %497 = tpu.matmul %419, %26, %cst_136 {dimension_numbers = #tpu.dot_dimension_numbers<[1], [0], [0], [1], [0, 0, 1, 1], [], []>} : vector<1x32xf32>, vector<32x128xf32>, vector<1x128xf32> -> vector<1x128xf32>
    %498 = arith.addf %496, %497 : vector<1x128xf32>
    %499 = arith.addf %498, %28 : vector<1x128xf32>
    %500 = math.tanh %499 : vector<1x128xf32>
    %501 = arith.mulf %500, %38 : vector<1x128xf32>
    %502 = arith.addf %501, %41 : vector<1x128xf32>
    %503 = vector.extract_strided_slice %502 {offsets = [0, 0], sizes = [1, 32], strides = [1, 1]} : vector<1x128xf32> to vector<1x32xf32>
    %504 = vector.extract_strided_slice %502 {offsets = [0, 32], sizes = [1, 32], strides = [1, 1]} : vector<1x128xf32> to vector<1x32xf32>
    %505 = vector.extract_strided_slice %502 {offsets = [0, 64], sizes = [1, 32], strides = [1, 1]} : vector<1x128xf32> to vector<1x32xf32>
    %506 = vector.extract_strided_slice %502 {offsets = [0, 96], sizes = [1, 32], strides = [1, 1]} : vector<1x128xf32> to vector<1x32xf32>
    %507 = arith.mulf %504, %425 : vector<1x32xf32>
    %508 = arith.mulf %503, %505 : vector<1x32xf32>
    %509 = arith.addf %507, %508 : vector<1x32xf32>
    %510 = math.tanh %509 : vector<1x32xf32>
    %511 = arith.mulf %506, %510 : vector<1x32xf32>
    %c1_i32_137 = arith.constant 1 : i32
    %512 = arith.cmpi sge, %c4_i32, %c1_i32_137 : i32
    %c1_i32_138 = arith.constant 1 : i32
    %513 = arith.subi %c4_i32, %c1_i32_138 : i32
    %c8_i32_139 = arith.constant 8 : i32
    %514 = arith.cmpi slt, %513, %c8_i32_139 : i32
    %515 = arith.andi %512, %514 : i1
    %516 = arith.extui %515 : i1 to i32
    %517 = arith.sitofp %516 : i32 to f32
    %518 = vector.broadcast %517 : f32 to vector<1x32xf32>
    %519 = arith.mulf %518, %511 : vector<1x32xf32>
    %cst_140 = arith.constant 1.000000e+00 : f32
    %520 = arith.subf %cst_140, %517 : f32
    %521 = vector.broadcast %520 : f32 to vector<1x32xf32>
    %522 = arith.mulf %521, %419 : vector<1x32xf32>
    %523 = arith.addf %519, %522 : vector<1x32xf32>
    %524 = vector.broadcast %517 : f32 to vector<1x32xf32>
    %525 = arith.mulf %524, %509 : vector<1x32xf32>
    %cst_141 = arith.constant 1.000000e+00 : f32
    %526 = arith.subf %cst_141, %517 : f32
    %527 = vector.broadcast %526 : f32 to vector<1x32xf32>
    %528 = arith.mulf %527, %425 : vector<1x32xf32>
    %529 = arith.addf %525, %528 : vector<1x32xf32>
    %cst_142 = arith.constant dense<0.000000e+00> : vector<1x128xf32>
    %530 = tpu.matmul %419, %25, %cst_142 {dimension_numbers = #tpu.dot_dimension_numbers<[1], [0], [0], [1], [0, 0, 1, 1], [], []>} : vector<1x32xf32>, vector<32x128xf32>, vector<1x128xf32> -> vector<1x128xf32>
    %cst_143 = arith.constant dense<0.000000e+00> : vector<1x128xf32>
    %531 = tpu.matmul %453, %27, %cst_143 {dimension_numbers = #tpu.dot_dimension_numbers<[1], [0], [0], [1], [0, 0, 1, 1], [], []>} : vector<1x32xf32>, vector<32x128xf32>, vector<1x128xf32> -> vector<1x128xf32>
    %532 = arith.addf %530, %531 : vector<1x128xf32>
    %533 = arith.addf %532, %29 : vector<1x128xf32>
    %534 = math.tanh %533 : vector<1x128xf32>
    %535 = arith.mulf %534, %38 : vector<1x128xf32>
    %536 = arith.addf %535, %41 : vector<1x128xf32>
    %537 = vector.extract_strided_slice %536 {offsets = [0, 0], sizes = [1, 32], strides = [1, 1]} : vector<1x128xf32> to vector<1x32xf32>
    %538 = vector.extract_strided_slice %536 {offsets = [0, 32], sizes = [1, 32], strides = [1, 1]} : vector<1x128xf32> to vector<1x32xf32>
    %539 = vector.extract_strided_slice %536 {offsets = [0, 64], sizes = [1, 32], strides = [1, 1]} : vector<1x128xf32> to vector<1x32xf32>
    %540 = vector.extract_strided_slice %536 {offsets = [0, 96], sizes = [1, 32], strides = [1, 1]} : vector<1x128xf32> to vector<1x32xf32>
    %541 = arith.mulf %538, %459 : vector<1x32xf32>
    %542 = arith.mulf %537, %539 : vector<1x32xf32>
    %543 = arith.addf %541, %542 : vector<1x32xf32>
    %544 = math.tanh %543 : vector<1x32xf32>
    %545 = arith.mulf %540, %544 : vector<1x32xf32>
    %c2_i32_144 = arith.constant 2 : i32
    %546 = arith.cmpi sge, %c4_i32, %c2_i32_144 : i32
    %c2_i32_145 = arith.constant 2 : i32
    %547 = arith.subi %c4_i32, %c2_i32_145 : i32
    %c8_i32_146 = arith.constant 8 : i32
    %548 = arith.cmpi slt, %547, %c8_i32_146 : i32
    %549 = arith.andi %546, %548 : i1
    %550 = arith.extui %549 : i1 to i32
    %551 = arith.sitofp %550 : i32 to f32
    %552 = vector.broadcast %551 : f32 to vector<1x32xf32>
    %553 = arith.mulf %552, %545 : vector<1x32xf32>
    %cst_147 = arith.constant 1.000000e+00 : f32
    %554 = arith.subf %cst_147, %551 : f32
    %555 = vector.broadcast %554 : f32 to vector<1x32xf32>
    %556 = arith.mulf %555, %453 : vector<1x32xf32>
    %557 = arith.addf %553, %556 : vector<1x32xf32>
    %558 = vector.broadcast %551 : f32 to vector<1x32xf32>
    %559 = arith.mulf %558, %543 : vector<1x32xf32>
    %cst_148 = arith.constant 1.000000e+00 : f32
    %560 = arith.subf %cst_148, %551 : f32
    %561 = vector.broadcast %560 : f32 to vector<1x32xf32>
    %562 = arith.mulf %561, %459 : vector<1x32xf32>
    %563 = arith.addf %559, %562 : vector<1x32xf32>
    %c2_i32_149 = arith.constant 2 : i32
    %564 = arith.subi %c4_i32, %c2_i32_149 : i32
    %c0_i32_150 = arith.constant 0 : i32
    %565 = arith.maxsi %564, %c0_i32_150 : i32
    %566 = arith.index_cast %565 : i32 to index
    %c0_151 = arith.constant 0 : index
    %567 = vector.load %arg11[%566, %c0_151] : memref<8x32xf32, #tpu.memory_space<vmem>>, vector<1x32xf32>
    tpu.vector_store %arg11[%566, %c0_151], %557 {strides = array<i32>} : memref<8x32xf32, #tpu.memory_space<vmem>>, vector<1x32xf32>,
    %c5_i32 = arith.constant 5 : i32
    %c7_i32_152 = arith.constant 7 : i32
    %568 = arith.minsi %c5_i32, %c7_i32_152 : i32
    %569 = arith.index_cast %568 : i32 to index
    %c0_153 = arith.constant 0 : index
    %570 = vector.load %arg10[%569, %c0_153] : memref<8x128xf32, #tpu.memory_space<vmem>>, vector<1x128xf32>
    %cst_154 = arith.constant dense<0.000000e+00> : vector<1x128xf32>
    %571 = tpu.matmul %489, %23, %cst_154 {dimension_numbers = #tpu.dot_dimension_numbers<[1], [0], [0], [1], [0, 0, 1, 1], [], []>} : vector<1x32xf32>, vector<32x128xf32>, vector<1x128xf32> -> vector<1x128xf32>
    %572 = arith.addf %570, %571 : vector<1x128xf32>
    %573 = math.tanh %572 : vector<1x128xf32>
    %574 = arith.mulf %573, %38 : vector<1x128xf32>
    %575 = arith.addf %574, %41 : vector<1x128xf32>
    %576 = vector.extract_strided_slice %575 {offsets = [0, 0], sizes = [1, 32], strides = [1, 1]} : vector<1x128xf32> to vector<1x32xf32>
    %577 = vector.extract_strided_slice %575 {offsets = [0, 32], sizes = [1, 32], strides = [1, 1]} : vector<1x128xf32> to vector<1x32xf32>
    %578 = vector.extract_strided_slice %575 {offsets = [0, 64], sizes = [1, 32], strides = [1, 1]} : vector<1x128xf32> to vector<1x32xf32>
    %579 = vector.extract_strided_slice %575 {offsets = [0, 96], sizes = [1, 32], strides = [1, 1]} : vector<1x128xf32> to vector<1x32xf32>
    %580 = arith.mulf %577, %495 : vector<1x32xf32>
    %581 = arith.mulf %576, %578 : vector<1x32xf32>
    %582 = arith.addf %580, %581 : vector<1x32xf32>
    %583 = math.tanh %582 : vector<1x32xf32>
    %584 = arith.mulf %579, %583 : vector<1x32xf32>
    %c8_i32_155 = arith.constant 8 : i32
    %585 = arith.cmpi slt, %c5_i32, %c8_i32_155 : i32
    %586 = arith.extui %585 : i1 to i32
    %587 = arith.sitofp %586 : i32 to f32
    %588 = vector.broadcast %587 : f32 to vector<1x32xf32>
    %589 = arith.mulf %588, %584 : vector<1x32xf32>
    %cst_156 = arith.constant 1.000000e+00 : f32
    %590 = arith.subf %cst_156, %587 : f32
    %591 = vector.broadcast %590 : f32 to vector<1x32xf32>
    %592 = arith.mulf %591, %489 : vector<1x32xf32>
    %593 = arith.addf %589, %592 : vector<1x32xf32>
    %594 = vector.broadcast %587 : f32 to vector<1x32xf32>
    %595 = arith.mulf %594, %582 : vector<1x32xf32>
    %cst_157 = arith.constant 1.000000e+00 : f32
    %596 = arith.subf %cst_157, %587 : f32
    %597 = vector.broadcast %596 : f32 to vector<1x32xf32>
    %598 = arith.mulf %597, %495 : vector<1x32xf32>
    %599 = arith.addf %595, %598 : vector<1x32xf32>
    %cst_158 = arith.constant dense<0.000000e+00> : vector<1x128xf32>
    %600 = tpu.matmul %489, %24, %cst_158 {dimension_numbers = #tpu.dot_dimension_numbers<[1], [0], [0], [1], [0, 0, 1, 1], [], []>} : vector<1x32xf32>, vector<32x128xf32>, vector<1x128xf32> -> vector<1x128xf32>
    %cst_159 = arith.constant dense<0.000000e+00> : vector<1x128xf32>
    %601 = tpu.matmul %523, %26, %cst_159 {dimension_numbers = #tpu.dot_dimension_numbers<[1], [0], [0], [1], [0, 0, 1, 1], [], []>} : vector<1x32xf32>, vector<32x128xf32>, vector<1x128xf32> -> vector<1x128xf32>
    %602 = arith.addf %600, %601 : vector<1x128xf32>
    %603 = arith.addf %602, %28 : vector<1x128xf32>
    %604 = math.tanh %603 : vector<1x128xf32>
    %605 = arith.mulf %604, %38 : vector<1x128xf32>
    %606 = arith.addf %605, %41 : vector<1x128xf32>
    %607 = vector.extract_strided_slice %606 {offsets = [0, 0], sizes = [1, 32], strides = [1, 1]} : vector<1x128xf32> to vector<1x32xf32>
    %608 = vector.extract_strided_slice %606 {offsets = [0, 32], sizes = [1, 32], strides = [1, 1]} : vector<1x128xf32> to vector<1x32xf32>
    %609 = vector.extract_strided_slice %606 {offsets = [0, 64], sizes = [1, 32], strides = [1, 1]} : vector<1x128xf32> to vector<1x32xf32>
    %610 = vector.extract_strided_slice %606 {offsets = [0, 96], sizes = [1, 32], strides = [1, 1]} : vector<1x128xf32> to vector<1x32xf32>
    %611 = arith.mulf %608, %529 : vector<1x32xf32>
    %612 = arith.mulf %607, %609 : vector<1x32xf32>
    %613 = arith.addf %611, %612 : vector<1x32xf32>
    %614 = math.tanh %613 : vector<1x32xf32>
    %615 = arith.mulf %610, %614 : vector<1x32xf32>
    %c1_i32_160 = arith.constant 1 : i32
    %616 = arith.cmpi sge, %c5_i32, %c1_i32_160 : i32
    %c1_i32_161 = arith.constant 1 : i32
    %617 = arith.subi %c5_i32, %c1_i32_161 : i32
    %c8_i32_162 = arith.constant 8 : i32
    %618 = arith.cmpi slt, %617, %c8_i32_162 : i32
    %619 = arith.andi %616, %618 : i1
    %620 = arith.extui %619 : i1 to i32
    %621 = arith.sitofp %620 : i32 to f32
    %622 = vector.broadcast %621 : f32 to vector<1x32xf32>
    %623 = arith.mulf %622, %615 : vector<1x32xf32>
    %cst_163 = arith.constant 1.000000e+00 : f32
    %624 = arith.subf %cst_163, %621 : f32
    %625 = vector.broadcast %624 : f32 to vector<1x32xf32>
    %626 = arith.mulf %625, %523 : vector<1x32xf32>
    %627 = arith.addf %623, %626 : vector<1x32xf32>
    %628 = vector.broadcast %621 : f32 to vector<1x32xf32>
    %629 = arith.mulf %628, %613 : vector<1x32xf32>
    %cst_164 = arith.constant 1.000000e+00 : f32
    %630 = arith.subf %cst_164, %621 : f32
    %631 = vector.broadcast %630 : f32 to vector<1x32xf32>
    %632 = arith.mulf %631, %529 : vector<1x32xf32>
    %633 = arith.addf %629, %632 : vector<1x32xf32>
    %cst_165 = arith.constant dense<0.000000e+00> : vector<1x128xf32>
    %634 = tpu.matmul %523, %25, %cst_165 {dimension_numbers = #tpu.dot_dimension_numbers<[1], [0], [0], [1], [0, 0, 1, 1], [], []>} : vector<1x32xf32>, vector<32x128xf32>, vector<1x128xf32> -> vector<1x128xf32>
    %cst_166 = arith.constant dense<0.000000e+00> : vector<1x128xf32>
    %635 = tpu.matmul %557, %27, %cst_166 {dimension_numbers = #tpu.dot_dimension_numbers<[1], [0], [0], [1], [0, 0, 1, 1], [], []>} : vector<1x32xf32>, vector<32x128xf32>, vector<1x128xf32> -> vector<1x128xf32>
    %636 = arith.addf %634, %635 : vector<1x128xf32>
    %637 = arith.addf %636, %29 : vector<1x128xf32>
    %638 = math.tanh %637 : vector<1x128xf32>
    %639 = arith.mulf %638, %38 : vector<1x128xf32>
    %640 = arith.addf %639, %41 : vector<1x128xf32>
    %641 = vector.extract_strided_slice %640 {offsets = [0, 0], sizes = [1, 32], strides = [1, 1]} : vector<1x128xf32> to vector<1x32xf32>
    %642 = vector.extract_strided_slice %640 {offsets = [0, 32], sizes = [1, 32], strides = [1, 1]} : vector<1x128xf32> to vector<1x32xf32>
    %643 = vector.extract_strided_slice %640 {offsets = [0, 64], sizes = [1, 32], strides = [1, 1]} : vector<1x128xf32> to vector<1x32xf32>
    %644 = vector.extract_strided_slice %640 {offsets = [0, 96], sizes = [1, 32], strides = [1, 1]} : vector<1x128xf32> to vector<1x32xf32>
    %645 = arith.mulf %642, %563 : vector<1x32xf32>
    %646 = arith.mulf %641, %643 : vector<1x32xf32>
    %647 = arith.addf %645, %646 : vector<1x32xf32>
    %648 = math.tanh %647 : vector<1x32xf32>
    %649 = arith.mulf %644, %648 : vector<1x32xf32>
    %c2_i32_167 = arith.constant 2 : i32
    %650 = arith.cmpi sge, %c5_i32, %c2_i32_167 : i32
    %c2_i32_168 = arith.constant 2 : i32
    %651 = arith.subi %c5_i32, %c2_i32_168 : i32
    %c8_i32_169 = arith.constant 8 : i32
    %652 = arith.cmpi slt, %651, %c8_i32_169 : i32
    %653 = arith.andi %650, %652 : i1
    %654 = arith.extui %653 : i1 to i32
    %655 = arith.sitofp %654 : i32 to f32
    %656 = vector.broadcast %655 : f32 to vector<1x32xf32>
    %657 = arith.mulf %656, %649 : vector<1x32xf32>
    %cst_170 = arith.constant 1.000000e+00 : f32
    %658 = arith.subf %cst_170, %655 : f32
    %659 = vector.broadcast %658 : f32 to vector<1x32xf32>
    %660 = arith.mulf %659, %557 : vector<1x32xf32>
    %661 = arith.addf %657, %660 : vector<1x32xf32>
    %662 = vector.broadcast %655 : f32 to vector<1x32xf32>
    %663 = arith.mulf %662, %647 : vector<1x32xf32>
    %cst_171 = arith.constant 1.000000e+00 : f32
    %664 = arith.subf %cst_171, %655 : f32
    %665 = vector.broadcast %664 : f32 to vector<1x32xf32>
    %666 = arith.mulf %665, %563 : vector<1x32xf32>
    %667 = arith.addf %663, %666 : vector<1x32xf32>
    %c2_i32_172 = arith.constant 2 : i32
    %668 = arith.subi %c5_i32, %c2_i32_172 : i32
    %c0_i32_173 = arith.constant 0 : i32
    %669 = arith.maxsi %668, %c0_i32_173 : i32
    %670 = arith.index_cast %669 : i32 to index
    %c0_174 = arith.constant 0 : index
    %671 = vector.load %arg11[%670, %c0_174] : memref<8x32xf32, #tpu.memory_space<vmem>>, vector<1x32xf32>
    tpu.vector_store %arg11[%670, %c0_174], %661 {strides = array<i32>} : memref<8x32xf32, #tpu.memory_space<vmem>>, vector<1x32xf32>,
    %c6_i32 = arith.constant 6 : i32
    %c7_i32_175 = arith.constant 7 : i32
    %672 = arith.minsi %c6_i32, %c7_i32_175 : i32
    %673 = arith.index_cast %672 : i32 to index
    %c0_176 = arith.constant 0 : index
    %674 = vector.load %arg10[%673, %c0_176] : memref<8x128xf32, #tpu.memory_space<vmem>>, vector<1x128xf32>
    %cst_177 = arith.constant dense<0.000000e+00> : vector<1x128xf32>
    %675 = tpu.matmul %593, %23, %cst_177 {dimension_numbers = #tpu.dot_dimension_numbers<[1], [0], [0], [1], [0, 0, 1, 1], [], []>} : vector<1x32xf32>, vector<32x128xf32>, vector<1x128xf32> -> vector<1x128xf32>
    %676 = arith.addf %674, %675 : vector<1x128xf32>
    %677 = math.tanh %676 : vector<1x128xf32>
    %678 = arith.mulf %677, %38 : vector<1x128xf32>
    %679 = arith.addf %678, %41 : vector<1x128xf32>
    %680 = vector.extract_strided_slice %679 {offsets = [0, 0], sizes = [1, 32], strides = [1, 1]} : vector<1x128xf32> to vector<1x32xf32>
    %681 = vector.extract_strided_slice %679 {offsets = [0, 32], sizes = [1, 32], strides = [1, 1]} : vector<1x128xf32> to vector<1x32xf32>
    %682 = vector.extract_strided_slice %679 {offsets = [0, 64], sizes = [1, 32], strides = [1, 1]} : vector<1x128xf32> to vector<1x32xf32>
    %683 = vector.extract_strided_slice %679 {offsets = [0, 96], sizes = [1, 32], strides = [1, 1]} : vector<1x128xf32> to vector<1x32xf32>
    %684 = arith.mulf %681, %599 : vector<1x32xf32>
    %685 = arith.mulf %680, %682 : vector<1x32xf32>
    %686 = arith.addf %684, %685 : vector<1x32xf32>
    %687 = math.tanh %686 : vector<1x32xf32>
    %688 = arith.mulf %683, %687 : vector<1x32xf32>
    %c8_i32_178 = arith.constant 8 : i32
    %689 = arith.cmpi slt, %c6_i32, %c8_i32_178 : i32
    %690 = arith.extui %689 : i1 to i32
    %691 = arith.sitofp %690 : i32 to f32
    %692 = vector.broadcast %691 : f32 to vector<1x32xf32>
    %693 = arith.mulf %692, %688 : vector<1x32xf32>
    %cst_179 = arith.constant 1.000000e+00 : f32
    %694 = arith.subf %cst_179, %691 : f32
    %695 = vector.broadcast %694 : f32 to vector<1x32xf32>
    %696 = arith.mulf %695, %593 : vector<1x32xf32>
    %697 = arith.addf %693, %696 : vector<1x32xf32>
    %698 = vector.broadcast %691 : f32 to vector<1x32xf32>
    %699 = arith.mulf %698, %686 : vector<1x32xf32>
    %cst_180 = arith.constant 1.000000e+00 : f32
    %700 = arith.subf %cst_180, %691 : f32
    %701 = vector.broadcast %700 : f32 to vector<1x32xf32>
    %702 = arith.mulf %701, %599 : vector<1x32xf32>
    %703 = arith.addf %699, %702 : vector<1x32xf32>
    %cst_181 = arith.constant dense<0.000000e+00> : vector<1x128xf32>
    %704 = tpu.matmul %593, %24, %cst_181 {dimension_numbers = #tpu.dot_dimension_numbers<[1], [0], [0], [1], [0, 0, 1, 1], [], []>} : vector<1x32xf32>, vector<32x128xf32>, vector<1x128xf32> -> vector<1x128xf32>
    %cst_182 = arith.constant dense<0.000000e+00> : vector<1x128xf32>
    %705 = tpu.matmul %627, %26, %cst_182 {dimension_numbers = #tpu.dot_dimension_numbers<[1], [0], [0], [1], [0, 0, 1, 1], [], []>} : vector<1x32xf32>, vector<32x128xf32>, vector<1x128xf32> -> vector<1x128xf32>
    %706 = arith.addf %704, %705 : vector<1x128xf32>
    %707 = arith.addf %706, %28 : vector<1x128xf32>
    %708 = math.tanh %707 : vector<1x128xf32>
    %709 = arith.mulf %708, %38 : vector<1x128xf32>
    %710 = arith.addf %709, %41 : vector<1x128xf32>
    %711 = vector.extract_strided_slice %710 {offsets = [0, 0], sizes = [1, 32], strides = [1, 1]} : vector<1x128xf32> to vector<1x32xf32>
    %712 = vector.extract_strided_slice %710 {offsets = [0, 32], sizes = [1, 32], strides = [1, 1]} : vector<1x128xf32> to vector<1x32xf32>
    %713 = vector.extract_strided_slice %710 {offsets = [0, 64], sizes = [1, 32], strides = [1, 1]} : vector<1x128xf32> to vector<1x32xf32>
    %714 = vector.extract_strided_slice %710 {offsets = [0, 96], sizes = [1, 32], strides = [1, 1]} : vector<1x128xf32> to vector<1x32xf32>
    %715 = arith.mulf %712, %633 : vector<1x32xf32>
    %716 = arith.mulf %711, %713 : vector<1x32xf32>
    %717 = arith.addf %715, %716 : vector<1x32xf32>
    %718 = math.tanh %717 : vector<1x32xf32>
    %719 = arith.mulf %714, %718 : vector<1x32xf32>
    %c1_i32_183 = arith.constant 1 : i32
    %720 = arith.cmpi sge, %c6_i32, %c1_i32_183 : i32
    %c1_i32_184 = arith.constant 1 : i32
    %721 = arith.subi %c6_i32, %c1_i32_184 : i32
    %c8_i32_185 = arith.constant 8 : i32
    %722 = arith.cmpi slt, %721, %c8_i32_185 : i32
    %723 = arith.andi %720, %722 : i1
    %724 = arith.extui %723 : i1 to i32
    %725 = arith.sitofp %724 : i32 to f32
    %726 = vector.broadcast %725 : f32 to vector<1x32xf32>
    %727 = arith.mulf %726, %719 : vector<1x32xf32>
    %cst_186 = arith.constant 1.000000e+00 : f32
    %728 = arith.subf %cst_186, %725 : f32
    %729 = vector.broadcast %728 : f32 to vector<1x32xf32>
    %730 = arith.mulf %729, %627 : vector<1x32xf32>
    %731 = arith.addf %727, %730 : vector<1x32xf32>
    %732 = vector.broadcast %725 : f32 to vector<1x32xf32>
    %733 = arith.mulf %732, %717 : vector<1x32xf32>
    %cst_187 = arith.constant 1.000000e+00 : f32
    %734 = arith.subf %cst_187, %725 : f32
    %735 = vector.broadcast %734 : f32 to vector<1x32xf32>
    %736 = arith.mulf %735, %633 : vector<1x32xf32>
    %737 = arith.addf %733, %736 : vector<1x32xf32>
    %cst_188 = arith.constant dense<0.000000e+00> : vector<1x128xf32>
    %738 = tpu.matmul %627, %25, %cst_188 {dimension_numbers = #tpu.dot_dimension_numbers<[1], [0], [0], [1], [0, 0, 1, 1], [], []>} : vector<1x32xf32>, vector<32x128xf32>, vector<1x128xf32> -> vector<1x128xf32>
    %cst_189 = arith.constant dense<0.000000e+00> : vector<1x128xf32>
    %739 = tpu.matmul %661, %27, %cst_189 {dimension_numbers = #tpu.dot_dimension_numbers<[1], [0], [0], [1], [0, 0, 1, 1], [], []>} : vector<1x32xf32>, vector<32x128xf32>, vector<1x128xf32> -> vector<1x128xf32>
    %740 = arith.addf %738, %739 : vector<1x128xf32>
    %741 = arith.addf %740, %29 : vector<1x128xf32>
    %742 = math.tanh %741 : vector<1x128xf32>
    %743 = arith.mulf %742, %38 : vector<1x128xf32>
    %744 = arith.addf %743, %41 : vector<1x128xf32>
    %745 = vector.extract_strided_slice %744 {offsets = [0, 0], sizes = [1, 32], strides = [1, 1]} : vector<1x128xf32> to vector<1x32xf32>
    %746 = vector.extract_strided_slice %744 {offsets = [0, 32], sizes = [1, 32], strides = [1, 1]} : vector<1x128xf32> to vector<1x32xf32>
    %747 = vector.extract_strided_slice %744 {offsets = [0, 64], sizes = [1, 32], strides = [1, 1]} : vector<1x128xf32> to vector<1x32xf32>
    %748 = vector.extract_strided_slice %744 {offsets = [0, 96], sizes = [1, 32], strides = [1, 1]} : vector<1x128xf32> to vector<1x32xf32>
    %749 = arith.mulf %746, %667 : vector<1x32xf32>
    %750 = arith.mulf %745, %747 : vector<1x32xf32>
    %751 = arith.addf %749, %750 : vector<1x32xf32>
    %752 = math.tanh %751 : vector<1x32xf32>
    %753 = arith.mulf %748, %752 : vector<1x32xf32>
    %c2_i32_190 = arith.constant 2 : i32
    %754 = arith.cmpi sge, %c6_i32, %c2_i32_190 : i32
    %c2_i32_191 = arith.constant 2 : i32
    %755 = arith.subi %c6_i32, %c2_i32_191 : i32
    %c8_i32_192 = arith.constant 8 : i32
    %756 = arith.cmpi slt, %755, %c8_i32_192 : i32
    %757 = arith.andi %754, %756 : i1
    %758 = arith.extui %757 : i1 to i32
    %759 = arith.sitofp %758 : i32 to f32
    %760 = vector.broadcast %759 : f32 to vector<1x32xf32>
    %761 = arith.mulf %760, %753 : vector<1x32xf32>
    %cst_193 = arith.constant 1.000000e+00 : f32
    %762 = arith.subf %cst_193, %759 : f32
    %763 = vector.broadcast %762 : f32 to vector<1x32xf32>
    %764 = arith.mulf %763, %661 : vector<1x32xf32>
    %765 = arith.addf %761, %764 : vector<1x32xf32>
    %766 = vector.broadcast %759 : f32 to vector<1x32xf32>
    %767 = arith.mulf %766, %751 : vector<1x32xf32>
    %cst_194 = arith.constant 1.000000e+00 : f32
    %768 = arith.subf %cst_194, %759 : f32
    %769 = vector.broadcast %768 : f32 to vector<1x32xf32>
    %770 = arith.mulf %769, %667 : vector<1x32xf32>
    %771 = arith.addf %767, %770 : vector<1x32xf32>
    %c2_i32_195 = arith.constant 2 : i32
    %772 = arith.subi %c6_i32, %c2_i32_195 : i32
    %c0_i32_196 = arith.constant 0 : i32
    %773 = arith.maxsi %772, %c0_i32_196 : i32
    %774 = arith.index_cast %773 : i32 to index
    %c0_197 = arith.constant 0 : index
    %775 = vector.load %arg11[%774, %c0_197] : memref<8x32xf32, #tpu.memory_space<vmem>>, vector<1x32xf32>
    tpu.vector_store %arg11[%774, %c0_197], %765 {strides = array<i32>} : memref<8x32xf32, #tpu.memory_space<vmem>>, vector<1x32xf32>,
    %c7_i32_198 = arith.constant 7 : i32
    %c7_i32_199 = arith.constant 7 : i32
    %776 = arith.minsi %c7_i32_198, %c7_i32_199 : i32
    %777 = arith.index_cast %776 : i32 to index
    %c0_200 = arith.constant 0 : index
    %778 = vector.load %arg10[%777, %c0_200] : memref<8x128xf32, #tpu.memory_space<vmem>>, vector<1x128xf32>
    %cst_201 = arith.constant dense<0.000000e+00> : vector<1x128xf32>
    %779 = tpu.matmul %697, %23, %cst_201 {dimension_numbers = #tpu.dot_dimension_numbers<[1], [0], [0], [1], [0, 0, 1, 1], [], []>} : vector<1x32xf32>, vector<32x128xf32>, vector<1x128xf32> -> vector<1x128xf32>
    %780 = arith.addf %778, %779 : vector<1x128xf32>
    %781 = math.tanh %780 : vector<1x128xf32>
    %782 = arith.mulf %781, %38 : vector<1x128xf32>
    %783 = arith.addf %782, %41 : vector<1x128xf32>
    %784 = vector.extract_strided_slice %783 {offsets = [0, 0], sizes = [1, 32], strides = [1, 1]} : vector<1x128xf32> to vector<1x32xf32>
    %785 = vector.extract_strided_slice %783 {offsets = [0, 32], sizes = [1, 32], strides = [1, 1]} : vector<1x128xf32> to vector<1x32xf32>
    %786 = vector.extract_strided_slice %783 {offsets = [0, 64], sizes = [1, 32], strides = [1, 1]} : vector<1x128xf32> to vector<1x32xf32>
    %787 = vector.extract_strided_slice %783 {offsets = [0, 96], sizes = [1, 32], strides = [1, 1]} : vector<1x128xf32> to vector<1x32xf32>
    %788 = arith.mulf %785, %703 : vector<1x32xf32>
    %789 = arith.mulf %784, %786 : vector<1x32xf32>
    %790 = arith.addf %788, %789 : vector<1x32xf32>
    %791 = math.tanh %790 : vector<1x32xf32>
    %792 = arith.mulf %787, %791 : vector<1x32xf32>
    %c8_i32_202 = arith.constant 8 : i32
    %793 = arith.cmpi slt, %c7_i32_198, %c8_i32_202 : i32
    %794 = arith.extui %793 : i1 to i32
    %795 = arith.sitofp %794 : i32 to f32
    %796 = vector.broadcast %795 : f32 to vector<1x32xf32>
    %797 = arith.mulf %796, %792 : vector<1x32xf32>
    %cst_203 = arith.constant 1.000000e+00 : f32
    %798 = arith.subf %cst_203, %795 : f32
    %799 = vector.broadcast %798 : f32 to vector<1x32xf32>
    %800 = arith.mulf %799, %697 : vector<1x32xf32>
    %801 = arith.addf %797, %800 : vector<1x32xf32>
    %802 = vector.broadcast %795 : f32 to vector<1x32xf32>
    %803 = arith.mulf %802, %790 : vector<1x32xf32>
    %cst_204 = arith.constant 1.000000e+00 : f32
    %804 = arith.subf %cst_204, %795 : f32
    %805 = vector.broadcast %804 : f32 to vector<1x32xf32>
    %806 = arith.mulf %805, %703 : vector<1x32xf32>
    %807 = arith.addf %803, %806 : vector<1x32xf32>
    %cst_205 = arith.constant dense<0.000000e+00> : vector<1x128xf32>
    %808 = tpu.matmul %697, %24, %cst_205 {dimension_numbers = #tpu.dot_dimension_numbers<[1], [0], [0], [1], [0, 0, 1, 1], [], []>} : vector<1x32xf32>, vector<32x128xf32>, vector<1x128xf32> -> vector<1x128xf32>
    %cst_206 = arith.constant dense<0.000000e+00> : vector<1x128xf32>
    %809 = tpu.matmul %731, %26, %cst_206 {dimension_numbers = #tpu.dot_dimension_numbers<[1], [0], [0], [1], [0, 0, 1, 1], [], []>} : vector<1x32xf32>, vector<32x128xf32>, vector<1x128xf32> -> vector<1x128xf32>
    %810 = arith.addf %808, %809 : vector<1x128xf32>
    %811 = arith.addf %810, %28 : vector<1x128xf32>
    %812 = math.tanh %811 : vector<1x128xf32>
    %813 = arith.mulf %812, %38 : vector<1x128xf32>
    %814 = arith.addf %813, %41 : vector<1x128xf32>
    %815 = vector.extract_strided_slice %814 {offsets = [0, 0], sizes = [1, 32], strides = [1, 1]} : vector<1x128xf32> to vector<1x32xf32>
    %816 = vector.extract_strided_slice %814 {offsets = [0, 32], sizes = [1, 32], strides = [1, 1]} : vector<1x128xf32> to vector<1x32xf32>
    %817 = vector.extract_strided_slice %814 {offsets = [0, 64], sizes = [1, 32], strides = [1, 1]} : vector<1x128xf32> to vector<1x32xf32>
    %818 = vector.extract_strided_slice %814 {offsets = [0, 96], sizes = [1, 32], strides = [1, 1]} : vector<1x128xf32> to vector<1x32xf32>
    %819 = arith.mulf %816, %737 : vector<1x32xf32>
    %820 = arith.mulf %815, %817 : vector<1x32xf32>
    %821 = arith.addf %819, %820 : vector<1x32xf32>
    %822 = math.tanh %821 : vector<1x32xf32>
    %823 = arith.mulf %818, %822 : vector<1x32xf32>
    %c1_i32_207 = arith.constant 1 : i32
    %824 = arith.cmpi sge, %c7_i32_198, %c1_i32_207 : i32
    %c1_i32_208 = arith.constant 1 : i32
    %825 = arith.subi %c7_i32_198, %c1_i32_208 : i32
    %c8_i32_209 = arith.constant 8 : i32
    %826 = arith.cmpi slt, %825, %c8_i32_209 : i32
    %827 = arith.andi %824, %826 : i1
    %828 = arith.extui %827 : i1 to i32
    %829 = arith.sitofp %828 : i32 to f32
    %830 = vector.broadcast %829 : f32 to vector<1x32xf32>
    %831 = arith.mulf %830, %823 : vector<1x32xf32>
    %cst_210 = arith.constant 1.000000e+00 : f32
    %832 = arith.subf %cst_210, %829 : f32
    %833 = vector.broadcast %832 : f32 to vector<1x32xf32>
    %834 = arith.mulf %833, %731 : vector<1x32xf32>
    %835 = arith.addf %831, %834 : vector<1x32xf32>
    %836 = vector.broadcast %829 : f32 to vector<1x32xf32>
    %837 = arith.mulf %836, %821 : vector<1x32xf32>
    %cst_211 = arith.constant 1.000000e+00 : f32
    %838 = arith.subf %cst_211, %829 : f32
    %839 = vector.broadcast %838 : f32 to vector<1x32xf32>
    %840 = arith.mulf %839, %737 : vector<1x32xf32>
    %841 = arith.addf %837, %840 : vector<1x32xf32>
    %cst_212 = arith.constant dense<0.000000e+00> : vector<1x128xf32>
    %842 = tpu.matmul %731, %25, %cst_212 {dimension_numbers = #tpu.dot_dimension_numbers<[1], [0], [0], [1], [0, 0, 1, 1], [], []>} : vector<1x32xf32>, vector<32x128xf32>, vector<1x128xf32> -> vector<1x128xf32>
    %cst_213 = arith.constant dense<0.000000e+00> : vector<1x128xf32>
    %843 = tpu.matmul %765, %27, %cst_213 {dimension_numbers = #tpu.dot_dimension_numbers<[1], [0], [0], [1], [0, 0, 1, 1], [], []>} : vector<1x32xf32>, vector<32x128xf32>, vector<1x128xf32> -> vector<1x128xf32>
    %844 = arith.addf %842, %843 : vector<1x128xf32>
    %845 = arith.addf %844, %29 : vector<1x128xf32>
    %846 = math.tanh %845 : vector<1x128xf32>
    %847 = arith.mulf %846, %38 : vector<1x128xf32>
    %848 = arith.addf %847, %41 : vector<1x128xf32>
    %849 = vector.extract_strided_slice %848 {offsets = [0, 0], sizes = [1, 32], strides = [1, 1]} : vector<1x128xf32> to vector<1x32xf32>
    %850 = vector.extract_strided_slice %848 {offsets = [0, 32], sizes = [1, 32], strides = [1, 1]} : vector<1x128xf32> to vector<1x32xf32>
    %851 = vector.extract_strided_slice %848 {offsets = [0, 64], sizes = [1, 32], strides = [1, 1]} : vector<1x128xf32> to vector<1x32xf32>
    %852 = vector.extract_strided_slice %848 {offsets = [0, 96], sizes = [1, 32], strides = [1, 1]} : vector<1x128xf32> to vector<1x32xf32>
    %853 = arith.mulf %850, %771 : vector<1x32xf32>
    %854 = arith.mulf %849, %851 : vector<1x32xf32>
    %855 = arith.addf %853, %854 : vector<1x32xf32>
    %856 = math.tanh %855 : vector<1x32xf32>
    %857 = arith.mulf %852, %856 : vector<1x32xf32>
    %c2_i32_214 = arith.constant 2 : i32
    %858 = arith.cmpi sge, %c7_i32_198, %c2_i32_214 : i32
    %c2_i32_215 = arith.constant 2 : i32
    %859 = arith.subi %c7_i32_198, %c2_i32_215 : i32
    %c8_i32_216 = arith.constant 8 : i32
    %860 = arith.cmpi slt, %859, %c8_i32_216 : i32
    %861 = arith.andi %858, %860 : i1
    %862 = arith.extui %861 : i1 to i32
    %863 = arith.sitofp %862 : i32 to f32
    %864 = vector.broadcast %863 : f32 to vector<1x32xf32>
    %865 = arith.mulf %864, %857 : vector<1x32xf32>
    %cst_217 = arith.constant 1.000000e+00 : f32
    %866 = arith.subf %cst_217, %863 : f32
    %867 = vector.broadcast %866 : f32 to vector<1x32xf32>
    %868 = arith.mulf %867, %765 : vector<1x32xf32>
    %869 = arith.addf %865, %868 : vector<1x32xf32>
    %870 = vector.broadcast %863 : f32 to vector<1x32xf32>
    %871 = arith.mulf %870, %855 : vector<1x32xf32>
    %cst_218 = arith.constant 1.000000e+00 : f32
    %872 = arith.subf %cst_218, %863 : f32
    %873 = vector.broadcast %872 : f32 to vector<1x32xf32>
    %874 = arith.mulf %873, %771 : vector<1x32xf32>
    %875 = arith.addf %871, %874 : vector<1x32xf32>
    %c2_i32_219 = arith.constant 2 : i32
    %876 = arith.subi %c7_i32_198, %c2_i32_219 : i32
    %c0_i32_220 = arith.constant 0 : i32
    %877 = arith.maxsi %876, %c0_i32_220 : i32
    %878 = arith.index_cast %877 : i32 to index
    %c0_221 = arith.constant 0 : index
    %879 = vector.load %arg11[%878, %c0_221] : memref<8x32xf32, #tpu.memory_space<vmem>>, vector<1x32xf32>
    tpu.vector_store %arg11[%878, %c0_221], %869 {strides = array<i32>} : memref<8x32xf32, #tpu.memory_space<vmem>>, vector<1x32xf32>,
    %c8_i32_222 = arith.constant 8 : i32
    %c7_i32_223 = arith.constant 7 : i32
    %880 = arith.minsi %c8_i32_222, %c7_i32_223 : i32
    %881 = arith.index_cast %880 : i32 to index
    %c0_224 = arith.constant 0 : index
    %882 = vector.load %arg10[%881, %c0_224] : memref<8x128xf32, #tpu.memory_space<vmem>>, vector<1x128xf32>
    %cst_225 = arith.constant dense<0.000000e+00> : vector<1x128xf32>
    %883 = tpu.matmul %801, %23, %cst_225 {dimension_numbers = #tpu.dot_dimension_numbers<[1], [0], [0], [1], [0, 0, 1, 1], [], []>} : vector<1x32xf32>, vector<32x128xf32>, vector<1x128xf32> -> vector<1x128xf32>
    %884 = arith.addf %882, %883 : vector<1x128xf32>
    %885 = math.tanh %884 : vector<1x128xf32>
    %886 = arith.mulf %885, %38 : vector<1x128xf32>
    %887 = arith.addf %886, %41 : vector<1x128xf32>
    %888 = vector.extract_strided_slice %887 {offsets = [0, 0], sizes = [1, 32], strides = [1, 1]} : vector<1x128xf32> to vector<1x32xf32>
    %889 = vector.extract_strided_slice %887 {offsets = [0, 32], sizes = [1, 32], strides = [1, 1]} : vector<1x128xf32> to vector<1x32xf32>
    %890 = vector.extract_strided_slice %887 {offsets = [0, 64], sizes = [1, 32], strides = [1, 1]} : vector<1x128xf32> to vector<1x32xf32>
    %891 = vector.extract_strided_slice %887 {offsets = [0, 96], sizes = [1, 32], strides = [1, 1]} : vector<1x128xf32> to vector<1x32xf32>
    %892 = arith.mulf %889, %807 : vector<1x32xf32>
    %893 = arith.mulf %888, %890 : vector<1x32xf32>
    %894 = arith.addf %892, %893 : vector<1x32xf32>
    %895 = math.tanh %894 : vector<1x32xf32>
    %896 = arith.mulf %891, %895 : vector<1x32xf32>
    %c8_i32_226 = arith.constant 8 : i32
    %897 = arith.cmpi slt, %c8_i32_222, %c8_i32_226 : i32
    %898 = arith.extui %897 : i1 to i32
    %899 = arith.sitofp %898 : i32 to f32
    %900 = vector.broadcast %899 : f32 to vector<1x32xf32>
    %901 = arith.mulf %900, %896 : vector<1x32xf32>
    %cst_227 = arith.constant 1.000000e+00 : f32
    %902 = arith.subf %cst_227, %899 : f32
    %903 = vector.broadcast %902 : f32 to vector<1x32xf32>
    %904 = arith.mulf %903, %801 : vector<1x32xf32>
    %905 = arith.addf %901, %904 : vector<1x32xf32>
    %906 = vector.broadcast %899 : f32 to vector<1x32xf32>
    %907 = arith.mulf %906, %894 : vector<1x32xf32>
    %cst_228 = arith.constant 1.000000e+00 : f32
    %908 = arith.subf %cst_228, %899 : f32
    %909 = vector.broadcast %908 : f32 to vector<1x32xf32>
    %910 = arith.mulf %909, %807 : vector<1x32xf32>
    %911 = arith.addf %907, %910 : vector<1x32xf32>
    %cst_229 = arith.constant dense<0.000000e+00> : vector<1x128xf32>
    %912 = tpu.matmul %801, %24, %cst_229 {dimension_numbers = #tpu.dot_dimension_numbers<[1], [0], [0], [1], [0, 0, 1, 1], [], []>} : vector<1x32xf32>, vector<32x128xf32>, vector<1x128xf32> -> vector<1x128xf32>
    %cst_230 = arith.constant dense<0.000000e+00> : vector<1x128xf32>
    %913 = tpu.matmul %835, %26, %cst_230 {dimension_numbers = #tpu.dot_dimension_numbers<[1], [0], [0], [1], [0, 0, 1, 1], [], []>} : vector<1x32xf32>, vector<32x128xf32>, vector<1x128xf32> -> vector<1x128xf32>
    %914 = arith.addf %912, %913 : vector<1x128xf32>
    %915 = arith.addf %914, %28 : vector<1x128xf32>
    %916 = math.tanh %915 : vector<1x128xf32>
    %917 = arith.mulf %916, %38 : vector<1x128xf32>
    %918 = arith.addf %917, %41 : vector<1x128xf32>
    %919 = vector.extract_strided_slice %918 {offsets = [0, 0], sizes = [1, 32], strides = [1, 1]} : vector<1x128xf32> to vector<1x32xf32>
    %920 = vector.extract_strided_slice %918 {offsets = [0, 32], sizes = [1, 32], strides = [1, 1]} : vector<1x128xf32> to vector<1x32xf32>
    %921 = vector.extract_strided_slice %918 {offsets = [0, 64], sizes = [1, 32], strides = [1, 1]} : vector<1x128xf32> to vector<1x32xf32>
    %922 = vector.extract_strided_slice %918 {offsets = [0, 96], sizes = [1, 32], strides = [1, 1]} : vector<1x128xf32> to vector<1x32xf32>
    %923 = arith.mulf %920, %841 : vector<1x32xf32>
    %924 = arith.mulf %919, %921 : vector<1x32xf32>
    %925 = arith.addf %923, %924 : vector<1x32xf32>
    %926 = math.tanh %925 : vector<1x32xf32>
    %927 = arith.mulf %922, %926 : vector<1x32xf32>
    %c1_i32_231 = arith.constant 1 : i32
    %928 = arith.cmpi sge, %c8_i32_222, %c1_i32_231 : i32
    %c1_i32_232 = arith.constant 1 : i32
    %929 = arith.subi %c8_i32_222, %c1_i32_232 : i32
    %c8_i32_233 = arith.constant 8 : i32
    %930 = arith.cmpi slt, %929, %c8_i32_233 : i32
    %931 = arith.andi %928, %930 : i1
    %932 = arith.extui %931 : i1 to i32
    %933 = arith.sitofp %932 : i32 to f32
    %934 = vector.broadcast %933 : f32 to vector<1x32xf32>
    %935 = arith.mulf %934, %927 : vector<1x32xf32>
    %cst_234 = arith.constant 1.000000e+00 : f32
    %936 = arith.subf %cst_234, %933 : f32
    %937 = vector.broadcast %936 : f32 to vector<1x32xf32>
    %938 = arith.mulf %937, %835 : vector<1x32xf32>
    %939 = arith.addf %935, %938 : vector<1x32xf32>
    %940 = vector.broadcast %933 : f32 to vector<1x32xf32>
    %941 = arith.mulf %940, %925 : vector<1x32xf32>
    %cst_235 = arith.constant 1.000000e+00 : f32
    %942 = arith.subf %cst_235, %933 : f32
    %943 = vector.broadcast %942 : f32 to vector<1x32xf32>
    %944 = arith.mulf %943, %841 : vector<1x32xf32>
    %945 = arith.addf %941, %944 : vector<1x32xf32>
    %cst_236 = arith.constant dense<0.000000e+00> : vector<1x128xf32>
    %946 = tpu.matmul %835, %25, %cst_236 {dimension_numbers = #tpu.dot_dimension_numbers<[1], [0], [0], [1], [0, 0, 1, 1], [], []>} : vector<1x32xf32>, vector<32x128xf32>, vector<1x128xf32> -> vector<1x128xf32>
    %cst_237 = arith.constant dense<0.000000e+00> : vector<1x128xf32>
    %947 = tpu.matmul %869, %27, %cst_237 {dimension_numbers = #tpu.dot_dimension_numbers<[1], [0], [0], [1], [0, 0, 1, 1], [], []>} : vector<1x32xf32>, vector<32x128xf32>, vector<1x128xf32> -> vector<1x128xf32>
    %948 = arith.addf %946, %947 : vector<1x128xf32>
    %949 = arith.addf %948, %29 : vector<1x128xf32>
    %950 = math.tanh %949 : vector<1x128xf32>
    %951 = arith.mulf %950, %38 : vector<1x128xf32>
    %952 = arith.addf %951, %41 : vector<1x128xf32>
    %953 = vector.extract_strided_slice %952 {offsets = [0, 0], sizes = [1, 32], strides = [1, 1]} : vector<1x128xf32> to vector<1x32xf32>
    %954 = vector.extract_strided_slice %952 {offsets = [0, 32], sizes = [1, 32], strides = [1, 1]} : vector<1x128xf32> to vector<1x32xf32>
    %955 = vector.extract_strided_slice %952 {offsets = [0, 64], sizes = [1, 32], strides = [1, 1]} : vector<1x128xf32> to vector<1x32xf32>
    %956 = vector.extract_strided_slice %952 {offsets = [0, 96], sizes = [1, 32], strides = [1, 1]} : vector<1x128xf32> to vector<1x32xf32>
    %957 = arith.mulf %954, %875 : vector<1x32xf32>
    %958 = arith.mulf %953, %955 : vector<1x32xf32>
    %959 = arith.addf %957, %958 : vector<1x32xf32>
    %960 = math.tanh %959 : vector<1x32xf32>
    %961 = arith.mulf %956, %960 : vector<1x32xf32>
    %c2_i32_238 = arith.constant 2 : i32
    %962 = arith.cmpi sge, %c8_i32_222, %c2_i32_238 : i32
    %c2_i32_239 = arith.constant 2 : i32
    %963 = arith.subi %c8_i32_222, %c2_i32_239 : i32
    %c8_i32_240 = arith.constant 8 : i32
    %964 = arith.cmpi slt, %963, %c8_i32_240 : i32
    %965 = arith.andi %962, %964 : i1
    %966 = arith.extui %965 : i1 to i32
    %967 = arith.sitofp %966 : i32 to f32
    %968 = vector.broadcast %967 : f32 to vector<1x32xf32>
    %969 = arith.mulf %968, %961 : vector<1x32xf32>
    %cst_241 = arith.constant 1.000000e+00 : f32
    %970 = arith.subf %cst_241, %967 : f32
    %971 = vector.broadcast %970 : f32 to vector<1x32xf32>
    %972 = arith.mulf %971, %869 : vector<1x32xf32>
    %973 = arith.addf %969, %972 : vector<1x32xf32>
    %974 = vector.broadcast %967 : f32 to vector<1x32xf32>
    %975 = arith.mulf %974, %959 : vector<1x32xf32>
    %cst_242 = arith.constant 1.000000e+00 : f32
    %976 = arith.subf %cst_242, %967 : f32
    %977 = vector.broadcast %976 : f32 to vector<1x32xf32>
    %978 = arith.mulf %977, %875 : vector<1x32xf32>
    %979 = arith.addf %975, %978 : vector<1x32xf32>
    %c2_i32_243 = arith.constant 2 : i32
    %980 = arith.subi %c8_i32_222, %c2_i32_243 : i32
    %c0_i32_244 = arith.constant 0 : i32
    %981 = arith.maxsi %980, %c0_i32_244 : i32
    %982 = arith.index_cast %981 : i32 to index
    %c0_245 = arith.constant 0 : index
    %983 = vector.load %arg11[%982, %c0_245] : memref<8x32xf32, #tpu.memory_space<vmem>>, vector<1x32xf32>
    tpu.vector_store %arg11[%982, %c0_245], %973 {strides = array<i32>} : memref<8x32xf32, #tpu.memory_space<vmem>>, vector<1x32xf32>,
    %c9_i32 = arith.constant 9 : i32
    %c7_i32_246 = arith.constant 7 : i32
    %984 = arith.minsi %c9_i32, %c7_i32_246 : i32
    %985 = arith.index_cast %984 : i32 to index
    %c0_247 = arith.constant 0 : index
    %986 = vector.load %arg10[%985, %c0_247] : memref<8x128xf32, #tpu.memory_space<vmem>>, vector<1x128xf32>
    %cst_248 = arith.constant dense<0.000000e+00> : vector<1x128xf32>
    %987 = tpu.matmul %905, %23, %cst_248 {dimension_numbers = #tpu.dot_dimension_numbers<[1], [0], [0], [1], [0, 0, 1, 1], [], []>} : vector<1x32xf32>, vector<32x128xf32>, vector<1x128xf32> -> vector<1x128xf32>
    %988 = arith.addf %986, %987 : vector<1x128xf32>
    %989 = math.tanh %988 : vector<1x128xf32>
    %990 = arith.mulf %989, %38 : vector<1x128xf32>
    %991 = arith.addf %990, %41 : vector<1x128xf32>
    %992 = vector.extract_strided_slice %991 {offsets = [0, 0], sizes = [1, 32], strides = [1, 1]} : vector<1x128xf32> to vector<1x32xf32>
    %993 = vector.extract_strided_slice %991 {offsets = [0, 32], sizes = [1, 32], strides = [1, 1]} : vector<1x128xf32> to vector<1x32xf32>
    %994 = vector.extract_strided_slice %991 {offsets = [0, 64], sizes = [1, 32], strides = [1, 1]} : vector<1x128xf32> to vector<1x32xf32>
    %995 = vector.extract_strided_slice %991 {offsets = [0, 96], sizes = [1, 32], strides = [1, 1]} : vector<1x128xf32> to vector<1x32xf32>
    %996 = arith.mulf %993, %911 : vector<1x32xf32>
    %997 = arith.mulf %992, %994 : vector<1x32xf32>
    %998 = arith.addf %996, %997 : vector<1x32xf32>
    %999 = math.tanh %998 : vector<1x32xf32>
    %1000 = arith.mulf %995, %999 : vector<1x32xf32>
    %c8_i32_249 = arith.constant 8 : i32
    %1001 = arith.cmpi slt, %c9_i32, %c8_i32_249 : i32
    %1002 = arith.extui %1001 : i1 to i32
    %1003 = arith.sitofp %1002 : i32 to f32
    %1004 = vector.broadcast %1003 : f32 to vector<1x32xf32>
    %1005 = arith.mulf %1004, %1000 : vector<1x32xf32>
    %cst_250 = arith.constant 1.000000e+00 : f32
    %1006 = arith.subf %cst_250, %1003 : f32
    %1007 = vector.broadcast %1006 : f32 to vector<1x32xf32>
    %1008 = arith.mulf %1007, %905 : vector<1x32xf32>
    %1009 = arith.addf %1005, %1008 : vector<1x32xf32>
    %1010 = vector.broadcast %1003 : f32 to vector<1x32xf32>
    %1011 = arith.mulf %1010, %998 : vector<1x32xf32>
    %cst_251 = arith.constant 1.000000e+00 : f32
    %1012 = arith.subf %cst_251, %1003 : f32
    %1013 = vector.broadcast %1012 : f32 to vector<1x32xf32>
    %1014 = arith.mulf %1013, %911 : vector<1x32xf32>
    %1015 = arith.addf %1011, %1014 : vector<1x32xf32>
    %cst_252 = arith.constant dense<0.000000e+00> : vector<1x128xf32>
    %1016 = tpu.matmul %905, %24, %cst_252 {dimension_numbers = #tpu.dot_dimension_numbers<[1], [0], [0], [1], [0, 0, 1, 1], [], []>} : vector<1x32xf32>, vector<32x128xf32>, vector<1x128xf32> -> vector<1x128xf32>
    %cst_253 = arith.constant dense<0.000000e+00> : vector<1x128xf32>
    %1017 = tpu.matmul %939, %26, %cst_253 {dimension_numbers = #tpu.dot_dimension_numbers<[1], [0], [0], [1], [0, 0, 1, 1], [], []>} : vector<1x32xf32>, vector<32x128xf32>, vector<1x128xf32> -> vector<1x128xf32>
    %1018 = arith.addf %1016, %1017 : vector<1x128xf32>
    %1019 = arith.addf %1018, %28 : vector<1x128xf32>
    %1020 = math.tanh %1019 : vector<1x128xf32>
    %1021 = arith.mulf %1020, %38 : vector<1x128xf32>
    %1022 = arith.addf %1021, %41 : vector<1x128xf32>
    %1023 = vector.extract_strided_slice %1022 {offsets = [0, 0], sizes = [1, 32], strides = [1, 1]} : vector<1x128xf32> to vector<1x32xf32>
    %1024 = vector.extract_strided_slice %1022 {offsets = [0, 32], sizes = [1, 32], strides = [1, 1]} : vector<1x128xf32> to vector<1x32xf32>
    %1025 = vector.extract_strided_slice %1022 {offsets = [0, 64], sizes = [1, 32], strides = [1, 1]} : vector<1x128xf32> to vector<1x32xf32>
    %1026 = vector.extract_strided_slice %1022 {offsets = [0, 96], sizes = [1, 32], strides = [1, 1]} : vector<1x128xf32> to vector<1x32xf32>
    %1027 = arith.mulf %1024, %945 : vector<1x32xf32>
    %1028 = arith.mulf %1023, %1025 : vector<1x32xf32>
    %1029 = arith.addf %1027, %1028 : vector<1x32xf32>
    %1030 = math.tanh %1029 : vector<1x32xf32>
    %1031 = arith.mulf %1026, %1030 : vector<1x32xf32>
    %c1_i32_254 = arith.constant 1 : i32
    %1032 = arith.cmpi sge, %c9_i32, %c1_i32_254 : i32
    %c1_i32_255 = arith.constant 1 : i32
    %1033 = arith.subi %c9_i32, %c1_i32_255 : i32
    %c8_i32_256 = arith.constant 8 : i32
    %1034 = arith.cmpi slt, %1033, %c8_i32_256 : i32
    %1035 = arith.andi %1032, %1034 : i1
    %1036 = arith.extui %1035 : i1 to i32
    %1037 = arith.sitofp %1036 : i32 to f32
    %1038 = vector.broadcast %1037 : f32 to vector<1x32xf32>
    %1039 = arith.mulf %1038, %1031 : vector<1x32xf32>
    %cst_257 = arith.constant 1.000000e+00 : f32
    %1040 = arith.subf %cst_257, %1037 : f32
    %1041 = vector.broadcast %1040 : f32 to vector<1x32xf32>
    %1042 = arith.mulf %1041, %939 : vector<1x32xf32>
    %1043 = arith.addf %1039, %1042 : vector<1x32xf32>
    %1044 = vector.broadcast %1037 : f32 to vector<1x32xf32>
    %1045 = arith.mulf %1044, %1029 : vector<1x32xf32>
    %cst_258 = arith.constant 1.000000e+00 : f32
    %1046 = arith.subf %cst_258, %1037 : f32
    %1047 = vector.broadcast %1046 : f32 to vector<1x32xf32>
    %1048 = arith.mulf %1047, %945 : vector<1x32xf32>
    %1049 = arith.addf %1045, %1048 : vector<1x32xf32>
    %cst_259 = arith.constant dense<0.000000e+00> : vector<1x128xf32>
    %1050 = tpu.matmul %939, %25, %cst_259 {dimension_numbers = #tpu.dot_dimension_numbers<[1], [0], [0], [1], [0, 0, 1, 1], [], []>} : vector<1x32xf32>, vector<32x128xf32>, vector<1x128xf32> -> vector<1x128xf32>
    %cst_260 = arith.constant dense<0.000000e+00> : vector<1x128xf32>
    %1051 = tpu.matmul %973, %27, %cst_260 {dimension_numbers = #tpu.dot_dimension_numbers<[1], [0], [0], [1], [0, 0, 1, 1], [], []>} : vector<1x32xf32>, vector<32x128xf32>, vector<1x128xf32> -> vector<1x128xf32>
    %1052 = arith.addf %1050, %1051 : vector<1x128xf32>
    %1053 = arith.addf %1052, %29 : vector<1x128xf32>
    %1054 = math.tanh %1053 : vector<1x128xf32>
    %1055 = arith.mulf %1054, %38 : vector<1x128xf32>
    %1056 = arith.addf %1055, %41 : vector<1x128xf32>
    %1057 = vector.extract_strided_slice %1056 {offsets = [0, 0], sizes = [1, 32], strides = [1, 1]} : vector<1x128xf32> to vector<1x32xf32>
    %1058 = vector.extract_strided_slice %1056 {offsets = [0, 32], sizes = [1, 32], strides = [1, 1]} : vector<1x128xf32> to vector<1x32xf32>
    %1059 = vector.extract_strided_slice %1056 {offsets = [0, 64], sizes = [1, 32], strides = [1, 1]} : vector<1x128xf32> to vector<1x32xf32>
    %1060 = vector.extract_strided_slice %1056 {offsets = [0, 96], sizes = [1, 32], strides = [1, 1]} : vector<1x128xf32> to vector<1x32xf32>
    %1061 = arith.mulf %1058, %979 : vector<1x32xf32>
    %1062 = arith.mulf %1057, %1059 : vector<1x32xf32>
    %1063 = arith.addf %1061, %1062 : vector<1x32xf32>
    %1064 = math.tanh %1063 : vector<1x32xf32>
    %1065 = arith.mulf %1060, %1064 : vector<1x32xf32>
    %c2_i32_261 = arith.constant 2 : i32
    %1066 = arith.cmpi sge, %c9_i32, %c2_i32_261 : i32
    %c2_i32_262 = arith.constant 2 : i32
    %1067 = arith.subi %c9_i32, %c2_i32_262 : i32
    %c8_i32_263 = arith.constant 8 : i32
    %1068 = arith.cmpi slt, %1067, %c8_i32_263 : i32
    %1069 = arith.andi %1066, %1068 : i1
    %1070 = arith.extui %1069 : i1 to i32
    %1071 = arith.sitofp %1070 : i32 to f32
    %1072 = vector.broadcast %1071 : f32 to vector<1x32xf32>
    %1073 = arith.mulf %1072, %1065 : vector<1x32xf32>
    %cst_264 = arith.constant 1.000000e+00 : f32
    %1074 = arith.subf %cst_264, %1071 : f32
    %1075 = vector.broadcast %1074 : f32 to vector<1x32xf32>
    %1076 = arith.mulf %1075, %973 : vector<1x32xf32>
    %1077 = arith.addf %1073, %1076 : vector<1x32xf32>
    %1078 = vector.broadcast %1071 : f32 to vector<1x32xf32>
    %1079 = arith.mulf %1078, %1063 : vector<1x32xf32>
    %cst_265 = arith.constant 1.000000e+00 : f32
    %1080 = arith.subf %cst_265, %1071 : f32
    %1081 = vector.broadcast %1080 : f32 to vector<1x32xf32>
    %1082 = arith.mulf %1081, %979 : vector<1x32xf32>
    %1083 = arith.addf %1079, %1082 : vector<1x32xf32>
    %c2_i32_266 = arith.constant 2 : i32
    %1084 = arith.subi %c9_i32, %c2_i32_266 : i32
    %c0_i32_267 = arith.constant 0 : i32
    %1085 = arith.maxsi %1084, %c0_i32_267 : i32
    %1086 = arith.index_cast %1085 : i32 to index
    %c0_268 = arith.constant 0 : index
    %1087 = vector.load %arg11[%1086, %c0_268] : memref<8x32xf32, #tpu.memory_space<vmem>>, vector<1x32xf32>
    tpu.vector_store %arg11[%1086, %c0_268], %1077 {strides = array<i32>} : memref<8x32xf32, #tpu.memory_space<vmem>>, vector<1x32xf32>,
    %c10_i32 = arith.constant 10 : i32
    %c0_269 = arith.constant 0 : index
    %c0_270 = arith.constant 0 : index
    %1088 = vector.load %arg8[%c0_269, %c0_270] : memref<3x32xf32, #tpu.memory_space<vmem>>, vector<1x32xf32>
    tpu.vector_store %arg8[%c0_269, %c0_270], %1009 {strides = array<i32>} : memref<3x32xf32, #tpu.memory_space<vmem>>, vector<1x32xf32>,
    %c0_271 = arith.constant 0 : index
    %c0_272 = arith.constant 0 : index
    %1089 = vector.load %arg9[%c0_271, %c0_272] : memref<3x32xf32, #tpu.memory_space<vmem>>, vector<1x32xf32>
    tpu.vector_store %arg9[%c0_271, %c0_272], %1015 {strides = array<i32>} : memref<3x32xf32, #tpu.memory_space<vmem>>, vector<1x32xf32>,
    %c1_273 = arith.constant 1 : index
    %c0_274 = arith.constant 0 : index
    %1090 = vector.load %arg8[%c1_273, %c0_274] : memref<3x32xf32, #tpu.memory_space<vmem>>, vector<1x32xf32>
    tpu.vector_store %arg8[%c1_273, %c0_274], %1043 {strides = array<i32>} : memref<3x32xf32, #tpu.memory_space<vmem>>, vector<1x32xf32>,
    %c1_275 = arith.constant 1 : index
    %c0_276 = arith.constant 0 : index
    %1091 = vector.load %arg9[%c1_275, %c0_276] : memref<3x32xf32, #tpu.memory_space<vmem>>, vector<1x32xf32>
    tpu.vector_store %arg9[%c1_275, %c0_276], %1049 {strides = array<i32>} : memref<3x32xf32, #tpu.memory_space<vmem>>, vector<1x32xf32>,
    %c2_277 = arith.constant 2 : index
    %c0_278 = arith.constant 0 : index
    %1092 = vector.load %arg8[%c2_277, %c0_278] : memref<3x32xf32, #tpu.memory_space<vmem>>, vector<1x32xf32>
    tpu.vector_store %arg8[%c2_277, %c0_278], %1077 {strides = array<i32>} : memref<3x32xf32, #tpu.memory_space<vmem>>, vector<1x32xf32>,
    %c2_279 = arith.constant 2 : index
    %c0_280 = arith.constant 0 : index
    %1093 = vector.load %arg9[%c2_279, %c0_280] : memref<3x32xf32, #tpu.memory_space<vmem>>, vector<1x32xf32>
    tpu.vector_store %arg9[%c2_279, %c0_280], %1083 {strides = array<i32>} : memref<3x32xf32, #tpu.memory_space<vmem>>, vector<1x32xf32>,
    %c0_281 = arith.constant 0 : index
    %c0_282 = arith.constant 0 : index
    %1094 = vector.load %arg11[%c0_281, %c0_282] : memref<8x32xf32, #tpu.memory_space<vmem>>, vector<8x32xf32>
    %c216 = arith.constant 216 : index
    %c0_283 = arith.constant 0 : index
    %1095 = vector.load %arg6[%c216, %c0_283] : memref<256x128xf32, #tpu.memory_space<vmem>>, vector<32x128xf32>
    %cst_284 = arith.constant dense<0.000000e+00> : vector<8x128xf32>
    %1096 = tpu.matmul %1094, %1095, %cst_284 {dimension_numbers = #tpu.dot_dimension_numbers<[1], [0], [0], [1], [0, 0, 1, 1], [], []>} : vector<8x32xf32>, vector<32x128xf32>, vector<8x128xf32> -> vector<8x128xf32>
    %c248 = arith.constant 248 : index
    %c0_285 = arith.constant 0 : index
    %1097 = vector.load %arg6[%c248, %c0_285] : memref<256x128xf32, #tpu.memory_space<vmem>>, vector<1x128xf32>
    %1098 = vector.broadcast %1097 : vector<1x128xf32> to vector<8x128xf32>
    %1099 = arith.addf %1096, %1098 : vector<8x128xf32>
    %1100 = math.absf %1099 : vector<8x128xf32>
    %cst_286 = arith.constant 0.000000e+00 : f32
    %1101 = vector.broadcast %cst_286 : f32 to vector<8x128xf32>
    %1102 = arith.subf %1101, %1100 : vector<8x128xf32>
    %1103 = math.exp %1102 : vector<8x128xf32>
    %cst_287 = arith.constant 9.99999974E-5 : f32
    %1104 = vector.broadcast %cst_287 : f32 to vector<8x128xf32>
    %1105 = arith.cmpf olt, %1103, %1104 : vector<8x128xf32>
    %cst_288 = arith.constant 5.000000e-01 : f32
    %1106 = vector.broadcast %cst_288 : f32 to vector<8x128xf32>
    %1107 = arith.mulf %1106, %1103 : vector<8x128xf32>
    %cst_289 = arith.constant 1.000000e+00 : f32
    %1108 = vector.broadcast %cst_289 : f32 to vector<8x128xf32>
    %1109 = arith.subf %1108, %1107 : vector<8x128xf32>
    %1110 = arith.mulf %1103, %1109 : vector<8x128xf32>
    %cst_290 = arith.constant 1.000000e+00 : f32
    %1111 = vector.broadcast %cst_290 : f32 to vector<8x128xf32>
    %1112 = arith.addf %1111, %1103 : vector<8x128xf32>
    %1113 = math.log %1112 : vector<8x128xf32>
    %1114 = arith.select %1105, %1110, %1113 : vector<8x128xi1>, vector<8x128xf32>
    %cst_291 = arith.constant 0.000000e+00 : f32
    %1115 = vector.broadcast %cst_291 : f32 to vector<8x128xf32>
    %1116 = arith.maximumf %1099, %1115 : vector<8x128xf32>
    %1117 = arith.addf %1116, %1114 : vector<8x128xf32>
    %cst_292 = arith.constant 0.000000e+00 : f32
    %1118 = vector.broadcast %cst_292 : f32 to vector<8x128xf32>
    %1119 = arith.subf %1118, %1117 : vector<8x128xf32>
    %c0_293 = arith.constant 0 : index
    %c0_294 = arith.constant 0 : index
    %1120 = vector.load %arg7[%c0_293, %c0_294] : memref<8x128xf32, #tpu.memory_space<vmem>>, vector<8x128xf32>
    tpu.vector_store %arg7[%c0_293, %c0_294], %1119 {strides = array<i32>} : memref<8x128xf32, #tpu.memory_space<vmem>>, vector<8x128xf32>,
    return
  }
}

</mosaic_0001>

<llo_original>
// kernel: tpu_custom_call.1
$region0: #{tpu_custom_call.1}
  #allocation0 [shape = 'u32[]', space=smem, size = 0x4, offset = 0x4, fixed_abs, tag = 'smem constant byte address 0x4 - core index']
  #allocation1 [shape = 'u32[144,128]{1,0:T(1,128)}', space=vmem, size = 0x12000, scoped, tag = 'internal scratch']
  #allocation2 [shape = 'f32[8,128]{1,0:T(8,128)}', space=vmem, size = 0x1000, scoped, tag = 'scratch operand']
  #allocation3 [shape = 'f32[8,32]{1,0:T(8,128)}', space=vmem, size = 0x1000, scoped, tag = 'scratch operand']
  %s0 = inlined_call_operand.vmem [shape: f32[8,16], index: 0, kind: input, shape index: {}]
  %s1 = inlined_call_operand.vmem [shape: f32[8,20], index: 1, kind: input, shape index: {}]
  %s2 = inlined_call_operand.vmem [shape: f32[3,32], index: 2, kind: input, shape index: {}]
  %s3 = inlined_call_operand.vmem [shape: f32[3,32], index: 3, kind: input, shape index: {}]
  %s4 = inlined_call_operand.vmem [shape: f32[20,16], index: 4, kind: input, shape index: {}]
  %s5 = inlined_call_operand.vmem [shape: f32[1,16], index: 5, kind: input, shape index: {}]
  %s6 = inlined_call_operand.hbm [shape: f32[256,128], index: 6, kind: input, shape index: {}]
  %s7 = inlined_call_operand.hbm [shape: f32[8,128], index: 7, kind: output, shape index: {0}]
  %s8 = inlined_call_operand.hbm [shape: f32[3,32], index: 8, kind: output, shape index: {1}]
  %s9 = inlined_call_operand.hbm [shape: f32[3,32], index: 9, kind: output, shape index: {2}]
  %10 = xla_tuple %s7, %s8, %s9
  %s11 = sld [smem:[#allocation0]]
  $region58: #{tpu_custom_call.1} parent=0
    _
  %s13 = ssub.s32 1, %s11
  %s14 = scalar_select 0, %s13, %s11
  $region1: #{tpu_custom_call.1} parent=0
    #allocation4 [shape = 'u8[131072]{0}', space=vmem, size = 0x20000, scoped, tag = 'input window, operand 6, single buffered']
    #allocation5 [shape = 's32[1]{0}', space=sflag, size = 0x4, scoped, tag = 'scoped memory for tpu_custom_call.1']
    #allocation6 [shape = 's32[1]{0}', space=sflag, size = 0x4, scoped, tag = 'scoped memory for tpu_custom_call.1']
    #allocation7 [shape = 'u8[4096]{0}', space=vmem, size = 0x1000, scoped, tag = 'output window, operand 0, single buffered']
    #allocation8 [shape = 'u8[2048]{0}', space=vmem, size = 0x800, scoped, tag = 'output window, operand 1, single buffered']
    #allocation9 [shape = 's32[1]{0}', space=sflag, size = 0x4, scoped, tag = 'scoped memory for tpu_custom_call.1']
    #allocation10 [shape = 'u8[2048]{0}', space=vmem, size = 0x800, scoped, tag = 'output window, operand 2, single buffered']
    %15 = vsyncpa [#allocation5], 0
    %16 = vsyncpa [#allocation6], 0
    %17 = vsyncpa [#allocation9], 0
    // Predicated region
    $region2: #{tpu_custom_call.1} parent=1 // pred_check
      _
    $region3: #{tpu_custom_call.1} parent=1 // pred_check_branch
      %19 = sbr.rel (0) target = $region5
    $region4: #{tpu_custom_call.1} parent=1 // pred_region
      _
    $region5: #{tpu_custom_call.1} parent=1 // pred_fallthru
      _
    // Predicated region
    $region6: #{tpu_custom_call.1} parent=1 // pred_check
      _
    $region7: #{tpu_custom_call.1} parent=1 // pred_check_branch
      %21 = sbr.rel (0) target = $region9
    $region8: #{tpu_custom_call.1} parent=1 // pred_region
      _
    $region9: #{tpu_custom_call.1} parent=1 // pred_fallthru
      _
    // Predicated region
    $region10: #{tpu_custom_call.1} parent=1 // pred_check
      _
    $region11: #{tpu_custom_call.1} parent=1 // pred_check_branch
      %23 = sbr.rel (0) target = $region13
    $region12: #{tpu_custom_call.1} parent=1 // pred_region
      _
    $region13: #{tpu_custom_call.1} parent=1 // pred_fallthru
      _
    // Predicated region
    $region14: #{tpu_custom_call.1} parent=1 // pred_check
      _
    $region15: #{tpu_custom_call.1} parent=1 // pred_check_branch
      %25 = sbr.rel (0) target = $region17
    $region16: #{tpu_custom_call.1} parent=1 // pred_region
      _
    $region17: #{tpu_custom_call.1} parent=1 // pred_fallthru
      _
    // Predicated region
    $region18: #{tpu_custom_call.1} parent=1 // pred_check
      _
    $region19: #{tpu_custom_call.1} parent=1 // pred_check_branch
      %27 = sbr.rel (0) target = $region21
    $region20: #{tpu_custom_call.1} parent=1 // pred_region
      _
    $region21: #{tpu_custom_call.1} parent=1 // pred_fallthru
      _
    // Predicated region
    $region22: #{tpu_custom_call.1} parent=1 // pred_check
      _
    $region23: #{tpu_custom_call.1} parent=1 // pred_check_branch
      %29 = sbr.rel (0) target = $region25
    $region24: #{tpu_custom_call.1} parent=1 // pred_region
      _
    $region25: #{tpu_custom_call.1} parent=1 // pred_fallthru
      _
    // Predicated region
    $region26: #{tpu_custom_call.1} parent=1 // pred_check
      _
    $region27: #{tpu_custom_call.1} parent=1 // pred_check_branch
      %31 = sbr.rel (0) target = $region29
    $region28: #{tpu_custom_call.1} parent=1 // pred_region
      %s33 = ssub.s32 4096, 4096
      %34 = vsyncadd [#allocation5], %s33
      %s35 = sshll.u32 [#allocation4], 4
      %s36 = int_to_ptr.vmem [resolvable:$true] %s35
      %41 = dma.hbm_to_vmem [thread:$0]  %s6, 4096, %s36, [#allocation5], 128, 128, 8
    $region29: #{tpu_custom_call.1} parent=1 // pred_fallthru
      _
    // Predicated region
    $region30: #{tpu_custom_call.1} parent=1 // pred_check
      _
    $region31: #{tpu_custom_call.1} parent=1 // pred_check_branch
      %43 = sbr.rel (0) target = $region33
    $region32: #{tpu_custom_call.1} parent=1 // pred_region
      %44 = dma.done [#allocation5], 4096
    $region33: #{tpu_custom_call.1} parent=1 // pred_fallthru
      _
    %v45 = vld [vmem:[%s0] sm:$0xff]
    %v46 = vld [vmem:[#allocation4] sm:$0xff]
    %v47 = vld [vmem:[#allocation4 + $0x8] sm:$0xff]
    %v48 = vld [vmem:[%s1] sm:$0xff]
    %v49 = vld [vmem:[%s4] sm:$0xff]
    %v50 = vld [vmem:[%s4 + $0x8] sm:$0xff]
    %v51 = vld [vmem:[%s4 + $0x10] sm:$0xf]
    %v52 = vld [vmem:[%s5] sm:$0x1]
    %v54 = vlaneseq
    %v55 = vshrl.u32 %v54, 7
    %v56 = vsub.s32 0, %v55
    %v57 = vrot.slane %v52, %v56
    %vm59 = vcmask 162816
    %v61 = vsel %vm59, %v48, 0
    %vm63 = vcmask 1043456
    %v65 = vsel %vm63, %v51, 0
    %67 = vmatprep.subr.mxu0 0.0
    %68 = vmatpush1.msra.mxu0 %v49
    %69 = vmatprep.subr.mxu0 0.0
    %70 = vmatpush1.msra.mxu0 %v50
    %71 = vmatprep.subr.mxu0 0.0
    %72 = vmatpush1.msra.mxu0 %v65
    %73 = vmatprep.subr.mxu0 0.0
    %74 = vmatpush1.msra.mxu0 0.0
    %75 = vmatprep.subr.mxu0 0.0
    %76 = vmatpush1.msra.mxu0 0.0
    %77 = vmatprep.subr.mxu0 0.0
    %78 = vmatpush1.msra.mxu0 0.0
    %79 = vmatprep.subr.mxu0 0.0
    %80 = vmatpush1.msra.mxu0 0.0
    %81 = vmatprep.subr.mxu0 0.0
    %82 = vmatpush1.msra.mxu0 0.0
    %83 = vmatprep.subr.mxu0 0.0
    %84 = vmatpush1.msra.mxu0 0.0
    %85 = vmatprep.subr.mxu0 0.0
    %86 = vmatpush1.msra.mxu0 0.0
    %87 = vmatprep.subr.mxu0 0.0
    %88 = vmatpush1.msra.mxu0 0.0
    %89 = vmatprep.subr.mxu0 0.0
    %90 = vmatpush1.msra.mxu0 0.0
    %91 = vmatprep.subr.mxu0 0.0
    %92 = vmatpush1.msra.mxu0 0.0
    %93 = vmatprep.subr.mxu0 0.0
    %94 = vmatpush1.msra.mxu0 0.0
    %95 = vmatprep.subr.mxu0 0.0
    %96 = vmatpush1.msra.mxu0 0.0
    %97 = vmatprep.subr.mxu0 0.0
    %98 = vmatpush1.msra.mxu0 0.0
    %99 = vmatprep.subr.mxu0 0.0
    %100 = vmatpush1.msra.mxu0 0.0
    %101 = vmatprep.subr.mxu0 0.0
    %102 = vmatpush1.msra.mxu0 0.0
    %103 = vmatprep.subr.mxu0 0.0
    %104 = vmatpush1.msra.mxu0 0.0
    %105 = vmatprep.subr.mxu0 0.0
    %106 = vmatpush1.msra.mxu0 0.0
    %107 = vmatprep.subr.mxu0 0.0
    %108 = vmatpush1.msra.mxu0 0.0
    %109 = vmatprep.subr.mxu0 0.0
    %110 = vmatpush1.msra.mxu0 0.0
    %111 = vmatprep.subr.mxu0 0.0
    %112 = vmatpush1.msra.mxu0 0.0
    %113 = vmatprep.subr.mxu0 0.0
    %114 = vmatpush1.msra.mxu0 0.0
    %115 = vmatprep.subr.mxu0 0.0
    %116 = vmatpush1.msra.mxu0 0.0
    %117 = vmatprep.subr.mxu0 0.0
    %118 = vmatpush1.msra.mxu0 0.0
    %119 = vmatprep.subr.mxu0 0.0
    %120 = vmatpush1.msra.mxu0 0.0
    %121 = vmatprep.subr.mxu0 0.0
    %122 = vmatpush1.msra.mxu0 0.0
    %123 = vmatprep.subr.mxu0 0.0
    %124 = vmatpush1.msra.mxu0 0.0
    %125 = vmatprep.subr.mxu0 0.0
    %126 = vmatpush1.msra.mxu0 0.0
    %127 = vmatprep.subr.mxu0 0.0
    %128 = vmatpush1.msra.mxu0 0.0
    %129 = vmatprep.subr.mxu0 0.0
    %130 = vmatpush1.msra.mxu0 0.0
    %131 = vmatprep.mubr.f32.mxu0 0.0
    %132 = vmatmul.mubr.f32.gmra.mrb[0].mxu0 %v61
    %v133 = vpop.f32.mrb[0].mxu0
    %v134 = vadd.f32 %v57, %v133
    %v135 = vpop.f32.mrb[0].mxu0
    %136 = vdwg.mxu0
    %vm137 = vcmp.gt.f32.partialorder %v134, 0.0
    %v138 = vmul.f32 %v134, 0.01
    %v139 = vsel %vm137, %v134, %v138
    %v140 = vld [vmem:[#allocation4 + $0x10] sm:$0xff]
    %v141 = vld [vmem:[#allocation4 + $0x18] sm:$0xff]
    %vm142 = vcmask 130048
    %v144 = vsel %vm142, %v139, 0
    %146 = vmatprep.subr.mxu0 0.0
    %147 = vmatpush1.msra.mxu0 %v140
    %148 = vmatprep.subr.mxu0 0.0
    %149 = vmatpush1.msra.mxu0 %v141
    %150 = vmatprep.subr.mxu0 0.0
    %151 = vmatpush1.msra.mxu0 0.0
    %152 = vmatprep.subr.mxu0 0.0
    %153 = vmatpush1.msra.mxu0 0.0
    %154 = vmatprep.subr.mxu0 0.0
    %155 = vmatpush1.msra.mxu0 0.0
    %156 = vmatprep.subr.mxu0 0.0
    %157 = vmatpush1.msra.mxu0 0.0
    %158 = vmatprep.subr.mxu0 0.0
    %159 = vmatpush1.msra.mxu0 0.0
    %160 = vmatprep.subr.mxu0 0.0
    %161 = vmatpush1.msra.mxu0 0.0
    %162 = vmatprep.subr.mxu0 0.0
    %163 = vmatpush1.msra.mxu0 0.0
    %164 = vmatprep.subr.mxu0 0.0
    %165 = vmatpush1.msra.mxu0 0.0
    %166 = vmatprep.subr.mxu0 0.0
    %167 = vmatpush1.msra.mxu0 0.0
    %168 = vmatprep.subr.mxu0 0.0
    %169 = vmatpush1.msra.mxu0 0.0
    %170 = vmatprep.subr.mxu0 0.0
    %171 = vmatpush1.msra.mxu0 0.0
    %172 = vmatprep.subr.mxu0 0.0
    %173 = vmatpush1.msra.mxu0 0.0
    %174 = vmatprep.subr.mxu0 0.0
    %175 = vmatpush1.msra.mxu0 0.0
    %176 = vmatprep.subr.mxu0 0.0
    %177 = vmatpush1.msra.mxu0 0.0
    %178 = vmatprep.subr.mxu0 0.0
    %179 = vmatpush1.msra.mxu0 0.0
    %180 = vmatprep.subr.mxu0 0.0
    %181 = vmatpush1.msra.mxu0 0.0
    %182 = vmatprep.subr.mxu0 0.0
    %183 = vmatpush1.msra.mxu0 0.0
    %184 = vmatprep.subr.mxu0 0.0
    %185 = vmatpush1.msra.mxu0 0.0
    %186 = vmatprep.subr.mxu0 0.0
    %187 = vmatpush1.msra.mxu0 0.0
    %188 = vmatprep.subr.mxu0 0.0
    %189 = vmatpush1.msra.mxu0 0.0
    %190 = vmatprep.subr.mxu0 0.0
    %191 = vmatpush1.msra.mxu0 0.0
    %192 = vmatprep.subr.mxu0 0.0
    %193 = vmatpush1.msra.mxu0 0.0
    %194 = vmatprep.subr.mxu0 0.0
    %195 = vmatpush1.msra.mxu0 0.0
    %196 = vmatprep.subr.mxu0 0.0
    %197 = vmatpush1.msra.mxu0 0.0
    %198 = vmatprep.subr.mxu0 0.0
    %199 = vmatpush1.msra.mxu0 0.0
    %200 = vmatprep.subr.mxu0 0.0
    %201 = vmatpush1.msra.mxu0 0.0
    %202 = vmatprep.subr.mxu0 0.0
    %203 = vmatpush1.msra.mxu0 0.0
    %204 = vmatprep.subr.mxu0 0.0
    %205 = vmatpush1.msra.mxu0 0.0
    %206 = vmatprep.subr.mxu0 0.0
    %207 = vmatpush1.msra.mxu0 0.0
    %208 = vmatprep.subr.mxu0 0.0
    %209 = vmatpush1.msra.mxu0 0.0
    %210 = vmatprep.mubr.f32.mxu0 0.0
    %211 = vmatmul.mubr.f32.gmra.mrb[0].mxu0 %v144
    %v212 = vpop.f32.mrb[0].mxu0
    %v213 = vadd.f32 0.0, %v212
    %v214 = vpop.f32.mrb[0].mxu0
    %215 = vdwg.mxu0
    %v217 = vsel %vm142, %v45, 0
    %219 = vmatprep.subr.mxu0 0.0
    %220 = vmatpush1.msra.mxu0 %v46
    %221 = vmatprep.subr.mxu0 0.0
    %222 = vmatpush1.msra.mxu0 %v47
    %223 = vmatprep.subr.mxu0 0.0
    %224 = vmatpush1.msra.mxu0 0.0
    %225 = vmatprep.subr.mxu0 0.0
    %226 = vmatpush1.msra.mxu0 0.0
    %227 = vmatprep.subr.mxu0 0.0
    %228 = vmatpush1.msra.mxu0 0.0
    %229 = vmatprep.subr.mxu0 0.0
    %230 = vmatpush1.msra.mxu0 0.0
    %231 = vmatprep.subr.mxu0 0.0
    %232 = vmatpush1.msra.mxu0 0.0
    %233 = vmatprep.subr.mxu0 0.0
    %234 = vmatpush1.msra.mxu0 0.0
    %235 = vmatprep.subr.mxu0 0.0
    %236 = vmatpush1.msra.mxu0 0.0
    %237 = vmatprep.subr.mxu0 0.0
    %238 = vmatpush1.msra.mxu0 0.0
    %239 = vmatprep.subr.mxu0 0.0
    %240 = vmatpush1.msra.mxu0 0.0
    %241 = vmatprep.subr.mxu0 0.0
    %242 = vmatpush1.msra.mxu0 0.0
    %243 = vmatprep.subr.mxu0 0.0
    %244 = vmatpush1.msra.mxu0 0.0
    %245 = vmatprep.subr.mxu0 0.0
    %246 = vmatpush1.msra.mxu0 0.0
    %247 = vmatprep.subr.mxu0 0.0
    %248 = vmatpush1.msra.mxu0 0.0
    %249 = vmatprep.subr.mxu0 0.0
    %250 = vmatpush1.msra.mxu0 0.0
    %251 = vmatprep.subr.mxu0 0.0
    %252 = vmatpush1.msra.mxu0 0.0
    %253 = vmatprep.subr.mxu0 0.0
    %254 = vmatpush1.msra.mxu0 0.0
    %255 = vmatprep.subr.mxu0 0.0
    %256 = vmatpush1.msra.mxu0 0.0
    %257 = vmatprep.subr.mxu0 0.0
    %258 = vmatpush1.msra.mxu0 0.0
    %259 = vmatprep.subr.mxu0 0.0
    %260 = vmatpush1.msra.mxu0 0.0
    %261 = vmatprep.subr.mxu0 0.0
    %262 = vmatpush1.msra.mxu0 0.0
    %263 = vmatprep.subr.mxu0 0.0
    %264 = vmatpush1.msra.mxu0 0.0
    %265 = vmatprep.subr.mxu0 0.0
    %266 = vmatpush1.msra.mxu0 0.0
    %267 = vmatprep.subr.mxu0 0.0
    %268 = vmatpush1.msra.mxu0 0.0
    %269 = vmatprep.subr.mxu0 0.0
    %270 = vmatpush1.msra.mxu0 0.0
    %271 = vmatprep.subr.mxu0 0.0
    %272 = vmatpush1.msra.mxu0 0.0
    %273 = vmatprep.subr.mxu0 0.0
    %274 = vmatpush1.msra.mxu0 0.0
    %275 = vmatprep.subr.mxu0 0.0
    %276 = vmatpush1.msra.mxu0 0.0
    %277 = vmatprep.subr.mxu0 0.0
    %278 = vmatpush1.msra.mxu0 0.0
    %279 = vmatprep.subr.mxu0 0.0
    %280 = vmatpush1.msra.mxu0 0.0
    %281 = vmatprep.subr.mxu0 0.0
    %282 = vmatpush1.msra.mxu0 0.0
    %283 = vmatprep.mubr.f32.mxu0 0.0
    %284 = vmatmul.mubr.f32.gmra.mrb[0].mxu0 %v217
    %v285 = vpop.f32.mrb[0].mxu0
    %v286 = vadd.f32 %v213, %v285
    %v287 = vpop.f32.mrb[0].mxu0
    %288 = vdwg.mxu0
    %v289 = vld [vmem:[#allocation4 + $0x20] sm:$0x1]
    %v290 = vlaneseq
    %v291 = vshrl.u32 %v290, 7
    %v292 = vsub.s32 0, %v291
    %v293 = vrot.slane %v289, %v292
    %v294 = vadd.f32 %v286, %v293
    %295 = vst [vmem:[#allocation2] sm:$0xff] %v294
    %v296 = vld [vmem:[#allocation4 + $0x28] sm:$0xff]
    %v297 = vld [vmem:[#allocation4 + $0x30] sm:$0xff]
    %v298 = vld [vmem:[#allocation4 + $0x38] sm:$0xff]
    %v299 = vld [vmem:[#allocation4 + $0x40] sm:$0xff]
    %v300 = vld [vmem:[#allocation4 + $0x48] sm:$0xff]
    %v301 = vld [vmem:[#allocation4 + $0x50] sm:$0xff]
    %v302 = vld [vmem:[#allocation4 + $0x58] sm:$0xff]
    %v303 = vld [vmem:[#allocation4 + $0x60] sm:$0xff]
    %v304 = vld [vmem:[#allocation4 + $0x90] sm:$0xff]
    %v305 = vld [vmem:[#allocation4 + $0x98] sm:$0xff]
    %v306 = vld [vmem:[#allocation4 + $0xa0] sm:$0xff]
    %v307 = vld [vmem:[#allocation4 + $0xa8] sm:$0xff]
    %v308 = vld [vmem:[#allocation4 + $0x68] sm:$0xff]
    %v309 = vld [vmem:[#allocation4 + $0x70] sm:$0xff]
    %v310 = vld [vmem:[#allocation4 + $0x78] sm:$0xff]
    %v311 = vld [vmem:[#allocation4 + $0x80] sm:$0xff]
    %v312 = vld [vmem:[#allocation4 + $0xb0] sm:$0xff]
    %v313 = vld [vmem:[#allocation4 + $0xb8] sm:$0xff]
    %v314 = vld [vmem:[#allocation4 + $0xc0] sm:$0xff]
    %v315 = vld [vmem:[#allocation4 + $0xc8] sm:$0xff]
    %v316 = vld [vmem:[#allocation4 + $0x88] sm:$0x1]
    %v317 = vld [vmem:[#allocation4 + $0xd0] sm:$0x1]
    %v318 = vlaneseq
    %v319 = vand.u32 %v318, 127
    %vm320 = vcmp.ge.s32.totalorder %v319, 64
    %vm321 = vcmp.lt.s32.totalorder %v319, 96
    %vm322 = vmand %vm320, %vm321
    %v323 = vsel %vm322, 1.0, 0.5
    %v324 = vsel %vm322, 0.0, 0.5
    %v325 = vld [vmem:[%s2] sm:$0x1]
    %v326 = vld [vmem:[%s2 + $0x1] sm:$0x1]
    %v327 = vld [vmem:[%s2 + $0x2] sm:$0x1]
    %v328 = vld [vmem:[%s3] sm:$0x1]
    %v329 = vld [vmem:[%s3 + $0x1] sm:$0x1]
    %v330 = vld [vmem:[%s3 + $0x2] sm:$0x1]
    %v331 = vld [vmem:[#allocation2] sm:$0x1]
    %vm332 = vcmask 261120
    %v334 = vsel %vm332, %v325, 0
    %336 = vmatprep.subr.mxu0 0.0
    %337 = vmatpush1.msra.mxu0 %v296
    %338 = vmatprep.subr.mxu0 0.0
    %339 = vmatpush1.msra.mxu0 %v297
    %340 = vmatprep.subr.mxu0 0.0
    %341 = vmatpush1.msra.mxu0 %v298
    %342 = vmatprep.subr.mxu0 0.0
    %343 = vmatpush1.msra.mxu0 %v299
    %344 = vmatprep.subr.mxu0 0.0
    %345 = vmatpush1.msra.mxu0 0.0
    %346 = vmatprep.subr.mxu0 0.0
    %347 = vmatpush1.msra.mxu0 0.0
    %348 = vmatprep.subr.mxu0 0.0
    %349 = vmatpush1.msra.mxu0 0.0
    %350 = vmatprep.subr.mxu0 0.0
    %351 = vmatpush1.msra.mxu0 0.0
    %352 = vmatprep.subr.mxu0 0.0
    %353 = vmatpush1.msra.mxu0 0.0
    %354 = vmatprep.subr.mxu0 0.0
    %355 = vmatpush1.msra.mxu0 0.0
    %356 = vmatprep.subr.mxu0 0.0
    %357 = vmatpush1.msra.mxu0 0.0
    %358 = vmatprep.subr.mxu0 0.0
    %359 = vmatpush1.msra.mxu0 0.0
    %360 = vmatprep.subr.mxu0 0.0
    %361 = vmatpush1.msra.mxu0 0.0
    %362 = vmatprep.subr.mxu0 0.0
    %363 = vmatpush1.msra.mxu0 0.0
    %364 = vmatprep.subr.mxu0 0.0
    %365 = vmatpush1.msra.mxu0 0.0
    %366 = vmatprep.subr.mxu0 0.0
    %367 = vmatpush1.msra.mxu0 0.0
    %368 = vmatprep.subr.mxu0 0.0
    %369 = vmatpush1.msra.mxu0 0.0
    %370 = vmatprep.subr.mxu0 0.0
    %371 = vmatpush1.msra.mxu0 0.0
    %372 = vmatprep.subr.mxu0 0.0
    %373 = vmatpush1.msra.mxu0 0.0
    %374 = vmatprep.subr.mxu0 0.0
    %375 = vmatpush1.msra.mxu0 0.0
    %376 = vmatprep.subr.mxu0 0.0
    %377 = vmatpush1.msra.mxu0 0.0
    %378 = vmatprep.subr.mxu0 0.0
    %379 = vmatpush1.msra.mxu0 0.0
    %380 = vmatprep.subr.mxu0 0.0
    %381 = vmatpush1.msra.mxu0 0.0
    %382 = vmatprep.subr.mxu0 0.0
    %383 = vmatpush1.msra.mxu0 0.0
    %384 = vmatprep.subr.mxu0 0.0
    %385 = vmatpush1.msra.mxu0 0.0
    %386 = vmatprep.subr.mxu0 0.0
    %387 = vmatpush1.msra.mxu0 0.0
    %388 = vmatprep.subr.mxu0 0.0
    %389 = vmatpush1.msra.mxu0 0.0
    %390 = vmatprep.subr.mxu0 0.0
    %391 = vmatpush1.msra.mxu0 0.0
    %392 = vmatprep.subr.mxu0 0.0
    %393 = vmatpush1.msra.mxu0 0.0
    %394 = vmatprep.subr.mxu0 0.0
    %395 = vmatpush1.msra.mxu0 0.0
    %396 = vmatprep.subr.mxu0 0.0
    %397 = vmatpush1.msra.mxu0 0.0
    %398 = vmatprep.subr.mxu0 0.0
    %399 = vmatpush1.msra.mxu0 0.0
    %400 = vmatprep.mubr.f32.mxu0 0.0
    %401 = vmatmul.mubr.f32.gmra.mrb[0].mxu0 %v334
    %v402 = vpop.f32.mrb[0].mxu0
    %v403 = vadd.f32 0.0, %v402
    %v404 = vpop.f32.mrb[0].mxu0
    %405 = vdwg.mxu0
    %v406 = vadd.f32 %v331, %v403
    %v407 = vtanh.pop %v406
    %v408 = vmul.f32 %v407, %v323
    %v409 = vadd.f32 %v408, %v324
    %411 = vrot.lane.b32.xlu0 %v328, 32
    %v412 = vpop.permute.xlu0 %411
    %v414 = vmul.f32 %v409, %v412
    %416 = vrot.lane.b32.xlu0 %v409, 64
    %v417 = vpop.permute.xlu0 %416
    %v419 = vmul.f32 %v409, %v417
    %421 = vrot.lane.b32.xlu0 %v419, 32
    %v422 = vpop.permute.xlu0 %421
    %v424 = vadd.f32 %v414, %v422
    %v425 = vtanh.pop %v424
    %427 = vrot.lane.b32.xlu0 %v425, 64
    %v428 = vpop.permute.xlu0 %427
    %v430 = vmul.f32 %v409, %v428
    %v431 = vmul.f32 %v325, 0.0
    %433 = vrot.lane.b32.xlu0 %v431, 96
    %v434 = vpop.permute.xlu0 %433
    %v436 = vadd.f32 %v430, %v434
    %v437 = vmul.f32 %v328, 0.0
    %439 = vrot.lane.b32.xlu0 %v437, 32
    %v440 = vpop.permute.xlu0 %439
    %v442 = vadd.f32 %v424, %v440
    %v444 = vsel %vm332, %v326, 0
    %446 = vmatprep.subr.mxu0 0.0
    %447 = vmatpush1.msra.mxu0 %v308
    %448 = vmatprep.subr.mxu0 0.0
    %449 = vmatpush1.msra.mxu0 %v309
    %450 = vmatprep.subr.mxu0 0.0
    %451 = vmatpush1.msra.mxu0 %v310
    %452 = vmatprep.subr.mxu0 0.0
    %453 = vmatpush1.msra.mxu0 %v311
    %454 = vmatprep.subr.mxu0 0.0
    %455 = vmatpush1.msra.mxu0 0.0
    %456 = vmatprep.subr.mxu0 0.0
    %457 = vmatpush1.msra.mxu0 0.0
    %458 = vmatprep.subr.mxu0 0.0
    %459 = vmatpush1.msra.mxu0 0.0
    %460 = vmatprep.subr.mxu0 0.0
    %461 = vmatpush1.msra.mxu0 0.0
    %462 = vmatprep.subr.mxu0 0.0
    %463 = vmatpush1.msra.mxu0 0.0
    %464 = vmatprep.subr.mxu0 0.0
    %465 = vmatpush1.msra.mxu0 0.0
    %466 = vmatprep.subr.mxu0 0.0
    %467 = vmatpush1.msra.mxu0 0.0
    %468 = vmatprep.subr.mxu0 0.0
    %469 = vmatpush1.msra.mxu0 0.0
    %470 = vmatprep.subr.mxu0 0.0
    %471 = vmatpush1.msra.mxu0 0.0
    %472 = vmatprep.subr.mxu0 0.0
    %473 = vmatpush1.msra.mxu0 0.0
    %474 = vmatprep.subr.mxu0 0.0
    %475 = vmatpush1.msra.mxu0 0.0
    %476 = vmatprep.subr.mxu0 0.0
    %477 = vmatpush1.msra.mxu0 0.0
    %478 = vmatprep.subr.mxu0 0.0
    %479 = vmatpush1.msra.mxu0 0.0
    %480 = vmatprep.subr.mxu0 0.0
    %481 = vmatpush1.msra.mxu0 0.0
    %482 = vmatprep.subr.mxu0 0.0
    %483 = vmatpush1.msra.mxu0 0.0
    %484 = vmatprep.subr.mxu0 0.0
    %485 = vmatpush1.msra.mxu0 0.0
    %486 = vmatprep.subr.mxu0 0.0
    %487 = vmatpush1.msra.mxu0 0.0
    %488 = vmatprep.subr.mxu0 0.0
    %489 = vmatpush1.msra.mxu0 0.0
    %490 = vmatprep.subr.mxu0 0.0
    %491 = vmatpush1.msra.mxu0 0.0
    %492 = vmatprep.subr.mxu0 0.0
    %493 = vmatpush1.msra.mxu0 0.0
    %494 = vmatprep.subr.mxu0 0.0
    %495 = vmatpush1.msra.mxu0 0.0
    %496 = vmatprep.subr.mxu0 0.0
    %497 = vmatpush1.msra.mxu0 0.0
    %498 = vmatprep.subr.mxu0 0.0
    %499 = vmatpush1.msra.mxu0 0.0
    %500 = vmatprep.subr.mxu0 0.0
    %501 = vmatpush1.msra.mxu0 0.0
    %502 = vmatprep.subr.mxu0 0.0
    %503 = vmatpush1.msra.mxu0 0.0
    %504 = vmatprep.subr.mxu0 0.0
    %505 = vmatpush1.msra.mxu0 0.0
    %506 = vmatprep.subr.mxu0 0.0
    %507 = vmatpush1.msra.mxu0 0.0
    %508 = vmatprep.subr.mxu0 0.0
    %509 = vmatpush1.msra.mxu0 0.0
    %510 = vmatprep.mubr.f32.mxu0 0.0
    %511 = vmatmul.mubr.f32.gmra.mrb[0].mxu0 %v444
    %v512 = vpop.f32.mrb[0].mxu0
    %v513 = vadd.f32 0.0, %v512
    %v514 = vpop.f32.mrb[0].mxu0
    %515 = vdwg.mxu0
    %516 = vmatprep.subr.mxu0 0.0
    %517 = vmatpush1.msra.mxu0 %v300
    %518 = vmatprep.subr.mxu0 0.0
    %519 = vmatpush1.msra.mxu0 %v301
    %520 = vmatprep.subr.mxu0 0.0
    %521 = vmatpush1.msra.mxu0 %v302
    %522 = vmatprep.subr.mxu0 0.0
    %523 = vmatpush1.msra.mxu0 %v303
    %524 = vmatprep.subr.mxu0 0.0
    %525 = vmatpush1.msra.mxu0 0.0
    %526 = vmatprep.subr.mxu0 0.0
    %527 = vmatpush1.msra.mxu0 0.0
    %528 = vmatprep.subr.mxu0 0.0
    %529 = vmatpush1.msra.mxu0 0.0
    %530 = vmatprep.subr.mxu0 0.0
    %531 = vmatpush1.msra.mxu0 0.0
    %532 = vmatprep.subr.mxu0 0.0
    %533 = vmatpush1.msra.mxu0 0.0
    %534 = vmatprep.subr.mxu0 0.0
    %535 = vmatpush1.msra.mxu0 0.0
    %536 = vmatprep.subr.mxu0 0.0
    %537 = vmatpush1.msra.mxu0 0.0
    %538 = vmatprep.subr.mxu0 0.0
    %539 = vmatpush1.msra.mxu0 0.0
    %540 = vmatprep.subr.mxu0 0.0
    %541 = vmatpush1.msra.mxu0 0.0
    %542 = vmatprep.subr.mxu0 0.0
    %543 = vmatpush1.msra.mxu0 0.0
    %544 = vmatprep.subr.mxu0 0.0
    %545 = vmatpush1.msra.mxu0 0.0
    %546 = vmatprep.subr.mxu0 0.0
    %547 = vmatpush1.msra.mxu0 0.0
    %548 = vmatprep.subr.mxu0 0.0
    %549 = vmatpush1.msra.mxu0 0.0
    %550 = vmatprep.subr.mxu0 0.0
    %551 = vmatpush1.msra.mxu0 0.0
    %552 = vmatprep.subr.mxu0 0.0
    %553 = vmatpush1.msra.mxu0 0.0
    %554 = vmatprep.subr.mxu0 0.0
    %555 = vmatpush1.msra.mxu0 0.0
    %556 = vmatprep.subr.mxu0 0.0
    %557 = vmatpush1.msra.mxu0 0.0
    %558 = vmatprep.subr.mxu0 0.0
    %559 = vmatpush1.msra.mxu0 0.0
    %560 = vmatprep.subr.mxu0 0.0
    %561 = vmatpush1.msra.mxu0 0.0
    %562 = vmatprep.subr.mxu0 0.0
    %563 = vmatpush1.msra.mxu0 0.0
    %564 = vmatprep.subr.mxu0 0.0
    %565 = vmatpush1.msra.mxu0 0.0
    %566 = vmatprep.subr.mxu0 0.0
    %567 = vmatpush1.msra.mxu0 0.0
    %568 = vmatprep.subr.mxu0 0.0
    %569 = vmatpush1.msra.mxu0 0.0
    %570 = vmatprep.subr.mxu0 0.0
    %571 = vmatpush1.msra.mxu0 0.0
    %572 = vmatprep.subr.mxu0 0.0
    %573 = vmatpush1.msra.mxu0 0.0
    %574 = vmatprep.subr.mxu0 0.0
    %575 = vmatpush1.msra.mxu0 0.0
    %576 = vmatprep.subr.mxu0 0.0
    %577 = vmatpush1.msra.mxu0 0.0
    %578 = vmatprep.subr.mxu0 0.0
    %579 = vmatpush1.msra.mxu0 0.0
    %580 = vmatprep.mubr.f32.mxu0 0.0
    %581 = vmatmul.mubr.f32.gmra.mrb[0].mxu0 %v334
    %v582 = vpop.f32.mrb[0].mxu0
    %v583 = vadd.f32 %v513, %v582
    %v584 = vpop.f32.mrb[0].mxu0
    %585 = vdwg.mxu0
    %v586 = vadd.f32 %v583, %v316
    %v587 = vtanh.pop %v586
    %v588 = vmul.f32 %v587, %v323
    %v589 = vadd.f32 %v588, %v324
    %591 = vrot.lane.b32.xlu0 %v329, 32
    %v592 = vpop.permute.xlu0 %591
    %v594 = vmul.f32 %v589, %v592
    %596 = vrot.lane.b32.xlu0 %v589, 64
    %v597 = vpop.permute.xlu0 %596
    %v599 = vmul.f32 %v589, %v597
    %601 = vrot.lane.b32.xlu0 %v599, 32
    %v602 = vpop.permute.xlu0 %601
    %v604 = vadd.f32 %v594, %v602
    %v605 = vtanh.pop %v604
    %607 = vrot.lane.b32.xlu0 %v605, 64
    %v608 = vpop.permute.xlu0 %607
    %v610 = vmul.f32 %v589, %v608
    %v611 = vmul.f32 %v610, 0.0
    %612 = vrot.lane.b32.xlu0 %v326, 96
    %v613 = vpop.permute.xlu0 %612
    %v615 = vadd.f32 %v611, %v613
    %v616 = vmul.f32 %v604, 0.0
    %v617 = vadd.f32 %v616, %v592
    %v619 = vsel %vm332, %v327, 0
    %621 = vmatprep.subr.mxu0 0.0
    %622 = vmatpush1.msra.mxu0 %v312
    %623 = vmatprep.subr.mxu0 0.0
    %624 = vmatpush1.msra.mxu0 %v313
    %625 = vmatprep.subr.mxu0 0.0
    %626 = vmatpush1.msra.mxu0 %v314
    %627 = vmatprep.subr.mxu0 0.0
    %628 = vmatpush1.msra.mxu0 %v315
    %629 = vmatprep.subr.mxu0 0.0
    %630 = vmatpush1.msra.mxu0 0.0
    %631 = vmatprep.subr.mxu0 0.0
    %632 = vmatpush1.msra.mxu0 0.0
    %633 = vmatprep.subr.mxu0 0.0
    %634 = vmatpush1.msra.mxu0 0.0
    %635 = vmatprep.subr.mxu0 0.0
    %636 = vmatpush1.msra.mxu0 0.0
    %637 = vmatprep.subr.mxu0 0.0
    %638 = vmatpush1.msra.mxu0 0.0
    %639 = vmatprep.subr.mxu0 0.0
    %640 = vmatpush1.msra.mxu0 0.0
    %641 = vmatprep.subr.mxu0 0.0
    %642 = vmatpush1.msra.mxu0 0.0
    %643 = vmatprep.subr.mxu0 0.0
    %644 = vmatpush1.msra.mxu0 0.0
    %645 = vmatprep.subr.mxu0 0.0
    %646 = vmatpush1.msra.mxu0 0.0
    %647 = vmatprep.subr.mxu0 0.0
    %648 = vmatpush1.msra.mxu0 0.0
    %649 = vmatprep.subr.mxu0 0.0
    %650 = vmatpush1.msra.mxu0 0.0
    %651 = vmatprep.subr.mxu0 0.0
    %652 = vmatpush1.msra.mxu0 0.0
    %653 = vmatprep.subr.mxu0 0.0
    %654 = vmatpush1.msra.mxu0 0.0
    %655 = vmatprep.subr.mxu0 0.0
    %656 = vmatpush1.msra.mxu0 0.0
    %657 = vmatprep.subr.mxu0 0.0
    %658 = vmatpush1.msra.mxu0 0.0
    %659 = vmatprep.subr.mxu0 0.0
    %660 = vmatpush1.msra.mxu0 0.0
    %661 = vmatprep.subr.mxu0 0.0
    %662 = vmatpush1.msra.mxu0 0.0
    %663 = vmatprep.subr.mxu0 0.0
    %664 = vmatpush1.msra.mxu0 0.0
    %665 = vmatprep.subr.mxu0 0.0
    %666 = vmatpush1.msra.mxu0 0.0
    %667 = vmatprep.subr.mxu0 0.0
    %668 = vmatpush1.msra.mxu0 0.0
    %669 = vmatprep.subr.mxu0 0.0
    %670 = vmatpush1.msra.mxu0 0.0
    %671 = vmatprep.subr.mxu0 0.0
    %672 = vmatpush1.msra.mxu0 0.0
    %673 = vmatprep.subr.mxu0 0.0
    %674 = vmatpush1.msra.mxu0 0.0
    %675 = vmatprep.subr.mxu0 0.0
    %676 = vmatpush1.msra.mxu0 0.0
    %677 = vmatprep.subr.mxu0 0.0
    %678 = vmatpush1.msra.mxu0 0.0
    %679 = vmatprep.subr.mxu0 0.0
    %680 = vmatpush1.msra.mxu0 0.0
    %681 = vmatprep.subr.mxu0 0.0
    %682 = vmatpush1.msra.mxu0 0.0
    %683 = vmatprep.subr.mxu0 0.0
    %684 = vmatpush1.msra.mxu0 0.0
    %685 = vmatprep.mubr.f32.mxu0 0.0
    %686 = vmatmul.mubr.f32.gmra.mrb[0].mxu0 %v619
    %v687 = vpop.f32.mrb[0].mxu0
    %v688 = vadd.f32 0.0, %v687
    %v689 = vpop.f32.mrb[0].mxu0
    %690 = vdwg.mxu0
    %691 = vmatprep.subr.mxu0 0.0
    %692 = vmatpush1.msra.mxu0 %v304
    %693 = vmatprep.subr.mxu0 0.0
    %694 = vmatpush1.msra.mxu0 %v305
    %695 = vmatprep.subr.mxu0 0.0
    %696 = vmatpush1.msra.mxu0 %v306
    %697 = vmatprep.subr.mxu0 0.0
    %698 = vmatpush1.msra.mxu0 %v307
    %699 = vmatprep.subr.mxu0 0.0
    %700 = vmatpush1.msra.mxu0 0.0
    %701 = vmatprep.subr.mxu0 0.0
    %702 = vmatpush1.msra.mxu0 0.0
    %703 = vmatprep.subr.mxu0 0.0
    %704 = vmatpush1.msra.mxu0 0.0
    %705 = vmatprep.subr.mxu0 0.0
    %706 = vmatpush1.msra.mxu0 0.0
    %707 = vmatprep.subr.mxu0 0.0
    %708 = vmatpush1.msra.mxu0 0.0
    %709 = vmatprep.subr.mxu0 0.0
    %710 = vmatpush1.msra.mxu0 0.0
    %711 = vmatprep.subr.mxu0 0.0
    %712 = vmatpush1.msra.mxu0 0.0
    %713 = vmatprep.subr.mxu0 0.0
    %714 = vmatpush1.msra.mxu0 0.0
    %715 = vmatprep.subr.mxu0 0.0
    %716 = vmatpush1.msra.mxu0 0.0
    %717 = vmatprep.subr.mxu0 0.0
    %718 = vmatpush1.msra.mxu0 0.0
    %719 = vmatprep.subr.mxu0 0.0
    %720 = vmatpush1.msra.mxu0 0.0
    %721 = vmatprep.subr.mxu0 0.0
    %722 = vmatpush1.msra.mxu0 0.0
    %723 = vmatprep.subr.mxu0 0.0
    %724 = vmatpush1.msra.mxu0 0.0
    %725 = vmatprep.subr.mxu0 0.0
    %726 = vmatpush1.msra.mxu0 0.0
    %727 = vmatprep.subr.mxu0 0.0
    %728 = vmatpush1.msra.mxu0 0.0
    %729 = vmatprep.subr.mxu0 0.0
    %730 = vmatpush1.msra.mxu0 0.0
    %731 = vmatprep.subr.mxu0 0.0
    %732 = vmatpush1.msra.mxu0 0.0
    %733 = vmatprep.subr.mxu0 0.0
    %734 = vmatpush1.msra.mxu0 0.0
    %735 = vmatprep.subr.mxu0 0.0
    %736 = vmatpush1.msra.mxu0 0.0
    %737 = vmatprep.subr.mxu0 0.0
    %738 = vmatpush1.msra.mxu0 0.0
    %739 = vmatprep.subr.mxu0 0.0
    %740 = vmatpush1.msra.mxu0 0.0
    %741 = vmatprep.subr.mxu0 0.0
    %742 = vmatpush1.msra.mxu0 0.0
    %743 = vmatprep.subr.mxu0 0.0
    %744 = vmatpush1.msra.mxu0 0.0
    %745 = vmatprep.subr.mxu0 0.0
    %746 = vmatpush1.msra.mxu0 0.0
    %747 = vmatprep.subr.mxu0 0.0
    %748 = vmatpush1.msra.mxu0 0.0
    %749 = vmatprep.subr.mxu0 0.0
    %750 = vmatpush1.msra.mxu0 0.0
    %751 = vmatprep.subr.mxu0 0.0
    %752 = vmatpush1.msra.mxu0 0.0
    %753 = vmatprep.subr.mxu0 0.0
    %754 = vmatpush1.msra.mxu0 0.0
    %755 = vmatprep.mubr.f32.mxu0 0.0
    %756 = vmatmul.mubr.f32.gmra.mrb[0].mxu0 %v444
    %v757 = vpop.f32.mrb[0].mxu0
    %v758 = vadd.f32 %v688, %v757
    %v759 = vpop.f32.mrb[0].mxu0
    %760 = vdwg.mxu0
    %v761 = vadd.f32 %v758, %v317
    %v762 = vtanh.pop %v761
    %v763 = vmul.f32 %v762, %v323
    %v764 = vadd.f32 %v763, %v324
    %766 = vrot.lane.b32.xlu0 %v330, 32
    %v767 = vpop.permute.xlu0 %766
    %v769 = vmul.f32 %v764, %v767
    %771 = vrot.lane.b32.xlu0 %v764, 64
    %v772 = vpop.permute.xlu0 %771
    %v774 = vmul.f32 %v764, %v772
    %776 = vrot.lane.b32.xlu0 %v774, 32
    %v777 = vpop.permute.xlu0 %776
    %v779 = vadd.f32 %v769, %v777
    %v780 = vtanh.pop %v779
    %782 = vrot.lane.b32.xlu0 %v780, 64
    %v783 = vpop.permute.xlu0 %782
    %v785 = vmul.f32 %v764, %v783
    %v786 = vmul.f32 %v785, 0.0
    %787 = vrot.lane.b32.xlu0 %v327, 96
    %v788 = vpop.permute.xlu0 %787
    %v790 = vadd.f32 %v786, %v788
    %v791 = vmul.f32 %v779, 0.0
    %v792 = vadd.f32 %v791, %v767
    %794 = vrot.lane.b32.xlu0 %v790, 32
    %v795 = vpop.permute.xlu0 %794
    %vm797 = vcmask 253952
    %798 = vst.msk [vmem:[#allocation3] sm:$0x1] %vm797, %v795
    %v799 = vld [vmem:[#allocation2 + $0x1] sm:$0x1]
    %801 = vrot.lane.b32.xlu0 %v436, 32
    %v802 = vpop.permute.xlu0 %801
    %v803 = vsel %vm332, %v802, 0
    %805 = vmatprep.subr.mxu0 0.0
    %806 = vmatpush1.msra.mxu0 %v296
    %807 = vmatprep.subr.mxu0 0.0
    %808 = vmatpush1.msra.mxu0 %v297
    %809 = vmatprep.subr.mxu0 0.0
    %810 = vmatpush1.msra.mxu0 %v298
    %811 = vmatprep.subr.mxu0 0.0
    %812 = vmatpush1.msra.mxu0 %v299
    %813 = vmatprep.subr.mxu0 0.0
    %814 = vmatpush1.msra.mxu0 0.0
    %815 = vmatprep.subr.mxu0 0.0
    %816 = vmatpush1.msra.mxu0 0.0
    %817 = vmatprep.subr.mxu0 0.0
    %818 = vmatpush1.msra.mxu0 0.0
    %819 = vmatprep.subr.mxu0 0.0
    %820 = vmatpush1.msra.mxu0 0.0
    %821 = vmatprep.subr.mxu0 0.0
    %822 = vmatpush1.msra.mxu0 0.0
    %823 = vmatprep.subr.mxu0 0.0
    %824 = vmatpush1.msra.mxu0 0.0
    %825 = vmatprep.subr.mxu0 0.0
    %826 = vmatpush1.msra.mxu0 0.0
    %827 = vmatprep.subr.mxu0 0.0
    %828 = vmatpush1.msra.mxu0 0.0
    %829 = vmatprep.subr.mxu0 0.0
    %830 = vmatpush1.msra.mxu0 0.0
    %831 = vmatprep.subr.mxu0 0.0
    %832 = vmatpush1.msra.mxu0 0.0
    %833 = vmatprep.subr.mxu0 0.0
    %834 = vmatpush1.msra.mxu0 0.0
    %835 = vmatprep.subr.mxu0 0.0
    %836 = vmatpush1.msra.mxu0 0.0
    %837 = vmatprep.subr.mxu0 0.0
    %838 = vmatpush1.msra.mxu0 0.0
    %839 = vmatprep.subr.mxu0 0.0
    %840 = vmatpush1.msra.mxu0 0.0
    %841 = vmatprep.subr.mxu0 0.0
    %842 = vmatpush1.msra.mxu0 0.0
    %843 = vmatprep.subr.mxu0 0.0
    %844 = vmatpush1.msra.mxu0 0.0
    %845 = vmatprep.subr.mxu0 0.0
    %846 = vmatpush1.msra.mxu0 0.0
    %847 = vmatprep.subr.mxu0 0.0
    %848 = vmatpush1.msra.mxu0 0.0
    %849 = vmatprep.subr.mxu0 0.0
    %850 = vmatpush1.msra.mxu0 0.0
    %851 = vmatprep.subr.mxu0 0.0
    %852 = vmatpush1.msra.mxu0 0.0
    %853 = vmatprep.subr.mxu0 0.0
    %854 = vmatpush1.msra.mxu0 0.0
    %855 = vmatprep.subr.mxu0 0.0
    %856 = vmatpush1.msra.mxu0 0.0
    %857 = vmatprep.subr.mxu0 0.0
    %858 = vmatpush1.msra.mxu0 0.0
    %859 = vmatprep.subr.mxu0 0.0
    %860 = vmatpush1.msra.mxu0 0.0
    %861 = vmatprep.subr.mxu0 0.0
    %862 = vmatpush1.msra.mxu0 0.0
    %863 = vmatprep.subr.mxu0 0.0
    %864 = vmatpush1.msra.mxu0 0.0
    %865 = vmatprep.subr.mxu0 0.0
    %866 = vmatpush1.msra.mxu0 0.0
    %867 = vmatprep.subr.mxu0 0.0
    %868 = vmatpush1.msra.mxu0 0.0
    %869 = vmatprep.mubr.f32.mxu0 0.0
    %870 = vmatmul.mubr.f32.gmra.mrb[0].mxu0 %v803
    %v871 = vpop.f32.mrb[0].mxu0
    %v872 = vadd.f32 0.0, %v871
    %v873 = vpop.f32.mrb[0].mxu0
    %874 = vdwg.mxu0
    %v875 = vadd.f32 %v799, %v872
    %v876 = vtanh.pop %v875
    %v877 = vmul.f32 %v876, %v323
    %v878 = vadd.f32 %v877, %v324
    %v879 = vmul.f32 %v878, %v442
    %881 = vrot.lane.b32.xlu0 %v878, 64
    %v882 = vpop.permute.xlu0 %881
    %v884 = vmul.f32 %v878, %v882
    %886 = vrot.lane.b32.xlu0 %v884, 32
    %v887 = vpop.permute.xlu0 %886
    %v889 = vadd.f32 %v879, %v887
    %v890 = vtanh.pop %v889
    %892 = vrot.lane.b32.xlu0 %v890, 64
    %v893 = vpop.permute.xlu0 %892
    %v895 = vmul.f32 %v878, %v893
    %v896 = vmul.f32 %v436, 0.0
    %v897 = vadd.f32 %v895, %v896
    %v898 = vmul.f32 %v442, 0.0
    %v899 = vadd.f32 %v889, %v898
    %901 = vrot.lane.b32.xlu0 %v615, 32
    %v902 = vpop.permute.xlu0 %901
    %v903 = vsel %vm332, %v902, 0
    %905 = vmatprep.subr.mxu0 0.0
    %906 = vmatpush1.msra.mxu0 %v308
    %907 = vmatprep.subr.mxu0 0.0
    %908 = vmatpush1.msra.mxu0 %v309
    %909 = vmatprep.subr.mxu0 0.0
    %910 = vmatpush1.msra.mxu0 %v310
    %911 = vmatprep.subr.mxu0 0.0
    %912 = vmatpush1.msra.mxu0 %v311
    %913 = vmatprep.subr.mxu0 0.0
    %914 = vmatpush1.msra.mxu0 0.0
    %915 = vmatprep.subr.mxu0 0.0
    %916 = vmatpush1.msra.mxu0 0.0
    %917 = vmatprep.subr.mxu0 0.0
    %918 = vmatpush1.msra.mxu0 0.0
    %919 = vmatprep.subr.mxu0 0.0
    %920 = vmatpush1.msra.mxu0 0.0
    %921 = vmatprep.subr.mxu0 0.0
    %922 = vmatpush1.msra.mxu0 0.0
    %923 = vmatprep.subr.mxu0 0.0
    %924 = vmatpush1.msra.mxu0 0.0
    %925 = vmatprep.subr.mxu0 0.0
    %926 = vmatpush1.msra.mxu0 0.0
    %927 = vmatprep.subr.mxu0 0.0
    %928 = vmatpush1.msra.mxu0 0.0
    %929 = vmatprep.subr.mxu0 0.0
    %930 = vmatpush1.msra.mxu0 0.0
    %931 = vmatprep.subr.mxu0 0.0
    %932 = vmatpush1.msra.mxu0 0.0
    %933 = vmatprep.subr.mxu0 0.0
    %934 = vmatpush1.msra.mxu0 0.0
    %935 = vmatprep.subr.mxu0 0.0
    %936 = vmatpush1.msra.mxu0 0.0
    %937 = vmatprep.subr.mxu0 0.0
    %938 = vmatpush1.msra.mxu0 0.0
    %939 = vmatprep.subr.mxu0 0.0
    %940 = vmatpush1.msra.mxu0 0.0
    %941 = vmatprep.subr.mxu0 0.0
    %942 = vmatpush1.msra.mxu0 0.0
    %943 = vmatprep.subr.mxu0 0.0
    %944 = vmatpush1.msra.mxu0 0.0
    %945 = vmatprep.subr.mxu0 0.0
    %946 = vmatpush1.msra.mxu0 0.0
    %947 = vmatprep.subr.mxu0 0.0
    %948 = vmatpush1.msra.mxu0 0.0
    %949 = vmatprep.subr.mxu0 0.0
    %950 = vmatpush1.msra.mxu0 0.0
    %951 = vmatprep.subr.mxu0 0.0
    %952 = vmatpush1.msra.mxu0 0.0
    %953 = vmatprep.subr.mxu0 0.0
    %954 = vmatpush1.msra.mxu0 0.0
    %955 = vmatprep.subr.mxu0 0.0
    %956 = vmatpush1.msra.mxu0 0.0
    %957 = vmatprep.subr.mxu0 0.0
    %958 = vmatpush1.msra.mxu0 0.0
    %959 = vmatprep.subr.mxu0 0.0
    %960 = vmatpush1.msra.mxu0 0.0
    %961 = vmatprep.subr.mxu0 0.0
    %962 = vmatpush1.msra.mxu0 0.0
    %963 = vmatprep.subr.mxu0 0.0
    %964 = vmatpush1.msra.mxu0 0.0
    %965 = vmatprep.subr.mxu0 0.0
    %966 = vmatpush1.msra.mxu0 0.0
    %967 = vmatprep.subr.mxu0 0.0
    %968 = vmatpush1.msra.mxu0 0.0
    %969 = vmatprep.mubr.f32.mxu0 0.0
    %970 = vmatmul.mubr.f32.gmra.mrb[0].mxu0 %v903
    %v971 = vpop.f32.mrb[0].mxu0
    %v972 = vadd.f32 0.0, %v971
    %v973 = vpop.f32.mrb[0].mxu0
    %974 = vdwg.mxu0
    %975 = vmatprep.subr.mxu0 0.0
    %976 = vmatpush1.msra.mxu0 %v300
    %977 = vmatprep.subr.mxu0 0.0
    %978 = vmatpush1.msra.mxu0 %v301
    %979 = vmatprep.subr.mxu0 0.0
    %980 = vmatpush1.msra.mxu0 %v302
    %981 = vmatprep.subr.mxu0 0.0
    %982 = vmatpush1.msra.mxu0 %v303
    %983 = vmatprep.subr.mxu0 0.0
    %984 = vmatpush1.msra.mxu0 0.0
    %985 = vmatprep.subr.mxu0 0.0
    %986 = vmatpush1.msra.mxu0 0.0
    %987 = vmatprep.subr.mxu0 0.0
    %988 = vmatpush1.msra.mxu0 0.0
    %989 = vmatprep.subr.mxu0 0.0
    %990 = vmatpush1.msra.mxu0 0.0
    %991 = vmatprep.subr.mxu0 0.0
    %992 = vmatpush1.msra.mxu0 0.0
    %993 = vmatprep.subr.mxu0 0.0
    %994 = vmatpush1.msra.mxu0 0.0
    %995 = vmatprep.subr.mxu0 0.0
    %996 = vmatpush1.msra.mxu0 0.0
    %997 = vmatprep.subr.mxu0 0.0
    %998 = vmatpush1.msra.mxu0 0.0
    %999 = vmatprep.subr.mxu0 0.0
    %1000 = vmatpush1.msra.mxu0 0.0
    %1001 = vmatprep.subr.mxu0 0.0
    %1002 = vmatpush1.msra.mxu0 0.0
    %1003 = vmatprep.subr.mxu0 0.0
    %1004 = vmatpush1.msra.mxu0 0.0
    %1005 = vmatprep.subr.mxu0 0.0
    %1006 = vmatpush1.msra.mxu0 0.0
    %1007 = vmatprep.subr.mxu0 0.0
    %1008 = vmatpush1.msra.mxu0 0.0
    %1009 = vmatprep.subr.mxu0 0.0
    %1010 = vmatpush1.msra.mxu0 0.0
    %1011 = vmatprep.subr.mxu0 0.0
    %1012 = vmatpush1.msra.mxu0 0.0
    %1013 = vmatprep.subr.mxu0 0.0
    %1014 = vmatpush1.msra.mxu0 0.0
    %1015 = vmatprep.subr.mxu0 0.0
    %1016 = vmatpush1.msra.mxu0 0.0
    %1017 = vmatprep.subr.mxu0 0.0
    %1018 = vmatpush1.msra.mxu0 0.0
    %1019 = vmatprep.subr.mxu0 0.0
    %1020 = vmatpush1.msra.mxu0 0.0
    %1021 = vmatprep.subr.mxu0 0.0
    %1022 = vmatpush1.msra.mxu0 0.0
    %1023 = vmatprep.subr.mxu0 0.0
    %1024 = vmatpush1.msra.mxu0 0.0
    %1025 = vmatprep.subr.mxu0 0.0
    %1026 = vmatpush1.msra.mxu0 0.0
    %1027 = vmatprep.subr.mxu0 0.0
    %1028 = vmatpush1.msra.mxu0 0.0
    %1029 = vmatprep.subr.mxu0 0.0
    %1030 = vmatpush1.msra.mxu0 0.0
    %1031 = vmatprep.subr.mxu0 0.0
    %1032 = vmatpush1.msra.mxu0 0.0
    %1033 = vmatprep.subr.mxu0 0.0
    %1034 = vmatpush1.msra.mxu0 0.0
    %1035 = vmatprep.subr.mxu0 0.0
    %1036 = vmatpush1.msra.mxu0 0.0
    %1037 = vmatprep.subr.mxu0 0.0
    %1038 = vmatpush1.msra.mxu0 0.0
    %1039 = vmatprep.mubr.f32.mxu0 0.0
    %1040 = vmatmul.mubr.f32.gmra.mrb[0].mxu0 %v803
    %v1041 = vpop.f32.mrb[0].mxu0
    %v1042 = vadd.f32 %v972, %v1041
    %v1043 = vpop.f32.mrb[0].mxu0
    %1044 = vdwg.mxu0
    %v1045 = vadd.f32 %v1042, %v316
    %v1046 = vtanh.pop %v1045
    %v1047 = vmul.f32 %v1046, %v323
    %v1048 = vadd.f32 %v1047, %v324
    %v1049 = vmul.f32 %v1048, %v617
    %1051 = vrot.lane.b32.xlu0 %v1048, 64
    %v1052 = vpop.permute.xlu0 %1051
    %v1054 = vmul.f32 %v1048, %v1052
    %1056 = vrot.lane.b32.xlu0 %v1054, 32
    %v1057 = vpop.permute.xlu0 %1056
    %v1059 = vadd.f32 %v1049, %v1057
    %v1060 = vtanh.pop %v1059
    %1062 = vrot.lane.b32.xlu0 %v1060, 64
    %v1063 = vpop.permute.xlu0 %1062
    %v1065 = vmul.f32 %v1048, %v1063
    %v1066 = vmul.f32 %v615, 0.0
    %v1067 = vadd.f32 %v1065, %v1066
    %v1068 = vmul.f32 %v617, 0.0
    %v1069 = vadd.f32 %v1059, %v1068
    %v1070 = vsel %vm332, %v795, 0
    %1072 = vmatprep.subr.mxu0 0.0
    %1073 = vmatpush1.msra.mxu0 %v312
    %1074 = vmatprep.subr.mxu0 0.0
    %1075 = vmatpush1.msra.mxu0 %v313
    %1076 = vmatprep.subr.mxu0 0.0
    %1077 = vmatpush1.msra.mxu0 %v314
    %1078 = vmatprep.subr.mxu0 0.0
    %1079 = vmatpush1.msra.mxu0 %v315
    %1080 = vmatprep.subr.mxu0 0.0
    %1081 = vmatpush1.msra.mxu0 0.0
    %1082 = vmatprep.subr.mxu0 0.0
    %1083 = vmatpush1.msra.mxu0 0.0
    %1084 = vmatprep.subr.mxu0 0.0
    %1085 = vmatpush1.msra.mxu0 0.0
    %1086 = vmatprep.subr.mxu0 0.0
    %1087 = vmatpush1.msra.mxu0 0.0
    %1088 = vmatprep.subr.mxu0 0.0
    %1089 = vmatpush1.msra.mxu0 0.0
    %1090 = vmatprep.subr.mxu0 0.0
    %1091 = vmatpush1.msra.mxu0 0.0
    %1092 = vmatprep.subr.mxu0 0.0
    %1093 = vmatpush1.msra.mxu0 0.0
    %1094 = vmatprep.subr.mxu0 0.0
    %1095 = vmatpush1.msra.mxu0 0.0
    %1096 = vmatprep.subr.mxu0 0.0
    %1097 = vmatpush1.msra.mxu0 0.0
    %1098 = vmatprep.subr.mxu0 0.0
    %1099 = vmatpush1.msra.mxu0 0.0
    %1100 = vmatprep.subr.mxu0 0.0
    %1101 = vmatpush1.msra.mxu0 0.0
    %1102 = vmatprep.subr.mxu0 0.0
    %1103 = vmatpush1.msra.mxu0 0.0
    %1104 = vmatprep.subr.mxu0 0.0
    %1105 = vmatpush1.msra.mxu0 0.0
    %1106 = vmatprep.subr.mxu0 0.0
    %1107 = vmatpush1.msra.mxu0 0.0
    %1108 = vmatprep.subr.mxu0 0.0
    %1109 = vmatpush1.msra.mxu0 0.0
    %1110 = vmatprep.subr.mxu0 0.0
    %1111 = vmatpush1.msra.mxu0 0.0
    %1112 = vmatprep.subr.mxu0 0.0
    %1113 = vmatpush1.msra.mxu0 0.0
    %1114 = vmatprep.subr.mxu0 0.0
    %1115 = vmatpush1.msra.mxu0 0.0
    %1116 = vmatprep.subr.mxu0 0.0
    %1117 = vmatpush1.msra.mxu0 0.0
    %1118 = vmatprep.subr.mxu0 0.0
    %1119 = vmatpush1.msra.mxu0 0.0
    %1120 = vmatprep.subr.mxu0 0.0
    %1121 = vmatpush1.msra.mxu0 0.0
    %1122 = vmatprep.subr.mxu0 0.0
    %1123 = vmatpush1.msra.mxu0 0.0
    %1124 = vmatprep.subr.mxu0 0.0
    %1125 = vmatpush1.msra.mxu0 0.0
    %1126 = vmatprep.subr.mxu0 0.0
    %1127 = vmatpush1.msra.mxu0 0.0
    %1128 = vmatprep.subr.mxu0 0.0
    %1129 = vmatpush1.msra.mxu0 0.0
    %1130 = vmatprep.subr.mxu0 0.0
    %1131 = vmatpush1.msra.mxu0 0.0
    %1132 = vmatprep.subr.mxu0 0.0
    %1133 = vmatpush1.msra.mxu0 0.0
    %1134 = vmatprep.subr.mxu0 0.0
    %1135 = vmatpush1.msra.mxu0 0.0
    %1136 = vmatprep.mubr.f32.mxu0 0.0
    %1137 = vmatmul.mubr.f32.gmra.mrb[0].mxu0 %v1070
    %v1138 = vpop.f32.mrb[0].mxu0
    %v1139 = vadd.f32 0.0, %v1138
    %v1140 = vpop.f32.mrb[0].mxu0
    %1141 = vdwg.mxu0
    %1142 = vmatprep.subr.mxu0 0.0
    %1143 = vmatpush1.msra.mxu0 %v304
    %1144 = vmatprep.subr.mxu0 0.0
    %1145 = vmatpush1.msra.mxu0 %v305
    %1146 = vmatprep.subr.mxu0 0.0
    %1147 = vmatpush1.msra.mxu0 %v306
    %1148 = vmatprep.subr.mxu0 0.0
    %1149 = vmatpush1.msra.mxu0 %v307
    %1150 = vmatprep.subr.mxu0 0.0
    %1151 = vmatpush1.msra.mxu0 0.0
    %1152 = vmatprep.subr.mxu0 0.0
    %1153 = vmatpush1.msra.mxu0 0.0
    %1154 = vmatprep.subr.mxu0 0.0
    %1155 = vmatpush1.msra.mxu0 0.0
    %1156 = vmatprep.subr.mxu0 0.0
    %1157 = vmatpush1.msra.mxu0 0.0
    %1158 = vmatprep.subr.mxu0 0.0
    %1159 = vmatpush1.msra.mxu0 0.0
    %1160 = vmatprep.subr.mxu0 0.0
    %1161 = vmatpush1.msra.mxu0 0.0
    %1162 = vmatprep.subr.mxu0 0.0
    %1163 = vmatpush1.msra.mxu0 0.0
    %1164 = vmatprep.subr.mxu0 0.0
    %1165 = vmatpush1.msra.mxu0 0.0
    %1166 = vmatprep.subr.mxu0 0.0
    %1167 = vmatpush1.msra.mxu0 0.0
    %1168 = vmatprep.subr.mxu0 0.0
    %1169 = vmatpush1.msra.mxu0 0.0
    %1170 = vmatprep.subr.mxu0 0.0
    %1171 = vmatpush1.msra.mxu0 0.0
    %1172 = vmatprep.subr.mxu0 0.0
    %1173 = vmatpush1.msra.mxu0 0.0
    %1174 = vmatprep.subr.mxu0 0.0
    %1175 = vmatpush1.msra.mxu0 0.0
    %1176 = vmatprep.subr.mxu0 0.0
    %1177 = vmatpush1.msra.mxu0 0.0
    %1178 = vmatprep.subr.mxu0 0.0
    %1179 = vmatpush1.msra.mxu0 0.0
    %1180 = vmatprep.subr.mxu0 0.0
    %1181 = vmatpush1.msra.mxu0 0.0
    %1182 = vmatprep.subr.mxu0 0.0
    %1183 = vmatpush1.msra.mxu0 0.0
    %1184 = vmatprep.subr.mxu0 0.0
    %1185 = vmatpush1.msra.mxu0 0.0
    %1186 = vmatprep.subr.mxu0 0.0
    %1187 = vmatpush1.msra.mxu0 0.0
    %1188 = vmatprep.subr.mxu0 0.0
    %1189 = vmatpush1.msra.mxu0 0.0
    %1190 = vmatprep.subr.mxu0 0.0
    %1191 = vmatpush1.msra.mxu0 0.0
    %1192 = vmatprep.subr.mxu0 0.0
    %1193 = vmatpush1.msra.mxu0 0.0
    %1194 = vmatprep.subr.mxu0 0.0
    %1195 = vmatpush1.msra.mxu0 0.0
    %1196 = vmatprep.subr.mxu0 0.0
    %1197 = vmatpush1.msra.mxu0 0.0
    %1198 = vmatprep.subr.mxu0 0.0
    %1199 = vmatpush1.msra.mxu0 0.0
    %1200 = vmatprep.subr.mxu0 0.0
    %1201 = vmatpush1.msra.mxu0 0.0
    %1202 = vmatprep.subr.mxu0 0.0
    %1203 = vmatpush1.msra.mxu0 0.0
    %1204 = vmatprep.subr.mxu0 0.0
    %1205 = vmatpush1.msra.mxu0 0.0
    %1206 = vmatprep.mubr.f32.mxu0 0.0
    %1207 = vmatmul.mubr.f32.gmra.mrb[0].mxu0 %v903
    %v1208 = vpop.f32.mrb[0].mxu0
    %v1209 = vadd.f32 %v1139, %v1208
    %v1210 = vpop.f32.mrb[0].mxu0
    %1211 = vdwg.mxu0
    %v1212 = vadd.f32 %v1209, %v317
    %v1213 = vtanh.pop %v1212
    %v1214 = vmul.f32 %v1213, %v323
    %v1215 = vadd.f32 %v1214, %v324
    %v1216 = vmul.f32 %v1215, %v792
    %1218 = vrot.lane.b32.xlu0 %v1215, 64
    %v1219 = vpop.permute.xlu0 %1218
    %v1221 = vmul.f32 %v1215, %v1219
    %1223 = vrot.lane.b32.xlu0 %v1221, 32
    %v1224 = vpop.permute.xlu0 %1223
    %v1226 = vadd.f32 %v1216, %v1224
    %v1227 = vtanh.pop %v1226
    %1229 = vrot.lane.b32.xlu0 %v1227, 64
    %v1230 = vpop.permute.xlu0 %1229
    %v1232 = vmul.f32 %v1215, %v1230
    %v1233 = vmul.f32 %v1232, 0.0
    %v1234 = vadd.f32 %v1233, %v790
    %v1235 = vmul.f32 %v1226, 0.0
    %v1236 = vadd.f32 %v1235, %v792
    %1238 = vrot.lane.b32.xlu0 %v1234, 32
    %v1239 = vpop.permute.xlu0 %1238
    %1241 = vst.msk [vmem:[#allocation3] sm:$0x1] %vm797, %v1239
    %v1242 = vld [vmem:[#allocation2 + $0x2] sm:$0x1]
    %1244 = vrot.lane.b32.xlu0 %v897, 32
    %v1245 = vpop.permute.xlu0 %1244
    %v1246 = vsel %vm332, %v1245, 0
    %1248 = vmatprep.subr.mxu0 0.0
    %1249 = vmatpush1.msra.mxu0 %v296
    %1250 = vmatprep.subr.mxu0 0.0
    %1251 = vmatpush1.msra.mxu0 %v297
    %1252 = vmatprep.subr.mxu0 0.0
    %1253 = vmatpush1.msra.mxu0 %v298
    %1254 = vmatprep.subr.mxu0 0.0
    %1255 = vmatpush1.msra.mxu0 %v299
    %1256 = vmatprep.subr.mxu0 0.0
    %1257 = vmatpush1.msra.mxu0 0.0
    %1258 = vmatprep.subr.mxu0 0.0
    %1259 = vmatpush1.msra.mxu0 0.0
    %1260 = vmatprep.subr.mxu0 0.0
    %1261 = vmatpush1.msra.mxu0 0.0
    %1262 = vmatprep.subr.mxu0 0.0
    %1263 = vmatpush1.msra.mxu0 0.0
    %1264 = vmatprep.subr.mxu0 0.0
    %1265 = vmatpush1.msra.mxu0 0.0
    %1266 = vmatprep.subr.mxu0 0.0
    %1267 = vmatpush1.msra.mxu0 0.0
    %1268 = vmatprep.subr.mxu0 0.0
    %1269 = vmatpush1.msra.mxu0 0.0
    %1270 = vmatprep.subr.mxu0 0.0
    %1271 = vmatpush1.msra.mxu0 0.0
    %1272 = vmatprep.subr.mxu0 0.0
    %1273 = vmatpush1.msra.mxu0 0.0
    %1274 = vmatprep.subr.mxu0 0.0
    %1275 = vmatpush1.msra.mxu0 0.0
    %1276 = vmatprep.subr.mxu0 0.0
    %1277 = vmatpush1.msra.mxu0 0.0
    %1278 = vmatprep.subr.mxu0 0.0
    %1279 = vmatpush1.msra.mxu0 0.0
    %1280 = vmatprep.subr.mxu0 0.0
    %1281 = vmatpush1.msra.mxu0 0.0
    %1282 = vmatprep.subr.mxu0 0.0
    %1283 = vmatpush1.msra.mxu0 0.0
    %1284 = vmatprep.subr.mxu0 0.0
    %1285 = vmatpush1.msra.mxu0 0.0
    %1286 = vmatprep.subr.mxu0 0.0
    %1287 = vmatpush1.msra.mxu0 0.0
    %1288 = vmatprep.subr.mxu0 0.0
    %1289 = vmatpush1.msra.mxu0 0.0
    %1290 = vmatprep.subr.mxu0 0.0
    %1291 = vmatpush1.msra.mxu0 0.0
    %1292 = vmatprep.subr.mxu0 0.0
    %1293 = vmatpush1.msra.mxu0 0.0
    %1294 = vmatprep.subr.mxu0 0.0
    %1295 = vmatpush1.msra.mxu0 0.0
    %1296 = vmatprep.subr.mxu0 0.0
    %1297 = vmatpush1.msra.mxu0 0.0
    %1298 = vmatprep.subr.mxu0 0.0
    %1299 = vmatpush1.msra.mxu0 0.0
    %1300 = vmatprep.subr.mxu0 0.0
    %1301 = vmatpush1.msra.mxu0 0.0
    %1302 = vmatprep.subr.mxu0 0.0
    %1303 = vmatpush1.msra.mxu0 0.0
    %1304 = vmatprep.subr.mxu0 0.0
    %1305 = vmatpush1.msra.mxu0 0.0
    %1306 = vmatprep.subr.mxu0 0.0
    %1307 = vmatpush1.msra.mxu0 0.0
    %1308 = vmatprep.subr.mxu0 0.0
    %1309 = vmatpush1.msra.mxu0 0.0
    %1310 = vmatprep.subr.mxu0 0.0
    %1311 = vmatpush1.msra.mxu0 0.0
    %1312 = vmatprep.mubr.f32.mxu0 0.0
    %1313 = vmatmul.mubr.f32.gmra.mrb[0].mxu0 %v1246
    %v1314 = vpop.f32.mrb[0].mxu0
    %v1315 = vadd.f32 0.0, %v1314
    %v1316 = vpop.f32.mrb[0].mxu0
    %1317 = vdwg.mxu0
    %v1318 = vadd.f32 %v1242, %v1315
    %v1319 = vtanh.pop %v1318
    %v1320 = vmul.f32 %v1319, %v323
    %v1321 = vadd.f32 %v1320, %v324
    %v1322 = vmul.f32 %v1321, %v899
    %1324 = vrot.lane.b32.xlu0 %v1321, 64
    %v1325 = vpop.permute.xlu0 %1324
    %v1327 = vmul.f32 %v1321, %v1325
    %1329 = vrot.lane.b32.xlu0 %v1327, 32
    %v1330 = vpop.permute.xlu0 %1329
    %v1332 = vadd.f32 %v1322, %v1330
    %v1333 = vtanh.pop %v1332
    %1335 = vrot.lane.b32.xlu0 %v1333, 64
    %v1336 = vpop.permute.xlu0 %1335
    %v1338 = vmul.f32 %v1321, %v1336
    %v1339 = vmul.f32 %v897, 0.0
    %v1340 = vadd.f32 %v1338, %v1339
    %v1341 = vmul.f32 %v899, 0.0
    %v1342 = vadd.f32 %v1332, %v1341
    %1344 = vrot.lane.b32.xlu0 %v1067, 32
    %v1345 = vpop.permute.xlu0 %1344
    %v1346 = vsel %vm332, %v1345, 0
    %1348 = vmatprep.subr.mxu0 0.0
    %1349 = vmatpush1.msra.mxu0 %v308
    %1350 = vmatprep.subr.mxu0 0.0
    %1351 = vmatpush1.msra.mxu0 %v309
    %1352 = vmatprep.subr.mxu0 0.0
    %1353 = vmatpush1.msra.mxu0 %v310
    %1354 = vmatprep.subr.mxu0 0.0
    %1355 = vmatpush1.msra.mxu0 %v311
    %1356 = vmatprep.subr.mxu0 0.0
    %1357 = vmatpush1.msra.mxu0 0.0
    %1358 = vmatprep.subr.mxu0 0.0
    %1359 = vmatpush1.msra.mxu0 0.0
    %1360 = vmatprep.subr.mxu0 0.0
    %1361 = vmatpush1.msra.mxu0 0.0
    %1362 = vmatprep.subr.mxu0 0.0
    %1363 = vmatpush1.msra.mxu0 0.0
    %1364 = vmatprep.subr.mxu0 0.0
    %1365 = vmatpush1.msra.mxu0 0.0
    %1366 = vmatprep.subr.mxu0 0.0
    %1367 = vmatpush1.msra.mxu0 0.0
    %1368 = vmatprep.subr.mxu0 0.0
    %1369 = vmatpush1.msra.mxu0 0.0
    %1370 = vmatprep.subr.mxu0 0.0
    %1371 = vmatpush1.msra.mxu0 0.0
    %1372 = vmatprep.subr.mxu0 0.0
    %1373 = vmatpush1.msra.mxu0 0.0
    %1374 = vmatprep.subr.mxu0 0.0
    %1375 = vmatpush1.msra.mxu0 0.0
    %1376 = vmatprep.subr.mxu0 0.0
    %1377 = vmatpush1.msra.mxu0 0.0
    %1378 = vmatprep.subr.mxu0 0.0
    %1379 = vmatpush1.msra.mxu0 0.0
    %1380 = vmatprep.subr.mxu0 0.0
    %1381 = vmatpush1.msra.mxu0 0.0
    %1382 = vmatprep.subr.mxu0 0.0
    %1383 = vmatpush1.msra.mxu0 0.0
    %1384 = vmatprep.subr.mxu0 0.0
    %1385 = vmatpush1.msra.mxu0 0.0
    %1386 = vmatprep.subr.mxu0 0.0
    %1387 = vmatpush1.msra.mxu0 0.0
    %1388 = vmatprep.subr.mxu0 0.0
    %1389 = vmatpush1.msra.mxu0 0.0
    %1390 = vmatprep.subr.mxu0 0.0
    %1391 = vmatpush1.msra.mxu0 0.0
    %1392 = vmatprep.subr.mxu0 0.0
    %1393 = vmatpush1.msra.mxu0 0.0
    %1394 = vmatprep.subr.mxu0 0.0
    %1395 = vmatpush1.msra.mxu0 0.0
    %1396 = vmatprep.subr.mxu0 0.0
    %1397 = vmatpush1.msra.mxu0 0.0
    %1398 = vmatprep.subr.mxu0 0.0
    %1399 = vmatpush1.msra.mxu0 0.0
    %1400 = vmatprep.subr.mxu0 0.0
    %1401 = vmatpush1.msra.mxu0 0.0
    %1402 = vmatprep.subr.mxu0 0.0
    %1403 = vmatpush1.msra.mxu0 0.0
    %1404 = vmatprep.subr.mxu0 0.0
    %1405 = vmatpush1.msra.mxu0 0.0
    %1406 = vmatprep.subr.mxu0 0.0
    %1407 = vmatpush1.msra.mxu0 0.0
    %1408 = vmatprep.subr.mxu0 0.0
    %1409 = vmatpush1.msra.mxu0 0.0
    %1410 = vmatprep.subr.mxu0 0.0
    %1411 = vmatpush1.msra.mxu0 0.0
    %1412 = vmatprep.mubr.f32.mxu0 0.0
    %1413 = vmatmul.mubr.f32.gmra.mrb[0].mxu0 %v1346
    %v1414 = vpop.f32.mrb[0].mxu0
    %v1415 = vadd.f32 0.0, %v1414
    %v1416 = vpop.f32.mrb[0].mxu0
    %1417 = vdwg.mxu0
    %1418 = vmatprep.subr.mxu0 0.0
    %1419 = vmatpush1.msra.mxu0 %v300
    %1420 = vmatprep.subr.mxu0 0.0
    %1421 = vmatpush1.msra.mxu0 %v301
    %1422 = vmatprep.subr.mxu0 0.0
    %1423 = vmatpush1.msra.mxu0 %v302
    %1424 = vmatprep.subr.mxu0 0.0
    %1425 = vmatpush1.msra.mxu0 %v303
    %1426 = vmatprep.subr.mxu0 0.0
    %1427 = vmatpush1.msra.mxu0 0.0
    %1428 = vmatprep.subr.mxu0 0.0
    %1429 = vmatpush1.msra.mxu0 0.0
    %1430 = vmatprep.subr.mxu0 0.0
    %1431 = vmatpush1.msra.mxu0 0.0
    %1432 = vmatprep.subr.mxu0 0.0
    %1433 = vmatpush1.msra.mxu0 0.0
    %1434 = vmatprep.subr.mxu0 0.0
    %1435 = vmatpush1.msra.mxu0 0.0
    %1436 = vmatprep.subr.mxu0 0.0
    %1437 = vmatpush1.msra.mxu0 0.0
    %1438 = vmatprep.subr.mxu0 0.0
    %1439 = vmatpush1.msra.mxu0 0.0
    %1440 = vmatprep.subr.mxu0 0.0
    %1441 = vmatpush1.msra.mxu0 0.0
    %1442 = vmatprep.subr.mxu0 0.0
    %1443 = vmatpush1.msra.mxu0 0.0
    %1444 = vmatprep.subr.mxu0 0.0
    %1445 = vmatpush1.msra.mxu0 0.0
    %1446 = vmatprep.subr.mxu0 0.0
    %1447 = vmatpush1.msra.mxu0 0.0
    %1448 = vmatprep.subr.mxu0 0.0
    %1449 = vmatpush1.msra.mxu0 0.0
    %1450 = vmatprep.subr.mxu0 0.0
    %1451 = vmatpush1.msra.mxu0 0.0
    %1452 = vmatprep.subr.mxu0 0.0
    %1453 = vmatpush1.msra.mxu0 0.0
    %1454 = vmatprep.subr.mxu0 0.0
    %1455 = vmatpush1.msra.mxu0 0.0
    %1456 = vmatprep.subr.mxu0 0.0
    %1457 = vmatpush1.msra.mxu0 0.0
    %1458 = vmatprep.subr.mxu0 0.0
    %1459 = vmatpush1.msra.mxu0 0.0
    %1460 = vmatprep.subr.mxu0 0.0
    %1461 = vmatpush1.msra.mxu0 0.0
    %1462 = vmatprep.subr.mxu0 0.0
    %1463 = vmatpush1.msra.mxu0 0.0
    %1464 = vmatprep.subr.mxu0 0.0
    %1465 = vmatpush1.msra.mxu0 0.0
    %1466 = vmatprep.subr.mxu0 0.0
    %1467 = vmatpush1.msra.mxu0 0.0
    %1468 = vmatprep.subr.mxu0 0.0
    %1469 = vmatpush1.msra.mxu0 0.0
    %1470 = vmatprep.subr.mxu0 0.0
    %1471 = vmatpush1.msra.mxu0 0.0
    %1472 = vmatprep.subr.mxu0 0.0
    %1473 = vmatpush1.msra.mxu0 0.0
    %1474 = vmatprep.subr.mxu0 0.0
    %1475 = vmatpush1.msra.mxu0 0.0
    %1476 = vmatprep.subr.mxu0 0.0
    %1477 = vmatpush1.msra.mxu0 0.0
    %1478 = vmatprep.subr.mxu0 0.0
    %1479 = vmatpush1.msra.mxu0 0.0
    %1480 = vmatprep.subr.mxu0 0.0
    %1481 = vmatpush1.msra.mxu0 0.0
    %1482 = vmatprep.mubr.f32.mxu0 0.0
    %1483 = vmatmul.mubr.f32.gmra.mrb[0].mxu0 %v1246
    %v1484 = vpop.f32.mrb[0].mxu0
    %v1485 = vadd.f32 %v1415, %v1484
    %v1486 = vpop.f32.mrb[0].mxu0
    %1487 = vdwg.mxu0
    %v1488 = vadd.f32 %v1485, %v316
    %v1489 = vtanh.pop %v1488
    %v1490 = vmul.f32 %v1489, %v323
    %v1491 = vadd.f32 %v1490, %v324
    %v1492 = vmul.f32 %v1491, %v1069
    %1494 = vrot.lane.b32.xlu0 %v1491, 64
    %v1495 = vpop.permute.xlu0 %1494
    %v1497 = vmul.f32 %v1491, %v1495
    %1499 = vrot.lane.b32.xlu0 %v1497, 32
    %v1500 = vpop.permute.xlu0 %1499
    %v1502 = vadd.f32 %v1492, %v1500
    %v1503 = vtanh.pop %v1502
    %1505 = vrot.lane.b32.xlu0 %v1503, 64
    %v1506 = vpop.permute.xlu0 %1505
    %v1508 = vmul.f32 %v1491, %v1506
    %v1509 = vmul.f32 %v1067, 0.0
    %v1510 = vadd.f32 %v1508, %v1509
    %v1511 = vmul.f32 %v1069, 0.0
    %v1512 = vadd.f32 %v1502, %v1511
    %v1513 = vsel %vm332, %v1239, 0
    %1515 = vmatprep.subr.mxu0 0.0
    %1516 = vmatpush1.msra.mxu0 %v312
    %1517 = vmatprep.subr.mxu0 0.0
    %1518 = vmatpush1.msra.mxu0 %v313
    %1519 = vmatprep.subr.mxu0 0.0
    %1520 = vmatpush1.msra.mxu0 %v314
    %1521 = vmatprep.subr.mxu0 0.0
    %1522 = vmatpush1.msra.mxu0 %v315
    %1523 = vmatprep.subr.mxu0 0.0
    %1524 = vmatpush1.msra.mxu0 0.0
    %1525 = vmatprep.subr.mxu0 0.0
    %1526 = vmatpush1.msra.mxu0 0.0
    %1527 = vmatprep.subr.mxu0 0.0
    %1528 = vmatpush1.msra.mxu0 0.0
    %1529 = vmatprep.subr.mxu0 0.0
    %1530 = vmatpush1.msra.mxu0 0.0
    %1531 = vmatprep.subr.mxu0 0.0
    %1532 = vmatpush1.msra.mxu0 0.0
    %1533 = vmatprep.subr.mxu0 0.0
    %1534 = vmatpush1.msra.mxu0 0.0
    %1535 = vmatprep.subr.mxu0 0.0
    %1536 = vmatpush1.msra.mxu0 0.0
    %1537 = vmatprep.subr.mxu0 0.0
    %1538 = vmatpush1.msra.mxu0 0.0
    %1539 = vmatprep.subr.mxu0 0.0
    %1540 = vmatpush1.msra.mxu0 0.0
    %1541 = vmatprep.subr.mxu0 0.0
    %1542 = vmatpush1.msra.mxu0 0.0
    %1543 = vmatprep.subr.mxu0 0.0
    %1544 = vmatpush1.msra.mxu0 0.0
    %1545 = vmatprep.subr.mxu0 0.0
    %1546 = vmatpush1.msra.mxu0 0.0
    %1547 = vmatprep.subr.mxu0 0.0
    %1548 = vmatpush1.msra.mxu0 0.0
    %1549 = vmatprep.subr.mxu0 0.0
    %1550 = vmatpush1.msra.mxu0 0.0
    %1551 = vmatprep.subr.mxu0 0.0
    %1552 = vmatpush1.msra.mxu0 0.0
    %1553 = vmatprep.subr.mxu0 0.0
    %1554 = vmatpush1.msra.mxu0 0.0
    %1555 = vmatprep.subr.mxu0 0.0
    %1556 = vmatpush1.msra.mxu0 0.0
    %1557 = vmatprep.subr.mxu0 0.0
    %1558 = vmatpush1.msra.mxu0 0.0
    %1559 = vmatprep.subr.mxu0 0.0
    %1560 = vmatpush1.msra.mxu0 0.0
    %1561 = vmatprep.subr.mxu0 0.0
    %1562 = vmatpush1.msra.mxu0 0.0
    %1563 = vmatprep.subr.mxu0 0.0
    %1564 = vmatpush1.msra.mxu0 0.0
    %1565 = vmatprep.subr.mxu0 0.0
    %1566 = vmatpush1.msra.mxu0 0.0
    %1567 = vmatprep.subr.mxu0 0.0
    %1568 = vmatpush1.msra.mxu0 0.0
    %1569 = vmatprep.subr.mxu0 0.0
    %1570 = vmatpush1.msra.mxu0 0.0
    %1571 = vmatprep.subr.mxu0 0.0
    %1572 = vmatpush1.msra.mxu0 0.0
    %1573 = vmatprep.subr.mxu0 0.0
    %1574 = vmatpush1.msra.mxu0 0.0
    %1575 = vmatprep.subr.mxu0 0.0
    %1576 = vmatpush1.msra.mxu0 0.0
    %1577 = vmatprep.subr.mxu0 0.0
    %1578 = vmatpush1.msra.mxu0 0.0
    %1579 = vmatprep.mubr.f32.mxu0 0.0
    %1580 = vmatmul.mubr.f32.gmra.mrb[0].mxu0 %v1513
    %v1581 = vpop.f32.mrb[0].mxu0
    %v1582 = vadd.f32 0.0, %v1581
    %v1583 = vpop.f32.mrb[0].mxu0
    %1584 = vdwg.mxu0
    %1585 = vmatprep.subr.mxu0 0.0
    %1586 = vmatpush1.msra.mxu0 %v304
    %1587 = vmatprep.subr.mxu0 0.0
    %1588 = vmatpush1.msra.mxu0 %v305
    %1589 = vmatprep.subr.mxu0 0.0
    %1590 = vmatpush1.msra.mxu0 %v306
    %1591 = vmatprep.subr.mxu0 0.0
    %1592 = vmatpush1.msra.mxu0 %v307
    %1593 = vmatprep.subr.mxu0 0.0
    %1594 = vmatpush1.msra.mxu0 0.0
    %1595 = vmatprep.subr.mxu0 0.0
    %1596 = vmatpush1.msra.mxu0 0.0
    %1597 = vmatprep.subr.mxu0 0.0
    %1598 = vmatpush1.msra.mxu0 0.0
    %1599 = vmatprep.subr.mxu0 0.0
    %1600 = vmatpush1.msra.mxu0 0.0
    %1601 = vmatprep.subr.mxu0 0.0
    %1602 = vmatpush1.msra.mxu0 0.0
    %1603 = vmatprep.subr.mxu0 0.0
    %1604 = vmatpush1.msra.mxu0 0.0
    %1605 = vmatprep.subr.mxu0 0.0
    %1606 = vmatpush1.msra.mxu0 0.0
    %1607 = vmatprep.subr.mxu0 0.0
    %1608 = vmatpush1.msra.mxu0 0.0
    %1609 = vmatprep.subr.mxu0 0.0
    %1610 = vmatpush1.msra.mxu0 0.0
    %1611 = vmatprep.subr.mxu0 0.0
    %1612 = vmatpush1.msra.mxu0 0.0
    %1613 = vmatprep.subr.mxu0 0.0
    %1614 = vmatpush1.msra.mxu0 0.0
    %1615 = vmatprep.subr.mxu0 0.0
    %1616 = vmatpush1.msra.mxu0 0.0
    %1617 = vmatprep.subr.mxu0 0.0
    %1618 = vmatpush1.msra.mxu0 0.0
    %1619 = vmatprep.subr.mxu0 0.0
    %1620 = vmatpush1.msra.mxu0 0.0
    %1621 = vmatprep.subr.mxu0 0.0
    %1622 = vmatpush1.msra.mxu0 0.0
    %1623 = vmatprep.subr.mxu0 0.0
    %1624 = vmatpush1.msra.mxu0 0.0
    %1625 = vmatprep.subr.mxu0 0.0
    %1626 = vmatpush1.msra.mxu0 0.0
    %1627 = vmatprep.subr.mxu0 0.0
    %1628 = vmatpush1.msra.mxu0 0.0
    %1629 = vmatprep.subr.mxu0 0.0
    %1630 = vmatpush1.msra.mxu0 0.0
    %1631 = vmatprep.subr.mxu0 0.0
    %1632 = vmatpush1.msra.mxu0 0.0
    %1633 = vmatprep.subr.mxu0 0.0
    %1634 = vmatpush1.msra.mxu0 0.0
    %1635 = vmatprep.subr.mxu0 0.0
    %1636 = vmatpush1.msra.mxu0 0.0
    %1637 = vmatprep.subr.mxu0 0.0
    %1638 = vmatpush1.msra.mxu0 0.0
    %1639 = vmatprep.subr.mxu0 0.0
    %1640 = vmatpush1.msra.mxu0 0.0
    %1641 = vmatprep.subr.mxu0 0.0
    %1642 = vmatpush1.msra.mxu0 0.0
    %1643 = vmatprep.subr.mxu0 0.0
    %1644 = vmatpush1.msra.mxu0 0.0
    %1645 = vmatprep.subr.mxu0 0.0
    %1646 = vmatpush1.msra.mxu0 0.0
    %1647 = vmatprep.subr.mxu0 0.0
    %1648 = vmatpush1.msra.mxu0 0.0
    %1649 = vmatprep.mubr.f32.mxu0 0.0
    %1650 = vmatmul.mubr.f32.gmra.mrb[0].mxu0 %v1346
    %v1651 = vpop.f32.mrb[0].mxu0
    %v1652 = vadd.f32 %v1582, %v1651
    %v1653 = vpop.f32.mrb[0].mxu0
    %1654 = vdwg.mxu0
    %v1655 = vadd.f32 %v1652, %v317
    %v1656 = vtanh.pop %v1655
    %v1657 = vmul.f32 %v1656, %v323
    %v1658 = vadd.f32 %v1657, %v324
    %v1659 = vmul.f32 %v1658, %v1236
    %1661 = vrot.lane.b32.xlu0 %v1658, 64
    %v1662 = vpop.permute.xlu0 %1661
    %v1664 = vmul.f32 %v1658, %v1662
    %1666 = vrot.lane.b32.xlu0 %v1664, 32
    %v1667 = vpop.permute.xlu0 %1666
    %v1669 = vadd.f32 %v1659, %v1667
    %v1670 = vtanh.pop %v1669
    %1672 = vrot.lane.b32.xlu0 %v1670, 64
    %v1673 = vpop.permute.xlu0 %1672
    %v1675 = vmul.f32 %v1658, %v1673
    %v1676 = vmul.f32 %v1234, 0.0
    %v1677 = vadd.f32 %v1675, %v1676
    %v1678 = vmul.f32 %v1236, 0.0
    %v1679 = vadd.f32 %v1669, %v1678
    %1681 = vrot.lane.b32.xlu0 %v1677, 32
    %v1682 = vpop.permute.xlu0 %1681
    %1684 = vst.msk [vmem:[#allocation3] sm:$0x1] %vm797, %v1682
    %v1685 = vld [vmem:[#allocation2 + $0x3] sm:$0x1]
    %1687 = vrot.lane.b32.xlu0 %v1340, 32
    %v1688 = vpop.permute.xlu0 %1687
    %v1689 = vsel %vm332, %v1688, 0
    %1691 = vmatprep.subr.mxu0 0.0
    %1692 = vmatpush1.msra.mxu0 %v296
    %1693 = vmatprep.subr.mxu0 0.0
    %1694 = vmatpush1.msra.mxu0 %v297
    %1695 = vmatprep.subr.mxu0 0.0
    %1696 = vmatpush1.msra.mxu0 %v298
    %1697 = vmatprep.subr.mxu0 0.0
    %1698 = vmatpush1.msra.mxu0 %v299
    %1699 = vmatprep.subr.mxu0 0.0
    %1700 = vmatpush1.msra.mxu0 0.0
    %1701 = vmatprep.subr.mxu0 0.0
    %1702 = vmatpush1.msra.mxu0 0.0
    %1703 = vmatprep.subr.mxu0 0.0
    %1704 = vmatpush1.msra.mxu0 0.0
    %1705 = vmatprep.subr.mxu0 0.0
    %1706 = vmatpush1.msra.mxu0 0.0
    %1707 = vmatprep.subr.mxu0 0.0
    %1708 = vmatpush1.msra.mxu0 0.0
    %1709 = vmatprep.subr.mxu0 0.0
    %1710 = vmatpush1.msra.mxu0 0.0
    %1711 = vmatprep.subr.mxu0 0.0
    %1712 = vmatpush1.msra.mxu0 0.0
    %1713 = vmatprep.subr.mxu0 0.0
    %1714 = vmatpush1.msra.mxu0 0.0
    %1715 = vmatprep.subr.mxu0 0.0
    %1716 = vmatpush1.msra.mxu0 0.0
    %1717 = vmatprep.subr.mxu0 0.0
    %1718 = vmatpush1.msra.mxu0 0.0
    %1719 = vmatprep.subr.mxu0 0.0
    %1720 = vmatpush1.msra.mxu0 0.0
    %1721 = vmatprep.subr.mxu0 0.0
    %1722 = vmatpush1.msra.mxu0 0.0
    %1723 = vmatprep.subr.mxu0 0.0
    %1724 = vmatpush1.msra.mxu0 0.0
    %1725 = vmatprep.subr.mxu0 0.0
    %1726 = vmatpush1.msra.mxu0 0.0
    %1727 = vmatprep.subr.mxu0 0.0
    %1728 = vmatpush1.msra.mxu0 0.0
    %1729 = vmatprep.subr.mxu0 0.0
    %1730 = vmatpush1.msra.mxu0 0.0
    %1731 = vmatprep.subr.mxu0 0.0
    %1732 = vmatpush1.msra.mxu0 0.0
    %1733 = vmatprep.subr.mxu0 0.0
    %1734 = vmatpush1.msra.mxu0 0.0
    %1735 = vmatprep.subr.mxu0 0.0
    %1736 = vmatpush1.msra.mxu0 0.0
    %1737 = vmatprep.subr.mxu0 0.0
    %1738 = vmatpush1.msra.mxu0 0.0
    %1739 = vmatprep.subr.mxu0 0.0
    %1740 = vmatpush1.msra.mxu0 0.0
    %1741 = vmatprep.subr.mxu0 0.0
    %1742 = vmatpush1.msra.mxu0 0.0
    %1743 = vmatprep.subr.mxu0 0.0
    %1744 = vmatpush1.msra.mxu0 0.0
    %1745 = vmatprep.subr.mxu0 0.0
    %1746 = vmatpush1.msra.mxu0 0.0
    %1747 = vmatprep.subr.mxu0 0.0
    %1748 = vmatpush1.msra.mxu0 0.0
    %1749 = vmatprep.subr.mxu0 0.0
    %1750 = vmatpush1.msra.mxu0 0.0
    %1751 = vmatprep.subr.mxu0 0.0
    %1752 = vmatpush1.msra.mxu0 0.0
    %1753 = vmatprep.subr.mxu0 0.0
    %1754 = vmatpush1.msra.mxu0 0.0
    %1755 = vmatprep.mubr.f32.mxu0 0.0
    %1756 = vmatmul.mubr.f32.gmra.mrb[0].mxu0 %v1689
    %v1757 = vpop.f32.mrb[0].mxu0
    %v1758 = vadd.f32 0.0, %v1757
    %v1759 = vpop.f32.mrb[0].mxu0
    %1760 = vdwg.mxu0
    %v1761 = vadd.f32 %v1685, %v1758
    %v1762 = vtanh.pop %v1761
    %v1763 = vmul.f32 %v1762, %v323
    %v1764 = vadd.f32 %v1763, %v324
    %v1765 = vmul.f32 %v1764, %v1342
    %1767 = vrot.lane.b32.xlu0 %v1764, 64
    %v1768 = vpop.permute.xlu0 %1767
    %v1770 = vmul.f32 %v1764, %v1768
    %1772 = vrot.lane.b32.xlu0 %v1770, 32
    %v1773 = vpop.permute.xlu0 %1772
    %v1775 = vadd.f32 %v1765, %v1773
    %v1776 = vtanh.pop %v1775
    %1778 = vrot.lane.b32.xlu0 %v1776, 64
    %v1779 = vpop.permute.xlu0 %1778
    %v1781 = vmul.f32 %v1764, %v1779
    %v1782 = vmul.f32 %v1340, 0.0
    %v1783 = vadd.f32 %v1781, %v1782
    %v1784 = vmul.f32 %v1342, 0.0
    %v1785 = vadd.f32 %v1775, %v1784
    %1787 = vrot.lane.b32.xlu0 %v1510, 32
    %v1788 = vpop.permute.xlu0 %1787
    %v1789 = vsel %vm332, %v1788, 0
    %1791 = vmatprep.subr.mxu0 0.0
    %1792 = vmatpush1.msra.mxu0 %v308
    %1793 = vmatprep.subr.mxu0 0.0
    %1794 = vmatpush1.msra.mxu0 %v309
    %1795 = vmatprep.subr.mxu0 0.0
    %1796 = vmatpush1.msra.mxu0 %v310
    %1797 = vmatprep.subr.mxu0 0.0
    %1798 = vmatpush1.msra.mxu0 %v311
    %1799 = vmatprep.subr.mxu0 0.0
    %1800 = vmatpush1.msra.mxu0 0.0
    %1801 = vmatprep.subr.mxu0 0.0
    %1802 = vmatpush1.msra.mxu0 0.0
    %1803 = vmatprep.subr.mxu0 0.0
    %1804 = vmatpush1.msra.mxu0 0.0
    %1805 = vmatprep.subr.mxu0 0.0
    %1806 = vmatpush1.msra.mxu0 0.0
    %1807 = vmatprep.subr.mxu0 0.0
    %1808 = vmatpush1.msra.mxu0 0.0
    %1809 = vmatprep.subr.mxu0 0.0
    %1810 = vmatpush1.msra.mxu0 0.0
    %1811 = vmatprep.subr.mxu0 0.0
    %1812 = vmatpush1.msra.mxu0 0.0
    %1813 = vmatprep.subr.mxu0 0.0
    %1814 = vmatpush1.msra.mxu0 0.0
    %1815 = vmatprep.subr.mxu0 0.0
    %1816 = vmatpush1.msra.mxu0 0.0
    %1817 = vmatprep.subr.mxu0 0.0
    %1818 = vmatpush1.msra.mxu0 0.0
    %1819 = vmatprep.subr.mxu0 0.0
    %1820 = vmatpush1.msra.mxu0 0.0
    %1821 = vmatprep.subr.mxu0 0.0
    %1822 = vmatpush1.msra.mxu0 0.0
    %1823 = vmatprep.subr.mxu0 0.0
    %1824 = vmatpush1.msra.mxu0 0.0
    %1825 = vmatprep.subr.mxu0 0.0
    %1826 = vmatpush1.msra.mxu0 0.0
    %1827 = vmatprep.subr.mxu0 0.0
    %1828 = vmatpush1.msra.mxu0 0.0
    %1829 = vmatprep.subr.mxu0 0.0
    %1830 = vmatpush1.msra.mxu0 0.0
    %1831 = vmatprep.subr.mxu0 0.0
    %1832 = vmatpush1.msra.mxu0 0.0
    %1833 = vmatprep.subr.mxu0 0.0
    %1834 = vmatpush1.msra.mxu0 0.0
    %1835 = vmatprep.subr.mxu0 0.0
    %1836 = vmatpush1.msra.mxu0 0.0
    %1837 = vmatprep.subr.mxu0 0.0
    %1838 = vmatpush1.msra.mxu0 0.0
    %1839 = vmatprep.subr.mxu0 0.0
    %1840 = vmatpush1.msra.mxu0 0.0
    %1841 = vmatprep.subr.mxu0 0.0
    %1842 = vmatpush1.msra.mxu0 0.0
    %1843 = vmatprep.subr.mxu0 0.0
    %1844 = vmatpush1.msra.mxu0 0.0
    %1845 = vmatprep.subr.mxu0 0.0
    %1846 = vmatpush1.msra.mxu0 0.0
    %1847 = vmatprep.subr.mxu0 0.0
    %1848 = vmatpush1.msra.mxu0 0.0
    %1849 = vmatprep.subr.mxu0 0.0
    %1850 = vmatpush1.msra.mxu0 0.0
    %1851 = vmatprep.subr.mxu0 0.0
    %1852 = vmatpush1.msra.mxu0 0.0
    %1853 = vmatprep.subr.mxu0 0.0
    %1854 = vmatpush1.msra.mxu0 0.0
    %1855 = vmatprep.mubr.f32.mxu0 0.0
    %1856 = vmatmul.mubr.f32.gmra.mrb[0].mxu0 %v1789
    %v1857 = vpop.f32.mrb[0].mxu0
    %v1858 = vadd.f32 0.0, %v1857
    %v1859 = vpop.f32.mrb[0].mxu0
    %1860 = vdwg.mxu0
    %1861 = vmatprep.subr.mxu0 0.0
    %1862 = vmatpush1.msra.mxu0 %v300
    %1863 = vmatprep.subr.mxu0 0.0
    %1864 = vmatpush1.msra.mxu0 %v301
    %1865 = vmatprep.subr.mxu0 0.0
    %1866 = vmatpush1.msra.mxu0 %v302
    %1867 = vmatprep.subr.mxu0 0.0
    %1868 = vmatpush1.msra.mxu0 %v303
    %1869 = vmatprep.subr.mxu0 0.0
    %1870 = vmatpush1.msra.mxu0 0.0
    %1871 = vmatprep.subr.mxu0 0.0
    %1872 = vmatpush1.msra.mxu0 0.0
    %1873 = vmatprep.subr.mxu0 0.0
    %1874 = vmatpush1.msra.mxu0 0.0
    %1875 = vmatprep.subr.mxu0 0.0
    %1876 = vmatpush1.msra.mxu0 0.0
    %1877 = vmatprep.subr.mxu0 0.0
    %1878 = vmatpush1.msra.mxu0 0.0
    %1879 = vmatprep.subr.mxu0 0.0
    %1880 = vmatpush1.msra.mxu0 0.0
    %1881 = vmatprep.subr.mxu0 0.0
    %1882 = vmatpush1.msra.mxu0 0.0
    %1883 = vmatprep.subr.mxu0 0.0
    %1884 = vmatpush1.msra.mxu0 0.0
    %1885 = vmatprep.subr.mxu0 0.0
    %1886 = vmatpush1.msra.mxu0 0.0
    %1887 = vmatprep.subr.mxu0 0.0
    %1888 = vmatpush1.msra.mxu0 0.0
    %1889 = vmatprep.subr.mxu0 0.0
    %1890 = vmatpush1.msra.mxu0 0.0
    %1891 = vmatprep.subr.mxu0 0.0
    %1892 = vmatpush1.msra.mxu0 0.0
    %1893 = vmatprep.subr.mxu0 0.0
    %1894 = vmatpush1.msra.mxu0 0.0
    %1895 = vmatprep.subr.mxu0 0.0
    %1896 = vmatpush1.msra.mxu0 0.0
    %1897 = vmatprep.subr.mxu0 0.0
    %1898 = vmatpush1.msra.mxu0 0.0
    %1899 = vmatprep.subr.mxu0 0.0
    %1900 = vmatpush1.msra.mxu0 0.0
    %1901 = vmatprep.subr.mxu0 0.0
    %1902 = vmatpush1.msra.mxu0 0.0
    %1903 = vmatprep.subr.mxu0 0.0
    %1904 = vmatpush1.msra.mxu0 0.0
    %1905 = vmatprep.subr.mxu0 0.0
    %1906 = vmatpush1.msra.mxu0 0.0
    %1907 = vmatprep.subr.mxu0 0.0
    %1908 = vmatpush1.msra.mxu0 0.0
    %1909 = vmatprep.subr.mxu0 0.0
    %1910 = vmatpush1.msra.mxu0 0.0
    %1911 = vmatprep.subr.mxu0 0.0
    %1912 = vmatpush1.msra.mxu0 0.0
    %1913 = vmatprep.subr.mxu0 0.0
    %1914 = vmatpush1.msra.mxu0 0.0
    %1915 = vmatprep.subr.mxu0 0.0
    %1916 = vmatpush1.msra.mxu0 0.0
    %1917 = vmatprep.subr.mxu0 0.0
    %1918 = vmatpush1.msra.mxu0 0.0
    %1919 = vmatprep.subr.mxu0 0.0
    %1920 = vmatpush1.msra.mxu0 0.0
    %1921 = vmatprep.subr.mxu0 0.0
    %1922 = vmatpush1.msra.mxu0 0.0
    %1923 = vmatprep.subr.mxu0 0.0
    %1924 = vmatpush1.msra.mxu0 0.0
    %1925 = vmatprep.mubr.f32.mxu0 0.0
    %1926 = vmatmul.mubr.f32.gmra.mrb[0].mxu0 %v1689
    %v1927 = vpop.f32.mrb[0].mxu0
    %v1928 = vadd.f32 %v1858, %v1927
    %v1929 = vpop.f32.mrb[0].mxu0
    %1930 = vdwg.mxu0
    %v1931 = vadd.f32 %v1928, %v316
    %v1932 = vtanh.pop %v1931
    %v1933 = vmul.f32 %v1932, %v323
    %v1934 = vadd.f32 %v1933, %v324
    %v1935 = vmul.f32 %v1934, %v1512
    %1937 = vrot.lane.b32.xlu0 %v1934, 64
    %v1938 = vpop.permute.xlu0 %1937
    %v1940 = vmul.f32 %v1934, %v1938
    %1942 = vrot.lane.b32.xlu0 %v1940, 32
    %v1943 = vpop.permute.xlu0 %1942
    %v1945 = vadd.f32 %v1935, %v1943
    %v1946 = vtanh.pop %v1945
    %1948 = vrot.lane.b32.xlu0 %v1946, 64
    %v1949 = vpop.permute.xlu0 %1948
    %v1951 = vmul.f32 %v1934, %v1949
    %v1952 = vmul.f32 %v1510, 0.0
    %v1953 = vadd.f32 %v1951, %v1952
    %v1954 = vmul.f32 %v1512, 0.0
    %v1955 = vadd.f32 %v1945, %v1954
    %v1956 = vsel %vm332, %v1682, 0
    %1958 = vmatprep.subr.mxu0 0.0
    %1959 = vmatpush1.msra.mxu0 %v312
    %1960 = vmatprep.subr.mxu0 0.0
    %1961 = vmatpush1.msra.mxu0 %v313
    %1962 = vmatprep.subr.mxu0 0.0
    %1963 = vmatpush1.msra.mxu0 %v314
    %1964 = vmatprep.subr.mxu0 0.0
    %1965 = vmatpush1.msra.mxu0 %v315
    %1966 = vmatprep.subr.mxu0 0.0
    %1967 = vmatpush1.msra.mxu0 0.0
    %1968 = vmatprep.subr.mxu0 0.0
    %1969 = vmatpush1.msra.mxu0 0.0
    %1970 = vmatprep.subr.mxu0 0.0
    %1971 = vmatpush1.msra.mxu0 0.0
    %1972 = vmatprep.subr.mxu0 0.0
    %1973 = vmatpush1.msra.mxu0 0.0
    %1974 = vmatprep.subr.mxu0 0.0
    %1975 = vmatpush1.msra.mxu0 0.0
    %1976 = vmatprep.subr.mxu0 0.0
    %1977 = vmatpush1.msra.mxu0 0.0
    %1978 = vmatprep.subr.mxu0 0.0
    %1979 = vmatpush1.msra.mxu0 0.0
    %1980 = vmatprep.subr.mxu0 0.0
    %1981 = vmatpush1.msra.mxu0 0.0
    %1982 = vmatprep.subr.mxu0 0.0
    %1983 = vmatpush1.msra.mxu0 0.0
    %1984 = vmatprep.subr.mxu0 0.0
    %1985 = vmatpush1.msra.mxu0 0.0
    %1986 = vmatprep.subr.mxu0 0.0
    %1987 = vmatpush1.msra.mxu0 0.0
    %1988 = vmatprep.subr.mxu0 0.0
    %1989 = vmatpush1.msra.mxu0 0.0
    %1990 = vmatprep.subr.mxu0 0.0
    %1991 = vmatpush1.msra.mxu0 0.0
    %1992 = vmatprep.subr.mxu0 0.0
    %1993 = vmatpush1.msra.mxu0 0.0
    %1994 = vmatprep.subr.mxu0 0.0
    %1995 = vmatpush1.msra.mxu0 0.0
    %1996 = vmatprep.subr.mxu0 0.0
    %1997 = vmatpush1.msra.mxu0 0.0
    %1998 = vmatprep.subr.mxu0 0.0
    %1999 = vmatpush1.msra.mxu0 0.0
    %2000 = vmatprep.subr.mxu0 0.0
    %2001 = vmatpush1.msra.mxu0 0.0
    %2002 = vmatprep.subr.mxu0 0.0
    %2003 = vmatpush1.msra.mxu0 0.0
    %2004 = vmatprep.subr.mxu0 0.0
    %2005 = vmatpush1.msra.mxu0 0.0
    %2006 = vmatprep.subr.mxu0 0.0
    %2007 = vmatpush1.msra.mxu0 0.0
    %2008 = vmatprep.subr.mxu0 0.0
    %2009 = vmatpush1.msra.mxu0 0.0
    %2010 = vmatprep.subr.mxu0 0.0
    %2011 = vmatpush1.msra.mxu0 0.0
    %2012 = vmatprep.subr.mxu0 0.0
    %2013 = vmatpush1.msra.mxu0 0.0
    %2014 = vmatprep.subr.mxu0 0.0
    %2015 = vmatpush1.msra.mxu0 0.0
    %2016 = vmatprep.subr.mxu0 0.0
    %2017 = vmatpush1.msra.mxu0 0.0
    %2018 = vmatprep.subr.mxu0 0.0
    %2019 = vmatpush1.msra.mxu0 0.0
    %2020 = vmatprep.subr.mxu0 0.0
    %2021 = vmatpush1.msra.mxu0 0.0
    %2022 = vmatprep.mubr.f32.mxu0 0.0
    %2023 = vmatmul.mubr.f32.gmra.mrb[0].mxu0 %v1956
    %v2024 = vpop.f32.mrb[0].mxu0
    %v2025 = vadd.f32 0.0, %v2024
    %v2026 = vpop.f32.mrb[0].mxu0
    %2027 = vdwg.mxu0
    %2028 = vmatprep.subr.mxu0 0.0
    %2029 = vmatpush1.msra.mxu0 %v304
    %2030 = vmatprep.subr.mxu0 0.0
    %2031 = vmatpush1.msra.mxu0 %v305
    %2032 = vmatprep.subr.mxu0 0.0
    %2033 = vmatpush1.msra.mxu0 %v306
    %2034 = vmatprep.subr.mxu0 0.0
    %2035 = vmatpush1.msra.mxu0 %v307
    %2036 = vmatprep.subr.mxu0 0.0
    %2037 = vmatpush1.msra.mxu0 0.0
    %2038 = vmatprep.subr.mxu0 0.0
    %2039 = vmatpush1.msra.mxu0 0.0
    %2040 = vmatprep.subr.mxu0 0.0
    %2041 = vmatpush1.msra.mxu0 0.0
    %2042 = vmatprep.subr.mxu0 0.0
    %2043 = vmatpush1.msra.mxu0 0.0
    %2044 = vmatprep.subr.mxu0 0.0
    %2045 = vmatpush1.msra.mxu0 0.0
    %2046 = vmatprep.subr.mxu0 0.0
    %2047 = vmatpush1.msra.mxu0 0.0
    %2048 = vmatprep.subr.mxu0 0.0
    %2049 = vmatpush1.msra.mxu0 0.0
    %2050 = vmatprep.subr.mxu0 0.0
    %2051 = vmatpush1.msra.mxu0 0.0
    %2052 = vmatprep.subr.mxu0 0.0
    %2053 = vmatpush1.msra.mxu0 0.0
    %2054 = vmatprep.subr.mxu0 0.0
    %2055 = vmatpush1.msra.mxu0 0.0
    %2056 = vmatprep.subr.mxu0 0.0
    %2057 = vmatpush1.msra.mxu0 0.0
    %2058 = vmatprep.subr.mxu0 0.0
    %2059 = vmatpush1.msra.mxu0 0.0
    %2060 = vmatprep.subr.mxu0 0.0
    %2061 = vmatpush1.msra.mxu0 0.0
    %2062 = vmatprep.subr.mxu0 0.0
    %2063 = vmatpush1.msra.mxu0 0.0
    %2064 = vmatprep.subr.mxu0 0.0
    %2065 = vmatpush1.msra.mxu0 0.0
    %2066 = vmatprep.subr.mxu0 0.0
    %2067 = vmatpush1.msra.mxu0 0.0
    %2068 = vmatprep.subr.mxu0 0.0
    %2069 = vmatpush1.msra.mxu0 0.0
    %2070 = vmatprep.subr.mxu0 0.0
    %2071 = vmatpush1.msra.mxu0 0.0
    %2072 = vmatprep.subr.mxu0 0.0
    %2073 = vmatpush1.msra.mxu0 0.0
    %2074 = vmatprep.subr.mxu0 0.0
    %2075 = vmatpush1.msra.mxu0 0.0
    %2076 = vmatprep.subr.mxu0 0.0
    %2077 = vmatpush1.msra.mxu0 0.0
    %2078 = vmatprep.subr.mxu0 0.0
    %2079 = vmatpush1.msra.mxu0 0.0
    %2080 = vmatprep.subr.mxu0 0.0
    %2081 = vmatpush1.msra.mxu0 0.0
    %2082 = vmatprep.subr.mxu0 0.0
    %2083 = vmatpush1.msra.mxu0 0.0
    %2084 = vmatprep.subr.mxu0 0.0
    %2085 = vmatpush1.msra.mxu0 0.0
    %2086 = vmatprep.subr.mxu0 0.0
    %2087 = vmatpush1.msra.mxu0 0.0
    %2088 = vmatprep.subr.mxu0 0.0
    %2089 = vmatpush1.msra.mxu0 0.0
    %2090 = vmatprep.subr.mxu0 0.0
    %2091 = vmatpush1.msra.mxu0 0.0
    %2092 = vmatprep.mubr.f32.mxu0 0.0
    %2093 = vmatmul.mubr.f32.gmra.mrb[0].mxu0 %v1789
    %v2094 = vpop.f32.mrb[0].mxu0
    %v2095 = vadd.f32 %v2025, %v2094
    %v2096 = vpop.f32.mrb[0].mxu0
    %2097 = vdwg.mxu0
    %v2098 = vadd.f32 %v2095, %v317
    %v2099 = vtanh.pop %v2098
    %v2100 = vmul.f32 %v2099, %v323
    %v2101 = vadd.f32 %v2100, %v324
    %v2102 = vmul.f32 %v2101, %v1679
    %2104 = vrot.lane.b32.xlu0 %v2101, 64
    %v2105 = vpop.permute.xlu0 %2104
    %v2107 = vmul.f32 %v2101, %v2105
    %2109 = vrot.lane.b32.xlu0 %v2107, 32
    %v2110 = vpop.permute.xlu0 %2109
    %v2112 = vadd.f32 %v2102, %v2110
    %v2113 = vtanh.pop %v2112
    %2115 = vrot.lane.b32.xlu0 %v2113, 64
    %v2116 = vpop.permute.xlu0 %2115
    %v2118 = vmul.f32 %v2101, %v2116
    %v2119 = vmul.f32 %v1677, 0.0
    %v2120 = vadd.f32 %v2118, %v2119
    %v2121 = vmul.f32 %v1679, 0.0
    %v2122 = vadd.f32 %v2112, %v2121
    %2124 = vrot.lane.b32.xlu0 %v2120, 32
    %v2125 = vpop.permute.xlu0 %2124
    %2127 = vst.msk [vmem:[#allocation3 + $0x1] sm:$0x1] %vm797, %v2125
    %v2128 = vld [vmem:[#allocation2 + $0x4] sm:$0x1]
    %2130 = vrot.lane.b32.xlu0 %v1783, 32
    %v2131 = vpop.permute.xlu0 %2130
    %v2132 = vsel %vm332, %v2131, 0
    %2134 = vmatprep.subr.mxu0 0.0
    %2135 = vmatpush1.msra.mxu0 %v296
    %2136 = vmatprep.subr.mxu0 0.0
    %2137 = vmatpush1.msra.mxu0 %v297
    %2138 = vmatprep.subr.mxu0 0.0
    %2139 = vmatpush1.msra.mxu0 %v298
    %2140 = vmatprep.subr.mxu0 0.0
    %2141 = vmatpush1.msra.mxu0 %v299
    %2142 = vmatprep.subr.mxu0 0.0
    %2143 = vmatpush1.msra.mxu0 0.0
    %2144 = vmatprep.subr.mxu0 0.0
    %2145 = vmatpush1.msra.mxu0 0.0
    %2146 = vmatprep.subr.mxu0 0.0
    %2147 = vmatpush1.msra.mxu0 0.0
    %2148 = vmatprep.subr.mxu0 0.0
    %2149 = vmatpush1.msra.mxu0 0.0
    %2150 = vmatprep.subr.mxu0 0.0
    %2151 = vmatpush1.msra.mxu0 0.0
    %2152 = vmatprep.subr.mxu0 0.0
    %2153 = vmatpush1.msra.mxu0 0.0
    %2154 = vmatprep.subr.mxu0 0.0
    %2155 = vmatpush1.msra.mxu0 0.0
    %2156 = vmatprep.subr.mxu0 0.0
    %2157 = vmatpush1.msra.mxu0 0.0
    %2158 = vmatprep.subr.mxu0 0.0
    %2159 = vmatpush1.msra.mxu0 0.0
    %2160 = vmatprep.subr.mxu0 0.0
    %2161 = vmatpush1.msra.mxu0 0.0
    %2162 = vmatprep.subr.mxu0 0.0
    %2163 = vmatpush1.msra.mxu0 0.0
    %2164 = vmatprep.subr.mxu0 0.0
    %2165 = vmatpush1.msra.mxu0 0.0
    %2166 = vmatprep.subr.mxu0 0.0
    %2167 = vmatpush1.msra.mxu0 0.0
    %2168 = vmatprep.subr.mxu0 0.0
    %2169 = vmatpush1.msra.mxu0 0.0
    %2170 = vmatprep.subr.mxu0 0.0
    %2171 = vmatpush1.msra.mxu0 0.0
    %2172 = vmatprep.subr.mxu0 0.0
    %2173 = vmatpush1.msra.mxu0 0.0
    %2174 = vmatprep.subr.mxu0 0.0
    %2175 = vmatpush1.msra.mxu0 0.0
    %2176 = vmatprep.subr.mxu0 0.0
    %2177 = vmatpush1.msra.mxu0 0.0
    %2178 = vmatprep.subr.mxu0 0.0
    %2179 = vmatpush1.msra.mxu0 0.0
    %2180 = vmatprep.subr.mxu0 0.0
    %2181 = vmatpush1.msra.mxu0 0.0
    %2182 = vmatprep.subr.mxu0 0.0
    %2183 = vmatpush1.msra.mxu0 0.0
    %2184 = vmatprep.subr.mxu0 0.0
    %2185 = vmatpush1.msra.mxu0 0.0
    %2186 = vmatprep.subr.mxu0 0.0
    %2187 = vmatpush1.msra.mxu0 0.0
    %2188 = vmatprep.subr.mxu0 0.0
    %2189 = vmatpush1.msra.mxu0 0.0
    %2190 = vmatprep.subr.mxu0 0.0
    %2191 = vmatpush1.msra.mxu0 0.0
    %2192 = vmatprep.subr.mxu0 0.0
    %2193 = vmatpush1.msra.mxu0 0.0
    %2194 = vmatprep.subr.mxu0 0.0
    %2195 = vmatpush1.msra.mxu0 0.0
    %2196 = vmatprep.subr.mxu0 0.0
    %2197 = vmatpush1.msra.mxu0 0.0
    %2198 = vmatprep.mubr.f32.mxu0 0.0
    %2199 = vmatmul.mubr.f32.gmra.mrb[0].mxu0 %v2132
    %v2200 = vpop.f32.mrb[0].mxu0
    %v2201 = vadd.f32 0.0, %v2200
    %v2202 = vpop.f32.mrb[0].mxu0
    %2203 = vdwg.mxu0
    %v2204 = vadd.f32 %v2128, %v2201
    %v2205 = vtanh.pop %v2204
    %v2206 = vmul.f32 %v2205, %v323
    %v2207 = vadd.f32 %v2206, %v324
    %v2208 = vmul.f32 %v2207, %v1785
    %2210 = vrot.lane.b32.xlu0 %v2207, 64
    %v2211 = vpop.permute.xlu0 %2210
    %v2213 = vmul.f32 %v2207, %v2211
    %2215 = vrot.lane.b32.xlu0 %v2213, 32
    %v2216 = vpop.permute.xlu0 %2215
    %v2218 = vadd.f32 %v2208, %v2216
    %v2219 = vtanh.pop %v2218
    %2221 = vrot.lane.b32.xlu0 %v2219, 64
    %v2222 = vpop.permute.xlu0 %2221
    %v2224 = vmul.f32 %v2207, %v2222
    %v2225 = vmul.f32 %v1783, 0.0
    %v2226 = vadd.f32 %v2224, %v2225
    %v2227 = vmul.f32 %v1785, 0.0
    %v2228 = vadd.f32 %v2218, %v2227
    %2230 = vrot.lane.b32.xlu0 %v1953, 32
    %v2231 = vpop.permute.xlu0 %2230
    %v2232 = vsel %vm332, %v2231, 0
    %2234 = vmatprep.subr.mxu0 0.0
    %2235 = vmatpush1.msra.mxu0 %v308
    %2236 = vmatprep.subr.mxu0 0.0
    %2237 = vmatpush1.msra.mxu0 %v309
    %2238 = vmatprep.subr.mxu0 0.0
    %2239 = vmatpush1.msra.mxu0 %v310
    %2240 = vmatprep.subr.mxu0 0.0
    %2241 = vmatpush1.msra.mxu0 %v311
    %2242 = vmatprep.subr.mxu0 0.0
    %2243 = vmatpush1.msra.mxu0 0.0
    %2244 = vmatprep.subr.mxu0 0.0
    %2245 = vmatpush1.msra.mxu0 0.0
    %2246 = vmatprep.subr.mxu0 0.0
    %2247 = vmatpush1.msra.mxu0 0.0
    %2248 = vmatprep.subr.mxu0 0.0
    %2249 = vmatpush1.msra.mxu0 0.0
    %2250 = vmatprep.subr.mxu0 0.0
    %2251 = vmatpush1.msra.mxu0 0.0
    %2252 = vmatprep.subr.mxu0 0.0
    %2253 = vmatpush1.msra.mxu0 0.0
    %2254 = vmatprep.subr.mxu0 0.0
    %2255 = vmatpush1.msra.mxu0 0.0
    %2256 = vmatprep.subr.mxu0 0.0
    %2257 = vmatpush1.msra.mxu0 0.0
    %2258 = vmatprep.subr.mxu0 0.0
    %2259 = vmatpush1.msra.mxu0 0.0
    %2260 = vmatprep.subr.mxu0 0.0
    %2261 = vmatpush1.msra.mxu0 0.0
    %2262 = vmatprep.subr.mxu0 0.0
    %2263 = vmatpush1.msra.mxu0 0.0
    %2264 = vmatprep.subr.mxu0 0.0
    %2265 = vmatpush1.msra.mxu0 0.0
    %2266 = vmatprep.subr.mxu0 0.0
    %2267 = vmatpush1.msra.mxu0 0.0
    %2268 = vmatprep.subr.mxu0 0.0
    %2269 = vmatpush1.msra.mxu0 0.0
    %2270 = vmatprep.subr.mxu0 0.0
    %2271 = vmatpush1.msra.mxu0 0.0
    %2272 = vmatprep.subr.mxu0 0.0
    %2273 = vmatpush1.msra.mxu0 0.0
    %2274 = vmatprep.subr.mxu0 0.0
    %2275 = vmatpush1.msra.mxu0 0.0
    %2276 = vmatprep.subr.mxu0 0.0
    %2277 = vmatpush1.msra.mxu0 0.0
    %2278 = vmatprep.subr.mxu0 0.0
    %2279 = vmatpush1.msra.mxu0 0.0
    %2280 = vmatprep.subr.mxu0 0.0
    %2281 = vmatpush1.msra.mxu0 0.0
    %2282 = vmatprep.subr.mxu0 0.0
    %2283 = vmatpush1.msra.mxu0 0.0
    %2284 = vmatprep.subr.mxu0 0.0
    %2285 = vmatpush1.msra.mxu0 0.0
    %2286 = vmatprep.subr.mxu0 0.0
    %2287 = vmatpush1.msra.mxu0 0.0
    %2288 = vmatprep.subr.mxu0 0.0
    %2289 = vmatpush1.msra.mxu0 0.0
    %2290 = vmatprep.subr.mxu0 0.0
    %2291 = vmatpush1.msra.mxu0 0.0
    %2292 = vmatprep.subr.mxu0 0.0
    %2293 = vmatpush1.msra.mxu0 0.0
    %2294 = vmatprep.subr.mxu0 0.0
    %2295 = vmatpush1.msra.mxu0 0.0
    %2296 = vmatprep.subr.mxu0 0.0
    %2297 = vmatpush1.msra.mxu0 0.0
    %2298 = vmatprep.mubr.f32.mxu0 0.0
    %2299 = vmatmul.mubr.f32.gmra.mrb[0].mxu0 %v2232
    %v2300 = vpop.f32.mrb[0].mxu0
    %v2301 = vadd.f32 0.0, %v2300
    %v2302 = vpop.f32.mrb[0].mxu0
    %2303 = vdwg.mxu0
    %2304 = vmatprep.subr.mxu0 0.0
    %2305 = vmatpush1.msra.mxu0 %v300
    %2306 = vmatprep.subr.mxu0 0.0
    %2307 = vmatpush1.msra.mxu0 %v301
    %2308 = vmatprep.subr.mxu0 0.0
    %2309 = vmatpush1.msra.mxu0 %v302
    %2310 = vmatprep.subr.mxu0 0.0
    %2311 = vmatpush1.msra.mxu0 %v303
    %2312 = vmatprep.subr.mxu0 0.0
    %2313 = vmatpush1.msra.mxu0 0.0
    %2314 = vmatprep.subr.mxu0 0.0
    %2315 = vmatpush1.msra.mxu0 0.0
    %2316 = vmatprep.subr.mxu0 0.0
    %2317 = vmatpush1.msra.mxu0 0.0
    %2318 = vmatprep.subr.mxu0 0.0
    %2319 = vmatpush1.msra.mxu0 0.0
    %2320 = vmatprep.subr.mxu0 0.0
    %2321 = vmatpush1.msra.mxu0 0.0
    %2322 = vmatprep.subr.mxu0 0.0
    %2323 = vmatpush1.msra.mxu0 0.0
    %2324 = vmatprep.subr.mxu0 0.0
    %2325 = vmatpush1.msra.mxu0 0.0
    %2326 = vmatprep.subr.mxu0 0.0
    %2327 = vmatpush1.msra.mxu0 0.0
    %2328 = vmatprep.subr.mxu0 0.0
    %2329 = vmatpush1.msra.mxu0 0.0
    %2330 = vmatprep.subr.mxu0 0.0
    %2331 = vmatpush1.msra.mxu0 0.0
    %2332 = vmatprep.subr.mxu0 0.0
    %2333 = vmatpush1.msra.mxu0 0.0
    %2334 = vmatprep.subr.mxu0 0.0
    %2335 = vmatpush1.msra.mxu0 0.0
    %2336 = vmatprep.subr.mxu0 0.0
    %2337 = vmatpush1.msra.mxu0 0.0
    %2338 = vmatprep.subr.mxu0 0.0
    %2339 = vmatpush1.msra.mxu0 0.0
    %2340 = vmatprep.subr.mxu0 0.0
    %2341 = vmatpush1.msra.mxu0 0.0
    %2342 = vmatprep.subr.mxu0 0.0
    %2343 = vmatpush1.msra.mxu0 0.0
    %2344 = vmatprep.subr.mxu0 0.0
    %2345 = vmatpush1.msra.mxu0 0.0
    %2346 = vmatprep.subr.mxu0 0.0
    %2347 = vmatpush1.msra.mxu0 0.0
    %2348 = vmatprep.subr.mxu0 0.0
    %2349 = vmatpush1.msra.mxu0 0.0
    %2350 = vmatprep.subr.mxu0 0.0
    %2351 = vmatpush1.msra.mxu0 0.0
    %2352 = vmatprep.subr.mxu0 0.0
    %2353 = vmatpush1.msra.mxu0 0.0
    %2354 = vmatprep.subr.mxu0 0.0
    %2355 = vmatpush1.msra.mxu0 0.0
    %2356 = vmatprep.subr.mxu0 0.0
    %2357 = vmatpush1.msra.mxu0 0.0
    %2358 = vmatprep.subr.mxu0 0.0
    %2359 = vmatpush1.msra.mxu0 0.0
    %2360 = vmatprep.subr.mxu0 0.0
    %2361 = vmatpush1.msra.mxu0 0.0
    %2362 = vmatprep.subr.mxu0 0.0
    %2363 = vmatpush1.msra.mxu0 0.0
    %2364 = vmatprep.subr.mxu0 0.0
    %2365 = vmatpush1.msra.mxu0 0.0
    %2366 = vmatprep.subr.mxu0 0.0
    %2367 = vmatpush1.msra.mxu0 0.0
    %2368 = vmatprep.mubr.f32.mxu0 0.0
    %2369 = vmatmul.mubr.f32.gmra.mrb[0].mxu0 %v2132
    %v2370 = vpop.f32.mrb[0].mxu0
    %v2371 = vadd.f32 %v2301, %v2370
    %v2372 = vpop.f32.mrb[0].mxu0
    %2373 = vdwg.mxu0
    %v2374 = vadd.f32 %v2371, %v316
    %v2375 = vtanh.pop %v2374
    %v2376 = vmul.f32 %v2375, %v323
    %v2377 = vadd.f32 %v2376, %v324
    %v2378 = vmul.f32 %v2377, %v1955
    %2380 = vrot.lane.b32.xlu0 %v2377, 64
    %v2381 = vpop.permute.xlu0 %2380
    %v2383 = vmul.f32 %v2377, %v2381
    %2385 = vrot.lane.b32.xlu0 %v2383, 32
    %v2386 = vpop.permute.xlu0 %2385
    %v2388 = vadd.f32 %v2378, %v2386
    %v2389 = vtanh.pop %v2388
    %2391 = vrot.lane.b32.xlu0 %v2389, 64
    %v2392 = vpop.permute.xlu0 %2391
    %v2394 = vmul.f32 %v2377, %v2392
    %v2395 = vmul.f32 %v1953, 0.0
    %v2396 = vadd.f32 %v2394, %v2395
    %v2397 = vmul.f32 %v1955, 0.0
    %v2398 = vadd.f32 %v2388, %v2397
    %v2399 = vsel %vm332, %v2125, 0
    %2401 = vmatprep.subr.mxu0 0.0
    %2402 = vmatpush1.msra.mxu0 %v312
    %2403 = vmatprep.subr.mxu0 0.0
    %2404 = vmatpush1.msra.mxu0 %v313
    %2405 = vmatprep.subr.mxu0 0.0
    %2406 = vmatpush1.msra.mxu0 %v314
    %2407 = vmatprep.subr.mxu0 0.0
    %2408 = vmatpush1.msra.mxu0 %v315
    %2409 = vmatprep.subr.mxu0 0.0
    %2410 = vmatpush1.msra.mxu0 0.0
    %2411 = vmatprep.subr.mxu0 0.0
    %2412 = vmatpush1.msra.mxu0 0.0
    %2413 = vmatprep.subr.mxu0 0.0
    %2414 = vmatpush1.msra.mxu0 0.0
    %2415 = vmatprep.subr.mxu0 0.0
    %2416 = vmatpush1.msra.mxu0 0.0
    %2417 = vmatprep.subr.mxu0 0.0
    %2418 = vmatpush1.msra.mxu0 0.0
    %2419 = vmatprep.subr.mxu0 0.0
    %2420 = vmatpush1.msra.mxu0 0.0
    %2421 = vmatprep.subr.mxu0 0.0
    %2422 = vmatpush1.msra.mxu0 0.0
    %2423 = vmatprep.subr.mxu0 0.0
    %2424 = vmatpush1.msra.mxu0 0.0
    %2425 = vmatprep.subr.mxu0 0.0
    %2426 = vmatpush1.msra.mxu0 0.0
    %2427 = vmatprep.subr.mxu0 0.0
    %2428 = vmatpush1.msra.mxu0 0.0
    %2429 = vmatprep.subr.mxu0 0.0
    %2430 = vmatpush1.msra.mxu0 0.0
    %2431 = vmatprep.subr.mxu0 0.0
    %2432 = vmatpush1.msra.mxu0 0.0
    %2433 = vmatprep.subr.mxu0 0.0
    %2434 = vmatpush1.msra.mxu0 0.0
    %2435 = vmatprep.subr.mxu0 0.0
    %2436 = vmatpush1.msra.mxu0 0.0
    %2437 = vmatprep.subr.mxu0 0.0
    %2438 = vmatpush1.msra.mxu0 0.0
    %2439 = vmatprep.subr.mxu0 0.0
    %2440 = vmatpush1.msra.mxu0 0.0
    %2441 = vmatprep.subr.mxu0 0.0
    %2442 = vmatpush1.msra.mxu0 0.0
    %2443 = vmatprep.subr.mxu0 0.0
    %2444 = vmatpush1.msra.mxu0 0.0
    %2445 = vmatprep.subr.mxu0 0.0
    %2446 = vmatpush1.msra.mxu0 0.0
    %2447 = vmatprep.subr.mxu0 0.0
    %2448 = vmatpush1.msra.mxu0 0.0
    %2449 = vmatprep.subr.mxu0 0.0
    %2450 = vmatpush1.msra.mxu0 0.0
    %2451 = vmatprep.subr.mxu0 0.0
    %2452 = vmatpush1.msra.mxu0 0.0
    %2453 = vmatprep.subr.mxu0 0.0
    %2454 = vmatpush1.msra.mxu0 0.0
    %2455 = vmatprep.subr.mxu0 0.0
    %2456 = vmatpush1.msra.mxu0 0.0
    %2457 = vmatprep.subr.mxu0 0.0
    %2458 = vmatpush1.msra.mxu0 0.0
    %2459 = vmatprep.subr.mxu0 0.0
    %2460 = vmatpush1.msra.mxu0 0.0
    %2461 = vmatprep.subr.mxu0 0.0
    %2462 = vmatpush1.msra.mxu0 0.0
    %2463 = vmatprep.subr.mxu0 0.0
    %2464 = vmatpush1.msra.mxu0 0.0
    %2465 = vmatprep.mubr.f32.mxu0 0.0
    %2466 = vmatmul.mubr.f32.gmra.mrb[0].mxu0 %v2399
    %v2467 = vpop.f32.mrb[0].mxu0
    %v2468 = vadd.f32 0.0, %v2467
    %v2469 = vpop.f32.mrb[0].mxu0
    %2470 = vdwg.mxu0
    %2471 = vmatprep.subr.mxu0 0.0
    %2472 = vmatpush1.msra.mxu0 %v304
    %2473 = vmatprep.subr.mxu0 0.0
    %2474 = vmatpush1.msra.mxu0 %v305
    %2475 = vmatprep.subr.mxu0 0.0
    %2476 = vmatpush1.msra.mxu0 %v306
    %2477 = vmatprep.subr.mxu0 0.0
    %2478 = vmatpush1.msra.mxu0 %v307
    %2479 = vmatprep.subr.mxu0 0.0
    %2480 = vmatpush1.msra.mxu0 0.0
    %2481 = vmatprep.subr.mxu0 0.0
    %2482 = vmatpush1.msra.mxu0 0.0
    %2483 = vmatprep.subr.mxu0 0.0
    %2484 = vmatpush1.msra.mxu0 0.0
    %2485 = vmatprep.subr.mxu0 0.0
    %2486 = vmatpush1.msra.mxu0 0.0
    %2487 = vmatprep.subr.mxu0 0.0
    %2488 = vmatpush1.msra.mxu0 0.0
    %2489 = vmatprep.subr.mxu0 0.0
    %2490 = vmatpush1.msra.mxu0 0.0
    %2491 = vmatprep.subr.mxu0 0.0
    %2492 = vmatpush1.msra.mxu0 0.0
    %2493 = vmatprep.subr.mxu0 0.0
    %2494 = vmatpush1.msra.mxu0 0.0
    %2495 = vmatprep.subr.mxu0 0.0
    %2496 = vmatpush1.msra.mxu0 0.0
    %2497 = vmatprep.subr.mxu0 0.0
    %2498 = vmatpush1.msra.mxu0 0.0
    %2499 = vmatprep.subr.mxu0 0.0
    %2500 = vmatpush1.msra.mxu0 0.0
    %2501 = vmatprep.subr.mxu0 0.0
    %2502 = vmatpush1.msra.mxu0 0.0
    %2503 = vmatprep.subr.mxu0 0.0
    %2504 = vmatpush1.msra.mxu0 0.0
    %2505 = vmatprep.subr.mxu0 0.0
    %2506 = vmatpush1.msra.mxu0 0.0
    %2507 = vmatprep.subr.mxu0 0.0
    %2508 = vmatpush1.msra.mxu0 0.0
    %2509 = vmatprep.subr.mxu0 0.0
    %2510 = vmatpush1.msra.mxu0 0.0
    %2511 = vmatprep.subr.mxu0 0.0
    %2512 = vmatpush1.msra.mxu0 0.0
    %2513 = vmatprep.subr.mxu0 0.0
    %2514 = vmatpush1.msra.mxu0 0.0
    %2515 = vmatprep.subr.mxu0 0.0
    %2516 = vmatpush1.msra.mxu0 0.0
    %2517 = vmatprep.subr.mxu0 0.0
    %2518 = vmatpush1.msra.mxu0 0.0
    %2519 = vmatprep.subr.mxu0 0.0
    %2520 = vmatpush1.msra.mxu0 0.0
    %2521 = vmatprep.subr.mxu0 0.0
    %2522 = vmatpush1.msra.mxu0 0.0
    %2523 = vmatprep.subr.mxu0 0.0
    %2524 = vmatpush1.msra.mxu0 0.0
    %2525 = vmatprep.subr.mxu0 0.0
    %2526 = vmatpush1.msra.mxu0 0.0
    %2527 = vmatprep.subr.mxu0 0.0
    %2528 = vmatpush1.msra.mxu0 0.0
    %2529 = vmatprep.subr.mxu0 0.0
    %2530 = vmatpush1.msra.mxu0 0.0
    %2531 = vmatprep.subr.mxu0 0.0
    %2532 = vmatpush1.msra.mxu0 0.0
    %2533 = vmatprep.subr.mxu0 0.0
    %2534 = vmatpush1.msra.mxu0 0.0
    %2535 = vmatprep.mubr.f32.mxu0 0.0
    %2536 = vmatmul.mubr.f32.gmra.mrb[0].mxu0 %v2232
    %v2537 = vpop.f32.mrb[0].mxu0
    %v2538 = vadd.f32 %v2468, %v2537
    %v2539 = vpop.f32.mrb[0].mxu0
    %2540 = vdwg.mxu0
    %v2541 = vadd.f32 %v2538, %v317
    %v2542 = vtanh.pop %v2541
    %v2543 = vmul.f32 %v2542, %v323
    %v2544 = vadd.f32 %v2543, %v324
    %v2545 = vmul.f32 %v2544, %v2122
    %2547 = vrot.lane.b32.xlu0 %v2544, 64
    %v2548 = vpop.permute.xlu0 %2547
    %v2550 = vmul.f32 %v2544, %v2548
    %2552 = vrot.lane.b32.xlu0 %v2550, 32
    %v2553 = vpop.permute.xlu0 %2552
    %v2555 = vadd.f32 %v2545, %v2553
    %v2556 = vtanh.pop %v2555
    %2558 = vrot.lane.b32.xlu0 %v2556, 64
    %v2559 = vpop.permute.xlu0 %2558
    %v2561 = vmul.f32 %v2544, %v2559
    %v2562 = vmul.f32 %v2120, 0.0
    %v2563 = vadd.f32 %v2561, %v2562
    %v2564 = vmul.f32 %v2122, 0.0
    %v2565 = vadd.f32 %v2555, %v2564
    %2567 = vrot.lane.b32.xlu0 %v2563, 32
    %v2568 = vpop.permute.xlu0 %2567
    %2570 = vst.msk [vmem:[#allocation3 + $0x2] sm:$0x1] %vm797, %v2568
    %v2571 = vld [vmem:[#allocation2 + $0x5] sm:$0x1]
    %2573 = vrot.lane.b32.xlu0 %v2226, 32
    %v2574 = vpop.permute.xlu0 %2573
    %v2575 = vsel %vm332, %v2574, 0
    %2577 = vmatprep.subr.mxu0 0.0
    %2578 = vmatpush1.msra.mxu0 %v296
    %2579 = vmatprep.subr.mxu0 0.0
    %2580 = vmatpush1.msra.mxu0 %v297
    %2581 = vmatprep.subr.mxu0 0.0
    %2582 = vmatpush1.msra.mxu0 %v298
    %2583 = vmatprep.subr.mxu0 0.0
    %2584 = vmatpush1.msra.mxu0 %v299
    %2585 = vmatprep.subr.mxu0 0.0
    %2586 = vmatpush1.msra.mxu0 0.0
    %2587 = vmatprep.subr.mxu0 0.0
    %2588 = vmatpush1.msra.mxu0 0.0
    %2589 = vmatprep.subr.mxu0 0.0
    %2590 = vmatpush1.msra.mxu0 0.0
    %2591 = vmatprep.subr.mxu0 0.0
    %2592 = vmatpush1.msra.mxu0 0.0
    %2593 = vmatprep.subr.mxu0 0.0
    %2594 = vmatpush1.msra.mxu0 0.0
    %2595 = vmatprep.subr.mxu0 0.0
    %2596 = vmatpush1.msra.mxu0 0.0
    %2597 = vmatprep.subr.mxu0 0.0
    %2598 = vmatpush1.msra.mxu0 0.0
    %2599 = vmatprep.subr.mxu0 0.0
    %2600 = vmatpush1.msra.mxu0 0.0
    %2601 = vmatprep.subr.mxu0 0.0
    %2602 = vmatpush1.msra.mxu0 0.0
    %2603 = vmatprep.subr.mxu0 0.0
    %2604 = vmatpush1.msra.mxu0 0.0
    %2605 = vmatprep.subr.mxu0 0.0
    %2606 = vmatpush1.msra.mxu0 0.0
    %2607 = vmatprep.subr.mxu0 0.0
    %2608 = vmatpush1.msra.mxu0 0.0
    %2609 = vmatprep.subr.mxu0 0.0
    %2610 = vmatpush1.msra.mxu0 0.0
    %2611 = vmatprep.subr.mxu0 0.0
    %2612 = vmatpush1.msra.mxu0 0.0
    %2613 = vmatprep.subr.mxu0 0.0
    %2614 = vmatpush1.msra.mxu0 0.0
    %2615 = vmatprep.subr.mxu0 0.0
    %2616 = vmatpush1.msra.mxu0 0.0
    %2617 = vmatprep.subr.mxu0 0.0
    %2618 = vmatpush1.msra.mxu0 0.0
    %2619 = vmatprep.subr.mxu0 0.0
    %2620 = vmatpush1.msra.mxu0 0.0
    %2621 = vmatprep.subr.mxu0 0.0
    %2622 = vmatpush1.msra.mxu0 0.0
    %2623 = vmatprep.subr.mxu0 0.0
    %2624 = vmatpush1.msra.mxu0 0.0
    %2625 = vmatprep.subr.mxu0 0.0
    %2626 = vmatpush1.msra.mxu0 0.0
    %2627 = vmatprep.subr.mxu0 0.0
    %2628 = vmatpush1.msra.mxu0 0.0
    %2629 = vmatprep.subr.mxu0 0.0
    %2630 = vmatpush1.msra.mxu0 0.0
    %2631 = vmatprep.subr.mxu0 0.0
    %2632 = vmatpush1.msra.mxu0 0.0
    %2633 = vmatprep.subr.mxu0 0.0
    %2634 = vmatpush1.msra.mxu0 0.0
    %2635 = vmatprep.subr.mxu0 0.0
    %2636 = vmatpush1.msra.mxu0 0.0
    %2637 = vmatprep.subr.mxu0 0.0
    %2638 = vmatpush1.msra.mxu0 0.0
    %2639 = vmatprep.subr.mxu0 0.0
    %2640 = vmatpush1.msra.mxu0 0.0
    %2641 = vmatprep.mubr.f32.mxu0 0.0
    %2642 = vmatmul.mubr.f32.gmra.mrb[0].mxu0 %v2575
    %v2643 = vpop.f32.mrb[0].mxu0
    %v2644 = vadd.f32 0.0, %v2643
    %v2645 = vpop.f32.mrb[0].mxu0
    %2646 = vdwg.mxu0
    %v2647 = vadd.f32 %v2571, %v2644
    %v2648 = vtanh.pop %v2647
    %v2649 = vmul.f32 %v2648, %v323
    %v2650 = vadd.f32 %v2649, %v324
    %v2651 = vmul.f32 %v2650, %v2228
    %2653 = vrot.lane.b32.xlu0 %v2650, 64
    %v2654 = vpop.permute.xlu0 %2653
    %v2656 = vmul.f32 %v2650, %v2654
    %2658 = vrot.lane.b32.xlu0 %v2656, 32
    %v2659 = vpop.permute.xlu0 %2658
    %v2661 = vadd.f32 %v2651, %v2659
    %v2662 = vtanh.pop %v2661
    %2664 = vrot.lane.b32.xlu0 %v2662, 64
    %v2665 = vpop.permute.xlu0 %2664
    %v2667 = vmul.f32 %v2650, %v2665
    %v2668 = vmul.f32 %v2226, 0.0
    %v2669 = vadd.f32 %v2667, %v2668
    %v2670 = vmul.f32 %v2228, 0.0
    %v2671 = vadd.f32 %v2661, %v2670
    %2673 = vrot.lane.b32.xlu0 %v2396, 32
    %v2674 = vpop.permute.xlu0 %2673
    %v2675 = vsel %vm332, %v2674, 0
    %2677 = vmatprep.subr.mxu0 0.0
    %2678 = vmatpush1.msra.mxu0 %v308
    %2679 = vmatprep.subr.mxu0 0.0
    %2680 = vmatpush1.msra.mxu0 %v309
    %2681 = vmatprep.subr.mxu0 0.0
    %2682 = vmatpush1.msra.mxu0 %v310
    %2683 = vmatprep.subr.mxu0 0.0
    %2684 = vmatpush1.msra.mxu0 %v311
    %2685 = vmatprep.subr.mxu0 0.0
    %2686 = vmatpush1.msra.mxu0 0.0
    %2687 = vmatprep.subr.mxu0 0.0
    %2688 = vmatpush1.msra.mxu0 0.0
    %2689 = vmatprep.subr.mxu0 0.0
    %2690 = vmatpush1.msra.mxu0 0.0
    %2691 = vmatprep.subr.mxu0 0.0
    %2692 = vmatpush1.msra.mxu0 0.0
    %2693 = vmatprep.subr.mxu0 0.0
    %2694 = vmatpush1.msra.mxu0 0.0
    %2695 = vmatprep.subr.mxu0 0.0
    %2696 = vmatpush1.msra.mxu0 0.0
    %2697 = vmatprep.subr.mxu0 0.0
    %2698 = vmatpush1.msra.mxu0 0.0
    %2699 = vmatprep.subr.mxu0 0.0
    %2700 = vmatpush1.msra.mxu0 0.0
    %2701 = vmatprep.subr.mxu0 0.0
    %2702 = vmatpush1.msra.mxu0 0.0
    %2703 = vmatprep.subr.mxu0 0.0
    %2704 = vmatpush1.msra.mxu0 0.0
    %2705 = vmatprep.subr.mxu0 0.0
    %2706 = vmatpush1.msra.mxu0 0.0
    %2707 = vmatprep.subr.mxu0 0.0
    %2708 = vmatpush1.msra.mxu0 0.0
    %2709 = vmatprep.subr.mxu0 0.0
    %2710 = vmatpush1.msra.mxu0 0.0
    %2711 = vmatprep.subr.mxu0 0.0
    %2712 = vmatpush1.msra.mxu0 0.0
    %2713 = vmatprep.subr.mxu0 0.0
    %2714 = vmatpush1.msra.mxu0 0.0
    %2715 = vmatprep.subr.mxu0 0.0
    %2716 = vmatpush1.msra.mxu0 0.0
    %2717 = vmatprep.subr.mxu0 0.0
    %2718 = vmatpush1.msra.mxu0 0.0
    %2719 = vmatprep.subr.mxu0 0.0
    %2720 = vmatpush1.msra.mxu0 0.0
    %2721 = vmatprep.subr.mxu0 0.0
    %2722 = vmatpush1.msra.mxu0 0.0
    %2723 = vmatprep.subr.mxu0 0.0
    %2724 = vmatpush1.msra.mxu0 0.0
    %2725 = vmatprep.subr.mxu0 0.0
    %2726 = vmatpush1.msra.mxu0 0.0
    %2727 = vmatprep.subr.mxu0 0.0
    %2728 = vmatpush1.msra.mxu0 0.0
    %2729 = vmatprep.subr.mxu0 0.0
    %2730 = vmatpush1.msra.mxu0 0.0
    %2731 = vmatprep.subr.mxu0 0.0
    %2732 = vmatpush1.msra.mxu0 0.0
    %2733 = vmatprep.subr.mxu0 0.0
    %2734 = vmatpush1.msra.mxu0 0.0
    %2735 = vmatprep.subr.mxu0 0.0
    %2736 = vmatpush1.msra.mxu0 0.0
    %2737 = vmatprep.subr.mxu0 0.0
    %2738 = vmatpush1.msra.mxu0 0.0
    %2739 = vmatprep.subr.mxu0 0.0
    %2740 = vmatpush1.msra.mxu0 0.0
    %2741 = vmatprep.mubr.f32.mxu0 0.0
    %2742 = vmatmul.mubr.f32.gmra.mrb[0].mxu0 %v2675
    %v2743 = vpop.f32.mrb[0].mxu0
    %v2744 = vadd.f32 0.0, %v2743
    %v2745 = vpop.f32.mrb[0].mxu0
    %2746 = vdwg.mxu0
    %2747 = vmatprep.subr.mxu0 0.0
    %2748 = vmatpush1.msra.mxu0 %v300
    %2749 = vmatprep.subr.mxu0 0.0
    %2750 = vmatpush1.msra.mxu0 %v301
    %2751 = vmatprep.subr.mxu0 0.0
    %2752 = vmatpush1.msra.mxu0 %v302
    %2753 = vmatprep.subr.mxu0 0.0
    %2754 = vmatpush1.msra.mxu0 %v303
    %2755 = vmatprep.subr.mxu0 0.0
    %2756 = vmatpush1.msra.mxu0 0.0
    %2757 = vmatprep.subr.mxu0 0.0
    %2758 = vmatpush1.msra.mxu0 0.0
    %2759 = vmatprep.subr.mxu0 0.0
    %2760 = vmatpush1.msra.mxu0 0.0
    %2761 = vmatprep.subr.mxu0 0.0
    %2762 = vmatpush1.msra.mxu0 0.0
    %2763 = vmatprep.subr.mxu0 0.0
    %2764 = vmatpush1.msra.mxu0 0.0
    %2765 = vmatprep.subr.mxu0 0.0
    %2766 = vmatpush1.msra.mxu0 0.0
    %2767 = vmatprep.subr.mxu0 0.0
    %2768 = vmatpush1.msra.mxu0 0.0
    %2769 = vmatprep.subr.mxu0 0.0
    %2770 = vmatpush1.msra.mxu0 0.0
    %2771 = vmatprep.subr.mxu0 0.0
    %2772 = vmatpush1.msra.mxu0 0.0
    %2773 = vmatprep.subr.mxu0 0.0
    %2774 = vmatpush1.msra.mxu0 0.0
    %2775 = vmatprep.subr.mxu0 0.0
    %2776 = vmatpush1.msra.mxu0 0.0
    %2777 = vmatprep.subr.mxu0 0.0
    %2778 = vmatpush1.msra.mxu0 0.0
    %2779 = vmatprep.subr.mxu0 0.0
    %2780 = vmatpush1.msra.mxu0 0.0
    %2781 = vmatprep.subr.mxu0 0.0
    %2782 = vmatpush1.msra.mxu0 0.0
    %2783 = vmatprep.subr.mxu0 0.0
    %2784 = vmatpush1.msra.mxu0 0.0
    %2785 = vmatprep.subr.mxu0 0.0
    %2786 = vmatpush1.msra.mxu0 0.0
    %2787 = vmatprep.subr.mxu0 0.0
    %2788 = vmatpush1.msra.mxu0 0.0
    %2789 = vmatprep.subr.mxu0 0.0
    %2790 = vmatpush1.msra.mxu0 0.0
    %2791 = vmatprep.subr.mxu0 0.0
    %2792 = vmatpush1.msra.mxu0 0.0
    %2793 = vmatprep.subr.mxu0 0.0
    %2794 = vmatpush1.msra.mxu0 0.0
    %2795 = vmatprep.subr.mxu0 0.0
    %2796 = vmatpush1.msra.mxu0 0.0
    %2797 = vmatprep.subr.mxu0 0.0
    %2798 = vmatpush1.msra.mxu0 0.0
    %2799 = vmatprep.subr.mxu0 0.0
    %2800 = vmatpush1.msra.mxu0 0.0
    %2801 = vmatprep.subr.mxu0 0.0
    %2802 = vmatpush1.msra.mxu0 0.0
    %2803 = vmatprep.subr.mxu0 0.0
    %2804 = vmatpush1.msra.mxu0 0.0
    %2805 = vmatprep.subr.mxu0 0.0
    %2806 = vmatpush1.msra.mxu0 0.0
    %2807 = vmatprep.subr.mxu0 0.0
    %2808 = vmatpush1.msra.mxu0 0.0
    %2809 = vmatprep.subr.mxu0 0.0
    %2810 = vmatpush1.msra.mxu0 0.0
    %2811 = vmatprep.mubr.f32.mxu0 0.0
    %2812 = vmatmul.mubr.f32.gmra.mrb[0].mxu0 %v2575
    %v2813 = vpop.f32.mrb[0].mxu0
    %v2814 = vadd.f32 %v2744, %v2813
    %v2815 = vpop.f32.mrb[0].mxu0
    %2816 = vdwg.mxu0
    %v2817 = vadd.f32 %v2814, %v316
    %v2818 = vtanh.pop %v2817
    %v2819 = vmul.f32 %v2818, %v323
    %v2820 = vadd.f32 %v2819, %v324
    %v2821 = vmul.f32 %v2820, %v2398
    %2823 = vrot.lane.b32.xlu0 %v2820, 64
    %v2824 = vpop.permute.xlu0 %2823
    %v2826 = vmul.f32 %v2820, %v2824
    %2828 = vrot.lane.b32.xlu0 %v2826, 32
    %v2829 = vpop.permute.xlu0 %2828
    %v2831 = vadd.f32 %v2821, %v2829
    %v2832 = vtanh.pop %v2831
    %2834 = vrot.lane.b32.xlu0 %v2832, 64
    %v2835 = vpop.permute.xlu0 %2834
    %v2837 = vmul.f32 %v2820, %v2835
    %v2838 = vmul.f32 %v2396, 0.0
    %v2839 = vadd.f32 %v2837, %v2838
    %v2840 = vmul.f32 %v2398, 0.0
    %v2841 = vadd.f32 %v2831, %v2840
    %v2842 = vsel %vm332, %v2568, 0
    %2844 = vmatprep.subr.mxu0 0.0
    %2845 = vmatpush1.msra.mxu0 %v312
    %2846 = vmatprep.subr.mxu0 0.0
    %2847 = vmatpush1.msra.mxu0 %v313
    %2848 = vmatprep.subr.mxu0 0.0
    %2849 = vmatpush1.msra.mxu0 %v314
    %2850 = vmatprep.subr.mxu0 0.0
    %2851 = vmatpush1.msra.mxu0 %v315
    %2852 = vmatprep.subr.mxu0 0.0
    %2853 = vmatpush1.msra.mxu0 0.0
    %2854 = vmatprep.subr.mxu0 0.0
    %2855 = vmatpush1.msra.mxu0 0.0
    %2856 = vmatprep.subr.mxu0 0.0
    %2857 = vmatpush1.msra.mxu0 0.0
    %2858 = vmatprep.subr.mxu0 0.0
    %2859 = vmatpush1.msra.mxu0 0.0
    %2860 = vmatprep.subr.mxu0 0.0
    %2861 = vmatpush1.msra.mxu0 0.0
    %2862 = vmatprep.subr.mxu0 0.0
    %2863 = vmatpush1.msra.mxu0 0.0
    %2864 = vmatprep.subr.mxu0 0.0
    %2865 = vmatpush1.msra.mxu0 0.0
    %2866 = vmatprep.subr.mxu0 0.0
    %2867 = vmatpush1.msra.mxu0 0.0
    %2868 = vmatprep.subr.mxu0 0.0
    %2869 = vmatpush1.msra.mxu0 0.0
    %2870 = vmatprep.subr.mxu0 0.0
    %2871 = vmatpush1.msra.mxu0 0.0
    %2872 = vmatprep.subr.mxu0 0.0
    %2873 = vmatpush1.msra.mxu0 0.0
    %2874 = vmatprep.subr.mxu0 0.0
    %2875 = vmatpush1.msra.mxu0 0.0
    %2876 = vmatprep.subr.mxu0 0.0
    %2877 = vmatpush1.msra.mxu0 0.0
    %2878 = vmatprep.subr.mxu0 0.0
    %2879 = vmatpush1.msra.mxu0 0.0
    %2880 = vmatprep.subr.mxu0 0.0
    %2881 = vmatpush1.msra.mxu0 0.0
    %2882 = vmatprep.subr.mxu0 0.0
    %2883 = vmatpush1.msra.mxu0 0.0
    %2884 = vmatprep.subr.mxu0 0.0
    %2885 = vmatpush1.msra.mxu0 0.0
    %2886 = vmatprep.subr.mxu0 0.0
    %2887 = vmatpush1.msra.mxu0 0.0
    %2888 = vmatprep.subr.mxu0 0.0
    %2889 = vmatpush1.msra.mxu0 0.0
    %2890 = vmatprep.subr.mxu0 0.0
    %2891 = vmatpush1.msra.mxu0 0.0
    %2892 = vmatprep.subr.mxu0 0.0
    %2893 = vmatpush1.msra.mxu0 0.0
    %2894 = vmatprep.subr.mxu0 0.0
    %2895 = vmatpush1.msra.mxu0 0.0
    %2896 = vmatprep.subr.mxu0 0.0
    %2897 = vmatpush1.msra.mxu0 0.0
    %2898 = vmatprep.subr.mxu0 0.0
    %2899 = vmatpush1.msra.mxu0 0.0
    %2900 = vmatprep.subr.mxu0 0.0
    %2901 = vmatpush1.msra.mxu0 0.0
    %2902 = vmatprep.subr.mxu0 0.0
    %2903 = vmatpush1.msra.mxu0 0.0
    %2904 = vmatprep.subr.mxu0 0.0
    %2905 = vmatpush1.msra.mxu0 0.0
    %2906 = vmatprep.subr.mxu0 0.0
    %2907 = vmatpush1.msra.mxu0 0.0
    %2908 = vmatprep.mubr.f32.mxu0 0.0
    %2909 = vmatmul.mubr.f32.gmra.mrb[0].mxu0 %v2842
    %v2910 = vpop.f32.mrb[0].mxu0
    %v2911 = vadd.f32 0.0, %v2910
    %v2912 = vpop.f32.mrb[0].mxu0
    %2913 = vdwg.mxu0
    %2914 = vmatprep.subr.mxu0 0.0
    %2915 = vmatpush1.msra.mxu0 %v304
    %2916 = vmatprep.subr.mxu0 0.0
    %2917 = vmatpush1.msra.mxu0 %v305
    %2918 = vmatprep.subr.mxu0 0.0
    %2919 = vmatpush1.msra.mxu0 %v306
    %2920 = vmatprep.subr.mxu0 0.0
    %2921 = vmatpush1.msra.mxu0 %v307
    %2922 = vmatprep.subr.mxu0 0.0
    %2923 = vmatpush1.msra.mxu0 0.0
    %2924 = vmatprep.subr.mxu0 0.0
    %2925 = vmatpush1.msra.mxu0 0.0
    %2926 = vmatprep.subr.mxu0 0.0
    %2927 = vmatpush1.msra.mxu0 0.0
    %2928 = vmatprep.subr.mxu0 0.0
    %2929 = vmatpush1.msra.mxu0 0.0
    %2930 = vmatprep.subr.mxu0 0.0
    %2931 = vmatpush1.msra.mxu0 0.0
    %2932 = vmatprep.subr.mxu0 0.0
    %2933 = vmatpush1.msra.mxu0 0.0
    %2934 = vmatprep.subr.mxu0 0.0
    %2935 = vmatpush1.msra.mxu0 0.0
    %2936 = vmatprep.subr.mxu0 0.0
    %2937 = vmatpush1.msra.mxu0 0.0
    %2938 = vmatprep.subr.mxu0 0.0
    %2939 = vmatpush1.msra.mxu0 0.0
    %2940 = vmatprep.subr.mxu0 0.0
    %2941 = vmatpush1.msra.mxu0 0.0
    %2942 = vmatprep.subr.mxu0 0.0
    %2943 = vmatpush1.msra.mxu0 0.0
    %2944 = vmatprep.subr.mxu0 0.0
    %2945 = vmatpush1.msra.mxu0 0.0
    %2946 = vmatprep.subr.mxu0 0.0
    %2947 = vmatpush1.msra.mxu0 0.0
    %2948 = vmatprep.subr.mxu0 0.0
    %2949 = vmatpush1.msra.mxu0 0.0
    %2950 = vmatprep.subr.mxu0 0.0
    %2951 = vmatpush1.msra.mxu0 0.0
    %2952 = vmatprep.subr.mxu0 0.0
    %2953 = vmatpush1.msra.mxu0 0.0
    %2954 = vmatprep.subr.mxu0 0.0
    %2955 = vmatpush1.msra.mxu0 0.0
    %2956 = vmatprep.subr.mxu0 0.0
    %2957 = vmatpush1.msra.mxu0 0.0
    %2958 = vmatprep.subr.mxu0 0.0
    %2959 = vmatpush1.msra.mxu0 0.0
    %2960 = vmatprep.subr.mxu0 0.0
    %2961 = vmatpush1.msra.mxu0 0.0
    %2962 = vmatprep.subr.mxu0 0.0
    %2963 = vmatpush1.msra.mxu0 0.0
    %2964 = vmatprep.subr.mxu0 0.0
    %2965 = vmatpush1.msra.mxu0 0.0
    %2966 = vmatprep.subr.mxu0 0.0
    %2967 = vmatpush1.msra.mxu0 0.0
    %2968 = vmatprep.subr.mxu0 0.0
    %2969 = vmatpush1.msra.mxu0 0.0
    %2970 = vmatprep.subr.mxu0 0.0
    %2971 = vmatpush1.msra.mxu0 0.0
    %2972 = vmatprep.subr.mxu0 0.0
    %2973 = vmatpush1.msra.mxu0 0.0
    %2974 = vmatprep.subr.mxu0 0.0
    %2975 = vmatpush1.msra.mxu0 0.0
    %2976 = vmatprep.subr.mxu0 0.0
    %2977 = vmatpush1.msra.mxu0 0.0
    %2978 = vmatprep.mubr.f32.mxu0 0.0
    %2979 = vmatmul.mubr.f32.gmra.mrb[0].mxu0 %v2675
    %v2980 = vpop.f32.mrb[0].mxu0
    %v2981 = vadd.f32 %v2911, %v2980
    %v2982 = vpop.f32.mrb[0].mxu0
    %2983 = vdwg.mxu0
    %v2984 = vadd.f32 %v2981, %v317
    %v2985 = vtanh.pop %v2984
    %v2986 = vmul.f32 %v2985, %v323
    %v2987 = vadd.f32 %v2986, %v324
    %v2988 = vmul.f32 %v2987, %v2565
    %2990 = vrot.lane.b32.xlu0 %v2987, 64
    %v2991 = vpop.permute.xlu0 %2990
    %v2993 = vmul.f32 %v2987, %v2991
    %2995 = vrot.lane.b32.xlu0 %v2993, 32
    %v2996 = vpop.permute.xlu0 %2995
    %v2998 = vadd.f32 %v2988, %v2996
    %v2999 = vtanh.pop %v2998
    %3001 = vrot.lane.b32.xlu0 %v2999, 64
    %v3002 = vpop.permute.xlu0 %3001
    %v3004 = vmul.f32 %v2987, %v3002
    %v3005 = vmul.f32 %v2563, 0.0
    %v3006 = vadd.f32 %v3004, %v3005
    %v3007 = vmul.f32 %v2565, 0.0
    %v3008 = vadd.f32 %v2998, %v3007
    %3010 = vrot.lane.b32.xlu0 %v3006, 32
    %v3011 = vpop.permute.xlu0 %3010
    %3013 = vst.msk [vmem:[#allocation3 + $0x3] sm:$0x1] %vm797, %v3011
    %v3014 = vld [vmem:[#allocation2 + $0x6] sm:$0x1]
    %3016 = vrot.lane.b32.xlu0 %v2669, 32
    %v3017 = vpop.permute.xlu0 %3016
    %v3018 = vsel %vm332, %v3017, 0
    %3020 = vmatprep.subr.mxu0 0.0
    %3021 = vmatpush1.msra.mxu0 %v296
    %3022 = vmatprep.subr.mxu0 0.0
    %3023 = vmatpush1.msra.mxu0 %v297
    %3024 = vmatprep.subr.mxu0 0.0
    %3025 = vmatpush1.msra.mxu0 %v298
    %3026 = vmatprep.subr.mxu0 0.0
    %3027 = vmatpush1.msra.mxu0 %v299
    %3028 = vmatprep.subr.mxu0 0.0
    %3029 = vmatpush1.msra.mxu0 0.0
    %3030 = vmatprep.subr.mxu0 0.0
    %3031 = vmatpush1.msra.mxu0 0.0
    %3032 = vmatprep.subr.mxu0 0.0
    %3033 = vmatpush1.msra.mxu0 0.0
    %3034 = vmatprep.subr.mxu0 0.0
    %3035 = vmatpush1.msra.mxu0 0.0
    %3036 = vmatprep.subr.mxu0 0.0
    %3037 = vmatpush1.msra.mxu0 0.0
    %3038 = vmatprep.subr.mxu0 0.0
    %3039 = vmatpush1.msra.mxu0 0.0
    %3040 = vmatprep.subr.mxu0 0.0
    %3041 = vmatpush1.msra.mxu0 0.0
    %3042 = vmatprep.subr.mxu0 0.0
    %3043 = vmatpush1.msra.mxu0 0.0
    %3044 = vmatprep.subr.mxu0 0.0
    %3045 = vmatpush1.msra.mxu0 0.0
    %3046 = vmatprep.subr.mxu0 0.0
    %3047 = vmatpush1.msra.mxu0 0.0
    %3048 = vmatprep.subr.mxu0 0.0
    %3049 = vmatpush1.msra.mxu0 0.0
    %3050 = vmatprep.subr.mxu0 0.0
    %3051 = vmatpush1.msra.mxu0 0.0
    %3052 = vmatprep.subr.mxu0 0.0
    %3053 = vmatpush1.msra.mxu0 0.0
    %3054 = vmatprep.subr.mxu0 0.0
    %3055 = vmatpush1.msra.mxu0 0.0
    %3056 = vmatprep.subr.mxu0 0.0
    %3057 = vmatpush1.msra.mxu0 0.0
    %3058 = vmatprep.subr.mxu0 0.0
    %3059 = vmatpush1.msra.mxu0 0.0
    %3060 = vmatprep.subr.mxu0 0.0
    %3061 = vmatpush1.msra.mxu0 0.0
    %3062 = vmatprep.subr.mxu0 0.0
    %3063 = vmatpush1.msra.mxu0 0.0
    %3064 = vmatprep.subr.mxu0 0.0
    %3065 = vmatpush1.msra.mxu0 0.0
    %3066 = vmatprep.subr.mxu0 0.0
    %3067 = vmatpush1.msra.mxu0 0.0
    %3068 = vmatprep.subr.mxu0 0.0
    %3069 = vmatpush1.msra.mxu0 0.0
    %3070 = vmatprep.subr.mxu0 0.0
    %3071 = vmatpush1.msra.mxu0 0.0
    %3072 = vmatprep.subr.mxu0 0.0
    %3073 = vmatpush1.msra.mxu0 0.0
    %3074 = vmatprep.subr.mxu0 0.0
    %3075 = vmatpush1.msra.mxu0 0.0
    %3076 = vmatprep.subr.mxu0 0.0
    %3077 = vmatpush1.msra.mxu0 0.0
    %3078 = vmatprep.subr.mxu0 0.0
    %3079 = vmatpush1.msra.mxu0 0.0
    %3080 = vmatprep.subr.mxu0 0.0
    %3081 = vmatpush1.msra.mxu0 0.0
    %3082 = vmatprep.subr.mxu0 0.0
    %3083 = vmatpush1.msra.mxu0 0.0
    %3084 = vmatprep.mubr.f32.mxu0 0.0
    %3085 = vmatmul.mubr.f32.gmra.mrb[0].mxu0 %v3018
    %v3086 = vpop.f32.mrb[0].mxu0
    %v3087 = vadd.f32 0.0, %v3086
    %v3088 = vpop.f32.mrb[0].mxu0
    %3089 = vdwg.mxu0
    %v3090 = vadd.f32 %v3014, %v3087
    %v3091 = vtanh.pop %v3090
    %v3092 = vmul.f32 %v3091, %v323
    %v3093 = vadd.f32 %v3092, %v324
    %v3094 = vmul.f32 %v3093, %v2671
    %3096 = vrot.lane.b32.xlu0 %v3093, 64
    %v3097 = vpop.permute.xlu0 %3096
    %v3099 = vmul.f32 %v3093, %v3097
    %3101 = vrot.lane.b32.xlu0 %v3099, 32
    %v3102 = vpop.permute.xlu0 %3101
    %v3104 = vadd.f32 %v3094, %v3102
    %v3105 = vtanh.pop %v3104
    %3107 = vrot.lane.b32.xlu0 %v3105, 64
    %v3108 = vpop.permute.xlu0 %3107
    %v3110 = vmul.f32 %v3093, %v3108
    %v3111 = vmul.f32 %v2669, 0.0
    %v3112 = vadd.f32 %v3110, %v3111
    %v3113 = vmul.f32 %v2671, 0.0
    %v3114 = vadd.f32 %v3104, %v3113
    %3116 = vrot.lane.b32.xlu0 %v2839, 32
    %v3117 = vpop.permute.xlu0 %3116
    %v3118 = vsel %vm332, %v3117, 0
    %3120 = vmatprep.subr.mxu0 0.0
    %3121 = vmatpush1.msra.mxu0 %v308
    %3122 = vmatprep.subr.mxu0 0.0
    %3123 = vmatpush1.msra.mxu0 %v309
    %3124 = vmatprep.subr.mxu0 0.0
    %3125 = vmatpush1.msra.mxu0 %v310
    %3126 = vmatprep.subr.mxu0 0.0
    %3127 = vmatpush1.msra.mxu0 %v311
    %3128 = vmatprep.subr.mxu0 0.0
    %3129 = vmatpush1.msra.mxu0 0.0
    %3130 = vmatprep.subr.mxu0 0.0
    %3131 = vmatpush1.msra.mxu0 0.0
    %3132 = vmatprep.subr.mxu0 0.0
    %3133 = vmatpush1.msra.mxu0 0.0
    %3134 = vmatprep.subr.mxu0 0.0
    %3135 = vmatpush1.msra.mxu0 0.0
    %3136 = vmatprep.subr.mxu0 0.0
    %3137 = vmatpush1.msra.mxu0 0.0
    %3138 = vmatprep.subr.mxu0 0.0
    %3139 = vmatpush1.msra.mxu0 0.0
    %3140 = vmatprep.subr.mxu0 0.0
    %3141 = vmatpush1.msra.mxu0 0.0
    %3142 = vmatprep.subr.mxu0 0.0
    %3143 = vmatpush1.msra.mxu0 0.0
    %3144 = vmatprep.subr.mxu0 0.0
    %3145 = vmatpush1.msra.mxu0 0.0
    %3146 = vmatprep.subr.mxu0 0.0
    %3147 = vmatpush1.msra.mxu0 0.0
    %3148 = vmatprep.subr.mxu0 0.0
    %3149 = vmatpush1.msra.mxu0 0.0
    %3150 = vmatprep.subr.mxu0 0.0
    %3151 = vmatpush1.msra.mxu0 0.0
    %3152 = vmatprep.subr.mxu0 0.0
    %3153 = vmatpush1.msra.mxu0 0.0
    %3154 = vmatprep.subr.mxu0 0.0
    %3155 = vmatpush1.msra.mxu0 0.0
    %3156 = vmatprep.subr.mxu0 0.0
    %3157 = vmatpush1.msra.mxu0 0.0
    %3158 = vmatprep.subr.mxu0 0.0
    %3159 = vmatpush1.msra.mxu0 0.0
    %3160 = vmatprep.subr.mxu0 0.0
    %3161 = vmatpush1.msra.mxu0 0.0
    %3162 = vmatprep.subr.mxu0 0.0
    %3163 = vmatpush1.msra.mxu0 0.0
    %3164 = vmatprep.subr.mxu0 0.0
    %3165 = vmatpush1.msra.mxu0 0.0
    %3166 = vmatprep.subr.mxu0 0.0
    %3167 = vmatpush1.msra.mxu0 0.0
    %3168 = vmatprep.subr.mxu0 0.0
    %3169 = vmatpush1.msra.mxu0 0.0
    %3170 = vmatprep.subr.mxu0 0.0
    %3171 = vmatpush1.msra.mxu0 0.0
    %3172 = vmatprep.subr.mxu0 0.0
    %3173 = vmatpush1.msra.mxu0 0.0
    %3174 = vmatprep.subr.mxu0 0.0
    %3175 = vmatpush1.msra.mxu0 0.0
    %3176 = vmatprep.subr.mxu0 0.0
    %3177 = vmatpush1.msra.mxu0 0.0
    %3178 = vmatprep.subr.mxu0 0.0
    %3179 = vmatpush1.msra.mxu0 0.0
    %3180 = vmatprep.subr.mxu0 0.0
    %3181 = vmatpush1.msra.mxu0 0.0
    %3182 = vmatprep.subr.mxu0 0.0
    %3183 = vmatpush1.msra.mxu0 0.0
    %3184 = vmatprep.mubr.f32.mxu0 0.0
    %3185 = vmatmul.mubr.f32.gmra.mrb[0].mxu0 %v3118
    %v3186 = vpop.f32.mrb[0].mxu0
    %v3187 = vadd.f32 0.0, %v3186
    %v3188 = vpop.f32.mrb[0].mxu0
    %3189 = vdwg.mxu0
    %3190 = vmatprep.subr.mxu0 0.0
    %3191 = vmatpush1.msra.mxu0 %v300
    %3192 = vmatprep.subr.mxu0 0.0
    %3193 = vmatpush1.msra.mxu0 %v301
    %3194 = vmatprep.subr.mxu0 0.0
    %3195 = vmatpush1.msra.mxu0 %v302
    %3196 = vmatprep.subr.mxu0 0.0
    %3197 = vmatpush1.msra.mxu0 %v303
    %3198 = vmatprep.subr.mxu0 0.0
    %3199 = vmatpush1.msra.mxu0 0.0
    %3200 = vmatprep.subr.mxu0 0.0
    %3201 = vmatpush1.msra.mxu0 0.0
    %3202 = vmatprep.subr.mxu0 0.0
    %3203 = vmatpush1.msra.mxu0 0.0
    %3204 = vmatprep.subr.mxu0 0.0
    %3205 = vmatpush1.msra.mxu0 0.0
    %3206 = vmatprep.subr.mxu0 0.0
    %3207 = vmatpush1.msra.mxu0 0.0
    %3208 = vmatprep.subr.mxu0 0.0
    %3209 = vmatpush1.msra.mxu0 0.0
    %3210 = vmatprep.subr.mxu0 0.0
    %3211 = vmatpush1.msra.mxu0 0.0
    %3212 = vmatprep.subr.mxu0 0.0
    %3213 = vmatpush1.msra.mxu0 0.0
    %3214 = vmatprep.subr.mxu0 0.0
    %3215 = vmatpush1.msra.mxu0 0.0
    %3216 = vmatprep.subr.mxu0 0.0
    %3217 = vmatpush1.msra.mxu0 0.0
    %3218 = vmatprep.subr.mxu0 0.0
    %3219 = vmatpush1.msra.mxu0 0.0
    %3220 = vmatprep.subr.mxu0 0.0
    %3221 = vmatpush1.msra.mxu0 0.0
    %3222 = vmatprep.subr.mxu0 0.0
    %3223 = vmatpush1.msra.mxu0 0.0
    %3224 = vmatprep.subr.mxu0 0.0
    %3225 = vmatpush1.msra.mxu0 0.0
    %3226 = vmatprep.subr.mxu0 0.0
    %3227 = vmatpush1.msra.mxu0 0.0
    %3228 = vmatprep.subr.mxu0 0.0
    %3229 = vmatpush1.msra.mxu0 0.0
    %3230 = vmatprep.subr.mxu0 0.0
    %3231 = vmatpush1.msra.mxu0 0.0
    %3232 = vmatprep.subr.mxu0 0.0
    %3233 = vmatpush1.msra.mxu0 0.0
    %3234 = vmatprep.subr.mxu0 0.0
    %3235 = vmatpush1.msra.mxu0 0.0
    %3236 = vmatprep.subr.mxu0 0.0
    %3237 = vmatpush1.msra.mxu0 0.0
    %3238 = vmatprep.subr.mxu0 0.0
    %3239 = vmatpush1.msra.mxu0 0.0
    %3240 = vmatprep.subr.mxu0 0.0
    %3241 = vmatpush1.msra.mxu0 0.0
    %3242 = vmatprep.subr.mxu0 0.0
    %3243 = vmatpush1.msra.mxu0 0.0
    %3244 = vmatprep.subr.mxu0 0.0
    %3245 = vmatpush1.msra.mxu0 0.0
    %3246 = vmatprep.subr.mxu0 0.0
    %3247 = vmatpush1.msra.mxu0 0.0
    %3248 = vmatprep.subr.mxu0 0.0
    %3249 = vmatpush1.msra.mxu0 0.0
    %3250 = vmatprep.subr.mxu0 0.0
    %3251 = vmatpush1.msra.mxu0 0.0
    %3252 = vmatprep.subr.mxu0 0.0
    %3253 = vmatpush1.msra.mxu0 0.0
    %3254 = vmatprep.mubr.f32.mxu0 0.0
    %3255 = vmatmul.mubr.f32.gmra.mrb[0].mxu0 %v3018
    %v3256 = vpop.f32.mrb[0].mxu0
    %v3257 = vadd.f32 %v3187, %v3256
    %v3258 = vpop.f32.mrb[0].mxu0
    %3259 = vdwg.mxu0
    %v3260 = vadd.f32 %v3257, %v316
    %v3261 = vtanh.pop %v3260
    %v3262 = vmul.f32 %v3261, %v323
    %v3263 = vadd.f32 %v3262, %v324
    %v3264 = vmul.f32 %v3263, %v2841
    %3266 = vrot.lane.b32.xlu0 %v3263, 64
    %v3267 = vpop.permute.xlu0 %3266
    %v3269 = vmul.f32 %v3263, %v3267
    %3271 = vrot.lane.b32.xlu0 %v3269, 32
    %v3272 = vpop.permute.xlu0 %3271
    %v3274 = vadd.f32 %v3264, %v3272
    %v3275 = vtanh.pop %v3274
    %3277 = vrot.lane.b32.xlu0 %v3275, 64
    %v3278 = vpop.permute.xlu0 %3277
    %v3280 = vmul.f32 %v3263, %v3278
    %v3281 = vmul.f32 %v2839, 0.0
    %v3282 = vadd.f32 %v3280, %v3281
    %v3283 = vmul.f32 %v2841, 0.0
    %v3284 = vadd.f32 %v3274, %v3283
    %v3285 = vsel %vm332, %v3011, 0
    %3287 = vmatprep.subr.mxu0 0.0
    %3288 = vmatpush1.msra.mxu0 %v312
    %3289 = vmatprep.subr.mxu0 0.0
    %3290 = vmatpush1.msra.mxu0 %v313
    %3291 = vmatprep.subr.mxu0 0.0
    %3292 = vmatpush1.msra.mxu0 %v314
    %3293 = vmatprep.subr.mxu0 0.0
    %3294 = vmatpush1.msra.mxu0 %v315
    %3295 = vmatprep.subr.mxu0 0.0
    %3296 = vmatpush1.msra.mxu0 0.0
    %3297 = vmatprep.subr.mxu0 0.0
    %3298 = vmatpush1.msra.mxu0 0.0
    %3299 = vmatprep.subr.mxu0 0.0
    %3300 = vmatpush1.msra.mxu0 0.0
    %3301 = vmatprep.subr.mxu0 0.0
    %3302 = vmatpush1.msra.mxu0 0.0
    %3303 = vmatprep.subr.mxu0 0.0
    %3304 = vmatpush1.msra.mxu0 0.0
    %3305 = vmatprep.subr.mxu0 0.0
    %3306 = vmatpush1.msra.mxu0 0.0
    %3307 = vmatprep.subr.mxu0 0.0
    %3308 = vmatpush1.msra.mxu0 0.0
    %3309 = vmatprep.subr.mxu0 0.0
    %3310 = vmatpush1.msra.mxu0 0.0
    %3311 = vmatprep.subr.mxu0 0.0
    %3312 = vmatpush1.msra.mxu0 0.0
    %3313 = vmatprep.subr.mxu0 0.0
    %3314 = vmatpush1.msra.mxu0 0.0
    %3315 = vmatprep.subr.mxu0 0.0
    %3316 = vmatpush1.msra.mxu0 0.0
    %3317 = vmatprep.subr.mxu0 0.0
    %3318 = vmatpush1.msra.mxu0 0.0
    %3319 = vmatprep.subr.mxu0 0.0
    %3320 = vmatpush1.msra.mxu0 0.0
    %3321 = vmatprep.subr.mxu0 0.0
    %3322 = vmatpush1.msra.mxu0 0.0
    %3323 = vmatprep.subr.mxu0 0.0
    %3324 = vmatpush1.msra.mxu0 0.0
    %3325 = vmatprep.subr.mxu0 0.0
    %3326 = vmatpush1.msra.mxu0 0.0
    %3327 = vmatprep.subr.mxu0 0.0
    %3328 = vmatpush1.msra.mxu0 0.0
    %3329 = vmatprep.subr.mxu0 0.0
    %3330 = vmatpush1.msra.mxu0 0.0
    %3331 = vmatprep.subr.mxu0 0.0
    %3332 = vmatpush1.msra.mxu0 0.0
    %3333 = vmatprep.subr.mxu0 0.0
    %3334 = vmatpush1.msra.mxu0 0.0
    %3335 = vmatprep.subr.mxu0 0.0
    %3336 = vmatpush1.msra.mxu0 0.0
    %3337 = vmatprep.subr.mxu0 0.0
    %3338 = vmatpush1.msra.mxu0 0.0
    %3339 = vmatprep.subr.mxu0 0.0
    %3340 = vmatpush1.msra.mxu0 0.0
    %3341 = vmatprep.subr.mxu0 0.0
    %3342 = vmatpush1.msra.mxu0 0.0
    %3343 = vmatprep.subr.mxu0 0.0
    %3344 = vmatpush1.msra.mxu0 0.0
    %3345 = vmatprep.subr.mxu0 0.0
    %3346 = vmatpush1.msra.mxu0 0.0
    %3347 = vmatprep.subr.mxu0 0.0
    %3348 = vmatpush1.msra.mxu0 0.0
    %3349 = vmatprep.subr.mxu0 0.0
    %3350 = vmatpush1.msra.mxu0 0.0
    %3351 = vmatprep.mubr.f32.mxu0 0.0
    %3352 = vmatmul.mubr.f32.gmra.mrb[0].mxu0 %v3285
    %v3353 = vpop.f32.mrb[0].mxu0
    %v3354 = vadd.f32 0.0, %v3353
    %v3355 = vpop.f32.mrb[0].mxu0
    %3356 = vdwg.mxu0
    %3357 = vmatprep.subr.mxu0 0.0
    %3358 = vmatpush1.msra.mxu0 %v304
    %3359 = vmatprep.subr.mxu0 0.0
    %3360 = vmatpush1.msra.mxu0 %v305
    %3361 = vmatprep.subr.mxu0 0.0
    %3362 = vmatpush1.msra.mxu0 %v306
    %3363 = vmatprep.subr.mxu0 0.0
    %3364 = vmatpush1.msra.mxu0 %v307
    %3365 = vmatprep.subr.mxu0 0.0
    %3366 = vmatpush1.msra.mxu0 0.0
    %3367 = vmatprep.subr.mxu0 0.0
    %3368 = vmatpush1.msra.mxu0 0.0
    %3369 = vmatprep.subr.mxu0 0.0
    %3370 = vmatpush1.msra.mxu0 0.0
    %3371 = vmatprep.subr.mxu0 0.0
    %3372 = vmatpush1.msra.mxu0 0.0
    %3373 = vmatprep.subr.mxu0 0.0
    %3374 = vmatpush1.msra.mxu0 0.0
    %3375 = vmatprep.subr.mxu0 0.0
    %3376 = vmatpush1.msra.mxu0 0.0
    %3377 = vmatprep.subr.mxu0 0.0
    %3378 = vmatpush1.msra.mxu0 0.0
    %3379 = vmatprep.subr.mxu0 0.0
    %3380 = vmatpush1.msra.mxu0 0.0
    %3381 = vmatprep.subr.mxu0 0.0
    %3382 = vmatpush1.msra.mxu0 0.0
    %3383 = vmatprep.subr.mxu0 0.0
    %3384 = vmatpush1.msra.mxu0 0.0
    %3385 = vmatprep.subr.mxu0 0.0
    %3386 = vmatpush1.msra.mxu0 0.0
    %3387 = vmatprep.subr.mxu0 0.0
    %3388 = vmatpush1.msra.mxu0 0.0
    %3389 = vmatprep.subr.mxu0 0.0
    %3390 = vmatpush1.msra.mxu0 0.0
    %3391 = vmatprep.subr.mxu0 0.0
    %3392 = vmatpush1.msra.mxu0 0.0
    %3393 = vmatprep.subr.mxu0 0.0
    %3394 = vmatpush1.msra.mxu0 0.0
    %3395 = vmatprep.subr.mxu0 0.0
    %3396 = vmatpush1.msra.mxu0 0.0
    %3397 = vmatprep.subr.mxu0 0.0
    %3398 = vmatpush1.msra.mxu0 0.0
    %3399 = vmatprep.subr.mxu0 0.0
    %3400 = vmatpush1.msra.mxu0 0.0
    %3401 = vmatprep.subr.mxu0 0.0
    %3402 = vmatpush1.msra.mxu0 0.0
    %3403 = vmatprep.subr.mxu0 0.0
    %3404 = vmatpush1.msra.mxu0 0.0
    %3405 = vmatprep.subr.mxu0 0.0
    %3406 = vmatpush1.msra.mxu0 0.0
    %3407 = vmatprep.subr.mxu0 0.0
    %3408 = vmatpush1.msra.mxu0 0.0
    %3409 = vmatprep.subr.mxu0 0.0
    %3410 = vmatpush1.msra.mxu0 0.0
    %3411 = vmatprep.subr.mxu0 0.0
    %3412 = vmatpush1.msra.mxu0 0.0
    %3413 = vmatprep.subr.mxu0 0.0
    %3414 = vmatpush1.msra.mxu0 0.0
    %3415 = vmatprep.subr.mxu0 0.0
    %3416 = vmatpush1.msra.mxu0 0.0
    %3417 = vmatprep.subr.mxu0 0.0
    %3418 = vmatpush1.msra.mxu0 0.0
    %3419 = vmatprep.subr.mxu0 0.0
    %3420 = vmatpush1.msra.mxu0 0.0
    %3421 = vmatprep.mubr.f32.mxu0 0.0
    %3422 = vmatmul.mubr.f32.gmra.mrb[0].mxu0 %v3118
    %v3423 = vpop.f32.mrb[0].mxu0
    %v3424 = vadd.f32 %v3354, %v3423
    %v3425 = vpop.f32.mrb[0].mxu0
    %3426 = vdwg.mxu0
    %v3427 = vadd.f32 %v3424, %v317
    %v3428 = vtanh.pop %v3427
    %v3429 = vmul.f32 %v3428, %v323
    %v3430 = vadd.f32 %v3429, %v324
    %v3431 = vmul.f32 %v3430, %v3008
    %3433 = vrot.lane.b32.xlu0 %v3430, 64
    %v3434 = vpop.permute.xlu0 %3433
    %v3436 = vmul.f32 %v3430, %v3434
    %3438 = vrot.lane.b32.xlu0 %v3436, 32
    %v3439 = vpop.permute.xlu0 %3438
    %v3441 = vadd.f32 %v3431, %v3439
    %v3442 = vtanh.pop %v3441
    %3444 = vrot.lane.b32.xlu0 %v3442, 64
    %v3445 = vpop.permute.xlu0 %3444
    %v3447 = vmul.f32 %v3430, %v3445
    %v3448 = vmul.f32 %v3006, 0.0
    %v3449 = vadd.f32 %v3447, %v3448
    %v3450 = vmul.f32 %v3008, 0.0
    %v3451 = vadd.f32 %v3441, %v3450
    %3453 = vrot.lane.b32.xlu0 %v3449, 32
    %v3454 = vpop.permute.xlu0 %3453
    %3456 = vst.msk [vmem:[#allocation3 + $0x4] sm:$0x1] %vm797, %v3454
    %v3457 = vld [vmem:[#allocation2 + $0x7] sm:$0x1]
    %3459 = vrot.lane.b32.xlu0 %v3112, 32
    %v3460 = vpop.permute.xlu0 %3459
    %v3461 = vsel %vm332, %v3460, 0
    %3463 = vmatprep.subr.mxu0 0.0
    %3464 = vmatpush1.msra.mxu0 %v296
    %3465 = vmatprep.subr.mxu0 0.0
    %3466 = vmatpush1.msra.mxu0 %v297
    %3467 = vmatprep.subr.mxu0 0.0
    %3468 = vmatpush1.msra.mxu0 %v298
    %3469 = vmatprep.subr.mxu0 0.0
    %3470 = vmatpush1.msra.mxu0 %v299
    %3471 = vmatprep.subr.mxu0 0.0
    %3472 = vmatpush1.msra.mxu0 0.0
    %3473 = vmatprep.subr.mxu0 0.0
    %3474 = vmatpush1.msra.mxu0 0.0
    %3475 = vmatprep.subr.mxu0 0.0
    %3476 = vmatpush1.msra.mxu0 0.0
    %3477 = vmatprep.subr.mxu0 0.0
    %3478 = vmatpush1.msra.mxu0 0.0
    %3479 = vmatprep.subr.mxu0 0.0
    %3480 = vmatpush1.msra.mxu0 0.0
    %3481 = vmatprep.subr.mxu0 0.0
    %3482 = vmatpush1.msra.mxu0 0.0
    %3483 = vmatprep.subr.mxu0 0.0
    %3484 = vmatpush1.msra.mxu0 0.0
    %3485 = vmatprep.subr.mxu0 0.0
    %3486 = vmatpush1.msra.mxu0 0.0
    %3487 = vmatprep.subr.mxu0 0.0
    %3488 = vmatpush1.msra.mxu0 0.0
    %3489 = vmatprep.subr.mxu0 0.0
    %3490 = vmatpush1.msra.mxu0 0.0
    %3491 = vmatprep.subr.mxu0 0.0
    %3492 = vmatpush1.msra.mxu0 0.0
    %3493 = vmatprep.subr.mxu0 0.0
    %3494 = vmatpush1.msra.mxu0 0.0
    %3495 = vmatprep.subr.mxu0 0.0
    %3496 = vmatpush1.msra.mxu0 0.0
    %3497 = vmatprep.subr.mxu0 0.0
    %3498 = vmatpush1.msra.mxu0 0.0
    %3499 = vmatprep.subr.mxu0 0.0
    %3500 = vmatpush1.msra.mxu0 0.0
    %3501 = vmatprep.subr.mxu0 0.0
    %3502 = vmatpush1.msra.mxu0 0.0
    %3503 = vmatprep.subr.mxu0 0.0
    %3504 = vmatpush1.msra.mxu0 0.0
    %3505 = vmatprep.subr.mxu0 0.0
    %3506 = vmatpush1.msra.mxu0 0.0
    %3507 = vmatprep.subr.mxu0 0.0
    %3508 = vmatpush1.msra.mxu0 0.0
    %3509 = vmatprep.subr.mxu0 0.0
    %3510 = vmatpush1.msra.mxu0 0.0
    %3511 = vmatprep.subr.mxu0 0.0
    %3512 = vmatpush1.msra.mxu0 0.0
    %3513 = vmatprep.subr.mxu0 0.0
    %3514 = vmatpush1.msra.mxu0 0.0
    %3515 = vmatprep.subr.mxu0 0.0
    %3516 = vmatpush1.msra.mxu0 0.0
    %3517 = vmatprep.subr.mxu0 0.0
    %3518 = vmatpush1.msra.mxu0 0.0
    %3519 = vmatprep.subr.mxu0 0.0
    %3520 = vmatpush1.msra.mxu0 0.0
    %3521 = vmatprep.subr.mxu0 0.0
    %3522 = vmatpush1.msra.mxu0 0.0
    %3523 = vmatprep.subr.mxu0 0.0
    %3524 = vmatpush1.msra.mxu0 0.0
    %3525 = vmatprep.subr.mxu0 0.0
    %3526 = vmatpush1.msra.mxu0 0.0
    %3527 = vmatprep.mubr.f32.mxu0 0.0
    %3528 = vmatmul.mubr.f32.gmra.mrb[0].mxu0 %v3461
    %v3529 = vpop.f32.mrb[0].mxu0
    %v3530 = vadd.f32 0.0, %v3529
    %v3531 = vpop.f32.mrb[0].mxu0
    %3532 = vdwg.mxu0
    %v3533 = vadd.f32 %v3457, %v3530
    %v3534 = vtanh.pop %v3533
    %v3535 = vmul.f32 %v3534, %v323
    %v3536 = vadd.f32 %v3535, %v324
    %v3537 = vmul.f32 %v3536, %v3114
    %3539 = vrot.lane.b32.xlu0 %v3536, 64
    %v3540 = vpop.permute.xlu0 %3539
    %v3542 = vmul.f32 %v3536, %v3540
    %3544 = vrot.lane.b32.xlu0 %v3542, 32
    %v3545 = vpop.permute.xlu0 %3544
    %v3547 = vadd.f32 %v3537, %v3545
    %v3548 = vtanh.pop %v3547
    %3550 = vrot.lane.b32.xlu0 %v3548, 64
    %v3551 = vpop.permute.xlu0 %3550
    %v3553 = vmul.f32 %v3536, %v3551
    %v3554 = vmul.f32 %v3112, 0.0
    %v3555 = vadd.f32 %v3553, %v3554
    %v3556 = vmul.f32 %v3114, 0.0
    %v3557 = vadd.f32 %v3547, %v3556
    %3559 = vrot.lane.b32.xlu0 %v3282, 32
    %v3560 = vpop.permute.xlu0 %3559
    %v3561 = vsel %vm332, %v3560, 0
    %3563 = vmatprep.subr.mxu0 0.0
    %3564 = vmatpush1.msra.mxu0 %v308
    %3565 = vmatprep.subr.mxu0 0.0
    %3566 = vmatpush1.msra.mxu0 %v309
    %3567 = vmatprep.subr.mxu0 0.0
    %3568 = vmatpush1.msra.mxu0 %v310
    %3569 = vmatprep.subr.mxu0 0.0
    %3570 = vmatpush1.msra.mxu0 %v311
    %3571 = vmatprep.subr.mxu0 0.0
    %3572 = vmatpush1.msra.mxu0 0.0
    %3573 = vmatprep.subr.mxu0 0.0
    %3574 = vmatpush1.msra.mxu0 0.0
    %3575 = vmatprep.subr.mxu0 0.0
    %3576 = vmatpush1.msra.mxu0 0.0
    %3577 = vmatprep.subr.mxu0 0.0
    %3578 = vmatpush1.msra.mxu0 0.0
    %3579 = vmatprep.subr.mxu0 0.0
    %3580 = vmatpush1.msra.mxu0 0.0
    %3581 = vmatprep.subr.mxu0 0.0
    %3582 = vmatpush1.msra.mxu0 0.0
    %3583 = vmatprep.subr.mxu0 0.0
    %3584 = vmatpush1.msra.mxu0 0.0
    %3585 = vmatprep.subr.mxu0 0.0
    %3586 = vmatpush1.msra.mxu0 0.0
    %3587 = vmatprep.subr.mxu0 0.0
    %3588 = vmatpush1.msra.mxu0 0.0
    %3589 = vmatprep.subr.mxu0 0.0
    %3590 = vmatpush1.msra.mxu0 0.0
    %3591 = vmatprep.subr.mxu0 0.0
    %3592 = vmatpush1.msra.mxu0 0.0
    %3593 = vmatprep.subr.mxu0 0.0
    %3594 = vmatpush1.msra.mxu0 0.0
    %3595 = vmatprep.subr.mxu0 0.0
    %3596 = vmatpush1.msra.mxu0 0.0
    %3597 = vmatprep.subr.mxu0 0.0
    %3598 = vmatpush1.msra.mxu0 0.0
    %3599 = vmatprep.subr.mxu0 0.0
    %3600 = vmatpush1.msra.mxu0 0.0
    %3601 = vmatprep.subr.mxu0 0.0
    %3602 = vmatpush1.msra.mxu0 0.0
    %3603 = vmatprep.subr.mxu0 0.0
    %3604 = vmatpush1.msra.mxu0 0.0
    %3605 = vmatprep.subr.mxu0 0.0
    %3606 = vmatpush1.msra.mxu0 0.0
    %3607 = vmatprep.subr.mxu0 0.0
    %3608 = vmatpush1.msra.mxu0 0.0
    %3609 = vmatprep.subr.mxu0 0.0
    %3610 = vmatpush1.msra.mxu0 0.0
    %3611 = vmatprep.subr.mxu0 0.0
    %3612 = vmatpush1.msra.mxu0 0.0
    %3613 = vmatprep.subr.mxu0 0.0
    %3614 = vmatpush1.msra.mxu0 0.0
    %3615 = vmatprep.subr.mxu0 0.0
    %3616 = vmatpush1.msra.mxu0 0.0
    %3617 = vmatprep.subr.mxu0 0.0
    %3618 = vmatpush1.msra.mxu0 0.0
    %3619 = vmatprep.subr.mxu0 0.0
    %3620 = vmatpush1.msra.mxu0 0.0
    %3621 = vmatprep.subr.mxu0 0.0
    %3622 = vmatpush1.msra.mxu0 0.0
    %3623 = vmatprep.subr.mxu0 0.0
    %3624 = vmatpush1.msra.mxu0 0.0
    %3625 = vmatprep.subr.mxu0 0.0
    %3626 = vmatpush1.msra.mxu0 0.0
    %3627 = vmatprep.mubr.f32.mxu0 0.0
    %3628 = vmatmul.mubr.f32.gmra.mrb[0].mxu0 %v3561
    %v3629 = vpop.f32.mrb[0].mxu0
    %v3630 = vadd.f32 0.0, %v3629
    %v3631 = vpop.f32.mrb[0].mxu0
    %3632 = vdwg.mxu0
    %3633 = vmatprep.subr.mxu0 0.0
    %3634 = vmatpush1.msra.mxu0 %v300
    %3635 = vmatprep.subr.mxu0 0.0
    %3636 = vmatpush1.msra.mxu0 %v301
    %3637 = vmatprep.subr.mxu0 0.0
    %3638 = vmatpush1.msra.mxu0 %v302
    %3639 = vmatprep.subr.mxu0 0.0
    %3640 = vmatpush1.msra.mxu0 %v303
    %3641 = vmatprep.subr.mxu0 0.0
    %3642 = vmatpush1.msra.mxu0 0.0
    %3643 = vmatprep.subr.mxu0 0.0
    %3644 = vmatpush1.msra.mxu0 0.0
    %3645 = vmatprep.subr.mxu0 0.0
    %3646 = vmatpush1.msra.mxu0 0.0
    %3647 = vmatprep.subr.mxu0 0.0
    %3648 = vmatpush1.msra.mxu0 0.0
    %3649 = vmatprep.subr.mxu0 0.0
    %3650 = vmatpush1.msra.mxu0 0.0
    %3651 = vmatprep.subr.mxu0 0.0
    %3652 = vmatpush1.msra.mxu0 0.0
    %3653 = vmatprep.subr.mxu0 0.0
    %3654 = vmatpush1.msra.mxu0 0.0
    %3655 = vmatprep.subr.mxu0 0.0
    %3656 = vmatpush1.msra.mxu0 0.0
    %3657 = vmatprep.subr.mxu0 0.0
    %3658 = vmatpush1.msra.mxu0 0.0
    %3659 = vmatprep.subr.mxu0 0.0
    %3660 = vmatpush1.msra.mxu0 0.0
    %3661 = vmatprep.subr.mxu0 0.0
    %3662 = vmatpush1.msra.mxu0 0.0
    %3663 = vmatprep.subr.mxu0 0.0
    %3664 = vmatpush1.msra.mxu0 0.0
    %3665 = vmatprep.subr.mxu0 0.0
    %3666 = vmatpush1.msra.mxu0 0.0
    %3667 = vmatprep.subr.mxu0 0.0
    %3668 = vmatpush1.msra.mxu0 0.0
    %3669 = vmatprep.subr.mxu0 0.0
    %3670 = vmatpush1.msra.mxu0 0.0
    %3671 = vmatprep.subr.mxu0 0.0
    %3672 = vmatpush1.msra.mxu0 0.0
    %3673 = vmatprep.subr.mxu0 0.0
    %3674 = vmatpush1.msra.mxu0 0.0
    %3675 = vmatprep.subr.mxu0 0.0
    %3676 = vmatpush1.msra.mxu0 0.0
    %3677 = vmatprep.subr.mxu0 0.0
    %3678 = vmatpush1.msra.mxu0 0.0
    %3679 = vmatprep.subr.mxu0 0.0
    %3680 = vmatpush1.msra.mxu0 0.0
    %3681 = vmatprep.subr.mxu0 0.0
    %3682 = vmatpush1.msra.mxu0 0.0
    %3683 = vmatprep.subr.mxu0 0.0
    %3684 = vmatpush1.msra.mxu0 0.0
    %3685 = vmatprep.subr.mxu0 0.0
    %3686 = vmatpush1.msra.mxu0 0.0
    %3687 = vmatprep.subr.mxu0 0.0
    %3688 = vmatpush1.msra.mxu0 0.0
    %3689 = vmatprep.subr.mxu0 0.0
    %3690 = vmatpush1.msra.mxu0 0.0
    %3691 = vmatprep.subr.mxu0 0.0
    %3692 = vmatpush1.msra.mxu0 0.0
    %3693 = vmatprep.subr.mxu0 0.0
    %3694 = vmatpush1.msra.mxu0 0.0
    %3695 = vmatprep.subr.mxu0 0.0
    %3696 = vmatpush1.msra.mxu0 0.0
    %3697 = vmatprep.mubr.f32.mxu0 0.0
    %3698 = vmatmul.mubr.f32.gmra.mrb[0].mxu0 %v3461
    %v3699 = vpop.f32.mrb[0].mxu0
    %v3700 = vadd.f32 %v3630, %v3699
    %v3701 = vpop.f32.mrb[0].mxu0
    %3702 = vdwg.mxu0
    %v3703 = vadd.f32 %v3700, %v316
    %v3704 = vtanh.pop %v3703
    %v3705 = vmul.f32 %v3704, %v323
    %v3706 = vadd.f32 %v3705, %v324
    %v3707 = vmul.f32 %v3706, %v3284
    %3709 = vrot.lane.b32.xlu0 %v3706, 64
    %v3710 = vpop.permute.xlu0 %3709
    %v3712 = vmul.f32 %v3706, %v3710
    %3714 = vrot.lane.b32.xlu0 %v3712, 32
    %v3715 = vpop.permute.xlu0 %3714
    %v3717 = vadd.f32 %v3707, %v3715
    %v3718 = vtanh.pop %v3717
    %3720 = vrot.lane.b32.xlu0 %v3718, 64
    %v3721 = vpop.permute.xlu0 %3720
    %v3723 = vmul.f32 %v3706, %v3721
    %v3724 = vmul.f32 %v3282, 0.0
    %v3725 = vadd.f32 %v3723, %v3724
    %v3726 = vmul.f32 %v3284, 0.0
    %v3727 = vadd.f32 %v3717, %v3726
    %v3728 = vsel %vm332, %v3454, 0
    %3730 = vmatprep.subr.mxu0 0.0
    %3731 = vmatpush1.msra.mxu0 %v312
    %3732 = vmatprep.subr.mxu0 0.0
    %3733 = vmatpush1.msra.mxu0 %v313
    %3734 = vmatprep.subr.mxu0 0.0
    %3735 = vmatpush1.msra.mxu0 %v314
    %3736 = vmatprep.subr.mxu0 0.0
    %3737 = vmatpush1.msra.mxu0 %v315
    %3738 = vmatprep.subr.mxu0 0.0
    %3739 = vmatpush1.msra.mxu0 0.0
    %3740 = vmatprep.subr.mxu0 0.0
    %3741 = vmatpush1.msra.mxu0 0.0
    %3742 = vmatprep.subr.mxu0 0.0
    %3743 = vmatpush1.msra.mxu0 0.0
    %3744 = vmatprep.subr.mxu0 0.0
    %3745 = vmatpush1.msra.mxu0 0.0
    %3746 = vmatprep.subr.mxu0 0.0
    %3747 = vmatpush1.msra.mxu0 0.0
    %3748 = vmatprep.subr.mxu0 0.0
    %3749 = vmatpush1.msra.mxu0 0.0
    %3750 = vmatprep.subr.mxu0 0.0
    %3751 = vmatpush1.msra.mxu0 0.0
    %3752 = vmatprep.subr.mxu0 0.0
    %3753 = vmatpush1.msra.mxu0 0.0
    %3754 = vmatprep.subr.mxu0 0.0
    %3755 = vmatpush1.msra.mxu0 0.0
    %3756 = vmatprep.subr.mxu0 0.0
    %3757 = vmatpush1.msra.mxu0 0.0
    %3758 = vmatprep.subr.mxu0 0.0
    %3759 = vmatpush1.msra.mxu0 0.0
    %3760 = vmatprep.subr.mxu0 0.0
    %3761 = vmatpush1.msra.mxu0 0.0
    %3762 = vmatprep.subr.mxu0 0.0
    %3763 = vmatpush1.msra.mxu0 0.0
    %3764 = vmatprep.subr.mxu0 0.0
    %3765 = vmatpush1.msra.mxu0 0.0
    %3766 = vmatprep.subr.mxu0 0.0
    %3767 = vmatpush1.msra.mxu0 0.0
    %3768 = vmatprep.subr.mxu0 0.0
    %3769 = vmatpush1.msra.mxu0 0.0
    %3770 = vmatprep.subr.mxu0 0.0
    %3771 = vmatpush1.msra.mxu0 0.0
    %3772 = vmatprep.subr.mxu0 0.0
    %3773 = vmatpush1.msra.mxu0 0.0
    %3774 = vmatprep.subr.mxu0 0.0
    %3775 = vmatpush1.msra.mxu0 0.0
    %3776 = vmatprep.subr.mxu0 0.0
    %3777 = vmatpush1.msra.mxu0 0.0
    %3778 = vmatprep.subr.mxu0 0.0
    %3779 = vmatpush1.msra.mxu0 0.0
    %3780 = vmatprep.subr.mxu0 0.0
    %3781 = vmatpush1.msra.mxu0 0.0
    %3782 = vmatprep.subr.mxu0 0.0
    %3783 = vmatpush1.msra.mxu0 0.0
    %3784 = vmatprep.subr.mxu0 0.0
    %3785 = vmatpush1.msra.mxu0 0.0
    %3786 = vmatprep.subr.mxu0 0.0
    %3787 = vmatpush1.msra.mxu0 0.0
    %3788 = vmatprep.subr.mxu0 0.0
    %3789 = vmatpush1.msra.mxu0 0.0
    %3790 = vmatprep.subr.mxu0 0.0
    %3791 = vmatpush1.msra.mxu0 0.0
    %3792 = vmatprep.subr.mxu0 0.0
    %3793 = vmatpush1.msra.mxu0 0.0
    %3794 = vmatprep.mubr.f32.mxu0 0.0
    %3795 = vmatmul.mubr.f32.gmra.mrb[0].mxu0 %v3728
    %v3796 = vpop.f32.mrb[0].mxu0
    %v3797 = vadd.f32 0.0, %v3796
    %v3798 = vpop.f32.mrb[0].mxu0
    %3799 = vdwg.mxu0
    %3800 = vmatprep.subr.mxu0 0.0
    %3801 = vmatpush1.msra.mxu0 %v304
    %3802 = vmatprep.subr.mxu0 0.0
    %3803 = vmatpush1.msra.mxu0 %v305
    %3804 = vmatprep.subr.mxu0 0.0
    %3805 = vmatpush1.msra.mxu0 %v306
    %3806 = vmatprep.subr.mxu0 0.0
    %3807 = vmatpush1.msra.mxu0 %v307
    %3808 = vmatprep.subr.mxu0 0.0
    %3809 = vmatpush1.msra.mxu0 0.0
    %3810 = vmatprep.subr.mxu0 0.0
    %3811 = vmatpush1.msra.mxu0 0.0
    %3812 = vmatprep.subr.mxu0 0.0
    %3813 = vmatpush1.msra.mxu0 0.0
    %3814 = vmatprep.subr.mxu0 0.0
    %3815 = vmatpush1.msra.mxu0 0.0
    %3816 = vmatprep.subr.mxu0 0.0
    %3817 = vmatpush1.msra.mxu0 0.0
    %3818 = vmatprep.subr.mxu0 0.0
    %3819 = vmatpush1.msra.mxu0 0.0
    %3820 = vmatprep.subr.mxu0 0.0
    %3821 = vmatpush1.msra.mxu0 0.0
    %3822 = vmatprep.subr.mxu0 0.0
    %3823 = vmatpush1.msra.mxu0 0.0
    %3824 = vmatprep.subr.mxu0 0.0
    %3825 = vmatpush1.msra.mxu0 0.0
    %3826 = vmatprep.subr.mxu0 0.0
    %3827 = vmatpush1.msra.mxu0 0.0
    %3828 = vmatprep.subr.mxu0 0.0
    %3829 = vmatpush1.msra.mxu0 0.0
    %3830 = vmatprep.subr.mxu0 0.0
    %3831 = vmatpush1.msra.mxu0 0.0
    %3832 = vmatprep.subr.mxu0 0.0
    %3833 = vmatpush1.msra.mxu0 0.0
    %3834 = vmatprep.subr.mxu0 0.0
    %3835 = vmatpush1.msra.mxu0 0.0
    %3836 = vmatprep.subr.mxu0 0.0
    %3837 = vmatpush1.msra.mxu0 0.0
    %3838 = vmatprep.subr.mxu0 0.0
    %3839 = vmatpush1.msra.mxu0 0.0
    %3840 = vmatprep.subr.mxu0 0.0
    %3841 = vmatpush1.msra.mxu0 0.0
    %3842 = vmatprep.subr.mxu0 0.0
    %3843 = vmatpush1.msra.mxu0 0.0
    %3844 = vmatprep.subr.mxu0 0.0
    %3845 = vmatpush1.msra.mxu0 0.0
    %3846 = vmatprep.subr.mxu0 0.0
    %3847 = vmatpush1.msra.mxu0 0.0
    %3848 = vmatprep.subr.mxu0 0.0
    %3849 = vmatpush1.msra.mxu0 0.0
    %3850 = vmatprep.subr.mxu0 0.0
    %3851 = vmatpush1.msra.mxu0 0.0
    %3852 = vmatprep.subr.mxu0 0.0
    %3853 = vmatpush1.msra.mxu0 0.0
    %3854 = vmatprep.subr.mxu0 0.0
    %3855 = vmatpush1.msra.mxu0 0.0
    %3856 = vmatprep.subr.mxu0 0.0
    %3857 = vmatpush1.msra.mxu0 0.0
    %3858 = vmatprep.subr.mxu0 0.0
    %3859 = vmatpush1.msra.mxu0 0.0
    %3860 = vmatprep.subr.mxu0 0.0
    %3861 = vmatpush1.msra.mxu0 0.0
    %3862 = vmatprep.subr.mxu0 0.0
    %3863 = vmatpush1.msra.mxu0 0.0
    %3864 = vmatprep.mubr.f32.mxu0 0.0
    %3865 = vmatmul.mubr.f32.gmra.mrb[0].mxu0 %v3561
    %v3866 = vpop.f32.mrb[0].mxu0
    %v3867 = vadd.f32 %v3797, %v3866
    %v3868 = vpop.f32.mrb[0].mxu0
    %3869 = vdwg.mxu0
    %v3870 = vadd.f32 %v3867, %v317
    %v3871 = vtanh.pop %v3870
    %v3872 = vmul.f32 %v3871, %v323
    %v3873 = vadd.f32 %v3872, %v324
    %v3874 = vmul.f32 %v3873, %v3451
    %3876 = vrot.lane.b32.xlu0 %v3873, 64
    %v3877 = vpop.permute.xlu0 %3876
    %v3879 = vmul.f32 %v3873, %v3877
    %3881 = vrot.lane.b32.xlu0 %v3879, 32
    %v3882 = vpop.permute.xlu0 %3881
    %v3884 = vadd.f32 %v3874, %v3882
    %v3885 = vtanh.pop %v3884
    %3887 = vrot.lane.b32.xlu0 %v3885, 64
    %v3888 = vpop.permute.xlu0 %3887
    %v3890 = vmul.f32 %v3873, %v3888
    %v3891 = vmul.f32 %v3449, 0.0
    %v3892 = vadd.f32 %v3890, %v3891
    %v3893 = vmul.f32 %v3451, 0.0
    %v3894 = vadd.f32 %v3884, %v3893
    %3896 = vrot.lane.b32.xlu0 %v3892, 32
    %v3897 = vpop.permute.xlu0 %3896
    %3899 = vst.msk [vmem:[#allocation3 + $0x5] sm:$0x1] %vm797, %v3897
    %v3900 = vld [vmem:[#allocation2 + $0x7] sm:$0x1]
    %3902 = vrot.lane.b32.xlu0 %v3555, 32
    %v3903 = vpop.permute.xlu0 %3902
    %v3904 = vsel %vm332, %v3903, 0
    %3906 = vmatprep.subr.mxu0 0.0
    %3907 = vmatpush1.msra.mxu0 %v296
    %3908 = vmatprep.subr.mxu0 0.0
    %3909 = vmatpush1.msra.mxu0 %v297
    %3910 = vmatprep.subr.mxu0 0.0
    %3911 = vmatpush1.msra.mxu0 %v298
    %3912 = vmatprep.subr.mxu0 0.0
    %3913 = vmatpush1.msra.mxu0 %v299
    %3914 = vmatprep.subr.mxu0 0.0
    %3915 = vmatpush1.msra.mxu0 0.0
    %3916 = vmatprep.subr.mxu0 0.0
    %3917 = vmatpush1.msra.mxu0 0.0
    %3918 = vmatprep.subr.mxu0 0.0
    %3919 = vmatpush1.msra.mxu0 0.0
    %3920 = vmatprep.subr.mxu0 0.0
    %3921 = vmatpush1.msra.mxu0 0.0
    %3922 = vmatprep.subr.mxu0 0.0
    %3923 = vmatpush1.msra.mxu0 0.0
    %3924 = vmatprep.subr.mxu0 0.0
    %3925 = vmatpush1.msra.mxu0 0.0
    %3926 = vmatprep.subr.mxu0 0.0
    %3927 = vmatpush1.msra.mxu0 0.0
    %3928 = vmatprep.subr.mxu0 0.0
    %3929 = vmatpush1.msra.mxu0 0.0
    %3930 = vmatprep.subr.mxu0 0.0
    %3931 = vmatpush1.msra.mxu0 0.0
    %3932 = vmatprep.subr.mxu0 0.0
    %3933 = vmatpush1.msra.mxu0 0.0
    %3934 = vmatprep.subr.mxu0 0.0
    %3935 = vmatpush1.msra.mxu0 0.0
    %3936 = vmatprep.subr.mxu0 0.0
    %3937 = vmatpush1.msra.mxu0 0.0
    %3938 = vmatprep.subr.mxu0 0.0
    %3939 = vmatpush1.msra.mxu0 0.0
    %3940 = vmatprep.subr.mxu0 0.0
    %3941 = vmatpush1.msra.mxu0 0.0
    %3942 = vmatprep.subr.mxu0 0.0
    %3943 = vmatpush1.msra.mxu0 0.0
    %3944 = vmatprep.subr.mxu0 0.0
    %3945 = vmatpush1.msra.mxu0 0.0
    %3946 = vmatprep.subr.mxu0 0.0
    %3947 = vmatpush1.msra.mxu0 0.0
    %3948 = vmatprep.subr.mxu0 0.0
    %3949 = vmatpush1.msra.mxu0 0.0
    %3950 = vmatprep.subr.mxu0 0.0
    %3951 = vmatpush1.msra.mxu0 0.0
    %3952 = vmatprep.subr.mxu0 0.0
    %3953 = vmatpush1.msra.mxu0 0.0
    %3954 = vmatprep.subr.mxu0 0.0
    %3955 = vmatpush1.msra.mxu0 0.0
    %3956 = vmatprep.subr.mxu0 0.0
    %3957 = vmatpush1.msra.mxu0 0.0
    %3958 = vmatprep.subr.mxu0 0.0
    %3959 = vmatpush1.msra.mxu0 0.0
    %3960 = vmatprep.subr.mxu0 0.0
    %3961 = vmatpush1.msra.mxu0 0.0
    %3962 = vmatprep.subr.mxu0 0.0
    %3963 = vmatpush1.msra.mxu0 0.0
    %3964 = vmatprep.subr.mxu0 0.0
    %3965 = vmatpush1.msra.mxu0 0.0
    %3966 = vmatprep.subr.mxu0 0.0
    %3967 = vmatpush1.msra.mxu0 0.0
    %3968 = vmatprep.subr.mxu0 0.0
    %3969 = vmatpush1.msra.mxu0 0.0
    %3970 = vmatprep.mubr.f32.mxu0 0.0
    %3971 = vmatmul.mubr.f32.gmra.mrb[0].mxu0 %v3904
    %v3972 = vpop.f32.mrb[0].mxu0
    %v3973 = vadd.f32 0.0, %v3972
    %v3974 = vpop.f32.mrb[0].mxu0
    %3975 = vdwg.mxu0
    %v3976 = vadd.f32 %v3900, %v3973
    %v3977 = vtanh.pop %v3976
    %v3978 = vmul.f32 %v3977, %v323
    %v3979 = vadd.f32 %v3978, %v324
    %v3980 = vmul.f32 %v3979, %v3557
    %3982 = vrot.lane.b32.xlu0 %v3979, 64
    %v3983 = vpop.permute.xlu0 %3982
    %v3985 = vmul.f32 %v3979, %v3983
    %3987 = vrot.lane.b32.xlu0 %v3985, 32
    %v3988 = vpop.permute.xlu0 %3987
    %v3990 = vadd.f32 %v3980, %v3988
    %v3991 = vtanh.pop %v3990
    %3993 = vrot.lane.b32.xlu0 %v3991, 64
    %v3994 = vpop.permute.xlu0 %3993
    %v3996 = vmul.f32 %v3979, %v3994
    %v3997 = vmul.f32 %v3996, 0.0
    %v3998 = vadd.f32 %v3997, %v3555
    %v3999 = vmul.f32 %v3990, 0.0
    %v4000 = vadd.f32 %v3999, %v3557
    %4002 = vrot.lane.b32.xlu0 %v3725, 32
    %v4003 = vpop.permute.xlu0 %4002
    %v4004 = vsel %vm332, %v4003, 0
    %4006 = vmatprep.subr.mxu0 0.0
    %4007 = vmatpush1.msra.mxu0 %v308
    %4008 = vmatprep.subr.mxu0 0.0
    %4009 = vmatpush1.msra.mxu0 %v309
    %4010 = vmatprep.subr.mxu0 0.0
    %4011 = vmatpush1.msra.mxu0 %v310
    %4012 = vmatprep.subr.mxu0 0.0
    %4013 = vmatpush1.msra.mxu0 %v311
    %4014 = vmatprep.subr.mxu0 0.0
    %4015 = vmatpush1.msra.mxu0 0.0
    %4016 = vmatprep.subr.mxu0 0.0
    %4017 = vmatpush1.msra.mxu0 0.0
    %4018 = vmatprep.subr.mxu0 0.0
    %4019 = vmatpush1.msra.mxu0 0.0
    %4020 = vmatprep.subr.mxu0 0.0
    %4021 = vmatpush1.msra.mxu0 0.0
    %4022 = vmatprep.subr.mxu0 0.0
    %4023 = vmatpush1.msra.mxu0 0.0
    %4024 = vmatprep.subr.mxu0 0.0
    %4025 = vmatpush1.msra.mxu0 0.0
    %4026 = vmatprep.subr.mxu0 0.0
    %4027 = vmatpush1.msra.mxu0 0.0
    %4028 = vmatprep.subr.mxu0 0.0
    %4029 = vmatpush1.msra.mxu0 0.0
    %4030 = vmatprep.subr.mxu0 0.0
    %4031 = vmatpush1.msra.mxu0 0.0
    %4032 = vmatprep.subr.mxu0 0.0
    %4033 = vmatpush1.msra.mxu0 0.0
    %4034 = vmatprep.subr.mxu0 0.0
    %4035 = vmatpush1.msra.mxu0 0.0
    %4036 = vmatprep.subr.mxu0 0.0
    %4037 = vmatpush1.msra.mxu0 0.0
    %4038 = vmatprep.subr.mxu0 0.0
    %4039 = vmatpush1.msra.mxu0 0.0
    %4040 = vmatprep.subr.mxu0 0.0
    %4041 = vmatpush1.msra.mxu0 0.0
    %4042 = vmatprep.subr.mxu0 0.0
    %4043 = vmatpush1.msra.mxu0 0.0
    %4044 = vmatprep.subr.mxu0 0.0
    %4045 = vmatpush1.msra.mxu0 0.0
    %4046 = vmatprep.subr.mxu0 0.0
    %4047 = vmatpush1.msra.mxu0 0.0
    %4048 = vmatprep.subr.mxu0 0.0
    %4049 = vmatpush1.msra.mxu0 0.0
    %4050 = vmatprep.subr.mxu0 0.0
    %4051 = vmatpush1.msra.mxu0 0.0
    %4052 = vmatprep.subr.mxu0 0.0
    %4053 = vmatpush1.msra.mxu0 0.0
    %4054 = vmatprep.subr.mxu0 0.0
    %4055 = vmatpush1.msra.mxu0 0.0
    %4056 = vmatprep.subr.mxu0 0.0
    %4057 = vmatpush1.msra.mxu0 0.0
    %4058 = vmatprep.subr.mxu0 0.0
    %4059 = vmatpush1.msra.mxu0 0.0
    %4060 = vmatprep.subr.mxu0 0.0
    %4061 = vmatpush1.msra.mxu0 0.0
    %4062 = vmatprep.subr.mxu0 0.0
    %4063 = vmatpush1.msra.mxu0 0.0
    %4064 = vmatprep.subr.mxu0 0.0
    %4065 = vmatpush1.msra.mxu0 0.0
    %4066 = vmatprep.subr.mxu0 0.0
    %4067 = vmatpush1.msra.mxu0 0.0
    %4068 = vmatprep.subr.mxu0 0.0
    %4069 = vmatpush1.msra.mxu0 0.0
    %4070 = vmatprep.mubr.f32.mxu0 0.0
    %4071 = vmatmul.mubr.f32.gmra.mrb[0].mxu0 %v4004
    %v4072 = vpop.f32.mrb[0].mxu0
    %v4073 = vadd.f32 0.0, %v4072
    %v4074 = vpop.f32.mrb[0].mxu0
    %4075 = vdwg.mxu0
    %4076 = vmatprep.subr.mxu0 0.0
    %4077 = vmatpush1.msra.mxu0 %v300
    %4078 = vmatprep.subr.mxu0 0.0
    %4079 = vmatpush1.msra.mxu0 %v301
    %4080 = vmatprep.subr.mxu0 0.0
    %4081 = vmatpush1.msra.mxu0 %v302
    %4082 = vmatprep.subr.mxu0 0.0
    %4083 = vmatpush1.msra.mxu0 %v303
    %4084 = vmatprep.subr.mxu0 0.0
    %4085 = vmatpush1.msra.mxu0 0.0
    %4086 = vmatprep.subr.mxu0 0.0
    %4087 = vmatpush1.msra.mxu0 0.0
    %4088 = vmatprep.subr.mxu0 0.0
    %4089 = vmatpush1.msra.mxu0 0.0
    %4090 = vmatprep.subr.mxu0 0.0
    %4091 = vmatpush1.msra.mxu0 0.0
    %4092 = vmatprep.subr.mxu0 0.0
    %4093 = vmatpush1.msra.mxu0 0.0
    %4094 = vmatprep.subr.mxu0 0.0
    %4095 = vmatpush1.msra.mxu0 0.0
    %4096 = vmatprep.subr.mxu0 0.0
    %4097 = vmatpush1.msra.mxu0 0.0
    %4098 = vmatprep.subr.mxu0 0.0
    %4099 = vmatpush1.msra.mxu0 0.0
    %4100 = vmatprep.subr.mxu0 0.0
    %4101 = vmatpush1.msra.mxu0 0.0
    %4102 = vmatprep.subr.mxu0 0.0
    %4103 = vmatpush1.msra.mxu0 0.0
    %4104 = vmatprep.subr.mxu0 0.0
    %4105 = vmatpush1.msra.mxu0 0.0
    %4106 = vmatprep.subr.mxu0 0.0
    %4107 = vmatpush1.msra.mxu0 0.0
    %4108 = vmatprep.subr.mxu0 0.0
    %4109 = vmatpush1.msra.mxu0 0.0
    %4110 = vmatprep.subr.mxu0 0.0
    %4111 = vmatpush1.msra.mxu0 0.0
    %4112 = vmatprep.subr.mxu0 0.0
    %4113 = vmatpush1.msra.mxu0 0.0
    %4114 = vmatprep.subr.mxu0 0.0
    %4115 = vmatpush1.msra.mxu0 0.0
    %4116 = vmatprep.subr.mxu0 0.0
    %4117 = vmatpush1.msra.mxu0 0.0
    %4118 = vmatprep.subr.mxu0 0.0
    %4119 = vmatpush1.msra.mxu0 0.0
    %4120 = vmatprep.subr.mxu0 0.0
    %4121 = vmatpush1.msra.mxu0 0.0
    %4122 = vmatprep.subr.mxu0 0.0
    %4123 = vmatpush1.msra.mxu0 0.0
    %4124 = vmatprep.subr.mxu0 0.0
    %4125 = vmatpush1.msra.mxu0 0.0
    %4126 = vmatprep.subr.mxu0 0.0
    %4127 = vmatpush1.msra.mxu0 0.0
    %4128 = vmatprep.subr.mxu0 0.0
    %4129 = vmatpush1.msra.mxu0 0.0
    %4130 = vmatprep.subr.mxu0 0.0
    %4131 = vmatpush1.msra.mxu0 0.0
    %4132 = vmatprep.subr.mxu0 0.0
    %4133 = vmatpush1.msra.mxu0 0.0
    %4134 = vmatprep.subr.mxu0 0.0
    %4135 = vmatpush1.msra.mxu0 0.0
    %4136 = vmatprep.subr.mxu0 0.0
    %4137 = vmatpush1.msra.mxu0 0.0
    %4138 = vmatprep.subr.mxu0 0.0
    %4139 = vmatpush1.msra.mxu0 0.0
    %4140 = vmatprep.mubr.f32.mxu0 0.0
    %4141 = vmatmul.mubr.f32.gmra.mrb[0].mxu0 %v3904
    %v4142 = vpop.f32.mrb[0].mxu0
    %v4143 = vadd.f32 %v4073, %v4142
    %v4144 = vpop.f32.mrb[0].mxu0
    %4145 = vdwg.mxu0
    %v4146 = vadd.f32 %v4143, %v316
    %v4147 = vtanh.pop %v4146
    %v4148 = vmul.f32 %v4147, %v323
    %v4149 = vadd.f32 %v4148, %v324
    %v4150 = vmul.f32 %v4149, %v3727
    %4152 = vrot.lane.b32.xlu0 %v4149, 64
    %v4153 = vpop.permute.xlu0 %4152
    %v4155 = vmul.f32 %v4149, %v4153
    %4157 = vrot.lane.b32.xlu0 %v4155, 32
    %v4158 = vpop.permute.xlu0 %4157
    %v4160 = vadd.f32 %v4150, %v4158
    %v4161 = vtanh.pop %v4160
    %4163 = vrot.lane.b32.xlu0 %v4161, 64
    %v4164 = vpop.permute.xlu0 %4163
    %v4166 = vmul.f32 %v4149, %v4164
    %v4167 = vmul.f32 %v3725, 0.0
    %v4168 = vadd.f32 %v4166, %v4167
    %v4169 = vmul.f32 %v3727, 0.0
    %v4170 = vadd.f32 %v4160, %v4169
    %v4171 = vsel %vm332, %v3897, 0
    %4173 = vmatprep.subr.mxu0 0.0
    %4174 = vmatpush1.msra.mxu0 %v312
    %4175 = vmatprep.subr.mxu0 0.0
    %4176 = vmatpush1.msra.mxu0 %v313
    %4177 = vmatprep.subr.mxu0 0.0
    %4178 = vmatpush1.msra.mxu0 %v314
    %4179 = vmatprep.subr.mxu0 0.0
    %4180 = vmatpush1.msra.mxu0 %v315
    %4181 = vmatprep.subr.mxu0 0.0
    %4182 = vmatpush1.msra.mxu0 0.0
    %4183 = vmatprep.subr.mxu0 0.0
    %4184 = vmatpush1.msra.mxu0 0.0
    %4185 = vmatprep.subr.mxu0 0.0
    %4186 = vmatpush1.msra.mxu0 0.0
    %4187 = vmatprep.subr.mxu0 0.0
    %4188 = vmatpush1.msra.mxu0 0.0
    %4189 = vmatprep.subr.mxu0 0.0
    %4190 = vmatpush1.msra.mxu0 0.0
    %4191 = vmatprep.subr.mxu0 0.0
    %4192 = vmatpush1.msra.mxu0 0.0
    %4193 = vmatprep.subr.mxu0 0.0
    %4194 = vmatpush1.msra.mxu0 0.0
    %4195 = vmatprep.subr.mxu0 0.0
    %4196 = vmatpush1.msra.mxu0 0.0
    %4197 = vmatprep.subr.mxu0 0.0
    %4198 = vmatpush1.msra.mxu0 0.0
    %4199 = vmatprep.subr.mxu0 0.0
    %4200 = vmatpush1.msra.mxu0 0.0
    %4201 = vmatprep.subr.mxu0 0.0
    %4202 = vmatpush1.msra.mxu0 0.0
    %4203 = vmatprep.subr.mxu0 0.0
    %4204 = vmatpush1.msra.mxu0 0.0
    %4205 = vmatprep.subr.mxu0 0.0
    %4206 = vmatpush1.msra.mxu0 0.0
    %4207 = vmatprep.subr.mxu0 0.0
    %4208 = vmatpush1.msra.mxu0 0.0
    %4209 = vmatprep.subr.mxu0 0.0
    %4210 = vmatpush1.msra.mxu0 0.0
    %4211 = vmatprep.subr.mxu0 0.0
    %4212 = vmatpush1.msra.mxu0 0.0
    %4213 = vmatprep.subr.mxu0 0.0
    %4214 = vmatpush1.msra.mxu0 0.0
    %4215 = vmatprep.subr.mxu0 0.0
    %4216 = vmatpush1.msra.mxu0 0.0
    %4217 = vmatprep.subr.mxu0 0.0
    %4218 = vmatpush1.msra.mxu0 0.0
    %4219 = vmatprep.subr.mxu0 0.0
    %4220 = vmatpush1.msra.mxu0 0.0
    %4221 = vmatprep.subr.mxu0 0.0
    %4222 = vmatpush1.msra.mxu0 0.0
    %4223 = vmatprep.subr.mxu0 0.0
    %4224 = vmatpush1.msra.mxu0 0.0
    %4225 = vmatprep.subr.mxu0 0.0
    %4226 = vmatpush1.msra.mxu0 0.0
    %4227 = vmatprep.subr.mxu0 0.0
    %4228 = vmatpush1.msra.mxu0 0.0
    %4229 = vmatprep.subr.mxu0 0.0
    %4230 = vmatpush1.msra.mxu0 0.0
    %4231 = vmatprep.subr.mxu0 0.0
    %4232 = vmatpush1.msra.mxu0 0.0
    %4233 = vmatprep.subr.mxu0 0.0
    %4234 = vmatpush1.msra.mxu0 0.0
    %4235 = vmatprep.subr.mxu0 0.0
    %4236 = vmatpush1.msra.mxu0 0.0
    %4237 = vmatprep.mubr.f32.mxu0 0.0
    %4238 = vmatmul.mubr.f32.gmra.mrb[0].mxu0 %v4171
    %v4239 = vpop.f32.mrb[0].mxu0
    %v4240 = vadd.f32 0.0, %v4239
    %v4241 = vpop.f32.mrb[0].mxu0
    %4242 = vdwg.mxu0
    %4243 = vmatprep.subr.mxu0 0.0
    %4244 = vmatpush1.msra.mxu0 %v304
    %4245 = vmatprep.subr.mxu0 0.0
    %4246 = vmatpush1.msra.mxu0 %v305
    %4247 = vmatprep.subr.mxu0 0.0
    %4248 = vmatpush1.msra.mxu0 %v306
    %4249 = vmatprep.subr.mxu0 0.0
    %4250 = vmatpush1.msra.mxu0 %v307
    %4251 = vmatprep.subr.mxu0 0.0
    %4252 = vmatpush1.msra.mxu0 0.0
    %4253 = vmatprep.subr.mxu0 0.0
    %4254 = vmatpush1.msra.mxu0 0.0
    %4255 = vmatprep.subr.mxu0 0.0
    %4256 = vmatpush1.msra.mxu0 0.0
    %4257 = vmatprep.subr.mxu0 0.0
    %4258 = vmatpush1.msra.mxu0 0.0
    %4259 = vmatprep.subr.mxu0 0.0
    %4260 = vmatpush1.msra.mxu0 0.0
    %4261 = vmatprep.subr.mxu0 0.0
    %4262 = vmatpush1.msra.mxu0 0.0
    %4263 = vmatprep.subr.mxu0 0.0
    %4264 = vmatpush1.msra.mxu0 0.0
    %4265 = vmatprep.subr.mxu0 0.0
    %4266 = vmatpush1.msra.mxu0 0.0
    %4267 = vmatprep.subr.mxu0 0.0
    %4268 = vmatpush1.msra.mxu0 0.0
    %4269 = vmatprep.subr.mxu0 0.0
    %4270 = vmatpush1.msra.mxu0 0.0
    %4271 = vmatprep.subr.mxu0 0.0
    %4272 = vmatpush1.msra.mxu0 0.0
    %4273 = vmatprep.subr.mxu0 0.0
    %4274 = vmatpush1.msra.mxu0 0.0
    %4275 = vmatprep.subr.mxu0 0.0
    %4276 = vmatpush1.msra.mxu0 0.0
    %4277 = vmatprep.subr.mxu0 0.0
    %4278 = vmatpush1.msra.mxu0 0.0
    %4279 = vmatprep.subr.mxu0 0.0
    %4280 = vmatpush1.msra.mxu0 0.0
    %4281 = vmatprep.subr.mxu0 0.0
    %4282 = vmatpush1.msra.mxu0 0.0
    %4283 = vmatprep.subr.mxu0 0.0
    %4284 = vmatpush1.msra.mxu0 0.0
    %4285 = vmatprep.subr.mxu0 0.0
    %4286 = vmatpush1.msra.mxu0 0.0
    %4287 = vmatprep.subr.mxu0 0.0
    %4288 = vmatpush1.msra.mxu0 0.0
    %4289 = vmatprep.subr.mxu0 0.0
    %4290 = vmatpush1.msra.mxu0 0.0
    %4291 = vmatprep.subr.mxu0 0.0
    %4292 = vmatpush1.msra.mxu0 0.0
    %4293 = vmatprep.subr.mxu0 0.0
    %4294 = vmatpush1.msra.mxu0 0.0
    %4295 = vmatprep.subr.mxu0 0.0
    %4296 = vmatpush1.msra.mxu0 0.0
    %4297 = vmatprep.subr.mxu0 0.0
    %4298 = vmatpush1.msra.mxu0 0.0
    %4299 = vmatprep.subr.mxu0 0.0
    %4300 = vmatpush1.msra.mxu0 0.0
    %4301 = vmatprep.subr.mxu0 0.0
    %4302 = vmatpush1.msra.mxu0 0.0
    %4303 = vmatprep.subr.mxu0 0.0
    %4304 = vmatpush1.msra.mxu0 0.0
    %4305 = vmatprep.subr.mxu0 0.0
    %4306 = vmatpush1.msra.mxu0 0.0
    %4307 = vmatprep.mubr.f32.mxu0 0.0
    %4308 = vmatmul.mubr.f32.gmra.mrb[0].mxu0 %v4004
    %v4309 = vpop.f32.mrb[0].mxu0
    %v4310 = vadd.f32 %v4240, %v4309
    %v4311 = vpop.f32.mrb[0].mxu0
    %4312 = vdwg.mxu0
    %v4313 = vadd.f32 %v4310, %v317
    %v4314 = vtanh.pop %v4313
    %v4315 = vmul.f32 %v4314, %v323
    %v4316 = vadd.f32 %v4315, %v324
    %v4317 = vmul.f32 %v4316, %v3894
    %4319 = vrot.lane.b32.xlu0 %v4316, 64
    %v4320 = vpop.permute.xlu0 %4319
    %v4322 = vmul.f32 %v4316, %v4320
    %4324 = vrot.lane.b32.xlu0 %v4322, 32
    %v4325 = vpop.permute.xlu0 %4324
    %v4327 = vadd.f32 %v4317, %v4325
    %v4328 = vtanh.pop %v4327
    %4330 = vrot.lane.b32.xlu0 %v4328, 64
    %v4331 = vpop.permute.xlu0 %4330
    %v4333 = vmul.f32 %v4316, %v4331
    %v4334 = vmul.f32 %v3892, 0.0
    %v4335 = vadd.f32 %v4333, %v4334
    %v4336 = vmul.f32 %v3894, 0.0
    %v4337 = vadd.f32 %v4327, %v4336
    %4339 = vrot.lane.b32.xlu0 %v4335, 32
    %v4340 = vpop.permute.xlu0 %4339
    %4342 = vst.msk [vmem:[#allocation3 + $0x6] sm:$0x1] %vm797, %v4340
    %v4343 = vld [vmem:[#allocation2 + $0x7] sm:$0x1]
    %4345 = vrot.lane.b32.xlu0 %v3998, 32
    %v4346 = vpop.permute.xlu0 %4345
    %v4347 = vsel %vm332, %v4346, 0
    %4349 = vmatprep.subr.mxu0 0.0
    %4350 = vmatpush1.msra.mxu0 %v296
    %4351 = vmatprep.subr.mxu0 0.0
    %4352 = vmatpush1.msra.mxu0 %v297
    %4353 = vmatprep.subr.mxu0 0.0
    %4354 = vmatpush1.msra.mxu0 %v298
    %4355 = vmatprep.subr.mxu0 0.0
    %4356 = vmatpush1.msra.mxu0 %v299
    %4357 = vmatprep.subr.mxu0 0.0
    %4358 = vmatpush1.msra.mxu0 0.0
    %4359 = vmatprep.subr.mxu0 0.0
    %4360 = vmatpush1.msra.mxu0 0.0
    %4361 = vmatprep.subr.mxu0 0.0
    %4362 = vmatpush1.msra.mxu0 0.0
    %4363 = vmatprep.subr.mxu0 0.0
    %4364 = vmatpush1.msra.mxu0 0.0
    %4365 = vmatprep.subr.mxu0 0.0
    %4366 = vmatpush1.msra.mxu0 0.0
    %4367 = vmatprep.subr.mxu0 0.0
    %4368 = vmatpush1.msra.mxu0 0.0
    %4369 = vmatprep.subr.mxu0 0.0
    %4370 = vmatpush1.msra.mxu0 0.0
    %4371 = vmatprep.subr.mxu0 0.0
    %4372 = vmatpush1.msra.mxu0 0.0
    %4373 = vmatprep.subr.mxu0 0.0
    %4374 = vmatpush1.msra.mxu0 0.0
    %4375 = vmatprep.subr.mxu0 0.0
    %4376 = vmatpush1.msra.mxu0 0.0
    %4377 = vmatprep.subr.mxu0 0.0
    %4378 = vmatpush1.msra.mxu0 0.0
    %4379 = vmatprep.subr.mxu0 0.0
    %4380 = vmatpush1.msra.mxu0 0.0
    %4381 = vmatprep.subr.mxu0 0.0
    %4382 = vmatpush1.msra.mxu0 0.0
    %4383 = vmatprep.subr.mxu0 0.0
    %4384 = vmatpush1.msra.mxu0 0.0
    %4385 = vmatprep.subr.mxu0 0.0
    %4386 = vmatpush1.msra.mxu0 0.0
    %4387 = vmatprep.subr.mxu0 0.0
    %4388 = vmatpush1.msra.mxu0 0.0
    %4389 = vmatprep.subr.mxu0 0.0
    %4390 = vmatpush1.msra.mxu0 0.0
    %4391 = vmatprep.subr.mxu0 0.0
    %4392 = vmatpush1.msra.mxu0 0.0
    %4393 = vmatprep.subr.mxu0 0.0
    %4394 = vmatpush1.msra.mxu0 0.0
    %4395 = vmatprep.subr.mxu0 0.0
    %4396 = vmatpush1.msra.mxu0 0.0
    %4397 = vmatprep.subr.mxu0 0.0
    %4398 = vmatpush1.msra.mxu0 0.0
    %4399 = vmatprep.subr.mxu0 0.0
    %4400 = vmatpush1.msra.mxu0 0.0
    %4401 = vmatprep.subr.mxu0 0.0
    %4402 = vmatpush1.msra.mxu0 0.0
    %4403 = vmatprep.subr.mxu0 0.0
    %4404 = vmatpush1.msra.mxu0 0.0
    %4405 = vmatprep.subr.mxu0 0.0
    %4406 = vmatpush1.msra.mxu0 0.0
    %4407 = vmatprep.subr.mxu0 0.0
    %4408 = vmatpush1.msra.mxu0 0.0
    %4409 = vmatprep.subr.mxu0 0.0
    %4410 = vmatpush1.msra.mxu0 0.0
    %4411 = vmatprep.subr.mxu0 0.0
    %4412 = vmatpush1.msra.mxu0 0.0
    %4413 = vmatprep.mubr.f32.mxu0 0.0
    %4414 = vmatmul.mubr.f32.gmra.mrb[0].mxu0 %v4347
    %v4415 = vpop.f32.mrb[0].mxu0
    %v4416 = vadd.f32 0.0, %v4415
    %v4417 = vpop.f32.mrb[0].mxu0
    %4418 = vdwg.mxu0
    %v4419 = vadd.f32 %v4343, %v4416
    %v4420 = vtanh.pop %v4419
    %v4421 = vmul.f32 %v4420, %v323
    %v4422 = vadd.f32 %v4421, %v324
    %v4423 = vmul.f32 %v4422, %v4000
    %4425 = vrot.lane.b32.xlu0 %v4422, 64
    %v4426 = vpop.permute.xlu0 %4425
    %v4428 = vmul.f32 %v4422, %v4426
    %4430 = vrot.lane.b32.xlu0 %v4428, 32
    %v4431 = vpop.permute.xlu0 %4430
    %v4433 = vadd.f32 %v4423, %v4431
    %v4434 = vtanh.pop %v4433
    %4436 = vrot.lane.b32.xlu0 %v4434, 64
    %v4437 = vpop.permute.xlu0 %4436
    %v4439 = vmul.f32 %v4422, %v4437
    %v4440 = vmul.f32 %v4439, 0.0
    %v4441 = vadd.f32 %v4440, %v3998
    %v4442 = vmul.f32 %v4433, 0.0
    %v4443 = vadd.f32 %v4442, %v4000
    %4445 = vrot.lane.b32.xlu0 %v4168, 32
    %v4446 = vpop.permute.xlu0 %4445
    %v4447 = vsel %vm332, %v4446, 0
    %4449 = vmatprep.subr.mxu0 0.0
    %4450 = vmatpush1.msra.mxu0 %v308
    %4451 = vmatprep.subr.mxu0 0.0
    %4452 = vmatpush1.msra.mxu0 %v309
    %4453 = vmatprep.subr.mxu0 0.0
    %4454 = vmatpush1.msra.mxu0 %v310
    %4455 = vmatprep.subr.mxu0 0.0
    %4456 = vmatpush1.msra.mxu0 %v311
    %4457 = vmatprep.subr.mxu0 0.0
    %4458 = vmatpush1.msra.mxu0 0.0
    %4459 = vmatprep.subr.mxu0 0.0
    %4460 = vmatpush1.msra.mxu0 0.0
    %4461 = vmatprep.subr.mxu0 0.0
    %4462 = vmatpush1.msra.mxu0 0.0
    %4463 = vmatprep.subr.mxu0 0.0
    %4464 = vmatpush1.msra.mxu0 0.0
    %4465 = vmatprep.subr.mxu0 0.0
    %4466 = vmatpush1.msra.mxu0 0.0
    %4467 = vmatprep.subr.mxu0 0.0
    %4468 = vmatpush1.msra.mxu0 0.0
    %4469 = vmatprep.subr.mxu0 0.0
    %4470 = vmatpush1.msra.mxu0 0.0
    %4471 = vmatprep.subr.mxu0 0.0
    %4472 = vmatpush1.msra.mxu0 0.0
    %4473 = vmatprep.subr.mxu0 0.0
    %4474 = vmatpush1.msra.mxu0 0.0
    %4475 = vmatprep.subr.mxu0 0.0
    %4476 = vmatpush1.msra.mxu0 0.0
    %4477 = vmatprep.subr.mxu0 0.0
    %4478 = vmatpush1.msra.mxu0 0.0
    %4479 = vmatprep.subr.mxu0 0.0
    %4480 = vmatpush1.msra.mxu0 0.0
    %4481 = vmatprep.subr.mxu0 0.0
    %4482 = vmatpush1.msra.mxu0 0.0
    %4483 = vmatprep.subr.mxu0 0.0
    %4484 = vmatpush1.msra.mxu0 0.0
    %4485 = vmatprep.subr.mxu0 0.0
    %4486 = vmatpush1.msra.mxu0 0.0
    %4487 = vmatprep.subr.mxu0 0.0
    %4488 = vmatpush1.msra.mxu0 0.0
    %4489 = vmatprep.subr.mxu0 0.0
    %4490 = vmatpush1.msra.mxu0 0.0
    %4491 = vmatprep.subr.mxu0 0.0
    %4492 = vmatpush1.msra.mxu0 0.0
    %4493 = vmatprep.subr.mxu0 0.0
    %4494 = vmatpush1.msra.mxu0 0.0
    %4495 = vmatprep.subr.mxu0 0.0
    %4496 = vmatpush1.msra.mxu0 0.0
    %4497 = vmatprep.subr.mxu0 0.0
    %4498 = vmatpush1.msra.mxu0 0.0
    %4499 = vmatprep.subr.mxu0 0.0
    %4500 = vmatpush1.msra.mxu0 0.0
    %4501 = vmatprep.subr.mxu0 0.0
    %4502 = vmatpush1.msra.mxu0 0.0
    %4503 = vmatprep.subr.mxu0 0.0
    %4504 = vmatpush1.msra.mxu0 0.0
    %4505 = vmatprep.subr.mxu0 0.0
    %4506 = vmatpush1.msra.mxu0 0.0
    %4507 = vmatprep.subr.mxu0 0.0
    %4508 = vmatpush1.msra.mxu0 0.0
    %4509 = vmatprep.subr.mxu0 0.0
    %4510 = vmatpush1.msra.mxu0 0.0
    %4511 = vmatprep.subr.mxu0 0.0
    %4512 = vmatpush1.msra.mxu0 0.0
    %4513 = vmatprep.mubr.f32.mxu0 0.0
    %4514 = vmatmul.mubr.f32.gmra.mrb[0].mxu0 %v4447
    %v4515 = vpop.f32.mrb[0].mxu0
    %v4516 = vadd.f32 0.0, %v4515
    %v4517 = vpop.f32.mrb[0].mxu0
    %4518 = vdwg.mxu0
    %4519 = vmatprep.subr.mxu0 0.0
    %4520 = vmatpush1.msra.mxu0 %v300
    %4521 = vmatprep.subr.mxu0 0.0
    %4522 = vmatpush1.msra.mxu0 %v301
    %4523 = vmatprep.subr.mxu0 0.0
    %4524 = vmatpush1.msra.mxu0 %v302
    %4525 = vmatprep.subr.mxu0 0.0
    %4526 = vmatpush1.msra.mxu0 %v303
    %4527 = vmatprep.subr.mxu0 0.0
    %4528 = vmatpush1.msra.mxu0 0.0
    %4529 = vmatprep.subr.mxu0 0.0
    %4530 = vmatpush1.msra.mxu0 0.0
    %4531 = vmatprep.subr.mxu0 0.0
    %4532 = vmatpush1.msra.mxu0 0.0
    %4533 = vmatprep.subr.mxu0 0.0
    %4534 = vmatpush1.msra.mxu0 0.0
    %4535 = vmatprep.subr.mxu0 0.0
    %4536 = vmatpush1.msra.mxu0 0.0
    %4537 = vmatprep.subr.mxu0 0.0
    %4538 = vmatpush1.msra.mxu0 0.0
    %4539 = vmatprep.subr.mxu0 0.0
    %4540 = vmatpush1.msra.mxu0 0.0
    %4541 = vmatprep.subr.mxu0 0.0
    %4542 = vmatpush1.msra.mxu0 0.0
    %4543 = vmatprep.subr.mxu0 0.0
    %4544 = vmatpush1.msra.mxu0 0.0
    %4545 = vmatprep.subr.mxu0 0.0
    %4546 = vmatpush1.msra.mxu0 0.0
    %4547 = vmatprep.subr.mxu0 0.0
    %4548 = vmatpush1.msra.mxu0 0.0
    %4549 = vmatprep.subr.mxu0 0.0
    %4550 = vmatpush1.msra.mxu0 0.0
    %4551 = vmatprep.subr.mxu0 0.0
    %4552 = vmatpush1.msra.mxu0 0.0
    %4553 = vmatprep.subr.mxu0 0.0
    %4554 = vmatpush1.msra.mxu0 0.0
    %4555 = vmatprep.subr.mxu0 0.0
    %4556 = vmatpush1.msra.mxu0 0.0
    %4557 = vmatprep.subr.mxu0 0.0
    %4558 = vmatpush1.msra.mxu0 0.0
    %4559 = vmatprep.subr.mxu0 0.0
    %4560 = vmatpush1.msra.mxu0 0.0
    %4561 = vmatprep.subr.mxu0 0.0
    %4562 = vmatpush1.msra.mxu0 0.0
    %4563 = vmatprep.subr.mxu0 0.0
    %4564 = vmatpush1.msra.mxu0 0.0
    %4565 = vmatprep.subr.mxu0 0.0
    %4566 = vmatpush1.msra.mxu0 0.0
    %4567 = vmatprep.subr.mxu0 0.0
    %4568 = vmatpush1.msra.mxu0 0.0
    %4569 = vmatprep.subr.mxu0 0.0
    %4570 = vmatpush1.msra.mxu0 0.0
    %4571 = vmatprep.subr.mxu0 0.0
    %4572 = vmatpush1.msra.mxu0 0.0
    %4573 = vmatprep.subr.mxu0 0.0
    %4574 = vmatpush1.msra.mxu0 0.0
    %4575 = vmatprep.subr.mxu0 0.0
    %4576 = vmatpush1.msra.mxu0 0.0
    %4577 = vmatprep.subr.mxu0 0.0
    %4578 = vmatpush1.msra.mxu0 0.0
    %4579 = vmatprep.subr.mxu0 0.0
    %4580 = vmatpush1.msra.mxu0 0.0
    %4581 = vmatprep.subr.mxu0 0.0
    %4582 = vmatpush1.msra.mxu0 0.0
    %4583 = vmatprep.mubr.f32.mxu0 0.0
    %4584 = vmatmul.mubr.f32.gmra.mrb[0].mxu0 %v4347
    %v4585 = vpop.f32.mrb[0].mxu0
    %v4586 = vadd.f32 %v4516, %v4585
    %v4587 = vpop.f32.mrb[0].mxu0
    %4588 = vdwg.mxu0
    %v4589 = vadd.f32 %v4586, %v316
    %v4590 = vtanh.pop %v4589
    %v4591 = vmul.f32 %v4590, %v323
    %v4592 = vadd.f32 %v4591, %v324
    %v4593 = vmul.f32 %v4592, %v4170
    %4595 = vrot.lane.b32.xlu0 %v4592, 64
    %v4596 = vpop.permute.xlu0 %4595
    %v4598 = vmul.f32 %v4592, %v4596
    %4600 = vrot.lane.b32.xlu0 %v4598, 32
    %v4601 = vpop.permute.xlu0 %4600
    %v4603 = vadd.f32 %v4593, %v4601
    %v4604 = vtanh.pop %v4603
    %4606 = vrot.lane.b32.xlu0 %v4604, 64
    %v4607 = vpop.permute.xlu0 %4606
    %v4609 = vmul.f32 %v4592, %v4607
    %v4610 = vmul.f32 %v4609, 0.0
    %v4611 = vadd.f32 %v4610, %v4168
    %v4612 = vmul.f32 %v4603, 0.0
    %v4613 = vadd.f32 %v4612, %v4170
    %v4614 = vsel %vm332, %v4340, 0
    %4616 = vmatprep.subr.mxu0 0.0
    %4617 = vmatpush1.msra.mxu0 %v312
    %4618 = vmatprep.subr.mxu0 0.0
    %4619 = vmatpush1.msra.mxu0 %v313
    %4620 = vmatprep.subr.mxu0 0.0
    %4621 = vmatpush1.msra.mxu0 %v314
    %4622 = vmatprep.subr.mxu0 0.0
    %4623 = vmatpush1.msra.mxu0 %v315
    %4624 = vmatprep.subr.mxu0 0.0
    %4625 = vmatpush1.msra.mxu0 0.0
    %4626 = vmatprep.subr.mxu0 0.0
    %4627 = vmatpush1.msra.mxu0 0.0
    %4628 = vmatprep.subr.mxu0 0.0
    %4629 = vmatpush1.msra.mxu0 0.0
    %4630 = vmatprep.subr.mxu0 0.0
    %4631 = vmatpush1.msra.mxu0 0.0
    %4632 = vmatprep.subr.mxu0 0.0
    %4633 = vmatpush1.msra.mxu0 0.0
    %4634 = vmatprep.subr.mxu0 0.0
    %4635 = vmatpush1.msra.mxu0 0.0
    %4636 = vmatprep.subr.mxu0 0.0
    %4637 = vmatpush1.msra.mxu0 0.0
    %4638 = vmatprep.subr.mxu0 0.0
    %4639 = vmatpush1.msra.mxu0 0.0
    %4640 = vmatprep.subr.mxu0 0.0
    %4641 = vmatpush1.msra.mxu0 0.0
    %4642 = vmatprep.subr.mxu0 0.0
    %4643 = vmatpush1.msra.mxu0 0.0
    %4644 = vmatprep.subr.mxu0 0.0
    %4645 = vmatpush1.msra.mxu0 0.0
    %4646 = vmatprep.subr.mxu0 0.0
    %4647 = vmatpush1.msra.mxu0 0.0
    %4648 = vmatprep.subr.mxu0 0.0
    %4649 = vmatpush1.msra.mxu0 0.0
    %4650 = vmatprep.subr.mxu0 0.0
    %4651 = vmatpush1.msra.mxu0 0.0
    %4652 = vmatprep.subr.mxu0 0.0
    %4653 = vmatpush1.msra.mxu0 0.0
    %4654 = vmatprep.subr.mxu0 0.0
    %4655 = vmatpush1.msra.mxu0 0.0
    %4656 = vmatprep.subr.mxu0 0.0
    %4657 = vmatpush1.msra.mxu0 0.0
    %4658 = vmatprep.subr.mxu0 0.0
    %4659 = vmatpush1.msra.mxu0 0.0
    %4660 = vmatprep.subr.mxu0 0.0
    %4661 = vmatpush1.msra.mxu0 0.0
    %4662 = vmatprep.subr.mxu0 0.0
    %4663 = vmatpush1.msra.mxu0 0.0
    %4664 = vmatprep.subr.mxu0 0.0
    %4665 = vmatpush1.msra.mxu0 0.0
    %4666 = vmatprep.subr.mxu0 0.0
    %4667 = vmatpush1.msra.mxu0 0.0
    %4668 = vmatprep.subr.mxu0 0.0
    %4669 = vmatpush1.msra.mxu0 0.0
    %4670 = vmatprep.subr.mxu0 0.0
    %4671 = vmatpush1.msra.mxu0 0.0
    %4672 = vmatprep.subr.mxu0 0.0
    %4673 = vmatpush1.msra.mxu0 0.0
    %4674 = vmatprep.subr.mxu0 0.0
    %4675 = vmatpush1.msra.mxu0 0.0
    %4676 = vmatprep.subr.mxu0 0.0
    %4677 = vmatpush1.msra.mxu0 0.0
    %4678 = vmatprep.subr.mxu0 0.0
    %4679 = vmatpush1.msra.mxu0 0.0
    %4680 = vmatprep.mubr.f32.mxu0 0.0
    %4681 = vmatmul.mubr.f32.gmra.mrb[0].mxu0 %v4614
    %v4682 = vpop.f32.mrb[0].mxu0
    %v4683 = vadd.f32 0.0, %v4682
    %v4684 = vpop.f32.mrb[0].mxu0
    %4685 = vdwg.mxu0
    %4686 = vmatprep.subr.mxu0 0.0
    %4687 = vmatpush1.msra.mxu0 %v304
    %4688 = vmatprep.subr.mxu0 0.0
    %4689 = vmatpush1.msra.mxu0 %v305
    %4690 = vmatprep.subr.mxu0 0.0
    %4691 = vmatpush1.msra.mxu0 %v306
    %4692 = vmatprep.subr.mxu0 0.0
    %4693 = vmatpush1.msra.mxu0 %v307
    %4694 = vmatprep.subr.mxu0 0.0
    %4695 = vmatpush1.msra.mxu0 0.0
    %4696 = vmatprep.subr.mxu0 0.0
    %4697 = vmatpush1.msra.mxu0 0.0
    %4698 = vmatprep.subr.mxu0 0.0
    %4699 = vmatpush1.msra.mxu0 0.0
    %4700 = vmatprep.subr.mxu0 0.0
    %4701 = vmatpush1.msra.mxu0 0.0
    %4702 = vmatprep.subr.mxu0 0.0
    %4703 = vmatpush1.msra.mxu0 0.0
    %4704 = vmatprep.subr.mxu0 0.0
    %4705 = vmatpush1.msra.mxu0 0.0
    %4706 = vmatprep.subr.mxu0 0.0
    %4707 = vmatpush1.msra.mxu0 0.0
    %4708 = vmatprep.subr.mxu0 0.0
    %4709 = vmatpush1.msra.mxu0 0.0
    %4710 = vmatprep.subr.mxu0 0.0
    %4711 = vmatpush1.msra.mxu0 0.0
    %4712 = vmatprep.subr.mxu0 0.0
    %4713 = vmatpush1.msra.mxu0 0.0
    %4714 = vmatprep.subr.mxu0 0.0
    %4715 = vmatpush1.msra.mxu0 0.0
    %4716 = vmatprep.subr.mxu0 0.0
    %4717 = vmatpush1.msra.mxu0 0.0
    %4718 = vmatprep.subr.mxu0 0.0
    %4719 = vmatpush1.msra.mxu0 0.0
    %4720 = vmatprep.subr.mxu0 0.0
    %4721 = vmatpush1.msra.mxu0 0.0
    %4722 = vmatprep.subr.mxu0 0.0
    %4723 = vmatpush1.msra.mxu0 0.0
    %4724 = vmatprep.subr.mxu0 0.0
    %4725 = vmatpush1.msra.mxu0 0.0
    %4726 = vmatprep.subr.mxu0 0.0
    %4727 = vmatpush1.msra.mxu0 0.0
    %4728 = vmatprep.subr.mxu0 0.0
    %4729 = vmatpush1.msra.mxu0 0.0
    %4730 = vmatprep.subr.mxu0 0.0
    %4731 = vmatpush1.msra.mxu0 0.0
    %4732 = vmatprep.subr.mxu0 0.0
    %4733 = vmatpush1.msra.mxu0 0.0
    %4734 = vmatprep.subr.mxu0 0.0
    %4735 = vmatpush1.msra.mxu0 0.0
    %4736 = vmatprep.subr.mxu0 0.0
    %4737 = vmatpush1.msra.mxu0 0.0
    %4738 = vmatprep.subr.mxu0 0.0
    %4739 = vmatpush1.msra.mxu0 0.0
    %4740 = vmatprep.subr.mxu0 0.0
    %4741 = vmatpush1.msra.mxu0 0.0
    %4742 = vmatprep.subr.mxu0 0.0
    %4743 = vmatpush1.msra.mxu0 0.0
    %4744 = vmatprep.subr.mxu0 0.0
    %4745 = vmatpush1.msra.mxu0 0.0
    %4746 = vmatprep.subr.mxu0 0.0
    %4747 = vmatpush1.msra.mxu0 0.0
    %4748 = vmatprep.subr.mxu0 0.0
    %4749 = vmatpush1.msra.mxu0 0.0
    %4750 = vmatprep.mubr.f32.mxu0 0.0
    %4751 = vmatmul.mubr.f32.gmra.mrb[0].mxu0 %v4447
    %v4752 = vpop.f32.mrb[0].mxu0
    %v4753 = vadd.f32 %v4683, %v4752
    %v4754 = vpop.f32.mrb[0].mxu0
    %4755 = vdwg.mxu0
    %v4756 = vadd.f32 %v4753, %v317
    %v4757 = vtanh.pop %v4756
    %v4758 = vmul.f32 %v4757, %v323
    %v4759 = vadd.f32 %v4758, %v324
    %v4760 = vmul.f32 %v4759, %v4337
    %4762 = vrot.lane.b32.xlu0 %v4759, 64
    %v4763 = vpop.permute.xlu0 %4762
    %v4765 = vmul.f32 %v4759, %v4763
    %4767 = vrot.lane.b32.xlu0 %v4765, 32
    %v4768 = vpop.permute.xlu0 %4767
    %v4770 = vadd.f32 %v4760, %v4768
    %v4771 = vtanh.pop %v4770
    %4773 = vrot.lane.b32.xlu0 %v4771, 64
    %v4774 = vpop.permute.xlu0 %4773
    %v4776 = vmul.f32 %v4759, %v4774
    %v4777 = vmul.f32 %v4335, 0.0
    %v4778 = vadd.f32 %v4776, %v4777
    %v4779 = vmul.f32 %v4337, 0.0
    %v4780 = vadd.f32 %v4770, %v4779
    %4782 = vrot.lane.b32.xlu0 %v4778, 32
    %v4783 = vpop.permute.xlu0 %4782
    %4785 = vst.msk [vmem:[#allocation3 + $0x7] sm:$0x1] %vm797, %v4783
    %4787 = vrot.lane.b32.xlu0 %v4441, 32
    %v4788 = vpop.permute.xlu0 %4787
    %4790 = vst.msk [vmem:[#allocation8] sm:$0x1] %vm797, %v4788
    %4792 = vrot.lane.b32.xlu0 %v4443, 96
    %v4793 = vpop.permute.xlu0 %4792
    %4795 = vst.msk [vmem:[#allocation10] sm:$0x1] %vm797, %v4793
    %4797 = vrot.lane.b32.xlu0 %v4611, 32
    %v4798 = vpop.permute.xlu0 %4797
    %4800 = vst.msk [vmem:[#allocation8 + $0x1] sm:$0x1] %vm797, %v4798
    %4802 = vrot.lane.b32.xlu0 %v4613, 96
    %v4803 = vpop.permute.xlu0 %4802
    %4805 = vst.msk [vmem:[#allocation10 + $0x1] sm:$0x1] %vm797, %v4803
    %4806 = vst.msk [vmem:[#allocation8 + $0x2] sm:$0x1] %vm797, %v4783
    %4808 = vrot.lane.b32.xlu0 %v4780, 96
    %v4809 = vpop.permute.xlu0 %4808
    %4811 = vst.msk [vmem:[#allocation10 + $0x2] sm:$0x1] %vm797, %v4809
    %v4812 = vld [vmem:[#allocation3] sm:$0xff]
    %v4813 = vld [vmem:[#allocation4 + $0xd8] sm:$0xff]
    %v4814 = vld [vmem:[#allocation4 + $0xe0] sm:$0xff]
    %v4815 = vld [vmem:[#allocation4 + $0xe8] sm:$0xff]
    %v4816 = vld [vmem:[#allocation4 + $0xf0] sm:$0xff]
    %v4817 = vld [vmem:[#allocation4 + $0xf8] sm:$0x1]
    %v4818 = vlaneseq
    %v4819 = vshrl.u32 %v4818, 7
    %v4820 = vsub.s32 0, %v4819
    %v4821 = vrot.slane %v4817, %v4820
    %v4823 = vsel %vm332, %v4812, 0
    %4825 = vmatprep.subr.mxu0 0.0
    %4826 = vmatpush1.msra.mxu0 %v4813
    %4827 = vmatprep.subr.mxu0 0.0
    %4828 = vmatpush1.msra.mxu0 %v4814
    %4829 = vmatprep.subr.mxu0 0.0
    %4830 = vmatpush1.msra.mxu0 %v4815
    %4831 = vmatprep.subr.mxu0 0.0
    %4832 = vmatpush1.msra.mxu0 %v4816
    %4833 = vmatprep.subr.mxu0 0.0
    %4834 = vmatpush1.msra.mxu0 0.0
    %4835 = vmatprep.subr.mxu0 0.0
    %4836 = vmatpush1.msra.mxu0 0.0
    %4837 = vmatprep.subr.mxu0 0.0
    %4838 = vmatpush1.msra.mxu0 0.0
    %4839 = vmatprep.subr.mxu0 0.0
    %4840 = vmatpush1.msra.mxu0 0.0
    %4841 = vmatprep.subr.mxu0 0.0
    %4842 = vmatpush1.msra.mxu0 0.0
    %4843 = vmatprep.subr.mxu0 0.0
    %4844 = vmatpush1.msra.mxu0 0.0
    %4845 = vmatprep.subr.mxu0 0.0
    %4846 = vmatpush1.msra.mxu0 0.0
    %4847 = vmatprep.subr.mxu0 0.0
    %4848 = vmatpush1.msra.mxu0 0.0
    %4849 = vmatprep.subr.mxu0 0.0
    %4850 = vmatpush1.msra.mxu0 0.0
    %4851 = vmatprep.subr.mxu0 0.0
    %4852 = vmatpush1.msra.mxu0 0.0
    %4853 = vmatprep.subr.mxu0 0.0
    %4854 = vmatpush1.msra.mxu0 0.0
    %4855 = vmatprep.subr.mxu0 0.0
    %4856 = vmatpush1.msra.mxu0 0.0
    %4857 = vmatprep.subr.mxu0 0.0
    %4858 = vmatpush1.msra.mxu0 0.0
    %4859 = vmatprep.subr.mxu0 0.0
    %4860 = vmatpush1.msra.mxu0 0.0
    %4861 = vmatprep.subr.mxu0 0.0
    %4862 = vmatpush1.msra.mxu0 0.0
    %4863 = vmatprep.subr.mxu0 0.0
    %4864 = vmatpush1.msra.mxu0 0.0
    %4865 = vmatprep.subr.mxu0 0.0
    %4866 = vmatpush1.msra.mxu0 0.0
    %4867 = vmatprep.subr.mxu0 0.0
    %4868 = vmatpush1.msra.mxu0 0.0
    %4869 = vmatprep.subr.mxu0 0.0
    %4870 = vmatpush1.msra.mxu0 0.0
    %4871 = vmatprep.subr.mxu0 0.0
    %4872 = vmatpush1.msra.mxu0 0.0
    %4873 = vmatprep.subr.mxu0 0.0
    %4874 = vmatpush1.msra.mxu0 0.0
    %4875 = vmatprep.subr.mxu0 0.0
    %4876 = vmatpush1.msra.mxu0 0.0
    %4877 = vmatprep.subr.mxu0 0.0
    %4878 = vmatpush1.msra.mxu0 0.0
    %4879 = vmatprep.subr.mxu0 0.0
    %4880 = vmatpush1.msra.mxu0 0.0
    %4881 = vmatprep.subr.mxu0 0.0
    %4882 = vmatpush1.msra.mxu0 0.0
    %4883 = vmatprep.subr.mxu0 0.0
    %4884 = vmatpush1.msra.mxu0 0.0
    %4885 = vmatprep.subr.mxu0 0.0
    %4886 = vmatpush1.msra.mxu0 0.0
    %4887 = vmatprep.subr.mxu0 0.0
    %4888 = vmatpush1.msra.mxu0 0.0
    %4889 = vmatprep.mubr.f32.mxu0 0.0
    %4890 = vmatmul.mubr.f32.gmra.mrb[0].mxu0 %v4823
    %v4891 = vpop.f32.mrb[0].mxu0
    %v4892 = vadd.f32 %v4821, %v4891
    %v4893 = vpop.f32.mrb[0].mxu0
    %4894 = vdwg.mxu0
    %v4895 = vand.u32 2147483647, %v4892
    %v4896 = vsub.f32 0.0, %v4895
    %v4897 = vmul.f32 %v4896, 1.442695
    %v4898 = vpow.pop %v4897
    %vm4899 = vcmp.lt.f32.partialorder %v4898, 0.0001
    %v4900 = vmul.f32 %v4898, 0.5
    %v4901 = vsub.f32 1.0, %v4900
    %v4902 = vmul.f32 %v4898, %v4901
    %v4903 = vadd.f32 %v4898, 1.0
    %v4904 = vlog2.pop %v4903
    %v4905 = vmul.f32 %v4904, 0.6931472
    %v4906 = vsel %vm4899, %v4902, %v4905
    %v4907 = vmax.f32 %v4892, 0.0
    %v4908 = vadd.f32 %v4907, %v4906
    %v4909 = vsub.f32 0.0, %v4908
    %4910 = vst [vmem:[#allocation7] sm:$0xff] %v4909
    // Predicated region
    $region34: #{tpu_custom_call.1} parent=1 // pred_check
      _
    $region35: #{tpu_custom_call.1} parent=1 // pred_check_branch
      %4912 = sbr.rel (0) target = $region37
    $region36: #{tpu_custom_call.1} parent=1 // pred_region
      %s4914 = ssub.s32 128, 128
      %4915 = vsyncadd [#allocation6], %s4914
      %s4917 = sshll.u32 [#allocation7], 4
      %s4918 = int_to_ptr.vmem [resolvable:$true] %s4917
      %4920 = dma.vmem_to_hbm [thread:$0]  %s4918, 128, %s7, [#allocation6]
    $region37: #{tpu_custom_call.1} parent=1 // pred_fallthru
      _
    // Predicated region
    $region38: #{tpu_custom_call.1} parent=1 // pred_check
      _
    $region39: #{tpu_custom_call.1} parent=1 // pred_check_branch
      %4922 = sbr.rel (0) target = $region41
    $region40: #{tpu_custom_call.1} parent=1 // pred_region
      %s4924 = ssub.s32 64, 64
      %4925 = vsyncadd [#allocation9], %s4924
      %s4927 = sshll.u32 [#allocation8], 4
      %s4928 = int_to_ptr.vmem [resolvable:$true] %s4927
      %4930 = dma.vmem_to_hbm [thread:$0]  %s4928, 64, %s8, [#allocation9]
    $region41: #{tpu_custom_call.1} parent=1 // pred_fallthru
      _
    // Predicated region
    $region42: #{tpu_custom_call.1} parent=1 // pred_check
      _
    $region43: #{tpu_custom_call.1} parent=1 // pred_check_branch
      %4932 = sbr.rel (0) target = $region45
    $region44: #{tpu_custom_call.1} parent=1 // pred_region
      %s4934 = ssub.s32 64, 64
      %4935 = vsyncadd [#allocation9], %s4934
      %s4937 = sshll.u32 [#allocation10], 4
      %s4938 = int_to_ptr.vmem [resolvable:$true] %s4937
      %4940 = dma.vmem_to_hbm [thread:$0]  %s4938, 64, %s9, [#allocation9]
    $region45: #{tpu_custom_call.1} parent=1 // pred_fallthru
      _
    // Predicated region
    $region46: #{tpu_custom_call.1} parent=1 // pred_check
      _
    $region47: #{tpu_custom_call.1} parent=1 // pred_check_branch
      %4942 = sbr.rel (0) target = $region49
    $region48: #{tpu_custom_call.1} parent=1 // pred_region
      %4943 = dma.done [#allocation6], 128
    $region49: #{tpu_custom_call.1} parent=1 // pred_fallthru
      _
    // Predicated region
    $region50: #{tpu_custom_call.1} parent=1 // pred_check
      _
    $region51: #{tpu_custom_call.1} parent=1 // pred_check_branch
      %4945 = sbr.rel (0) target = $region53
    $region52: #{tpu_custom_call.1} parent=1 // pred_region
      %4946 = dma.done [#allocation9], 64
    $region53: #{tpu_custom_call.1} parent=1 // pred_fallthru
      _
    // Predicated region
    $region54: #{tpu_custom_call.1} parent=1 // pred_check
      _
    $region55: #{tpu_custom_call.1} parent=1 // pred_check_branch
      %4948 = sbr.rel (0) target = $region57
    $region56: #{tpu_custom_call.1} parent=1 // pred_region
      %4949 = dma.done [#allocation9], 64
    $region57: #{tpu_custom_call.1} parent=1 // pred_fallthru
      _
    %4950 = vsyncpa [#allocation5], 1
    %4951 = vsyncpa [#allocation6], 1
    %4952 = vsyncpa [#allocation9], 1

</llo_original>
